<compile_context>
chip_gen: v5e
topology: v5e:2x2
jax: 0.10.0
libtpu: 0.0.40
codegen_flags: <defaults>
</compile_context>

<pallas_src>
import math

import jax
import jax.numpy as jnp
import numpy as np
from jax import lax
from jax.experimental import pallas as pl
from jax.experimental.pallas import tpu as pltpu

_EPS = 1e-8


def _make_bsq_kernel(*, G, NG, D, TN, q_scale, logit_scale):
    """Fused BSQ forward tile kernel.

    Block views per (batch, token-tile) grid step:
      z_ref       (NG, G, TN)   input latents, tokens on the lane axis
      gcb_ref     (D, G)        +-1 group codebook, MSB-first
      sel_ref     (NG*TN, NG)   group selector for the MXU token sum
      zq_ref      (NG, G, TN)   sign codes, pre-scaled by q_scale
      idx_ref     (1, TN)       full-codebook indices (int32)
      gidx_ref    (NG, TN)      per-group indices (int32)
      probsum_ref (D, NG)       sum over tile tokens of softmax probs per code
      pse_ref     (1, 1)        sum over tile tokens of per-sample soft entropy
      commit_ref  (1, 1)        sum over tile tokens of ||zq*q_scale - z||^2
    """

    def kernel(z_ref, gcb_ref, sel_ref,
               zq_ref, idx_ref, gidx_ref, probsum_ref, pse_ref, commit_ref):
        z = z_ref[...].astype(jnp.float32)                         # (NG, G, TN)

        # --- sign quantization (torch.where(z > 0, 1, -1)), pre-scaled -------
        zq_scaled = jnp.where(z > 0.0, q_scale, -q_scale).astype(jnp.float32)
        zq_ref[...] = zq_scaled.astype(zq_ref.dtype)

        # --- commitment-loss partial: sum_n sum_c (zq*q_scale - z)^2 ---------
        d = zq_scaled - z
        d2 = (d * d).reshape(NG * G, TN)
        commit_ref[...] = jnp.sum(jnp.sum(d2, axis=0, keepdims=True),
                                  axis=1, keepdims=True)            # (1, 1)

        # --- per-group / full codebook indices (MSB-first) -------------------
        jrow = lax.broadcasted_iota(jnp.int32, (G, 1), 0)           # (G, 1)
        gbasis = jnp.left_shift(jnp.int32(1), (G - 1) - jrow).astype(jnp.float32)
        grows = []
        for g in range(NG):                                         # NG small & static
            bits = jnp.where(z[g] > 0.0, 1.0, 0.0)                  # (G, TN)
            grow = jnp.sum(bits * gbasis, axis=0,
                           keepdims=True).astype(jnp.int32)         # (1, TN)
            gidx_ref[pl.ds(g, 1), :] = grow                         # direct row write
            grows.append(grow)
        idx = grows[0]
        for g in range(1, NG):
            idx = jnp.left_shift(idx, G) + grows[g]
        # TODO(synk): torch returns int64 indices; int32 is exact for embed_dim <= 30.
        idx_ref[...] = idx

        # --- soft entropy, per-bit factorized (exact) ------------------------
        # a[j, n] = logit_scale * z[j, n]; group logits l_d = sum_j a_j * s_dj
        # over all +-1 sign patterns, so max / logsumexp / entropy factor per bit.
        zcat = jnp.concatenate([z[g] for g in range(NG)], axis=-1)  # (G, NG*TN)
        a = logit_scale * zcat
        aa = jnp.abs(a)
        t = 2.0 * aa
        u = jnp.exp(-t)                                             # (G, NG*TN)
        lp = jnp.log(1.0 + u)
        w = t * u / (1.0 + u)

        m = jnp.sum(aa, axis=0, keepdims=True)        # closed-form max logit
        slp = jnp.sum(lp, axis=0, keepdims=True)
        lse = m + slp                                 # logsumexp over the group
        ent = slp + jnp.sum(w, axis=0, keepdims=True)               # (1, NG*TN)
        pse_ref[...] = jnp.sum(ent, axis=1, keepdims=True)          # (1, 1)

        # --- codebook-usage probabilities: one MXU matmul + MXU token sum ----
        logits = jnp.dot(gcb_ref[...], a,
                         preferred_element_type=jnp.float32)        # (D, NG*TN)
        prob = jnp.exp(logits - lse)                                # softmax probs
        probsum_ref[...] = jnp.dot(prob, sel_ref[...],
                                   preferred_element_type=jnp.float32)  # (D, NG)
        # TODO(synk): a bf16 logits matmul (or a hi/lo factorized probsum) would
        # cut the remaining MXU + EUP cost further, but with inv_temperature=100
        # the softmax is extremely peaked and the entropy terms need re-validation.

    return kernel


def bsq_forward(x, *, group_size=9, l2_norm=True, inv_temperature=100.0,
                beta=0.0, gamma_0=1.0, gamma_1=1.0, tile_n=1024):
    """Forward pass of BinarySphericalQuantizer (soft_entropy=True,
    persample_entropy_compute='group', input_format='bchw', training=True)."""
    B, C, H, W = x.shape
    G = group_size
    assert C % G == 0, "embed_dim must be divisible by group_size"
    assert C <= 30, "int32 index packing is exact only for embed_dim <= 30"
    assert G <= 24, "per-group f32 index packing is exact only for group_size <= 24"
    NG = C // G
    D = 2 ** G

    HW = H * W
    tile_n = min(tile_n, HW)
    # TODO(synk): production inputs need padding + masking of the partial
    # accumulators when H*W is not a multiple of tile_n (or of 128).
    assert HW % tile_n == 0 and tile_n % 128 == 0
    T = HW // tile_n
    N = B * HW

    q_scale = 1.0 / math.sqrt(C) if l2_norm else 1.0
    logit_scale = 2.0 * inv_temperature * q_scale

    # grouped token-lane layout: pure reshape, no HBM transpose.
    z = x.reshape(B, NG, G, HW).astype(jnp.float32)

    # shared per-group codebook, MSB-first codes in {-1, +1}.
    codes = np.arange(D, dtype=np.int64)[:, None]
    shifts = np.arange(G - 1, -1, -1, dtype=np.int64)[None, :]
    gcb = jnp.asarray((((codes >> shifts) & 1) * 2 - 1).astype(np.float32))  # (D, G)

    # group selector for the MXU token sum of the lane-concatenated groups.
    sel_np = np.zeros((NG * tile_n, NG), dtype=np.float32)
    for g in range(NG):
        sel_np[g * tile_n:(g + 1) * tile_n, g] = 1.0
    sel = jnp.asarray(sel_np)

    kernel = _make_bsq_kernel(G=G, NG=NG, D=D, TN=tile_n,
                              q_scale=q_scale, logit_scale=logit_scale)

    out_shapes = (
        jax.ShapeDtypeStruct((B, NG, G, HW), x.dtype),        # zq (scaled)
        jax.ShapeDtypeStruct((B, 1, HW), jnp.int32),          # indices
        jax.ShapeDtypeStruct((B, NG, HW), jnp.int32),         # group indices
        jax.ShapeDtypeStruct((B, T, D, NG), jnp.float32),     # prob partials
        jax.ShapeDtypeStruct((B, T, 1, 1), jnp.float32),      # pse partials
        jax.ShapeDtypeStruct((B, T, 1, 1), jnp.float32),      # commit partials
    )
    in_specs = [
        pl.BlockSpec((None, NG, G, tile_n), lambda b, t: (b, 0, 0, t)),
        pl.BlockSpec((D, G), lambda b, t: (0, 0)),
        pl.BlockSpec((NG * tile_n, NG), lambda b, t: (0, 0)),
    ]
    out_specs = (
        pl.BlockSpec((None, NG, G, tile_n), lambda b, t: (b, 0, 0, t)),
        pl.BlockSpec((None, 1, tile_n), lambda b, t: (b, 0, t)),
        pl.BlockSpec((None, NG, tile_n), lambda b, t: (b, 0, t)),
        pl.BlockSpec((None, None, D, NG), lambda b, t: (b, t, 0, 0)),
        pl.BlockSpec((None, None, 1, 1), lambda b, t: (b, t, 0, 0)),
        pl.BlockSpec((None, None, 1, 1), lambda b, t: (b, t, 0, 0)),
    )

    zq_g, idx_b, gidx_b, probsum_t, pse_t, commit_t = pl.pallas_call(
        kernel,
        out_shape=out_shapes,
        grid_spec=pltpu.PrefetchScalarGridSpec(
            num_scalar_prefetch=0,
            grid=(B, T),
            in_specs=in_specs,
            out_specs=out_specs,
        ),
        compiler_params=pltpu.CompilerParams(
            dimension_semantics=("parallel", "parallel"),   # every step independent
            # 48 MiB fits v7x's 64 MiB VMEM; on v5e/v6e (128 MiB) raise this and
            # tile_n (1024-2048) for a little more per-step amortization.
            vmem_limit_bytes=48 * 1024 * 1024),
    )(z, gcb, sel)

    # Tiny final reductions in XLA so the Pallas grid stays fully 'parallel'.
    avg_prob = jnp.sum(probsum_t, axis=(0, 1)) / N + _EPS           # (D, NG)
    cb_entropy = jnp.sum(-avg_prob * jnp.log(avg_prob))
    persample_entropy = jnp.sum(pse_t) / N
    commit_loss = beta * jnp.sum(commit_t) / N
    entropy_penalty = gamma_0 * persample_entropy - gamma_1 * cb_entropy
    loss = commit_loss + entropy_penalty / inv_temperature

    zq = zq_g.reshape(B, C, H, W)                                    # NCHW, no transpose
    indices = idx_b.reshape(B, H, W)
    group_indices = jnp.transpose(gidx_b, (0, 2, 1)).reshape(B, H, W, NG)

    # TODO(synk): `used_codes` = torch.unique(indices) only in eval mode; the
    # module default (training=True) returns None, so None here.
    aux = {'H': cb_entropy, 'used_codes': None,
           'indices': indices, 'group_indices': group_indices}
    return zq, loss, aux


def bsq_reference(x, *, group_size=9, l2_norm=True, inv_temperature=100.0,
                  beta=0.0, gamma_0=1.0, gamma_1=1.0):
    """Pure-JAX mirror of the PyTorch forward, for validation."""
    B, C, H, W = x.shape
    G = group_size
    NG = C // G
    D = 2 ** G
    z = jnp.transpose(x, (0, 2, 3, 1)).astype(jnp.float32)
    zq = jnp.where(z > 0, 1.0, -1.0)
    basis = 2.0 ** jnp.arange(C - 1, -1, -1)
    gbasis = 2.0 ** jnp.arange(G - 1, -1, -1)
    indices = jnp.sum((zq + 1) / 2 * basis, axis=-1).astype(jnp.int32)
    zq_g = zq.reshape(B, H, W, NG, G)
    group_indices = jnp.sum((zq_g + 1) / 2 * gbasis, axis=-1).astype(jnp.int32)
    scale = math.sqrt(C) if l2_norm else 1.0
    gbasis_i = 2 ** jnp.arange(G - 1, -1, -1)
    codes = jnp.arange(D)
    cb = (((codes[:, None] // gbasis_i) % 2) * 2 - 1).astype(jnp.float32) / scale
    zd = z.reshape(B, H, W, NG, G)
    dist = -2.0 * jnp.einsum('bhwgc,dc->bhwgd', zd, cb)
    prob = jax.nn.softmax(-dist * inv_temperature, axis=-1)
    pse = jnp.mean(jnp.sum(-(prob + _EPS) * jnp.log(prob + _EPS), axis=(-1, -2)))
    avg_prob = jnp.mean(prob, axis=(0, 1, 2))
    cbh = jnp.sum(-(avg_prob + _EPS) * jnp.log(avg_prob + _EPS))
    q_scale = 1.0 / math.sqrt(C) if l2_norm else 1.0
    zqs = zq * q_scale
    commit = beta * jnp.mean(jnp.sum((zqs - z) ** 2, axis=-1))
    loss = commit + (gamma_0 * pse - gamma_1 * cbh) / inv_temperature
    return jnp.transpose(zqs, (0, 3, 1, 2)), loss, indices, group_indices, cbh


if __name__ == "__main__":
    key = jax.random.PRNGKey(0)
    # embed_dim=18 (module default), group_size=9 -> 2 groups, 512-entry codebook.
    # B*H*W = 2048 tokens; tile_n=512 -> grid (B=2, T=2) exercises the partial sums.
    B, C, H, W = 2, 18, 32, 32
    x = jax.random.normal(key, (B, C, H, W), dtype=jnp.float32)

    zq, loss, aux = bsq_forward(x, tile_n=512)
    jax.block_until_ready((zq, loss, aux['indices'], aux['group_indices'], aux['H']))

    zq_r, loss_r, idx_r, gidx_r, cbh_r = bsq_reference(x)
    np.testing.assert_allclose(np.asarray(zq), np.asarray(zq_r), atol=1e-6)
    np.testing.assert_array_equal(np.asarray(aux['indices']), np.asarray(idx_r))
    np.testing.assert_array_equal(np.asarray(aux['group_indices']), np.asarray(gidx_r))
    np.testing.assert_allclose(float(aux['H']), float(cbh_r), rtol=1e-4, atol=1e-4)
    # NOTE: loss differs from the torch-style reference only by the O(2**G * eps)
    # per-token term from entr(prob + eps) vs the exact closed-form entropy
    # (~2e-6 on the loss), well inside tolerance.
    np.testing.assert_allclose(float(loss), float(loss_r), rtol=1e-4, atol=1e-4)

    print("KERNEL_OK")
</pallas_src>

<mosaic_0001>
module attributes {stable_mosaic.version = 11 : i64} {
  func.func @kernel(%arg0: i32, %arg1: i32, %arg2: memref<1x2x9x512xf32, #tpu.memory_space<vmem>>, %arg3: memref<512x9xf32, #tpu.memory_space<vmem>>, %arg4: memref<1024x2xf32, #tpu.memory_space<vmem>>, %arg5: memref<1x2x9x512xf32, #tpu.memory_space<vmem>>, %arg6: memref<1x1x512xi32, #tpu.memory_space<vmem>>, %arg7: memref<1x2x512xi32, #tpu.memory_space<vmem>>, %arg8: memref<1x1x512x2xf32, #tpu.memory_space<vmem>>, %arg9: memref<1x1x1x1xf32, #tpu.memory_space<vmem>>, %arg10: memref<1x1x1x1xf32, #tpu.memory_space<vmem>>) attributes {dimension_semantics = [#tpu.dimension_semantics<parallel>, #tpu.dimension_semantics<parallel>], iteration_bounds = array<i64: 2, 2>, scalar_prefetch = 0 : i64, scratch_operands = 0 : i64, tpu.core_type = #tpu.core_type<tc>, window_params = [{transform_indices = @transform_0, window_bounds = array<i64: 1, 2, 9, 512>}, {pipeline_mode = #tpu.pipeline_mode<synchronous>, transform_indices = @transform_1, window_bounds = array<i64: 512, 9>}, {pipeline_mode = #tpu.pipeline_mode<synchronous>, transform_indices = @transform_2, window_bounds = array<i64: 1024, 2>}, {transform_indices = @transform_3, window_bounds = array<i64: 1, 2, 9, 512>}, {transform_indices = @transform_4, window_bounds = array<i64: 1, 1, 512>}, {transform_indices = @transform_5, window_bounds = array<i64: 1, 2, 512>}, {transform_indices = @transform_6, window_bounds = array<i64: 1, 1, 512, 2>}, {transform_indices = @transform_7, window_bounds = array<i64: 1, 1, 1, 1>}, {transform_indices = @transform_8, window_bounds = array<i64: 1, 1, 1, 1>}]} {
    %c0 = arith.constant 0 : index
    %c0_0 = arith.constant 0 : index
    %c0_1 = arith.constant 0 : index
    %c0_2 = arith.constant 0 : index
    %0 = vector.load %arg2[%c0, %c0_0, %c0_1, %c0_2] : memref<1x2x9x512xf32, #tpu.memory_space<vmem>>, vector<1x2x9x512xf32>
    %1 = vector.shape_cast %0 : vector<1x2x9x512xf32> to vector<2x9x512xf32>
    %cst = arith.constant 0.000000e+00 : f32
    %2 = vector.broadcast %cst : f32 to vector<2x9x512xf32>
    %3 = arith.cmpf ogt, %1, %2 : vector<2x9x512xf32>
    %cst_3 = arith.constant 0.235702261 : f32
    %cst_4 = arith.constant -0.235702261 : f32
    %4 = vector.broadcast %cst_3 : f32 to vector<2x9x512xf32>
    %5 = vector.broadcast %cst_4 : f32 to vector<2x9x512xf32>
    %6 = arith.select %3, %4, %5 : vector<2x9x512xi1>, vector<2x9x512xf32>
    %c0_5 = arith.constant 0 : index
    %c0_6 = arith.constant 0 : index
    %c0_7 = arith.constant 0 : index
    %c0_8 = arith.constant 0 : index
    %7 = vector.load %arg5[%c0_5, %c0_6, %c0_7, %c0_8] : memref<1x2x9x512xf32, #tpu.memory_space<vmem>>, vector<1x2x9x512xf32>
    %8 = vector.shape_cast %7 : vector<1x2x9x512xf32> to vector<2x9x512xf32>
    %9 = vector.shape_cast %6 : vector<2x9x512xf32> to vector<1x2x9x512xf32>
    tpu.vector_store %arg5[%c0_5, %c0_6, %c0_7, %c0_8], %9 {strides = array<i32>} : memref<1x2x9x512xf32, #tpu.memory_space<vmem>>, vector<1x2x9x512xf32>,
    %10 = arith.subf %6, %1 : vector<2x9x512xf32>
    %11 = arith.mulf %10, %10 : vector<2x9x512xf32>
    %12 = vector.shape_cast %11 : vector<2x9x512xf32> to vector<18x512xf32>
    %cst_9 = arith.constant dense<0.000000e+00> : vector<512xf32>
    %13 = vector.multi_reduction <add>, %12, %cst_9 [0] : vector<18x512xf32> to vector<512xf32>
    %14 = vector.shape_cast %13 : vector<512xf32> to vector<1x512xf32>
    %cst_10 = arith.constant dense<0.000000e+00> : vector<1xf32>
    %15 = vector.multi_reduction <add>, %14, %cst_10 [1] : vector<1x512xf32> to vector<1xf32>
    %16 = vector.shape_cast %15 : vector<1xf32> to vector<1x1xf32>
    %c0_11 = arith.constant 0 : index
    %c0_12 = arith.constant 0 : index
    %c0_13 = arith.constant 0 : index
    %c0_14 = arith.constant 0 : index
    %17 = vector.load %arg10[%c0_11, %c0_12, %c0_13, %c0_14] : memref<1x1x1x1xf32, #tpu.memory_space<vmem>>, vector<1x1x1x1xf32>
    %18 = vector.shape_cast %17 : vector<1x1x1x1xf32> to vector<1x1xf32>
    %19 = vector.shape_cast %16 : vector<1x1xf32> to vector<1x1x1x1xf32>
    tpu.vector_store %arg10[%c0_11, %c0_12, %c0_13, %c0_14], %19 {strides = array<i32>} : memref<1x1x1x1xf32, #tpu.memory_space<vmem>>, vector<1x1x1x1xf32>,
    %20 = tpu.iota {dimensions = array<i32: 0>} : vector<9x1xi32>
    %c8_i32 = arith.constant 8 : i32
    %21 = vector.broadcast %c8_i32 : i32 to vector<9x1xi32>
    %22 = arith.subi %21, %20 : vector<9x1xi32>
    %c1_i32 = arith.constant 1 : i32
    %23 = vector.broadcast %c1_i32 : i32 to vector<9x1xi32>
    %24 = arith.shli %23, %22 : vector<9x1xi32>
    %25 = arith.sitofp %24 : vector<9x1xi32> to vector<9x1xf32>
    %26 = vector.extract_strided_slice %1 {offsets = [0, 0, 0], sizes = [1, 9, 512], strides = [1, 1, 1]} : vector<2x9x512xf32> to vector<1x9x512xf32>
    %27 = vector.shape_cast %26 : vector<1x9x512xf32> to vector<9x512xf32>
    %cst_15 = arith.constant 0.000000e+00 : f32
    %28 = vector.broadcast %cst_15 : f32 to vector<9x512xf32>
    %29 = arith.cmpf ogt, %27, %28 : vector<9x512xf32>
    %cst_16 = arith.constant 1.000000e+00 : f32
    %cst_17 = arith.constant 0.000000e+00 : f32
    %30 = vector.broadcast %cst_16 : f32 to vector<9x512xf32>
    %31 = vector.broadcast %cst_17 : f32 to vector<9x512xf32>
    %32 = arith.select %29, %30, %31 : vector<9x512xi1>, vector<9x512xf32>
    %33 = vector.broadcast %25 : vector<9x1xf32> to vector<9x512xf32>
    %34 = arith.mulf %32, %33 : vector<9x512xf32>
    %cst_18 = arith.constant dense<0.000000e+00> : vector<512xf32>
    %35 = vector.multi_reduction <add>, %34, %cst_18 [0] : vector<9x512xf32> to vector<512xf32>
    %36 = vector.shape_cast %35 : vector<512xf32> to vector<1x512xf32>
    %37 = arith.fptosi %36 : vector<1x512xf32> to vector<1x512xi32>
    %c0_19 = arith.constant 0 : index
    %c0_20 = arith.constant 0 : index
    %c0_21 = arith.constant 0 : index
    %38 = vector.load %arg7[%c0_19, %c0_20, %c0_21] : memref<1x2x512xi32, #tpu.memory_space<vmem>>, vector<1x1x512xi32>
    %39 = vector.shape_cast %38 : vector<1x1x512xi32> to vector<1x512xi32>
    %40 = vector.shape_cast %37 : vector<1x512xi32> to vector<1x1x512xi32>
    tpu.vector_store %arg7[%c0_19, %c0_20, %c0_21], %40 {strides = array<i32>} : memref<1x2x512xi32, #tpu.memory_space<vmem>>, vector<1x1x512xi32>,
    %41 = vector.extract_strided_slice %1 {offsets = [1, 0, 0], sizes = [1, 9, 512], strides = [1, 1, 1]} : vector<2x9x512xf32> to vector<1x9x512xf32>
    %42 = vector.shape_cast %41 : vector<1x9x512xf32> to vector<9x512xf32>
    %cst_22 = arith.constant 0.000000e+00 : f32
    %43 = vector.broadcast %cst_22 : f32 to vector<9x512xf32>
    %44 = arith.cmpf ogt, %42, %43 : vector<9x512xf32>
    %cst_23 = arith.constant 1.000000e+00 : f32
    %cst_24 = arith.constant 0.000000e+00 : f32
    %45 = vector.broadcast %cst_23 : f32 to vector<9x512xf32>
    %46 = vector.broadcast %cst_24 : f32 to vector<9x512xf32>
    %47 = arith.select %44, %45, %46 : vector<9x512xi1>, vector<9x512xf32>
    %48 = vector.broadcast %25 : vector<9x1xf32> to vector<9x512xf32>
    %49 = arith.mulf %47, %48 : vector<9x512xf32>
    %cst_25 = arith.constant dense<0.000000e+00> : vector<512xf32>
    %50 = vector.multi_reduction <add>, %49, %cst_25 [0] : vector<9x512xf32> to vector<512xf32>
    %51 = vector.shape_cast %50 : vector<512xf32> to vector<1x512xf32>
    %52 = arith.fptosi %51 : vector<1x512xf32> to vector<1x512xi32>
    %c0_26 = arith.constant 0 : index
    %c1 = arith.constant 1 : index
    %c0_27 = arith.constant 0 : index
    %53 = vector.load %arg7[%c0_26, %c1, %c0_27] : memref<1x2x512xi32, #tpu.memory_space<vmem>>, vector<1x1x512xi32>
    %54 = vector.shape_cast %53 : vector<1x1x512xi32> to vector<1x512xi32>
    %55 = vector.shape_cast %52 : vector<1x512xi32> to vector<1x1x512xi32>
    tpu.vector_store %arg7[%c0_26, %c1, %c0_27], %55 {strides = array<i32>} : memref<1x2x512xi32, #tpu.memory_space<vmem>>, vector<1x1x512xi32>,
    %c9_i32 = arith.constant 9 : i32
    %56 = vector.broadcast %c9_i32 : i32 to vector<1x512xi32>
    %57 = arith.shli %37, %56 : vector<1x512xi32>
    %58 = arith.addi %57, %52 : vector<1x512xi32>
    %c0_28 = arith.constant 0 : index
    %c0_29 = arith.constant 0 : index
    %c0_30 = arith.constant 0 : index
    %59 = vector.load %arg6[%c0_28, %c0_29, %c0_30] : memref<1x1x512xi32, #tpu.memory_space<vmem>>, vector<1x1x512xi32>
    %60 = vector.shape_cast %59 : vector<1x1x512xi32> to vector<1x512xi32>
    %61 = vector.shape_cast %58 : vector<1x512xi32> to vector<1x1x512xi32>
    tpu.vector_store %arg6[%c0_28, %c0_29, %c0_30], %61 {strides = array<i32>} : memref<1x1x512xi32, #tpu.memory_space<vmem>>, vector<1x1x512xi32>,
    %62 = vector.extract_strided_slice %1 {offsets = [0, 0, 0], sizes = [1, 9, 512], strides = [1, 1, 1]} : vector<2x9x512xf32> to vector<1x9x512xf32>
    %63 = vector.shape_cast %62 : vector<1x9x512xf32> to vector<9x512xf32>
    %64 = vector.extract_strided_slice %1 {offsets = [1, 0, 0], sizes = [1, 9, 512], strides = [1, 1, 1]} : vector<2x9x512xf32> to vector<1x9x512xf32>
    %65 = vector.shape_cast %64 : vector<1x9x512xf32> to vector<9x512xf32>
    %66 = tpu.concatenate %63, %65 in 1 : vector<9x512xf32>, vector<9x512xf32> -> vector<9x1024xf32>
    %cst_31 = arith.constant 47.1404533 : f32
    %67 = vector.broadcast %cst_31 : f32 to vector<9x1024xf32>
    %68 = arith.mulf %67, %66 : vector<9x1024xf32>
    %69 = math.absf %68 : vector<9x1024xf32>
    %cst_32 = arith.constant 2.000000e+00 : f32
    %70 = vector.broadcast %cst_32 : f32 to vector<9x1024xf32>
    %71 = arith.mulf %70, %69 : vector<9x1024xf32>
    %cst_33 = arith.constant 0.000000e+00 : f32
    %72 = vector.broadcast %cst_33 : f32 to vector<9x1024xf32>
    %73 = arith.subf %72, %71 : vector<9x1024xf32>
    %74 = math.exp %73 : vector<9x1024xf32>
    %cst_34 = arith.constant 1.000000e+00 : f32
    %75 = vector.broadcast %cst_34 : f32 to vector<9x1024xf32>
    %76 = arith.addf %75, %74 : vector<9x1024xf32>
    %77 = math.log %76 : vector<9x1024xf32>
    %78 = arith.mulf %71, %74 : vector<9x1024xf32>
    %cst_35 = arith.constant 1.000000e+00 : f32
    %79 = vector.broadcast %cst_35 : f32 to vector<9x1024xf32>
    %80 = arith.addf %79, %74 : vector<9x1024xf32>
    %81 = arith.divf %78, %80 : vector<9x1024xf32>
    %cst_36 = arith.constant dense<0.000000e+00> : vector<1024xf32>
    %82 = vector.multi_reduction <add>, %69, %cst_36 [0] : vector<9x1024xf32> to vector<1024xf32>
    %83 = vector.shape_cast %82 : vector<1024xf32> to vector<1x1024xf32>
    %cst_37 = arith.constant dense<0.000000e+00> : vector<1024xf32>
    %84 = vector.multi_reduction <add>, %77, %cst_37 [0] : vector<9x1024xf32> to vector<1024xf32>
    %85 = vector.shape_cast %84 : vector<1024xf32> to vector<1x1024xf32>
    %86 = arith.addf %83, %85 : vector<1x1024xf32>
    %cst_38 = arith.constant dense<0.000000e+00> : vector<1024xf32>
    %87 = vector.multi_reduction <add>, %81, %cst_38 [0] : vector<9x1024xf32> to vector<1024xf32>
    %88 = vector.shape_cast %87 : vector<1024xf32> to vector<1x1024xf32>
    %89 = arith.addf %85, %88 : vector<1x1024xf32>
    %cst_39 = arith.constant dense<0.000000e+00> : vector<1xf32>
    %90 = vector.multi_reduction <add>, %89, %cst_39 [1] : vector<1x1024xf32> to vector<1xf32>
    %91 = vector.shape_cast %90 : vector<1xf32> to vector<1x1xf32>
    %c0_40 = arith.constant 0 : index
    %c0_41 = arith.constant 0 : index
    %c0_42 = arith.constant 0 : index
    %c0_43 = arith.constant 0 : index
    %92 = vector.load %arg9[%c0_40, %c0_41, %c0_42, %c0_43] : memref<1x1x1x1xf32, #tpu.memory_space<vmem>>, vector<1x1x1x1xf32>
    %93 = vector.shape_cast %92 : vector<1x1x1x1xf32> to vector<1x1xf32>
    %94 = vector.shape_cast %91 : vector<1x1xf32> to vector<1x1x1x1xf32>
    tpu.vector_store %arg9[%c0_40, %c0_41, %c0_42, %c0_43], %94 {strides = array<i32>} : memref<1x1x1x1xf32, #tpu.memory_space<vmem>>, vector<1x1x1x1xf32>,
    %c0_44 = arith.constant 0 : index
    %c0_45 = arith.constant 0 : index
    %95 = vector.load %arg3[%c0_44, %c0_45] : memref<512x9xf32, #tpu.memory_space<vmem>>, vector<512x9xf32>
    %cst_46 = arith.constant dense<0.000000e+00> : vector<512x1024xf32>
    %96 = tpu.matmul %95, %68, %cst_46 {dimension_numbers = #tpu.dot_dimension_numbers<[1], [0], [0], [1], [0, 0, 1, 1], [], []>} : vector<512x9xf32>, vector<9x1024xf32>, vector<512x1024xf32> -> vector<512x1024xf32>
    %97 = vector.broadcast %86 : vector<1x1024xf32> to vector<512x1024xf32>
    %98 = arith.subf %96, %97 : vector<512x1024xf32>
    %99 = math.exp %98 : vector<512x1024xf32>
    %c0_47 = arith.constant 0 : index
    %c0_48 = arith.constant 0 : index
    %100 = vector.load %arg4[%c0_47, %c0_48] : memref<1024x2xf32, #tpu.memory_space<vmem>>, vector<1024x2xf32>
    %cst_49 = arith.constant dense<0.000000e+00> : vector<512x2xf32>
    %101 = tpu.matmul %99, %100, %cst_49 {dimension_numbers = #tpu.dot_dimension_numbers<[1], [0], [0], [1], [0, 0, 1, 1], [], []>} : vector<512x1024xf32>, vector<1024x2xf32>, vector<512x2xf32> -> vector<512x2xf32>
    %c0_50 = arith.constant 0 : index
    %c0_51 = arith.constant 0 : index
    %c0_52 = arith.constant 0 : index
    %c0_53 = arith.constant 0 : index
    %102 = vector.load %arg8[%c0_50, %c0_51, %c0_52, %c0_53] : memref<1x1x512x2xf32, #tpu.memory_space<vmem>>, vector<1x1x512x2xf32>
    %103 = vector.shape_cast %102 : vector<1x1x512x2xf32> to vector<512x2xf32>
    %104 = vector.shape_cast %101 : vector<512x2xf32> to vector<1x1x512x2xf32>
    tpu.vector_store %arg8[%c0_50, %c0_51, %c0_52, %c0_53], %104 {strides = array<i32>} : memref<1x1x512x2xf32, #tpu.memory_space<vmem>>, vector<1x1x512x2xf32>,
    return
  }
  func.func @transform_0(%arg0: i32, %arg1: i32) -> (i32, i32, i32, i32) {
    %c0_i32 = arith.constant 0 : i32
    %c0_i32_0 = arith.constant 0 : i32
    %c0_i32_1 = arith.constant 0 : i32
    return %arg0, %c0_i32, %c0_i32_0, %arg1 : i32, i32, i32, i32
  }
  func.func @transform_1(%arg0: i32, %arg1: i32) -> (i32, i32) {
    %c0_i32 = arith.constant 0 : i32
    %c0_i32_0 = arith.constant 0 : i32
    %c0_i32_1 = arith.constant 0 : i32
    return %c0_i32, %c0_i32_0 : i32, i32
  }
  func.func @transform_2(%arg0: i32, %arg1: i32) -> (i32, i32) {
    %c0_i32 = arith.constant 0 : i32
    %c0_i32_0 = arith.constant 0 : i32
    %c0_i32_1 = arith.constant 0 : i32
    return %c0_i32, %c0_i32_0 : i32, i32
  }
  func.func @transform_3(%arg0: i32, %arg1: i32) -> (i32, i32, i32, i32) {
    %c0_i32 = arith.constant 0 : i32
    %c0_i32_0 = arith.constant 0 : i32
    %c0_i32_1 = arith.constant 0 : i32
    return %arg0, %c0_i32, %c0_i32_0, %arg1 : i32, i32, i32, i32
  }
  func.func @transform_4(%arg0: i32, %arg1: i32) -> (i32, i32, i32) {
    %c0_i32 = arith.constant 0 : i32
    %c0_i32_0 = arith.constant 0 : i32
    return %arg0, %c0_i32, %arg1 : i32, i32, i32
  }
  func.func @transform_5(%arg0: i32, %arg1: i32) -> (i32, i32, i32) {
    %c0_i32 = arith.constant 0 : i32
    %c0_i32_0 = arith.constant 0 : i32
    return %arg0, %c0_i32, %arg1 : i32, i32, i32
  }
  func.func @transform_6(%arg0: i32, %arg1: i32) -> (i32, i32, i32, i32) {
    %c0_i32 = arith.constant 0 : i32
    %c0_i32_0 = arith.constant 0 : i32
    %c0_i32_1 = arith.constant 0 : i32
    return %arg0, %arg1, %c0_i32, %c0_i32_0 : i32, i32, i32, i32
  }
  func.func @transform_7(%arg0: i32, %arg1: i32) -> (i32, i32, i32, i32) {
    %c0_i32 = arith.constant 0 : i32
    %c0_i32_0 = arith.constant 0 : i32
    %c0_i32_1 = arith.constant 0 : i32
    return %arg0, %arg1, %c0_i32, %c0_i32_0 : i32, i32, i32, i32
  }
  func.func @transform_8(%arg0: i32, %arg1: i32) -> (i32, i32, i32, i32) {
    %c0_i32 = arith.constant 0 : i32
    %c0_i32_0 = arith.constant 0 : i32
    %c0_i32_1 = arith.constant 0 : i32
    return %arg0, %arg1, %c0_i32, %c0_i32_0 : i32, i32, i32, i32
  }
}

</mosaic_0001>

<llo_original>
// kernel: tpu_custom_call.1
$region0: #{tpu_custom_call.1}
  #allocation0 [shape = 'u32[]', space=smem, size = 0x4, offset = 0x4, fixed_abs, tag = 'smem constant byte address 0x4 - core index']
  #allocation1 [shape = 'u32[72,128]{1,0:T(1,128)}', space=vmem, size = 0x9000, scoped, tag = 'internal scratch']
  %s0 = inlined_call_operand.vmem [shape: f32[2,2,9,1024], index: 0, kind: input, shape index: {}]
  %s1 = inlined_call_operand.vmem [shape: f32[512,9], index: 1, kind: input, shape index: {}]
  %s2 = inlined_call_operand.vmem [shape: f32[1024,2], index: 2, kind: input, shape index: {}]
  %s3 = inlined_call_operand.vmem [shape: f32[2,2,9,1024], index: 3, kind: output, shape index: {0}]
  %s4 = inlined_call_operand.hbm [shape: s32[2,1,1024], index: 4, kind: output, shape index: {1}]
  %s5 = inlined_call_operand.hbm [shape: s32[2,2,1024], index: 5, kind: output, shape index: {2}]
  %s6 = inlined_call_operand.vmem [shape: f32[2,2,512,2], index: 6, kind: output, shape index: {3}]
  %s7 = inlined_call_operand.vmem [shape: f32[2,2,1,1], index: 7, kind: output, shape index: {4}]
  %s8 = inlined_call_operand.vmem [shape: f32[2,2,1,1], index: 8, kind: output, shape index: {5}]
  %9 = xla_tuple %s3, %s4, %s5, %s6, %s7, %s8
  %s10 = sld [smem:[#allocation0]]
  $region127: #{tpu_custom_call.1} parent=0
    _
  %s12 = ssub.s32 1, %s10
  %s13 = scalar_select 0, %s12, %s10
  $region1: #{tpu_custom_call.1} parent=0
    #allocation2 [shape = 'u8[131072]{0}', space=vmem, size = 0x20000, scoped, tag = 'input window, operand 0']
    #allocation3 [shape = 'u8[131072]{0}', space=vmem, size = 0x20000, scoped, tag = 'output window, operand 0']
    #allocation4 [shape = 'u8[4096]{0}', space=vmem, size = 0x1000, scoped, tag = 'output window, operand 1']
    #allocation5 [shape = 's32[2]{0}', space=sflag, size = 0x8, scoped, tag = 'scoped memory for tpu_custom_call.1']
    #allocation6 [shape = 'u8[8192]{0}', space=vmem, size = 0x2000, scoped, tag = 'output window, operand 2']
    #allocation7 [shape = 's32[2]{0}', space=sflag, size = 0x8, scoped, tag = 'scoped memory for tpu_custom_call.1']
    %14 = vsyncpa [#allocation5], 0
    %s15 = scalar_lea.sflag [#allocation5], 1
    %16 = vsyncpa %s15, 0
    %17 = vsyncpa [#allocation7], 0
    %s18 = scalar_lea.sflag [#allocation7], 1
    %19 = vsyncpa %s18, 0
    loop: start=0, step=1, limit=6
    $region2: #{tpu_custom_call.1} parent=1 // loop_pre_header
      _
    $region3: #{tpu_custom_call.1} parent=1 // loop_header
      %s21 = sphi 0, %s25
      %p22 = scmp.ge.s32.totalorder %s21, 6
      %s28 = sphi 0, %s40
      %s29 = sphi 0, %s36
      %s30 = sphi 0, %s28
      %s31 = sphi 0, %s29
      %s32 = sphi 0, %s30
      %s33 = sphi 0, %s31
      %s45 = sphi 0, %s47
      %s48 = sphi 0, %s45
      %s49 = sphi 0, %s48
      %s65 = sphi 0, %s49
      %s69 = sphi 0, %s69
      %s71 = sphi 0, %s69
      %s72 = sphi 0, %s71
      %s86 = sphi 0, %s72
      %s90 = sphi 0, %s90
      %s92 = sphi 0, %s90
      %s93 = sphi 0, %s92
      %s107 = sphi 0, %s93
      %s115 = sphi 0, %s117
      %s118 = sphi 0, %s115
      %s119 = sphi 0, %s118
      %s135 = sphi 0, %s119
      %s143 = sphi 0, %s145
      %s146 = sphi 0, %s143
      %s147 = sphi 0, %s146
      %s163 = sphi 0, %s147
      %s171 = sphi 0, %s173
      %s174 = sphi 0, %s171
      %s175 = sphi 0, %s174
      %s191 = sphi 0, %s175
      %s199 = sphi 0, %s201
      %s202 = sphi 0, %s199
      %s203 = sphi 0, %s202
      %s219 = sphi 0, %s203
      %s227 = sphi 0, %s229
      %s230 = sphi 0, %s227
      %s231 = sphi 0, %s230
      %s247 = sphi 0, %s231
      %s255 = sphi 0, %s257
      %s258 = sphi 0, %s255
      %s259 = sphi 0, %s258
      %s275 = sphi 0, %s259
    $region4: #{tpu_custom_call.1} parent=1 // loop_header_branch
      %24 = sbr.rel (%p22) target = $region8
    $region5: #{tpu_custom_call.1} parent=1 // loop_body
      %s26 = ssub.s32 %s21, 1
      %s27 = ssub.s32 %s21, 2
      %s34 = sadd.s32 1, %s29
      %p35 = scmp.ge.s32.totalorder %s34, 2
      %s36 = scalar_select %p35, 0, %s34
      %s37 = sadd.s32 1, %s28
      %s38 = scalar_select %p35, %s37, %s28
      %p39 = scmp.ge.s32.totalorder %s38, 2
      %s40 = scalar_select %p39, 0, %s38
      %s41 = ssub.s32 %s28, %s40
      %s42 = ssub.s32 %s29, %s36
      %s43 = sor.u32 %s41, %s42
      %p44 = scmp.eq.s32.totalorder %s43, 0
      %s46 = sadd.s32 %s45, 1
      %s47 = scalar_select %p44, %s45, %s46
      %p50 = pneg %p44
      %p51 = scmp.eq.s32.totalorder %s21, 3
      %p52 = por %p50, %p51
      %p53 = scmp.ne.s32.totalorder %s45, %s48
      %p54 = scmp.eq.s32.totalorder %s21, 0
      %p55 = por %p53, %p54
      %p56 = scmp.ne.s32.totalorder %s45, %s48
      %p57 = scmp.eq.s32.totalorder %s26, 3
      %p58 = por %p56, %p57
      %p59 = scmp.ne.s32.totalorder %s48, %s49
      %p60 = scmp.eq.s32.totalorder %s26, 0
      %p61 = por %p59, %p60
      %p62 = scmp.ne.s32.totalorder %s48, %s49
      %p63 = scmp.eq.s32.totalorder %s27, 3
      %p64 = por %p62, %p63
      %p66 = scmp.ne.s32.totalorder %s49, %s65
      %p67 = scmp.eq.s32.totalorder %s27, 0
      %p68 = por %p66, %p67
      %s70 = sadd.s32 %s69, 1
      %p73 = scmp.eq.s32.totalorder %s21, 3
      %p74 = scmp.ne.s32.totalorder %s69, %s71
      %p75 = scmp.eq.s32.totalorder %s21, 0
      %p76 = por %p74, %p75
      %p77 = scmp.ne.s32.totalorder %s69, %s71
      %p78 = scmp.eq.s32.totalorder %s26, 3
      %p79 = por %p77, %p78
      %p80 = scmp.ne.s32.totalorder %s71, %s72
      %p81 = scmp.eq.s32.totalorder %s26, 0
      %p82 = por %p80, %p81
      %p83 = scmp.ne.s32.totalorder %s71, %s72
      %p84 = scmp.eq.s32.totalorder %s27, 3
      %p85 = por %p83, %p84
      %p87 = scmp.ne.s32.totalorder %s72, %s86
      %p88 = scmp.eq.s32.totalorder %s27, 0
      %p89 = por %p87, %p88
      %s91 = sadd.s32 %s90, 1
      %p94 = scmp.eq.s32.totalorder %s21, 3
      %p95 = scmp.ne.s32.totalorder %s90, %s92
      %p96 = scmp.eq.s32.totalorder %s21, 0
      %p97 = por %p95, %p96
      %p98 = scmp.ne.s32.totalorder %s90, %s92
      %p99 = scmp.eq.s32.totalorder %s26, 3
      %p100 = por %p98, %p99
      %p101 = scmp.ne.s32.totalorder %s92, %s93
      %p102 = scmp.eq.s32.totalorder %s26, 0
      %p103 = por %p101, %p102
      %p104 = scmp.ne.s32.totalorder %s92, %s93
      %p105 = scmp.eq.s32.totalorder %s27, 3
      %p106 = por %p104, %p105
      %p108 = scmp.ne.s32.totalorder %s93, %s107
      %p109 = scmp.eq.s32.totalorder %s27, 0
      %p110 = por %p108, %p109
      %s111 = ssub.s32 %s28, %s40
      %s112 = ssub.s32 %s29, %s36
      %s113 = sor.u32 %s111, %s112
      %p114 = scmp.eq.s32.totalorder %s113, 0
      %s116 = sadd.s32 %s115, 1
      %s117 = scalar_select %p114, %s115, %s116
      %p120 = pneg %p114
      %p121 = scmp.eq.s32.totalorder %s21, 3
      %p122 = por %p120, %p121
      %p123 = scmp.ne.s32.totalorder %s115, %s118
      %p124 = scmp.eq.s32.totalorder %s21, 0
      %p125 = por %p123, %p124
      %p126 = scmp.ne.s32.totalorder %s115, %s118
      %p127 = scmp.eq.s32.totalorder %s26, 3
      %p128 = por %p126, %p127
      %p129 = scmp.ne.s32.totalorder %s118, %s119
      %p130 = scmp.eq.s32.totalorder %s26, 0
      %p131 = por %p129, %p130
      %p132 = scmp.ne.s32.totalorder %s118, %s119
      %p133 = scmp.eq.s32.totalorder %s27, 3
      %p134 = por %p132, %p133
      %p136 = scmp.ne.s32.totalorder %s119, %s135
      %p137 = scmp.eq.s32.totalorder %s27, 0
      %p138 = por %p136, %p137
      %s139 = ssub.s32 %s28, %s40
      %s140 = ssub.s32 %s29, %s36
      %s141 = sor.u32 %s139, %s140
      %p142 = scmp.eq.s32.totalorder %s141, 0
      %s144 = sadd.s32 %s143, 1
      %s145 = scalar_select %p142, %s143, %s144
      %p148 = pneg %p142
      %p149 = scmp.eq.s32.totalorder %s21, 3
      %p150 = por %p148, %p149
      %p151 = scmp.ne.s32.totalorder %s143, %s146
      %p152 = scmp.eq.s32.totalorder %s21, 0
      %p153 = por %p151, %p152
      %p154 = scmp.ne.s32.totalorder %s143, %s146
      %p155 = scmp.eq.s32.totalorder %s26, 3
      %p156 = por %p154, %p155
      %p157 = scmp.ne.s32.totalorder %s146, %s147
      %p158 = scmp.eq.s32.totalorder %s26, 0
      %p159 = por %p157, %p158
      %p160 = scmp.ne.s32.totalorder %s146, %s147
      %p161 = scmp.eq.s32.totalorder %s27, 3
      %p162 = por %p160, %p161
      %p164 = scmp.ne.s32.totalorder %s147, %s163
      %p165 = scmp.eq.s32.totalorder %s27, 0
      %p166 = por %p164, %p165
      %s167 = ssub.s32 %s28, %s40
      %s168 = ssub.s32 %s29, %s36
      %s169 = sor.u32 %s167, %s168
      %p170 = scmp.eq.s32.totalorder %s169, 0
      %s172 = sadd.s32 %s171, 1
      %s173 = scalar_select %p170, %s171, %s172
      %p176 = pneg %p170
      %p177 = scmp.eq.s32.totalorder %s21, 3
      %p178 = por %p176, %p177
      %p179 = scmp.ne.s32.totalorder %s171, %s174
      %p180 = scmp.eq.s32.totalorder %s21, 0
      %p181 = por %p179, %p180
      %p182 = scmp.ne.s32.totalorder %s171, %s174
      %p183 = scmp.eq.s32.totalorder %s26, 3
      %p184 = por %p182, %p183
      %p185 = scmp.ne.s32.totalorder %s174, %s175
      %p186 = scmp.eq.s32.totalorder %s26, 0
      %p187 = por %p185, %p186
      %p188 = scmp.ne.s32.totalorder %s174, %s175
      %p189 = scmp.eq.s32.totalorder %s27, 3
      %p190 = por %p188, %p189
      %p192 = scmp.ne.s32.totalorder %s175, %s191
      %p193 = scmp.eq.s32.totalorder %s27, 0
      %p194 = por %p192, %p193
      %s195 = ssub.s32 %s28, %s40
      %s196 = ssub.s32 %s29, %s36
      %s197 = sor.u32 %s195, %s196
      %p198 = scmp.eq.s32.totalorder %s197, 0
      %s200 = sadd.s32 %s199, 1
      %s201 = scalar_select %p198, %s199, %s200
      %p204 = pneg %p198
      %p205 = scmp.eq.s32.totalorder %s21, 3
      %p206 = por %p204, %p205
      %p207 = scmp.ne.s32.totalorder %s199, %s202
      %p208 = scmp.eq.s32.totalorder %s21, 0
      %p209 = por %p207, %p208
      %p210 = scmp.ne.s32.totalorder %s199, %s202
      %p211 = scmp.eq.s32.totalorder %s26, 3
      %p212 = por %p210, %p211
      %p213 = scmp.ne.s32.totalorder %s202, %s203
      %p214 = scmp.eq.s32.totalorder %s26, 0
      %p215 = por %p213, %p214
      %p216 = scmp.ne.s32.totalorder %s202, %s203
      %p217 = scmp.eq.s32.totalorder %s27, 3
      %p218 = por %p216, %p217
      %p220 = scmp.ne.s32.totalorder %s203, %s219
      %p221 = scmp.eq.s32.totalorder %s27, 0
      %p222 = por %p220, %p221
      %s223 = ssub.s32 %s28, %s40
      %s224 = ssub.s32 %s29, %s36
      %s225 = sor.u32 %s223, %s224
      %p226 = scmp.eq.s32.totalorder %s225, 0
      %s228 = sadd.s32 %s227, 1
      %s229 = scalar_select %p226, %s227, %s228
      %p232 = pneg %p226
      %p233 = scmp.eq.s32.totalorder %s21, 3
      %p234 = por %p232, %p233
      %p235 = scmp.ne.s32.totalorder %s227, %s230
      %p236 = scmp.eq.s32.totalorder %s21, 0
      %p237 = por %p235, %p236
      %p238 = scmp.ne.s32.totalorder %s227, %s230
      %p239 = scmp.eq.s32.totalorder %s26, 3
      %p240 = por %p238, %p239
      %p241 = scmp.ne.s32.totalorder %s230, %s231
      %p242 = scmp.eq.s32.totalorder %s26, 0
      %p243 = por %p241, %p242
      %p244 = scmp.ne.s32.totalorder %s230, %s231
      %p245 = scmp.eq.s32.totalorder %s27, 3
      %p246 = por %p244, %p245
      %p248 = scmp.ne.s32.totalorder %s231, %s247
      %p249 = scmp.eq.s32.totalorder %s27, 0
      %p250 = por %p248, %p249
      %s251 = ssub.s32 %s28, %s40
      %s252 = ssub.s32 %s29, %s36
      %s253 = sor.u32 %s251, %s252
      %p254 = scmp.eq.s32.totalorder %s253, 0
      %s256 = sadd.s32 %s255, 1
      %s257 = scalar_select %p254, %s255, %s256
      %p260 = pneg %p254
      %p261 = scmp.eq.s32.totalorder %s21, 3
      %p262 = por %p260, %p261
      %p263 = scmp.ne.s32.totalorder %s255, %s258
      %p264 = scmp.eq.s32.totalorder %s21, 0
      %p265 = por %p263, %p264
      %p266 = scmp.ne.s32.totalorder %s255, %s258
      %p267 = scmp.eq.s32.totalorder %s26, 3
      %p268 = por %p266, %p267
      %p269 = scmp.ne.s32.totalorder %s258, %s259
      %p270 = scmp.eq.s32.totalorder %s26, 0
      %p271 = por %p269, %p270
      %p272 = scmp.ne.s32.totalorder %s258, %s259
      %p273 = scmp.eq.s32.totalorder %s27, 3
      %p274 = por %p272, %p273
      %p276 = scmp.ne.s32.totalorder %s259, %s275
      %p277 = scmp.eq.s32.totalorder %s27, 0
      %p278 = por %p276, %p277
      %p279 = scmp.le.s32.totalorder 1, %s21
      %p280 = scmp.lt.s32.totalorder %s21, 5
      %p281 = pnand %p279, %p280
      %p282 = pneg %p281
      // Predicated region
      $region9: #{tpu_custom_call.1} parent=5 // pred_check
        _
      $region10: #{tpu_custom_call.1} parent=5 // pred_check_branch
        %284 = sbr.rel (%p281) target = $region12
      $region11: #{tpu_custom_call.1} parent=5 // pred_region
        %s285 = ssub.s32 %s21, 1
        // Predicated region
        $region13: #{tpu_custom_call.1} parent=11 // pred_check
          %p286 = pneg %p82
        $region14: #{tpu_custom_call.1} parent=11 // pred_check_branch
          %288 = sbr.rel (%p286) target = $region16
        $region15: #{tpu_custom_call.1} parent=11 // pred_region
          _
        $region16: #{tpu_custom_call.1} parent=11 // pred_fallthru
          _
        // Predicated region
        $region17: #{tpu_custom_call.1} parent=11 // pred_check
          %p289 = pneg %p103
        $region18: #{tpu_custom_call.1} parent=11 // pred_check_branch
          %291 = sbr.rel (%p289) target = $region20
        $region19: #{tpu_custom_call.1} parent=11 // pred_region
          _
        $region20: #{tpu_custom_call.1} parent=11 // pred_fallthru
          _
      $region12: #{tpu_custom_call.1} parent=5 // pred_fallthru
        _
      %p292 = scmp.lt.s32.totalorder %s21, 4
      // Predicated region
      $region21: #{tpu_custom_call.1} parent=5 // pred_check
        %p293 = pneg %p292
      $region22: #{tpu_custom_call.1} parent=5 // pred_check_branch
        %295 = sbr.rel (%p293) target = $region24
      $region23: #{tpu_custom_call.1} parent=5 // pred_region
        // Predicated region
        $region25: #{tpu_custom_call.1} parent=23 // pred_check
          %p296 = pneg %p55
        $region26: #{tpu_custom_call.1} parent=23 // pred_check_branch
          %298 = sbr.rel (%p296) target = $region28
        $region27: #{tpu_custom_call.1} parent=23 // pred_region
          %s299 = sand.u32 %s45, 1
          %s300 = sand.u32 %s45, 1
          %s301 = smul.addr %s300, 128
          %s302 = scalar_lea.vmem [#allocation2], %s301
          %s303 = smul.u32 4, %s29
          %s304 = smul.addr %s28, 32
          %s305 = sadd.s32 %s303, %s304
          %s306 = smul.addr %s305, 8
          %s307 = scalar_lea.vmem %s0, %s306
          // Predicated region
          $region29: #{tpu_custom_call.1} parent=27 // pred_check
            _
          $region30: #{tpu_custom_call.1} parent=27 // pred_check_branch
            %309 = sbr.rel (0) target = $region32
          $region31: #{tpu_custom_call.1} parent=27 // pred_region
            // Predicated region
            $region33: #{tpu_custom_call.1} parent=31 // pred_check
              _
            $region34: #{tpu_custom_call.1} parent=31 // pred_check_branch
              %311 = sbr.rel (0) target = $region36
            $region35: #{tpu_custom_call.1} parent=31 // pred_region
              loop: start=0, step=1, limit=1
              $region37: #{tpu_custom_call.1} parent=35 // loop_pre_header
                _
              $region38: #{tpu_custom_call.1} parent=35 // loop_header
                %s313 = sphi 0, %s317
                %p314 = scmp.ge.s32.totalorder %s313, 1
                %s318 = sphi %s307, %s307
                %s319 = sphi %s302, %s302
              $region39: #{tpu_custom_call.1} parent=35 // loop_header_branch
                %316 = sbr.rel (%p314) target = $region43
              $region40: #{tpu_custom_call.1} parent=35 // loop_body
                %v320 = vld [vmem:[%s318] sm:$0xff]
                %321 = vst [vmem:[%s319] sm:$0xff] %v320
                %v322 = vld [vmem:[%s318 + $0x8] sm:$0xff]
                %323 = vst [vmem:[%s319 + $0x8] sm:$0xff] %v322
                %v324 = vld [vmem:[%s318 + $0x10] sm:$0xff]
                %325 = vst [vmem:[%s319 + $0x10] sm:$0xff] %v324
                %v326 = vld [vmem:[%s318 + $0x18] sm:$0xff]
                %327 = vst [vmem:[%s319 + $0x18] sm:$0xff] %v326
                %v328 = vld [vmem:[%s318 + $0x40] sm:$0xff]
                %329 = vst [vmem:[%s319 + $0x20] sm:$0xff] %v328
                %v330 = vld [vmem:[%s318 + $0x48] sm:$0xff]
                %331 = vst [vmem:[%s319 + $0x28] sm:$0xff] %v330
                %v332 = vld [vmem:[%s318 + $0x50] sm:$0xff]
                %333 = vst [vmem:[%s319 + $0x30] sm:$0xff] %v332
                %v334 = vld [vmem:[%s318 + $0x58] sm:$0xff]
                %335 = vst [vmem:[%s319 + $0x38] sm:$0xff] %v334
                %v336 = vld [vmem:[%s318 + $0x80] sm:$0xff]
                %337 = vst [vmem:[%s319 + $0x40] sm:$0xff] %v336
                %v338 = vld [vmem:[%s318 + $0x88] sm:$0xff]
                %339 = vst [vmem:[%s319 + $0x48] sm:$0xff] %v338
                %v340 = vld [vmem:[%s318 + $0x90] sm:$0xff]
                %341 = vst [vmem:[%s319 + $0x50] sm:$0xff] %v340
                %v342 = vld [vmem:[%s318 + $0x98] sm:$0xff]
                %343 = vst [vmem:[%s319 + $0x58] sm:$0xff] %v342
                %v344 = vld [vmem:[%s318 + $0xc0] sm:$0xff]
                %345 = vst [vmem:[%s319 + $0x60] sm:$0xff] %v344
                %v346 = vld [vmem:[%s318 + $0xc8] sm:$0xff]
                %347 = vst [vmem:[%s319 + $0x68] sm:$0xff] %v346
                %v348 = vld [vmem:[%s318 + $0xd0] sm:$0xff]
                %349 = vst [vmem:[%s319 + $0x70] sm:$0xff] %v348
                %v350 = vld [vmem:[%s318 + $0xd8] sm:$0xff]
                %351 = vst [vmem:[%s319 + $0x78] sm:$0xff] %v350
              $region41: #{tpu_custom_call.1} parent=35 // loop_footer
                %s317 = sadd.s32 1, %s313
              $region42: #{tpu_custom_call.1} parent=35 // loop_footer_branch
                %312 = sbr.rel target = $region38
              $region43: #{tpu_custom_call.1} parent=35 // loop_exit
                _
            $region36: #{tpu_custom_call.1} parent=31 // pred_fallthru
              _
            // Predicated region
            $region44: #{tpu_custom_call.1} parent=31 // pred_check
              _
            $region45: #{tpu_custom_call.1} parent=31 // pred_check_branch
              %353 = sbr.rel target = $region47
            $region46: #{tpu_custom_call.1} parent=31 // pred_region
              _
            $region47: #{tpu_custom_call.1} parent=31 // pred_fallthru
              _
          $region32: #{tpu_custom_call.1} parent=27 // pred_fallthru
            _
          %354 = vnop
        $region28: #{tpu_custom_call.1} parent=23 // pred_fallthru
          _
      $region24: #{tpu_custom_call.1} parent=5 // pred_fallthru
        _
      %p355 = scmp.le.s32.totalorder 1, %s21
      %p356 = scmp.lt.s32.totalorder %s21, 5
      %p357 = pnand %p355, %p356
      %p358 = pneg %p357
      // Predicated region
      $region48: #{tpu_custom_call.1} parent=5 // pred_check
        _
      $region49: #{tpu_custom_call.1} parent=5 // pred_check_branch
        %360 = sbr.rel (%p357) target = $region51
      $region50: #{tpu_custom_call.1} parent=5 // pred_region
        %s361 = ssub.s32 %s21, 1
        %s362 = sand.u32 %s48, 1
        %s363 = sand.u32 %s48, 1
        %s364 = smul.addr %s363, 128
        %s365 = scalar_lea.vmem [#allocation2], %s364
        // Predicated region
        $region52: #{tpu_custom_call.1} parent=50 // pred_check
          %p366 = pneg %p61
        $region53: #{tpu_custom_call.1} parent=50 // pred_check_branch
          %368 = sbr.rel (%p366) target = $region55
        $region54: #{tpu_custom_call.1} parent=50 // pred_region
          _
        $region55: #{tpu_custom_call.1} parent=50 // pred_fallthru
          _
        %s369 = sand.u32 %s48, 1
        %s370 = sand.u32 %s48, 1
        %s371 = smul.addr %s370, 128
        %s372 = scalar_lea.vmem [#allocation2], %s371
        %p373 = pneg %p61
        %p374 = pneg %p58
        %p375 = pneg %p82
        %p376 = pneg %p79
        %p377 = pneg %p103
        %p378 = pneg %p100
        %p379 = pneg %p131
        %p380 = pneg %p128
        %s381 = sand.u32 %s118, 1
        %s382 = sand.u32 %s118, 1
        %s383 = smul.addr %s382, 128
        %s384 = scalar_lea.vmem [#allocation3], %s383
        %p385 = pneg %p159
        %p386 = pneg %p156
        %s387 = sand.u32 %s146, 1
        %s388 = scalar_lea.sflag [#allocation5], %s387
        %s389 = sand.u32 %s146, 1
        %s390 = smul.addr %s389, 4
        %s391 = scalar_lea.vmem [#allocation4], %s390
        %p392 = pneg %p187
        %p393 = pneg %p184
        %s394 = sand.u32 %s174, 1
        %s395 = scalar_lea.sflag [#allocation7], %s394
        %s396 = sand.u32 %s174, 1
        %s397 = smul.addr %s396, 8
        %s398 = scalar_lea.vmem [#allocation6], %s397
        %p399 = pneg %p215
        %p400 = pneg %p212
        %p401 = scmp.lt.s32.totalorder %s30, 1
        %s402 = scalar_select %p401, %s30, 1
        %p403 = scmp.lt.s32.totalorder %s31, 1
        %s404 = scalar_select %p403, %s31, 1
        %s405 = smul.addr %s404, 64
        %s406 = smul.addr %s402, 128
        %s407 = sadd.s32 %s405, %s406
        %s408 = smul.addr %s407, 8
        %s409 = scalar_lea.vmem %s6, %s408
        %p410 = pneg %p243
        %p411 = pneg %p240
        %p412 = scmp.lt.s32.totalorder %s30, 1
        %s413 = scalar_select %p412, %s30, 1
        %p414 = scmp.lt.s32.totalorder %s31, 1
        %s415 = scalar_select %p414, %s31, 1
        %s416 = smul.addr %s413, 2
        %s417 = sadd.s32 %s415, %s416
        %s418 = scalar_lea.vmem %s7, %s417
        %p419 = pneg %p271
        %p420 = pneg %p268
        %p421 = scmp.lt.s32.totalorder %s30, 1
        %s422 = scalar_select %p421, %s30, 1
        %p423 = scmp.lt.s32.totalorder %s31, 1
        %s424 = scalar_select %p423, %s31, 1
        %s425 = smul.addr %s422, 2
        %s426 = sadd.s32 %s424, %s425
        %s427 = scalar_lea.vmem %s8, %s426
        %s428 = smul.u32 4, %s31
        %s429 = smul.u32 4, %s31
        %s430 = smul.u32 4, %s31
        %s431 = smul.u32 4, %s31
        %p432 = scmp.lt.s32.totalorder %s30, 1
        %s433 = scalar_select %p432, %s30, 1
        %p434 = scmp.lt.s32.totalorder %s31, 1
        %s435 = scalar_select %p434, %s31, 1
        %s436 = smul.addr %s435, 64
        %s437 = smul.addr %s433, 128
        %s438 = sadd.s32 %s436, %s437
        %s439 = smul.addr %s438, 8
        %s440 = scalar_lea.vmem %s6, %s439
        %p441 = scmp.lt.s32.totalorder %s30, 1
        %s442 = scalar_select %p441, %s30, 1
        %p443 = scmp.lt.s32.totalorder %s31, 1
        %s444 = scalar_select %p443, %s31, 1
        %s445 = smul.addr %s442, 2
        %s446 = sadd.s32 %s444, %s445
        %s447 = scalar_lea.vmem %s7, %s446
        %p448 = scmp.lt.s32.totalorder %s30, 1
        %s449 = scalar_select %p448, %s30, 1
        %p450 = scmp.lt.s32.totalorder %s31, 1
        %s451 = scalar_select %p450, %s31, 1
        %s452 = smul.addr %s449, 2
        %s453 = sadd.s32 %s451, %s452
        %s454 = scalar_lea.vmem %s8, %s453
        %v455 = vld [vmem:[%s365] sm:$0xff]
        %v456 = vld [vmem:[%s365 + $0x8] sm:$0xff]
        %v457 = vld [vmem:[%s365 + $0x10] sm:$0xff]
        %v458 = vld [vmem:[%s365 + $0x18] sm:$0xff]
        %v459 = vld [vmem:[%s365 + $0x20] sm:$0x1]
        %v460 = vld [vmem:[%s365 + $0x28] sm:$0x1]
        %v461 = vld [vmem:[%s365 + $0x30] sm:$0x1]
        %v462 = vld [vmem:[%s365 + $0x38] sm:$0x1]
        %v463 = vld [vmem:[%s365 + $0x40] sm:$0xff]
        %v464 = vld [vmem:[%s365 + $0x48] sm:$0xff]
        %v465 = vld [vmem:[%s365 + $0x50] sm:$0xff]
        %v466 = vld [vmem:[%s365 + $0x58] sm:$0xff]
        %v467 = vld [vmem:[%s365 + $0x60] sm:$0x1]
        %v468 = vld [vmem:[%s365 + $0x68] sm:$0x1]
        %v469 = vld [vmem:[%s365 + $0x70] sm:$0x1]
        %v470 = vld [vmem:[%s365 + $0x78] sm:$0x1]
        %vm471 = vcmp.gt.f32.partialorder %v455, 0.0
        %vm472 = vcmp.gt.f32.partialorder %v456, 0.0
        %vm473 = vcmp.gt.f32.partialorder %v457, 0.0
        %vm474 = vcmp.gt.f32.partialorder %v458, 0.0
        %vm475 = vcmp.gt.f32.partialorder %v459, 0.0
        %vm476 = vcmp.gt.f32.partialorder %v460, 0.0
        %vm477 = vcmp.gt.f32.partialorder %v461, 0.0
        %vm478 = vcmp.gt.f32.partialorder %v462, 0.0
        %vm479 = vcmp.gt.f32.partialorder %v463, 0.0
        %vm480 = vcmp.gt.f32.partialorder %v464, 0.0
        %vm481 = vcmp.gt.f32.partialorder %v465, 0.0
        %vm482 = vcmp.gt.f32.partialorder %v466, 0.0
        %vm483 = vcmp.gt.f32.partialorder %v467, 0.0
        %vm484 = vcmp.gt.f32.partialorder %v468, 0.0
        %vm485 = vcmp.gt.f32.partialorder %v469, 0.0
        %vm486 = vcmp.gt.f32.partialorder %v470, 0.0
        %v487 = vsel %vm471, 0.23570226, -0.23570226
        %v488 = vsel %vm472, 0.23570226, -0.23570226
        %v489 = vsel %vm473, 0.23570226, -0.23570226
        %v490 = vsel %vm474, 0.23570226, -0.23570226
        %v491 = vsel %vm475, 0.23570226, -0.23570226
        %v492 = vsel %vm476, 0.23570226, -0.23570226
        %v493 = vsel %vm477, 0.23570226, -0.23570226
        %v494 = vsel %vm478, 0.23570226, -0.23570226
        %v495 = vsel %vm479, 0.23570226, -0.23570226
        %v496 = vsel %vm480, 0.23570226, -0.23570226
        %v497 = vsel %vm481, 0.23570226, -0.23570226
        %v498 = vsel %vm482, 0.23570226, -0.23570226
        %v499 = vsel %vm483, 0.23570226, -0.23570226
        %v500 = vsel %vm484, 0.23570226, -0.23570226
        %v501 = vsel %vm485, 0.23570226, -0.23570226
        %v502 = vsel %vm486, 0.23570226, -0.23570226
        %503 = vst [vmem:[%s384] sm:$0xff] %v487
        %504 = vst [vmem:[%s384 + $0x8] sm:$0xff] %v488
        %505 = vst [vmem:[%s384 + $0x10] sm:$0xff] %v489
        %506 = vst [vmem:[%s384 + $0x18] sm:$0xff] %v490
        %507 = vst [vmem:[%s384 + $0x20] sm:$0x1] %v491
        %508 = vst [vmem:[%s384 + $0x28] sm:$0x1] %v492
        %509 = vst [vmem:[%s384 + $0x30] sm:$0x1] %v493
        %510 = vst [vmem:[%s384 + $0x38] sm:$0x1] %v494
        %511 = vst [vmem:[%s384 + $0x40] sm:$0xff] %v495
        %512 = vst [vmem:[%s384 + $0x48] sm:$0xff] %v496
        %513 = vst [vmem:[%s384 + $0x50] sm:$0xff] %v497
        %514 = vst [vmem:[%s384 + $0x58] sm:$0xff] %v498
        %515 = vst [vmem:[%s384 + $0x60] sm:$0x1] %v499
        %516 = vst [vmem:[%s384 + $0x68] sm:$0x1] %v500
        %517 = vst [vmem:[%s384 + $0x70] sm:$0x1] %v501
        %518 = vst [vmem:[%s384 + $0x78] sm:$0x1] %v502
        %v519 = vsub.f32 %v487, %v455
        %v520 = vsub.f32 %v488, %v456
        %v521 = vsub.f32 %v489, %v457
        %v522 = vsub.f32 %v490, %v458
        %v523 = vsub.f32 %v491, %v459
        %v524 = vsub.f32 %v492, %v460
        %v525 = vsub.f32 %v493, %v461
        %v526 = vsub.f32 %v494, %v462
        %v527 = vsub.f32 %v495, %v463
        %v528 = vsub.f32 %v496, %v464
        %v529 = vsub.f32 %v497, %v465
        %v530 = vsub.f32 %v498, %v466
        %v531 = vsub.f32 %v499, %v467
        %v532 = vsub.f32 %v500, %v468
        %v533 = vsub.f32 %v501, %v469
        %v534 = vsub.f32 %v502, %v470
        %v535 = vmul.f32 %v519, %v519
        %v536 = vmul.f32 %v520, %v520
        %v537 = vmul.f32 %v521, %v521
        %v538 = vmul.f32 %v522, %v522
        %v539 = vmul.f32 %v523, %v523
        %v540 = vmul.f32 %v524, %v524
        %v541 = vmul.f32 %v525, %v525
        %v542 = vmul.f32 %v526, %v526
        %v543 = vmul.f32 %v527, %v527
        %v544 = vmul.f32 %v528, %v528
        %v545 = vmul.f32 %v529, %v529
        %v546 = vmul.f32 %v530, %v530
        %v547 = vmul.f32 %v531, %v531
        %v548 = vmul.f32 %v532, %v532
        %v549 = vmul.f32 %v533, %v533
        %v550 = vmul.f32 %v534, %v534
        %v567 = vrot.slane %v536, 7
        %v568 = vrot.slane %v537, 6
        %v569 = vrot.slane %v538, 5
        %v570 = vrot.slane %v540, 7
        %v571 = vrot.slane %v541, 6
        %v572 = vrot.slane %v542, 5
        %v573 = vrot.slane %v544, 7
        %v574 = vrot.slane %v545, 6
        %v575 = vrot.slane %v546, 5
        %v576 = vrot.slane %v548, 7
        %v577 = vrot.slane %v549, 6
        %v578 = vrot.slane %v550, 5
        %vm579 = vcmask 1040384
        %v580 = vsel %vm579, %v535, %v567
        %vm581 = vcmask 1042434
        %v582 = vsel %vm581, %v568, %v569
        %vm583 = vcmask 1041408
        %v584 = vsel %vm583, %v580, %v582
        %vm585 = vcmask 1041409
        %v586 = vsel %vm585, %v535, %v567
        %vm587 = vcmask 1043459
        %v588 = vsel %vm587, %v568, %v569
        %vm589 = vcmask 1042433
        %v590 = vsel %vm589, %v586, %v588
        %v591 = vrot.slane %v590, 1
        %v592 = vsel %vm581, %v535, %v567
        %vm593 = vcmask 1044484
        %v594 = vsel %vm593, %v568, %v569
        %vm595 = vcmask 1043458
        %v596 = vsel %vm595, %v592, %v594
        %v597 = vrot.slane %v596, 2
        %v598 = vsel %vm587, %v535, %v567
        %vm599 = vcmask 1045509
        %v600 = vsel %vm599, %v568, %v569
        %vm601 = vcmask 1044483
        %v602 = vsel %vm601, %v598, %v600
        %v603 = vrot.slane %v602, 3
        %v604 = vsel %vm593, %v535, %v567
        %vm605 = vcmask 1046534
        %v606 = vsel %vm605, %v568, %v569
        %vm607 = vcmask 1045508
        %v608 = vsel %vm607, %v604, %v606
        %v609 = vrot.slane %v608, 4
        %v610 = vsel %vm599, %v535, %v567
        %vm611 = vcmask 1046528
        %v612 = vsel %vm611, %v569, %v568
        %vm613 = vcmask 1046533
        %v614 = vsel %vm613, %v610, %v612
        %v615 = vrot.slane %v614, 5
        %v616 = vsel %vm605, %v535, %v567
        %v617 = vsel %vm579, %v568, %v569
        %vm618 = vcmask 1045504
        %v619 = vsel %vm618, %v617, %v616
        %v620 = vrot.slane %v619, 6
        %v621 = vsel %vm611, %v567, %v535
        %v622 = vsel %vm585, %v568, %v569
        %vm623 = vcmask 1046529
        %v624 = vsel %vm623, %v622, %v621
        %v625 = vrot.slane %v624, 7
        %v626 = vsel %vm579, %v539, %v570
        %v627 = vsel %vm581, %v571, %v572
        %v628 = vsel %vm583, %v626, %v627
        %v629 = vsel %vm579, %v543, %v573
        %v630 = vsel %vm581, %v574, %v575
        %v631 = vsel %vm583, %v629, %v630
        %v632 = vsel %vm585, %v543, %v573
        %v633 = vsel %vm587, %v574, %v575
        %v634 = vsel %vm589, %v632, %v633
        %v635 = vrot.slane %v634, 1
        %v636 = vsel %vm581, %v543, %v573
        %v637 = vsel %vm593, %v574, %v575
        %v638 = vsel %vm595, %v636, %v637
        %v639 = vrot.slane %v638, 2
        %v640 = vsel %vm587, %v543, %v573
        %v641 = vsel %vm599, %v574, %v575
        %v642 = vsel %vm601, %v640, %v641
        %v643 = vrot.slane %v642, 3
        %v644 = vsel %vm593, %v543, %v573
        %v645 = vsel %vm605, %v574, %v575
        %v646 = vsel %vm607, %v644, %v645
        %v647 = vrot.slane %v646, 4
        %v648 = vsel %vm599, %v543, %v573
        %v649 = vsel %vm611, %v575, %v574
        %v650 = vsel %vm613, %v648, %v649
        %v651 = vrot.slane %v650, 5
        %v652 = vsel %vm605, %v543, %v573
        %v653 = vsel %vm579, %v574, %v575
        %v654 = vsel %vm618, %v653, %v652
        %v655 = vrot.slane %v654, 6
        %v656 = vsel %vm611, %v573, %v543
        %v657 = vsel %vm585, %v574, %v575
        %v658 = vsel %vm623, %v657, %v656
        %v659 = vrot.slane %v658, 7
        %v660 = vsel %vm579, %v547, %v576
        %v661 = vsel %vm581, %v577, %v578
        %v662 = vsel %vm583, %v660, %v661
        %663 = vst [vmem:[#allocation1] ss:$9 sm:$0xff] %v584
        %s664 = scalar_lea.vmem [#allocation1], 1
        %665 = vst [vmem:[%s664] ss:$9 sm:$0xff] %v591
        %s666 = scalar_lea.vmem [#allocation1], 2
        %667 = vst [vmem:[%s666] ss:$9 sm:$0xff] %v597
        %s668 = scalar_lea.vmem [#allocation1], 3
        %669 = vst [vmem:[%s668] ss:$9 sm:$0xff] %v603
        %s670 = scalar_lea.vmem [#allocation1], 4
        %671 = vst [vmem:[%s670] ss:$9 sm:$0xff] %v609
        %s672 = scalar_lea.vmem [#allocation1], 5
        %673 = vst [vmem:[%s672] ss:$9 sm:$0xff] %v615
        %s674 = scalar_lea.vmem [#allocation1], 6
        %675 = vst [vmem:[%s674] ss:$9 sm:$0xff] %v620
        %s676 = scalar_lea.vmem [#allocation1], 7
        %677 = vst [vmem:[%s676] ss:$9 sm:$0xff] %v625
        %v678 = vld [vmem:[#allocation1] sm:$0xff]
        %v679 = vld [vmem:[#allocation1 + $0x9] sm:$0xff]
        %v680 = vld [vmem:[#allocation1 + $0x12] sm:$0xff]
        %v681 = vld [vmem:[#allocation1 + $0x1b] sm:$0xff]
        %682 = vst [vmem:[#allocation1] ss:$9 sm:$0xff] %v628
        %683 = vst [vmem:[%s664] ss:$9 sm:$0xff] %v631
        %684 = vst [vmem:[%s666] ss:$9 sm:$0xff] %v635
        %685 = vst [vmem:[%s668] ss:$9 sm:$0xff] %v639
        %686 = vst [vmem:[%s670] ss:$9 sm:$0xff] %v643
        %687 = vst [vmem:[%s672] ss:$9 sm:$0xff] %v647
        %688 = vst [vmem:[%s674] ss:$9 sm:$0xff] %v651
        %689 = vst [vmem:[%s676] ss:$9 sm:$0xff] %v655
        %v690 = vld [vmem:[#allocation1] sm:$0xff]
        %v691 = vld [vmem:[#allocation1 + $0x9] sm:$0xff]
        %v692 = vld [vmem:[#allocation1 + $0x12] sm:$0xff]
        %v693 = vld [vmem:[#allocation1 + $0x1b] sm:$0xff]
        %694 = vst [vmem:[#allocation1] ss:$9 sm:$0xff] %v659
        %695 = vst [vmem:[%s664] ss:$9 sm:$0xff] %v662
        %v696 = vld [vmem:[#allocation1] sm:$0xff]
        %v697 = vld [vmem:[#allocation1 + $0x9] sm:$0xff]
        %v698 = vld [vmem:[#allocation1 + $0x12] sm:$0xff]
        %v699 = vld [vmem:[#allocation1 + $0x1b] sm:$0xff]
        %v712 = vadd.f32 %v678, %v690
        %v713 = vsel %vm583, %v696, 0.0
        %v714 = vadd.f32 %v712, %v713
        %v715 = vrot.slane %v714, 4
        %v716 = vadd.f32 %v714, %v715
        %v717 = vrot.slane %v716, 2
        %v718 = vadd.f32 %v716, %v717
        %v719 = vrot.slane %v718, 1
        %v720 = vadd.f32 %v718, %v719
        %v721 = vadd.f32 %v679, %v691
        %v722 = vsel %vm583, %v697, 0.0
        %v723 = vadd.f32 %v721, %v722
        %v724 = vrot.slane %v723, 4
        %v725 = vadd.f32 %v723, %v724
        %v726 = vrot.slane %v725, 2
        %v727 = vadd.f32 %v725, %v726
        %v728 = vrot.slane %v727, 1
        %v729 = vadd.f32 %v727, %v728
        %v730 = vadd.f32 %v680, %v692
        %v731 = vsel %vm583, %v698, 0.0
        %v732 = vadd.f32 %v730, %v731
        %v733 = vrot.slane %v732, 4
        %v734 = vadd.f32 %v732, %v733
        %v735 = vrot.slane %v734, 2
        %v736 = vadd.f32 %v734, %v735
        %v737 = vrot.slane %v736, 1
        %v738 = vadd.f32 %v736, %v737
        %v739 = vadd.f32 %v681, %v693
        %v740 = vsel %vm583, %v699, 0.0
        %v741 = vadd.f32 %v739, %v740
        %v742 = vrot.slane %v741, 4
        %v743 = vadd.f32 %v741, %v742
        %v744 = vrot.slane %v743, 2
        %v745 = vadd.f32 %v743, %v744
        %v746 = vrot.slane %v745, 1
        %v747 = vadd.f32 %v745, %v746
        %v748 = vadd.f32 %v720, %v729
        %v749 = vadd.f32 %v748, %v738
        %v750 = vadd.f32 %v749, %v747
        %751 = vadd.xlane.f32.xlu0 %v750
        %v752 = vpop.xlane.xlu0 %751
        %vm753 = vcmask 0
        %754 = vst.msk [vmem:[%s454] sm:$0x1] %vm753, %v752
        %v755 = vlaneseq
        %v756 = vshrl.u32 %v755, 7
        %v757 = vadd.s32 %v756, 8
        %v758 = vsub.s32 8, %v756
        %v759 = vsub.s32 8, %v757
        %v760 = vshll.u32 1, %v758
        %v761 = vshll.u32 1, %v759
        %v762 = vcvt.s32.f32 %v760
        %v763 = vcvt.s32.f32 %v761
        %v764 = vsel %vm471, 1.0, 0.0
        %v765 = vsel %vm472, 1.0, 0.0
        %v766 = vsel %vm473, 1.0, 0.0
        %v767 = vsel %vm474, 1.0, 0.0
        %v768 = vsel %vm475, 1.0, 0.0
        %v769 = vsel %vm476, 1.0, 0.0
        %v770 = vsel %vm477, 1.0, 0.0
        %v771 = vsel %vm478, 1.0, 0.0
        %v772 = vmul.f32 %v764, %v762
        %v773 = vmul.f32 %v765, %v762
        %v774 = vmul.f32 %v766, %v762
        %v775 = vmul.f32 %v767, %v762
        %v776 = vmul.f32 %v768, %v763
        %v777 = vmul.f32 %v769, %v763
        %v778 = vmul.f32 %v770, %v763
        %v779 = vmul.f32 %v771, %v763
        %v780 = vsel %vm579, %v776, 0.0
        %v781 = vadd.f32 %v772, %v780
        %v782 = vrot.slane %v781, 4
        %v783 = vadd.f32 %v781, %v782
        %v784 = vrot.slane %v783, 2
        %v785 = vadd.f32 %v783, %v784
        %v786 = vrot.slane %v785, 1
        %v787 = vadd.f32 %v785, %v786
        %v788 = vsel %vm579, %v777, 0.0
        %v789 = vadd.f32 %v773, %v788
        %v790 = vrot.slane %v789, 4
        %v791 = vadd.f32 %v789, %v790
        %v792 = vrot.slane %v791, 2
        %v793 = vadd.f32 %v791, %v792
        %v794 = vrot.slane %v793, 1
        %v795 = vadd.f32 %v793, %v794
        %v796 = vsel %vm579, %v778, 0.0
        %v797 = vadd.f32 %v774, %v796
        %v798 = vrot.slane %v797, 4
        %v799 = vadd.f32 %v797, %v798
        %v800 = vrot.slane %v799, 2
        %v801 = vadd.f32 %v799, %v800
        %v802 = vrot.slane %v801, 1
        %v803 = vadd.f32 %v801, %v802
        %v804 = vsel %vm579, %v779, 0.0
        %v805 = vadd.f32 %v775, %v804
        %v806 = vrot.slane %v805, 4
        %v807 = vadd.f32 %v805, %v806
        %v808 = vrot.slane %v807, 2
        %v809 = vadd.f32 %v807, %v808
        %v810 = vrot.slane %v809, 1
        %v811 = vadd.f32 %v809, %v810
        %v812 = vcvt.f32.s32.to.zero.pseudo %v787
        %v813 = vcvt.f32.s32.to.zero.pseudo %v795
        %v814 = vcvt.f32.s32.to.zero.pseudo %v803
        %v815 = vcvt.f32.s32.to.zero.pseudo %v811
        %v816 = vrot.slane %v813, 7
        %v817 = vrot.slane %v814, 6
        %v818 = vrot.slane %v815, 5
        %v819 = vsel %vm579, %v812, %v816
        %v820 = vsel %vm581, %v817, %v818
        %v821 = vsel %vm583, %v819, %v820
        %v822 = vlaneseq
        %vm823 = vcmp.ge.s32.totalorder %v822, 0
        %vm824 = vcmp.lt.s32.totalorder %v822, 512
        %vm825 = vmand %vm823, %vm824
        %826 = vst.msk [vmem:[%s398] ss:$2 sm:$0xf] %vm825, %v821
        %v827 = vsel %vm479, 1.0, 0.0
        %v828 = vsel %vm480, 1.0, 0.0
        %v829 = vsel %vm481, 1.0, 0.0
        %v830 = vsel %vm482, 1.0, 0.0
        %v831 = vsel %vm483, 1.0, 0.0
        %v832 = vsel %vm484, 1.0, 0.0
        %v833 = vsel %vm485, 1.0, 0.0
        %v834 = vsel %vm486, 1.0, 0.0
        %v835 = vmul.f32 %v827, %v762
        %v836 = vmul.f32 %v828, %v762
        %v837 = vmul.f32 %v829, %v762
        %v838 = vmul.f32 %v830, %v762
        %v839 = vmul.f32 %v831, %v763
        %v840 = vmul.f32 %v832, %v763
        %v841 = vmul.f32 %v833, %v763
        %v842 = vmul.f32 %v834, %v763
        %v843 = vsel %vm579, %v839, 0.0
        %v844 = vadd.f32 %v835, %v843
        %v845 = vrot.slane %v844, 4
        %v846 = vadd.f32 %v844, %v845
        %v847 = vrot.slane %v846, 2
        %v848 = vadd.f32 %v846, %v847
        %v849 = vrot.slane %v848, 1
        %v850 = vadd.f32 %v848, %v849
        %v851 = vsel %vm579, %v840, 0.0
        %v852 = vadd.f32 %v836, %v851
        %v853 = vrot.slane %v852, 4
        %v854 = vadd.f32 %v852, %v853
        %v855 = vrot.slane %v854, 2
        %v856 = vadd.f32 %v854, %v855
        %v857 = vrot.slane %v856, 1
        %v858 = vadd.f32 %v856, %v857
        %v859 = vsel %vm579, %v841, 0.0
        %v860 = vadd.f32 %v837, %v859
        %v861 = vrot.slane %v860, 4
        %v862 = vadd.f32 %v860, %v861
        %v863 = vrot.slane %v862, 2
        %v864 = vadd.f32 %v862, %v863
        %v865 = vrot.slane %v864, 1
        %v866 = vadd.f32 %v864, %v865
        %v867 = vsel %vm579, %v842, 0.0
        %v868 = vadd.f32 %v838, %v867
        %v869 = vrot.slane %v868, 4
        %v870 = vadd.f32 %v868, %v869
        %v871 = vrot.slane %v870, 2
        %v872 = vadd.f32 %v870, %v871
        %v873 = vrot.slane %v872, 1
        %v874 = vadd.f32 %v872, %v873
        %v875 = vcvt.f32.s32.to.zero.pseudo %v850
        %v876 = vcvt.f32.s32.to.zero.pseudo %v858
        %v877 = vcvt.f32.s32.to.zero.pseudo %v866
        %v878 = vcvt.f32.s32.to.zero.pseudo %v874
        %v879 = vrot.slane %v876, 7
        %v880 = vrot.slane %v877, 6
        %v881 = vrot.slane %v878, 5
        %v882 = vsel %vm579, %v875, %v879
        %v883 = vsel %vm581, %v880, %v881
        %v884 = vsel %vm583, %v882, %v883
        %s885 = scalar_lea.vmem %s398, 1 [#allocation6]
        %886 = vst.msk [vmem:[%s885] ss:$2 sm:$0xf] %vm825, %v884
        %v887 = vshll.u32 %v812, 9
        %v888 = vshll.u32 %v813, 9
        %v889 = vshll.u32 %v814, 9
        %v890 = vshll.u32 %v815, 9
        %v891 = vadd.s32 %v887, %v875
        %v892 = vadd.s32 %v888, %v876
        %v893 = vadd.s32 %v889, %v877
        %v894 = vadd.s32 %v890, %v878
        %v895 = vrot.slane %v892, 7
        %v896 = vrot.slane %v893, 6
        %v897 = vrot.slane %v894, 5
        %v898 = vsel %vm579, %v891, %v895
        %v899 = vsel %vm581, %v896, %v897
        %v900 = vsel %vm583, %v898, %v899
        %901 = vst.msk [vmem:[%s391] sm:$0xf] %vm825, %v900
        %v902 = vmul.f32 %v455, 47.140453
        %v903 = vmul.f32 %v456, 47.140453
        %v904 = vmul.f32 %v457, 47.140453
        %v905 = vmul.f32 %v458, 47.140453
        %v906 = vmul.f32 %v463, 47.140453
        %v907 = vmul.f32 %v464, 47.140453
        %v908 = vmul.f32 %v465, 47.140453
        %v909 = vmul.f32 %v466, 47.140453
        %v910 = vmul.f32 %v459, 47.140453
        %v911 = vmul.f32 %v460, 47.140453
        %v912 = vmul.f32 %v461, 47.140453
        %v913 = vmul.f32 %v462, 47.140453
        %v914 = vmul.f32 %v467, 47.140453
        %v915 = vmul.f32 %v468, 47.140453
        %v916 = vmul.f32 %v469, 47.140453
        %v917 = vmul.f32 %v470, 47.140453
        %v918 = vand.u32 2147483647, %v902
        %v919 = vand.u32 2147483647, %v903
        %v920 = vand.u32 2147483647, %v904
        %v921 = vand.u32 2147483647, %v905
        %v922 = vand.u32 2147483647, %v906
        %v923 = vand.u32 2147483647, %v907
        %v924 = vand.u32 2147483647, %v908
        %v925 = vand.u32 2147483647, %v909
        %v926 = vand.u32 2147483647, %v910
        %v927 = vand.u32 2147483647, %v911
        %v928 = vand.u32 2147483647, %v912
        %v929 = vand.u32 2147483647, %v913
        %v930 = vand.u32 2147483647, %v914
        %v931 = vand.u32 2147483647, %v915
        %v932 = vand.u32 2147483647, %v916
        %v933 = vand.u32 2147483647, %v917
        %v934 = vmul.f32 %v918, 2.0
        %v935 = vmul.f32 %v919, 2.0
        %v936 = vmul.f32 %v920, 2.0
        %v937 = vmul.f32 %v921, 2.0
        %v938 = vmul.f32 %v922, 2.0
        %v939 = vmul.f32 %v923, 2.0
        %v940 = vmul.f32 %v924, 2.0
        %v941 = vmul.f32 %v925, 2.0
        %v942 = vmul.f32 %v926, 2.0
        %v943 = vmul.f32 %v927, 2.0
        %v944 = vmul.f32 %v928, 2.0
        %v945 = vmul.f32 %v929, 2.0
        %v946 = vmul.f32 %v930, 2.0
        %v947 = vmul.f32 %v931, 2.0
        %v948 = vmul.f32 %v932, 2.0
        %v949 = vmul.f32 %v933, 2.0
        %v950 = vsub.f32 0.0, %v934
        %v951 = vsub.f32 0.0, %v935
        %v952 = vsub.f32 0.0, %v936
        %v953 = vsub.f32 0.0, %v937
        %v954 = vsub.f32 0.0, %v938
        %v955 = vsub.f32 0.0, %v939
        %v956 = vsub.f32 0.0, %v940
        %v957 = vsub.f32 0.0, %v941
        %v958 = vsub.f32 0.0, %v942
        %v959 = vsub.f32 0.0, %v943
        %v960 = vsub.f32 0.0, %v944
        %v961 = vsub.f32 0.0, %v945
        %v962 = vsub.f32 0.0, %v946
        %v963 = vsub.f32 0.0, %v947
        %v964 = vsub.f32 0.0, %v948
        %v965 = vsub.f32 0.0, %v949
        %v966 = vmul.f32 %v950, 1.442695
        %v967 = vpow.pop %v966
        %v968 = vmul.f32 %v951, 1.442695
        %v969 = vpow.pop %v968
        %v970 = vmul.f32 %v952, 1.442695
        %v971 = vpow.pop %v970
        %v972 = vmul.f32 %v953, 1.442695
        %v973 = vpow.pop %v972
        %v974 = vmul.f32 %v954, 1.442695
        %v975 = vpow.pop %v974
        %v976 = vmul.f32 %v955, 1.442695
        %v977 = vpow.pop %v976
        %v978 = vmul.f32 %v956, 1.442695
        %v979 = vpow.pop %v978
        %v980 = vmul.f32 %v957, 1.442695
        %v981 = vpow.pop %v980
        %v982 = vmul.f32 %v958, 1.442695
        %v983 = vpow.pop %v982
        %v984 = vmul.f32 %v959, 1.442695
        %v985 = vpow.pop %v984
        %v986 = vmul.f32 %v960, 1.442695
        %v987 = vpow.pop %v986
        %v988 = vmul.f32 %v961, 1.442695
        %v989 = vpow.pop %v988
        %v990 = vmul.f32 %v962, 1.442695
        %v991 = vpow.pop %v990
        %v992 = vmul.f32 %v963, 1.442695
        %v993 = vpow.pop %v992
        %v994 = vmul.f32 %v964, 1.442695
        %v995 = vpow.pop %v994
        %v996 = vmul.f32 %v965, 1.442695
        %v997 = vpow.pop %v996
        %v998 = vadd.f32 %v967, 1.0
        %v999 = vadd.f32 %v969, 1.0
        %v1000 = vadd.f32 %v971, 1.0
        %v1001 = vadd.f32 %v973, 1.0
        %v1002 = vadd.f32 %v975, 1.0
        %v1003 = vadd.f32 %v977, 1.0
        %v1004 = vadd.f32 %v979, 1.0
        %v1005 = vadd.f32 %v981, 1.0
        %v1006 = vadd.f32 %v983, 1.0
        %v1007 = vadd.f32 %v985, 1.0
        %v1008 = vadd.f32 %v987, 1.0
        %v1009 = vadd.f32 %v989, 1.0
        %v1010 = vadd.f32 %v991, 1.0
        %v1011 = vadd.f32 %v993, 1.0
        %v1012 = vadd.f32 %v995, 1.0
        %v1013 = vadd.f32 %v997, 1.0
        %v1014 = vlog2.pop %v998
        %v1015 = vmul.f32 %v1014, 0.6931472
        %v1016 = vlog2.pop %v999
        %v1017 = vmul.f32 %v1016, 0.6931472
        %v1018 = vlog2.pop %v1000
        %v1019 = vmul.f32 %v1018, 0.6931472
        %v1020 = vlog2.pop %v1001
        %v1021 = vmul.f32 %v1020, 0.6931472
        %v1022 = vlog2.pop %v1002
        %v1023 = vmul.f32 %v1022, 0.6931472
        %v1024 = vlog2.pop %v1003
        %v1025 = vmul.f32 %v1024, 0.6931472
        %v1026 = vlog2.pop %v1004
        %v1027 = vmul.f32 %v1026, 0.6931472
        %v1028 = vlog2.pop %v1005
        %v1029 = vmul.f32 %v1028, 0.6931472
        %v1030 = vlog2.pop %v1006
        %v1031 = vmul.f32 %v1030, 0.6931472
        %v1032 = vlog2.pop %v1007
        %v1033 = vmul.f32 %v1032, 0.6931472
        %v1034 = vlog2.pop %v1008
        %v1035 = vmul.f32 %v1034, 0.6931472
        %v1036 = vlog2.pop %v1009
        %v1037 = vmul.f32 %v1036, 0.6931472
        %v1038 = vlog2.pop %v1010
        %v1039 = vmul.f32 %v1038, 0.6931472
        %v1040 = vlog2.pop %v1011
        %v1041 = vmul.f32 %v1040, 0.6931472
        %v1042 = vlog2.pop %v1012
        %v1043 = vmul.f32 %v1042, 0.6931472
        %v1044 = vlog2.pop %v1013
        %v1045 = vmul.f32 %v1044, 0.6931472
        %v1046 = vmul.f32 %v934, %v967
        %v1047 = vmul.f32 %v935, %v969
        %v1048 = vmul.f32 %v936, %v971
        %v1049 = vmul.f32 %v937, %v973
        %v1050 = vmul.f32 %v938, %v975
        %v1051 = vmul.f32 %v939, %v977
        %v1052 = vmul.f32 %v940, %v979
        %v1053 = vmul.f32 %v941, %v981
        %v1054 = vmul.f32 %v942, %v983
        %v1055 = vmul.f32 %v943, %v985
        %v1056 = vmul.f32 %v944, %v987
        %v1057 = vmul.f32 %v945, %v989
        %v1058 = vmul.f32 %v946, %v991
        %v1059 = vmul.f32 %v947, %v993
        %v1060 = vmul.f32 %v948, %v995
        %v1061 = vmul.f32 %v949, %v997
        %v1062 = vrcp.pop %v998
        %v1063 = vmul.f32 %v998, %v1062
        %v1064 = vsub.f32 1.0, %v1063
        %v1065 = vmul.f32 %v1062, %v1064
        %v1066 = vadd.f32 %v1062, %v1065
        %vm1067 = vweird.f32 %v998
        %vm1068 = vweird.f32 %v1062
        %vm1069 = vmor %vm1067, %vm1068
        %v1070 = vsel %vm1069, %v1062, %v1066
        %v1071 = vand.u32 2147483647, %v998
        %vm1072 = vcmp.eq.f32.partialorder %v1071, 8.507059e+37
        %v1073 = vand.u32 %v998, 2147483648
        %v1074 = vor.u32 1.1754944e-38, %v1073
        %v1075 = vsel %vm1072, %v1074, %v1070
        %v1076 = vmul.f32 %v1046, %v1075
        %v1077 = vrcp.pop %v999
        %v1078 = vmul.f32 %v999, %v1077
        %v1079 = vsub.f32 1.0, %v1078
        %v1080 = vmul.f32 %v1077, %v1079
        %v1081 = vadd.f32 %v1077, %v1080
        %vm1082 = vweird.f32 %v999
        %vm1083 = vweird.f32 %v1077
        %vm1084 = vmor %vm1082, %vm1083
        %v1085 = vsel %vm1084, %v1077, %v1081
        %v1086 = vand.u32 2147483647, %v999
        %vm1087 = vcmp.eq.f32.partialorder %v1086, 8.507059e+37
        %v1088 = vand.u32 %v999, 2147483648
        %v1089 = vor.u32 1.1754944e-38, %v1088
        %v1090 = vsel %vm1087, %v1089, %v1085
        %v1091 = vmul.f32 %v1047, %v1090
        %v1092 = vrcp.pop %v1000
        %v1093 = vmul.f32 %v1000, %v1092
        %v1094 = vsub.f32 1.0, %v1093
        %v1095 = vmul.f32 %v1092, %v1094
        %v1096 = vadd.f32 %v1092, %v1095
        %vm1097 = vweird.f32 %v1000
        %vm1098 = vweird.f32 %v1092
        %vm1099 = vmor %vm1097, %vm1098
        %v1100 = vsel %vm1099, %v1092, %v1096
        %v1101 = vand.u32 2147483647, %v1000
        %vm1102 = vcmp.eq.f32.partialorder %v1101, 8.507059e+37
        %v1103 = vand.u32 %v1000, 2147483648
        %v1104 = vor.u32 1.1754944e-38, %v1103
        %v1105 = vsel %vm1102, %v1104, %v1100
        %v1106 = vmul.f32 %v1048, %v1105
        %v1107 = vrcp.pop %v1001
        %v1108 = vmul.f32 %v1001, %v1107
        %v1109 = vsub.f32 1.0, %v1108
        %v1110 = vmul.f32 %v1107, %v1109
        %v1111 = vadd.f32 %v1107, %v1110
        %vm1112 = vweird.f32 %v1001
        %vm1113 = vweird.f32 %v1107
        %vm1114 = vmor %vm1112, %vm1113
        %v1115 = vsel %vm1114, %v1107, %v1111
        %v1116 = vand.u32 2147483647, %v1001
        %vm1117 = vcmp.eq.f32.partialorder %v1116, 8.507059e+37
        %v1118 = vand.u32 %v1001, 2147483648
        %v1119 = vor.u32 1.1754944e-38, %v1118
        %v1120 = vsel %vm1117, %v1119, %v1115
        %v1121 = vmul.f32 %v1049, %v1120
        %v1122 = vrcp.pop %v1002
        %v1123 = vmul.f32 %v1002, %v1122
        %v1124 = vsub.f32 1.0, %v1123
        %v1125 = vmul.f32 %v1122, %v1124
        %v1126 = vadd.f32 %v1122, %v1125
        %vm1127 = vweird.f32 %v1002
        %vm1128 = vweird.f32 %v1122
        %vm1129 = vmor %vm1127, %vm1128
        %v1130 = vsel %vm1129, %v1122, %v1126
        %v1131 = vand.u32 2147483647, %v1002
        %vm1132 = vcmp.eq.f32.partialorder %v1131, 8.507059e+37
        %v1133 = vand.u32 %v1002, 2147483648
        %v1134 = vor.u32 1.1754944e-38, %v1133
        %v1135 = vsel %vm1132, %v1134, %v1130
        %v1136 = vmul.f32 %v1050, %v1135
        %v1137 = vrcp.pop %v1003
        %v1138 = vmul.f32 %v1003, %v1137
        %v1139 = vsub.f32 1.0, %v1138
        %v1140 = vmul.f32 %v1137, %v1139
        %v1141 = vadd.f32 %v1137, %v1140
        %vm1142 = vweird.f32 %v1003
        %vm1143 = vweird.f32 %v1137
        %vm1144 = vmor %vm1142, %vm1143
        %v1145 = vsel %vm1144, %v1137, %v1141
        %v1146 = vand.u32 2147483647, %v1003
        %vm1147 = vcmp.eq.f32.partialorder %v1146, 8.507059e+37
        %v1148 = vand.u32 %v1003, 2147483648
        %v1149 = vor.u32 1.1754944e-38, %v1148
        %v1150 = vsel %vm1147, %v1149, %v1145
        %v1151 = vmul.f32 %v1051, %v1150
        %v1152 = vrcp.pop %v1004
        %v1153 = vmul.f32 %v1004, %v1152
        %v1154 = vsub.f32 1.0, %v1153
        %v1155 = vmul.f32 %v1152, %v1154
        %v1156 = vadd.f32 %v1152, %v1155
        %vm1157 = vweird.f32 %v1004
        %vm1158 = vweird.f32 %v1152
        %vm1159 = vmor %vm1157, %vm1158
        %v1160 = vsel %vm1159, %v1152, %v1156
        %v1161 = vand.u32 2147483647, %v1004
        %vm1162 = vcmp.eq.f32.partialorder %v1161, 8.507059e+37
        %v1163 = vand.u32 %v1004, 2147483648
        %v1164 = vor.u32 1.1754944e-38, %v1163
        %v1165 = vsel %vm1162, %v1164, %v1160
        %v1166 = vmul.f32 %v1052, %v1165
        %v1167 = vrcp.pop %v1005
        %v1168 = vmul.f32 %v1005, %v1167
        %v1169 = vsub.f32 1.0, %v1168
        %v1170 = vmul.f32 %v1167, %v1169
        %v1171 = vadd.f32 %v1167, %v1170
        %vm1172 = vweird.f32 %v1005
        %vm1173 = vweird.f32 %v1167
        %vm1174 = vmor %vm1172, %vm1173
        %v1175 = vsel %vm1174, %v1167, %v1171
        %v1176 = vand.u32 2147483647, %v1005
        %vm1177 = vcmp.eq.f32.partialorder %v1176, 8.507059e+37
        %v1178 = vand.u32 %v1005, 2147483648
        %v1179 = vor.u32 1.1754944e-38, %v1178
        %v1180 = vsel %vm1177, %v1179, %v1175
        %v1181 = vmul.f32 %v1053, %v1180
        %v1182 = vrcp.pop %v1006
        %v1183 = vmul.f32 %v1006, %v1182
        %v1184 = vsub.f32 1.0, %v1183
        %v1185 = vmul.f32 %v1182, %v1184
        %v1186 = vadd.f32 %v1182, %v1185
        %vm1187 = vweird.f32 %v1006
        %vm1188 = vweird.f32 %v1182
        %vm1189 = vmor %vm1187, %vm1188
        %v1190 = vsel %vm1189, %v1182, %v1186
        %v1191 = vand.u32 2147483647, %v1006
        %vm1192 = vcmp.eq.f32.partialorder %v1191, 8.507059e+37
        %v1193 = vand.u32 %v1006, 2147483648
        %v1194 = vor.u32 1.1754944e-38, %v1193
        %v1195 = vsel %vm1192, %v1194, %v1190
        %v1196 = vmul.f32 %v1054, %v1195
        %v1197 = vrcp.pop %v1007
        %v1198 = vmul.f32 %v1007, %v1197
        %v1199 = vsub.f32 1.0, %v1198
        %v1200 = vmul.f32 %v1197, %v1199
        %v1201 = vadd.f32 %v1197, %v1200
        %vm1202 = vweird.f32 %v1007
        %vm1203 = vweird.f32 %v1197
        %vm1204 = vmor %vm1202, %vm1203
        %v1205 = vsel %vm1204, %v1197, %v1201
        %v1206 = vand.u32 2147483647, %v1007
        %vm1207 = vcmp.eq.f32.partialorder %v1206, 8.507059e+37
        %v1208 = vand.u32 %v1007, 2147483648
        %v1209 = vor.u32 1.1754944e-38, %v1208
        %v1210 = vsel %vm1207, %v1209, %v1205
        %v1211 = vmul.f32 %v1055, %v1210
        %v1212 = vrcp.pop %v1008
        %v1213 = vmul.f32 %v1008, %v1212
        %v1214 = vsub.f32 1.0, %v1213
        %v1215 = vmul.f32 %v1212, %v1214
        %v1216 = vadd.f32 %v1212, %v1215
        %vm1217 = vweird.f32 %v1008
        %vm1218 = vweird.f32 %v1212
        %vm1219 = vmor %vm1217, %vm1218
        %v1220 = vsel %vm1219, %v1212, %v1216
        %v1221 = vand.u32 2147483647, %v1008
        %vm1222 = vcmp.eq.f32.partialorder %v1221, 8.507059e+37
        %v1223 = vand.u32 %v1008, 2147483648
        %v1224 = vor.u32 1.1754944e-38, %v1223
        %v1225 = vsel %vm1222, %v1224, %v1220
        %v1226 = vmul.f32 %v1056, %v1225
        %v1227 = vrcp.pop %v1009
        %v1228 = vmul.f32 %v1009, %v1227
        %v1229 = vsub.f32 1.0, %v1228
        %v1230 = vmul.f32 %v1227, %v1229
        %v1231 = vadd.f32 %v1227, %v1230
        %vm1232 = vweird.f32 %v1009
        %vm1233 = vweird.f32 %v1227
        %vm1234 = vmor %vm1232, %vm1233
        %v1235 = vsel %vm1234, %v1227, %v1231
        %v1236 = vand.u32 2147483647, %v1009
        %vm1237 = vcmp.eq.f32.partialorder %v1236, 8.507059e+37
        %v1238 = vand.u32 %v1009, 2147483648
        %v1239 = vor.u32 1.1754944e-38, %v1238
        %v1240 = vsel %vm1237, %v1239, %v1235
        %v1241 = vmul.f32 %v1057, %v1240
        %v1242 = vrcp.pop %v1010
        %v1243 = vmul.f32 %v1010, %v1242
        %v1244 = vsub.f32 1.0, %v1243
        %v1245 = vmul.f32 %v1242, %v1244
        %v1246 = vadd.f32 %v1242, %v1245
        %vm1247 = vweird.f32 %v1010
        %vm1248 = vweird.f32 %v1242
        %vm1249 = vmor %vm1247, %vm1248
        %v1250 = vsel %vm1249, %v1242, %v1246
        %v1251 = vand.u32 2147483647, %v1010
        %vm1252 = vcmp.eq.f32.partialorder %v1251, 8.507059e+37
        %v1253 = vand.u32 %v1010, 2147483648
        %v1254 = vor.u32 1.1754944e-38, %v1253
        %v1255 = vsel %vm1252, %v1254, %v1250
        %v1256 = vmul.f32 %v1058, %v1255
        %v1257 = vrcp.pop %v1011
        %v1258 = vmul.f32 %v1011, %v1257
        %v1259 = vsub.f32 1.0, %v1258
        %v1260 = vmul.f32 %v1257, %v1259
        %v1261 = vadd.f32 %v1257, %v1260
        %vm1262 = vweird.f32 %v1011
        %vm1263 = vweird.f32 %v1257
        %vm1264 = vmor %vm1262, %vm1263
        %v1265 = vsel %vm1264, %v1257, %v1261
        %v1266 = vand.u32 2147483647, %v1011
        %vm1267 = vcmp.eq.f32.partialorder %v1266, 8.507059e+37
        %v1268 = vand.u32 %v1011, 2147483648
        %v1269 = vor.u32 1.1754944e-38, %v1268
        %v1270 = vsel %vm1267, %v1269, %v1265
        %v1271 = vmul.f32 %v1059, %v1270
        %v1272 = vrcp.pop %v1012
        %v1273 = vmul.f32 %v1012, %v1272
        %v1274 = vsub.f32 1.0, %v1273
        %v1275 = vmul.f32 %v1272, %v1274
        %v1276 = vadd.f32 %v1272, %v1275
        %vm1277 = vweird.f32 %v1012
        %vm1278 = vweird.f32 %v1272
        %vm1279 = vmor %vm1277, %vm1278
        %v1280 = vsel %vm1279, %v1272, %v1276
        %v1281 = vand.u32 2147483647, %v1012
        %vm1282 = vcmp.eq.f32.partialorder %v1281, 8.507059e+37
        %v1283 = vand.u32 %v1012, 2147483648
        %v1284 = vor.u32 1.1754944e-38, %v1283
        %v1285 = vsel %vm1282, %v1284, %v1280
        %v1286 = vmul.f32 %v1060, %v1285
        %v1287 = vrcp.pop %v1013
        %v1288 = vmul.f32 %v1013, %v1287
        %v1289 = vsub.f32 1.0, %v1288
        %v1290 = vmul.f32 %v1287, %v1289
        %v1291 = vadd.f32 %v1287, %v1290
        %vm1292 = vweird.f32 %v1013
        %vm1293 = vweird.f32 %v1287
        %vm1294 = vmor %vm1292, %vm1293
        %v1295 = vsel %vm1294, %v1287, %v1291
        %v1296 = vand.u32 2147483647, %v1013
        %vm1297 = vcmp.eq.f32.partialorder %v1296, 8.507059e+37
        %v1298 = vand.u32 %v1013, 2147483648
        %v1299 = vor.u32 1.1754944e-38, %v1298
        %v1300 = vsel %vm1297, %v1299, %v1295
        %v1301 = vmul.f32 %v1061, %v1300
        %v1302 = vsel %vm579, %v926, 0.0
        %v1303 = vadd.f32 %v918, %v1302
        %v1304 = vrot.slane %v1303, 4
        %v1305 = vadd.f32 %v1303, %v1304
        %v1306 = vrot.slane %v1305, 2
        %v1307 = vadd.f32 %v1305, %v1306
        %v1308 = vrot.slane %v1307, 1
        %v1309 = vadd.f32 %v1307, %v1308
        %v1310 = vsel %vm579, %v927, 0.0
        %v1311 = vadd.f32 %v919, %v1310
        %v1312 = vrot.slane %v1311, 4
        %v1313 = vadd.f32 %v1311, %v1312
        %v1314 = vrot.slane %v1313, 2
        %v1315 = vadd.f32 %v1313, %v1314
        %v1316 = vrot.slane %v1315, 1
        %v1317 = vadd.f32 %v1315, %v1316
        %v1318 = vsel %vm579, %v928, 0.0
        %v1319 = vadd.f32 %v920, %v1318
        %v1320 = vrot.slane %v1319, 4
        %v1321 = vadd.f32 %v1319, %v1320
        %v1322 = vrot.slane %v1321, 2
        %v1323 = vadd.f32 %v1321, %v1322
        %v1324 = vrot.slane %v1323, 1
        %v1325 = vadd.f32 %v1323, %v1324
        %v1326 = vsel %vm579, %v929, 0.0
        %v1327 = vadd.f32 %v921, %v1326
        %v1328 = vrot.slane %v1327, 4
        %v1329 = vadd.f32 %v1327, %v1328
        %v1330 = vrot.slane %v1329, 2
        %v1331 = vadd.f32 %v1329, %v1330
        %v1332 = vrot.slane %v1331, 1
        %v1333 = vadd.f32 %v1331, %v1332
        %v1334 = vsel %vm579, %v930, 0.0
        %v1335 = vadd.f32 %v922, %v1334
        %v1336 = vrot.slane %v1335, 4
        %v1337 = vadd.f32 %v1335, %v1336
        %v1338 = vrot.slane %v1337, 2
        %v1339 = vadd.f32 %v1337, %v1338
        %v1340 = vrot.slane %v1339, 1
        %v1341 = vadd.f32 %v1339, %v1340
        %v1342 = vsel %vm579, %v931, 0.0
        %v1343 = vadd.f32 %v923, %v1342
        %v1344 = vrot.slane %v1343, 4
        %v1345 = vadd.f32 %v1343, %v1344
        %v1346 = vrot.slane %v1345, 2
        %v1347 = vadd.f32 %v1345, %v1346
        %v1348 = vrot.slane %v1347, 1
        %v1349 = vadd.f32 %v1347, %v1348
        %v1350 = vsel %vm579, %v932, 0.0
        %v1351 = vadd.f32 %v924, %v1350
        %v1352 = vrot.slane %v1351, 4
        %v1353 = vadd.f32 %v1351, %v1352
        %v1354 = vrot.slane %v1353, 2
        %v1355 = vadd.f32 %v1353, %v1354
        %v1356 = vrot.slane %v1355, 1
        %v1357 = vadd.f32 %v1355, %v1356
        %v1358 = vsel %vm579, %v933, 0.0
        %v1359 = vadd.f32 %v925, %v1358
        %v1360 = vrot.slane %v1359, 4
        %v1361 = vadd.f32 %v1359, %v1360
        %v1362 = vrot.slane %v1361, 2
        %v1363 = vadd.f32 %v1361, %v1362
        %v1364 = vrot.slane %v1363, 1
        %v1365 = vadd.f32 %v1363, %v1364
        %v1366 = vsel %vm579, %v1031, 0.0
        %v1367 = vadd.f32 %v1015, %v1366
        %v1368 = vrot.slane %v1367, 4
        %v1369 = vadd.f32 %v1367, %v1368
        %v1370 = vrot.slane %v1369, 2
        %v1371 = vadd.f32 %v1369, %v1370
        %v1372 = vrot.slane %v1371, 1
        %v1373 = vadd.f32 %v1371, %v1372
        %v1374 = vsel %vm579, %v1033, 0.0
        %v1375 = vadd.f32 %v1017, %v1374
        %v1376 = vrot.slane %v1375, 4
        %v1377 = vadd.f32 %v1375, %v1376
        %v1378 = vrot.slane %v1377, 2
        %v1379 = vadd.f32 %v1377, %v1378
        %v1380 = vrot.slane %v1379, 1
        %v1381 = vadd.f32 %v1379, %v1380
        %v1382 = vsel %vm579, %v1035, 0.0
        %v1383 = vadd.f32 %v1019, %v1382
        %v1384 = vrot.slane %v1383, 4
        %v1385 = vadd.f32 %v1383, %v1384
        %v1386 = vrot.slane %v1385, 2
        %v1387 = vadd.f32 %v1385, %v1386
        %v1388 = vrot.slane %v1387, 1
        %v1389 = vadd.f32 %v1387, %v1388
        %v1390 = vsel %vm579, %v1037, 0.0
        %v1391 = vadd.f32 %v1021, %v1390
        %v1392 = vrot.slane %v1391, 4
        %v1393 = vadd.f32 %v1391, %v1392
        %v1394 = vrot.slane %v1393, 2
        %v1395 = vadd.f32 %v1393, %v1394
        %v1396 = vrot.slane %v1395, 1
        %v1397 = vadd.f32 %v1395, %v1396
        %v1398 = vsel %vm579, %v1039, 0.0
        %v1399 = vadd.f32 %v1023, %v1398
        %v1400 = vrot.slane %v1399, 4
        %v1401 = vadd.f32 %v1399, %v1400
        %v1402 = vrot.slane %v1401, 2
        %v1403 = vadd.f32 %v1401, %v1402
        %v1404 = vrot.slane %v1403, 1
        %v1405 = vadd.f32 %v1403, %v1404
        %v1406 = vsel %vm579, %v1041, 0.0
        %v1407 = vadd.f32 %v1025, %v1406
        %v1408 = vrot.slane %v1407, 4
        %v1409 = vadd.f32 %v1407, %v1408
        %v1410 = vrot.slane %v1409, 2
        %v1411 = vadd.f32 %v1409, %v1410
        %v1412 = vrot.slane %v1411, 1
        %v1413 = vadd.f32 %v1411, %v1412
        %v1414 = vsel %vm579, %v1043, 0.0
        %v1415 = vadd.f32 %v1027, %v1414
        %v1416 = vrot.slane %v1415, 4
        %v1417 = vadd.f32 %v1415, %v1416
        %v1418 = vrot.slane %v1417, 2
        %v1419 = vadd.f32 %v1417, %v1418
        %v1420 = vrot.slane %v1419, 1
        %v1421 = vadd.f32 %v1419, %v1420
        %v1422 = vsel %vm579, %v1045, 0.0
        %v1423 = vadd.f32 %v1029, %v1422
        %v1424 = vrot.slane %v1423, 4
        %v1425 = vadd.f32 %v1423, %v1424
        %v1426 = vrot.slane %v1425, 2
        %v1427 = vadd.f32 %v1425, %v1426
        %v1428 = vrot.slane %v1427, 1
        %v1429 = vadd.f32 %v1427, %v1428
        %v1430 = vadd.f32 %v1309, %v1373
        %v1431 = vadd.f32 %v1317, %v1381
        %v1432 = vadd.f32 %v1325, %v1389
        %v1433 = vadd.f32 %v1333, %v1397
        %v1434 = vadd.f32 %v1341, %v1405
        %v1435 = vadd.f32 %v1349, %v1413
        %v1436 = vadd.f32 %v1357, %v1421
        %v1437 = vadd.f32 %v1365, %v1429
        %v1438 = vsel %vm579, %v1196, 0.0
        %v1439 = vadd.f32 %v1076, %v1438
        %v1440 = vrot.slane %v1439, 4
        %v1441 = vadd.f32 %v1439, %v1440
        %v1442 = vrot.slane %v1441, 2
        %v1443 = vadd.f32 %v1441, %v1442
        %v1444 = vrot.slane %v1443, 1
        %v1445 = vadd.f32 %v1443, %v1444
        %v1446 = vsel %vm579, %v1211, 0.0
        %v1447 = vadd.f32 %v1091, %v1446
        %v1448 = vrot.slane %v1447, 4
        %v1449 = vadd.f32 %v1447, %v1448
        %v1450 = vrot.slane %v1449, 2
        %v1451 = vadd.f32 %v1449, %v1450
        %v1452 = vrot.slane %v1451, 1
        %v1453 = vadd.f32 %v1451, %v1452
        %v1454 = vsel %vm579, %v1226, 0.0
        %v1455 = vadd.f32 %v1106, %v1454
        %v1456 = vrot.slane %v1455, 4
        %v1457 = vadd.f32 %v1455, %v1456
        %v1458 = vrot.slane %v1457, 2
        %v1459 = vadd.f32 %v1457, %v1458
        %v1460 = vrot.slane %v1459, 1
        %v1461 = vadd.f32 %v1459, %v1460
        %v1462 = vsel %vm579, %v1241, 0.0
        %v1463 = vadd.f32 %v1121, %v1462
        %v1464 = vrot.slane %v1463, 4
        %v1465 = vadd.f32 %v1463, %v1464
        %v1466 = vrot.slane %v1465, 2
        %v1467 = vadd.f32 %v1465, %v1466
        %v1468 = vrot.slane %v1467, 1
        %v1469 = vadd.f32 %v1467, %v1468
        %v1470 = vsel %vm579, %v1256, 0.0
        %v1471 = vadd.f32 %v1136, %v1470
        %v1472 = vrot.slane %v1471, 4
        %v1473 = vadd.f32 %v1471, %v1472
        %v1474 = vrot.slane %v1473, 2
        %v1475 = vadd.f32 %v1473, %v1474
        %v1476 = vrot.slane %v1475, 1
        %v1477 = vadd.f32 %v1475, %v1476
        %v1478 = vsel %vm579, %v1271, 0.0
        %v1479 = vadd.f32 %v1151, %v1478
        %v1480 = vrot.slane %v1479, 4
        %v1481 = vadd.f32 %v1479, %v1480
        %v1482 = vrot.slane %v1481, 2
        %v1483 = vadd.f32 %v1481, %v1482
        %v1484 = vrot.slane %v1483, 1
        %v1485 = vadd.f32 %v1483, %v1484
        %v1486 = vsel %vm579, %v1286, 0.0
        %v1487 = vadd.f32 %v1166, %v1486
        %v1488 = vrot.slane %v1487, 4
        %v1489 = vadd.f32 %v1487, %v1488
        %v1490 = vrot.slane %v1489, 2
        %v1491 = vadd.f32 %v1489, %v1490
        %v1492 = vrot.slane %v1491, 1
        %v1493 = vadd.f32 %v1491, %v1492
        %v1494 = vsel %vm579, %v1301, 0.0
        %v1495 = vadd.f32 %v1181, %v1494
        %v1496 = vrot.slane %v1495, 4
        %v1497 = vadd.f32 %v1495, %v1496
        %v1498 = vrot.slane %v1497, 2
        %v1499 = vadd.f32 %v1497, %v1498
        %v1500 = vrot.slane %v1499, 1
        %v1501 = vadd.f32 %v1499, %v1500
        %v1502 = vadd.f32 %v1373, %v1445
        %v1503 = vadd.f32 %v1381, %v1453
        %v1504 = vadd.f32 %v1389, %v1461
        %v1505 = vadd.f32 %v1397, %v1469
        %v1506 = vadd.f32 %v1405, %v1477
        %v1507 = vadd.f32 %v1413, %v1485
        %v1508 = vadd.f32 %v1421, %v1493
        %v1509 = vadd.f32 %v1429, %v1501
        %v1510 = vadd.f32 %v1502, %v1503
        %v1511 = vadd.f32 %v1510, %v1504
        %v1512 = vadd.f32 %v1511, %v1505
        %v1513 = vadd.f32 %v1512, %v1506
        %v1514 = vadd.f32 %v1513, %v1507
        %v1515 = vadd.f32 %v1514, %v1508
        %v1516 = vadd.f32 %v1515, %v1509
        %1517 = vadd.xlane.f32.xlu0 %v1516
        %v1518 = vpop.xlane.xlu0 %1517
        %1519 = vst.msk [vmem:[%s447] sm:$0x1] %vm753, %v1518
        %v1520 = vld [vmem:[%s1] sm:$0xff]
        %v1521 = vld [vmem:[%s1 + $0x8] sm:$0xff]
        %v1522 = vld [vmem:[%s1 + $0x10] sm:$0xff]
        %v1523 = vld [vmem:[%s1 + $0x18] sm:$0xff]
        %v1524 = vld [vmem:[%s1 + $0x20] sm:$0xff]
        %v1525 = vld [vmem:[%s1 + $0x28] sm:$0xff]
        %v1526 = vld [vmem:[%s1 + $0x30] sm:$0xff]
        %v1527 = vld [vmem:[%s1 + $0x38] sm:$0xff]
        %v1528 = vld [vmem:[%s1 + $0x40] sm:$0xff]
        %v1529 = vld [vmem:[%s1 + $0x48] sm:$0xff]
        %v1530 = vld [vmem:[%s1 + $0x50] sm:$0xff]
        %v1531 = vld [vmem:[%s1 + $0x58] sm:$0xff]
        %v1532 = vld [vmem:[%s1 + $0x60] sm:$0xff]
        %v1533 = vld [vmem:[%s1 + $0x68] sm:$0xff]
        %v1534 = vld [vmem:[%s1 + $0x70] sm:$0xff]
        %v1535 = vld [vmem:[%s1 + $0x78] sm:$0xff]
        %v1536 = vld [vmem:[%s1 + $0x80] sm:$0xff]
        %v1537 = vld [vmem:[%s1 + $0x88] sm:$0xff]
        %v1538 = vld [vmem:[%s1 + $0x90] sm:$0xff]
        %v1539 = vld [vmem:[%s1 + $0x98] sm:$0xff]
        %v1540 = vld [vmem:[%s1 + $0xa0] sm:$0xff]
        %v1541 = vld [vmem:[%s1 + $0xa8] sm:$0xff]
        %v1542 = vld [vmem:[%s1 + $0xb0] sm:$0xff]
        %v1543 = vld [vmem:[%s1 + $0xb8] sm:$0xff]
        %v1544 = vld [vmem:[%s1 + $0xc0] sm:$0xff]
        %v1545 = vld [vmem:[%s1 + $0xc8] sm:$0xff]
        %v1546 = vld [vmem:[%s1 + $0xd0] sm:$0xff]
        %v1547 = vld [vmem:[%s1 + $0xd8] sm:$0xff]
        %v1548 = vld [vmem:[%s1 + $0xe0] sm:$0xff]
        %v1549 = vld [vmem:[%s1 + $0xe8] sm:$0xff]
        %v1550 = vld [vmem:[%s1 + $0xf0] sm:$0xff]
        %v1551 = vld [vmem:[%s1 + $0xf8] sm:$0xff]
        %v1552 = vld [vmem:[%s1 + $0x100] sm:$0xff]
        %v1553 = vld [vmem:[%s1 + $0x108] sm:$0xff]
        %v1554 = vld [vmem:[%s1 + $0x110] sm:$0xff]
        %v1555 = vld [vmem:[%s1 + $0x118] sm:$0xff]
        %v1556 = vld [vmem:[%s1 + $0x120] sm:$0xff]
        %v1557 = vld [vmem:[%s1 + $0x128] sm:$0xff]
        %v1558 = vld [vmem:[%s1 + $0x130] sm:$0xff]
        %v1559 = vld [vmem:[%s1 + $0x138] sm:$0xff]
        %v1560 = vld [vmem:[%s1 + $0x140] sm:$0xff]
        %v1561 = vld [vmem:[%s1 + $0x148] sm:$0xff]
        %v1562 = vld [vmem:[%s1 + $0x150] sm:$0xff]
        %v1563 = vld [vmem:[%s1 + $0x158] sm:$0xff]
        %v1564 = vld [vmem:[%s1 + $0x160] sm:$0xff]
        %v1565 = vld [vmem:[%s1 + $0x168] sm:$0xff]
        %v1566 = vld [vmem:[%s1 + $0x170] sm:$0xff]
        %v1567 = vld [vmem:[%s1 + $0x178] sm:$0xff]
        %v1568 = vld [vmem:[%s1 + $0x180] sm:$0xff]
        %v1569 = vld [vmem:[%s1 + $0x188] sm:$0xff]
        %v1570 = vld [vmem:[%s1 + $0x190] sm:$0xff]
        %v1571 = vld [vmem:[%s1 + $0x198] sm:$0xff]
        %v1572 = vld [vmem:[%s1 + $0x1a0] sm:$0xff]
        %v1573 = vld [vmem:[%s1 + $0x1a8] sm:$0xff]
        %v1574 = vld [vmem:[%s1 + $0x1b0] sm:$0xff]
        %v1575 = vld [vmem:[%s1 + $0x1b8] sm:$0xff]
        %v1576 = vld [vmem:[%s1 + $0x1c0] sm:$0xff]
        %v1577 = vld [vmem:[%s1 + $0x1c8] sm:$0xff]
        %v1578 = vld [vmem:[%s1 + $0x1d0] sm:$0xff]
        %v1579 = vld [vmem:[%s1 + $0x1d8] sm:$0xff]
        %v1580 = vld [vmem:[%s1 + $0x1e0] sm:$0xff]
        %v1581 = vld [vmem:[%s1 + $0x1e8] sm:$0xff]
        %v1582 = vld [vmem:[%s1 + $0x1f0] sm:$0xff]
        %v1583 = vld [vmem:[%s1 + $0x1f8] sm:$0xff]
        %vm1584 = vcmask 72704
        %v1586 = vsel %vm1584, %v1520, 0
        %v1589 = vsel %vm1584, %v1521, 0
        %v1592 = vsel %vm1584, %v1522, 0
        %v1595 = vsel %vm1584, %v1523, 0
        %v1598 = vsel %vm1584, %v1524, 0
        %v1601 = vsel %vm1584, %v1525, 0
        %v1604 = vsel %vm1584, %v1526, 0
        %v1607 = vsel %vm1584, %v1527, 0
        %v1610 = vsel %vm1584, %v1528, 0
        %v1613 = vsel %vm1584, %v1529, 0
        %v1616 = vsel %vm1584, %v1530, 0
        %v1619 = vsel %vm1584, %v1531, 0
        %v1622 = vsel %vm1584, %v1532, 0
        %v1625 = vsel %vm1584, %v1533, 0
        %v1628 = vsel %vm1584, %v1534, 0
        %v1631 = vsel %vm1584, %v1535, 0
        %v1634 = vsel %vm1584, %v1536, 0
        %v1637 = vsel %vm1584, %v1537, 0
        %v1640 = vsel %vm1584, %v1538, 0
        %v1643 = vsel %vm1584, %v1539, 0
        %v1646 = vsel %vm1584, %v1540, 0
        %v1649 = vsel %vm1584, %v1541, 0
        %v1652 = vsel %vm1584, %v1542, 0
        %v1655 = vsel %vm1584, %v1543, 0
        %v1658 = vsel %vm1584, %v1544, 0
        %v1661 = vsel %vm1584, %v1545, 0
        %v1664 = vsel %vm1584, %v1546, 0
        %v1667 = vsel %vm1584, %v1547, 0
        %v1670 = vsel %vm1584, %v1548, 0
        %v1673 = vsel %vm1584, %v1549, 0
        %v1676 = vsel %vm1584, %v1550, 0
        %v1679 = vsel %vm1584, %v1551, 0
        %v1682 = vsel %vm1584, %v1552, 0
        %v1685 = vsel %vm1584, %v1553, 0
        %v1688 = vsel %vm1584, %v1554, 0
        %v1691 = vsel %vm1584, %v1555, 0
        %v1694 = vsel %vm1584, %v1556, 0
        %v1697 = vsel %vm1584, %v1557, 0
        %v1700 = vsel %vm1584, %v1558, 0
        %v1703 = vsel %vm1584, %v1559, 0
        %v1706 = vsel %vm1584, %v1560, 0
        %v1709 = vsel %vm1584, %v1561, 0
        %v1712 = vsel %vm1584, %v1562, 0
        %v1715 = vsel %vm1584, %v1563, 0
        %v1718 = vsel %vm1584, %v1564, 0
        %v1721 = vsel %vm1584, %v1565, 0
        %v1724 = vsel %vm1584, %v1566, 0
        %v1727 = vsel %vm1584, %v1567, 0
        %v1730 = vsel %vm1584, %v1568, 0
        %v1733 = vsel %vm1584, %v1569, 0
        %v1736 = vsel %vm1584, %v1570, 0
        %v1739 = vsel %vm1584, %v1571, 0
        %v1742 = vsel %vm1584, %v1572, 0
        %v1745 = vsel %vm1584, %v1573, 0
        %v1748 = vsel %vm1584, %v1574, 0
        %v1751 = vsel %vm1584, %v1575, 0
        %v1754 = vsel %vm1584, %v1576, 0
        %v1757 = vsel %vm1584, %v1577, 0
        %v1760 = vsel %vm1584, %v1578, 0
        %v1763 = vsel %vm1584, %v1579, 0
        %v1766 = vsel %vm1584, %v1580, 0
        %v1769 = vsel %vm1584, %v1581, 0
        %v1772 = vsel %vm1584, %v1582, 0
        %v1775 = vsel %vm1584, %v1583, 0
        %v1778 = vsel %vm579, %v910, 0
        %v1781 = vsel %vm579, %v911, 0
        %v1784 = vsel %vm579, %v912, 0
        %v1787 = vsel %vm579, %v913, 0
        %v1790 = vsel %vm579, %v914, 0
        %v1793 = vsel %vm579, %v915, 0
        %v1796 = vsel %vm579, %v916, 0
        %v1799 = vsel %vm579, %v917, 0
        %1801 = vmatpush.msra.mxu0 0.0
        %1802 = vmatpush.msra.mxu0 0.0
        %1803 = vmatpush.msra.mxu0 0.0
        %1804 = vmatpush.msra.mxu0 0.0
        %1805 = vmatpush.msra.mxu0 0.0
        %1806 = vmatpush.msra.mxu0 0.0
        %1807 = vmatpush.msra.mxu0 0.0
        %1808 = vmatpush.msra.mxu0 0.0
        %1809 = vmatpush.msra.mxu0 0.0
        %1810 = vmatpush.msra.mxu0 0.0
        %1811 = vmatpush.msra.mxu0 0.0
        %1812 = vmatpush.msra.mxu0 0.0
        %1813 = vmatpush.msra.mxu0 0.0
        %1814 = vmatpush.msra.mxu0 0.0
        %1815 = vmatpush.msra.mxu0 %v1778
        %1816 = vmatpush.msra.mxu0 %v902
        %1817 = vmatmul.f32.gmra.mxu0 %v1586
        %v1818 = vpop.f32.mrf.mxu0
        %v1819 = vadd.f32 0.0, %v1818
        %1820 = vmatmul.f32.gmra.mxu0 %v1589
        %v1821 = vpop.f32.mrf.mxu0
        %v1822 = vadd.f32 0.0, %v1821
        %1823 = vmatmul.f32.gmra.mxu0 %v1592
        %v1824 = vpop.f32.mrf.mxu0
        %v1825 = vadd.f32 0.0, %v1824
        %1826 = vmatmul.f32.gmra.mxu0 %v1595
        %v1827 = vpop.f32.mrf.mxu0
        %v1828 = vadd.f32 0.0, %v1827
        %1829 = vmatmul.f32.gmra.mxu0 %v1598
        %v1830 = vpop.f32.mrf.mxu0
        %v1831 = vadd.f32 0.0, %v1830
        %1832 = vmatmul.f32.gmra.mxu0 %v1601
        %v1833 = vpop.f32.mrf.mxu0
        %v1834 = vadd.f32 0.0, %v1833
        %1835 = vmatmul.f32.gmra.mxu0 %v1604
        %v1836 = vpop.f32.mrf.mxu0
        %v1837 = vadd.f32 0.0, %v1836
        %1838 = vmatmul.f32.gmra.mxu0 %v1607
        %v1839 = vpop.f32.mrf.mxu0
        %v1840 = vadd.f32 0.0, %v1839
        %1841 = vmatmul.f32.gmra.mxu0 %v1610
        %v1842 = vpop.f32.mrf.mxu0
        %v1843 = vadd.f32 0.0, %v1842
        %1844 = vmatmul.f32.gmra.mxu0 %v1613
        %v1845 = vpop.f32.mrf.mxu0
        %v1846 = vadd.f32 0.0, %v1845
        %1847 = vmatmul.f32.gmra.mxu0 %v1616
        %v1848 = vpop.f32.mrf.mxu0
        %v1849 = vadd.f32 0.0, %v1848
        %1850 = vmatmul.f32.gmra.mxu0 %v1619
        %v1851 = vpop.f32.mrf.mxu0
        %v1852 = vadd.f32 0.0, %v1851
        %1853 = vmatmul.f32.gmra.mxu0 %v1622
        %v1854 = vpop.f32.mrf.mxu0
        %v1855 = vadd.f32 0.0, %v1854
        %1856 = vmatmul.f32.gmra.mxu0 %v1625
        %v1857 = vpop.f32.mrf.mxu0
        %v1858 = vadd.f32 0.0, %v1857
        %1859 = vmatmul.f32.gmra.mxu0 %v1628
        %v1860 = vpop.f32.mrf.mxu0
        %v1861 = vadd.f32 0.0, %v1860
        %1862 = vmatmul.f32.gmra.mxu0 %v1631
        %v1863 = vpop.f32.mrf.mxu0
        %v1864 = vadd.f32 0.0, %v1863
        %1865 = vmatmul.f32.gmra.mxu0 %v1634
        %v1866 = vpop.f32.mrf.mxu0
        %v1867 = vadd.f32 0.0, %v1866
        %1868 = vmatmul.f32.gmra.mxu0 %v1637
        %v1869 = vpop.f32.mrf.mxu0
        %v1870 = vadd.f32 0.0, %v1869
        %1871 = vmatmul.f32.gmra.mxu0 %v1640
        %v1872 = vpop.f32.mrf.mxu0
        %v1873 = vadd.f32 0.0, %v1872
        %1874 = vmatmul.f32.gmra.mxu0 %v1643
        %v1875 = vpop.f32.mrf.mxu0
        %v1876 = vadd.f32 0.0, %v1875
        %1877 = vmatmul.f32.gmra.mxu0 %v1646
        %v1878 = vpop.f32.mrf.mxu0
        %v1879 = vadd.f32 0.0, %v1878
        %1880 = vmatmul.f32.gmra.mxu0 %v1649
        %v1881 = vpop.f32.mrf.mxu0
        %v1882 = vadd.f32 0.0, %v1881
        %1883 = vmatmul.f32.gmra.mxu0 %v1652
        %v1884 = vpop.f32.mrf.mxu0
        %v1885 = vadd.f32 0.0, %v1884
        %1886 = vmatmul.f32.gmra.mxu0 %v1655
        %v1887 = vpop.f32.mrf.mxu0
        %v1888 = vadd.f32 0.0, %v1887
        %1889 = vmatmul.f32.gmra.mxu0 %v1658
        %v1890 = vpop.f32.mrf.mxu0
        %v1891 = vadd.f32 0.0, %v1890
        %1892 = vmatmul.f32.gmra.mxu0 %v1661
        %v1893 = vpop.f32.mrf.mxu0
        %v1894 = vadd.f32 0.0, %v1893
        %1895 = vmatmul.f32.gmra.mxu0 %v1664
        %v1896 = vpop.f32.mrf.mxu0
        %v1897 = vadd.f32 0.0, %v1896
        %1898 = vmatmul.f32.gmra.mxu0 %v1667
        %v1899 = vpop.f32.mrf.mxu0
        %v1900 = vadd.f32 0.0, %v1899
        %1901 = vmatmul.f32.gmra.mxu0 %v1670
        %v1902 = vpop.f32.mrf.mxu0
        %v1903 = vadd.f32 0.0, %v1902
        %1904 = vmatmul.f32.gmra.mxu0 %v1673
        %v1905 = vpop.f32.mrf.mxu0
        %v1906 = vadd.f32 0.0, %v1905
        %1907 = vmatmul.f32.gmra.mxu0 %v1676
        %v1908 = vpop.f32.mrf.mxu0
        %v1909 = vadd.f32 0.0, %v1908
        %1910 = vmatmul.f32.gmra.mxu0 %v1679
        %v1911 = vpop.f32.mrf.mxu0
        %v1912 = vadd.f32 0.0, %v1911
        %1913 = vmatmul.f32.gmra.mxu0 %v1682
        %v1914 = vpop.f32.mrf.mxu0
        %v1915 = vadd.f32 0.0, %v1914
        %1916 = vmatmul.f32.gmra.mxu0 %v1685
        %v1917 = vpop.f32.mrf.mxu0
        %v1918 = vadd.f32 0.0, %v1917
        %1919 = vmatmul.f32.gmra.mxu0 %v1688
        %v1920 = vpop.f32.mrf.mxu0
        %v1921 = vadd.f32 0.0, %v1920
        %1922 = vmatmul.f32.gmra.mxu0 %v1691
        %v1923 = vpop.f32.mrf.mxu0
        %v1924 = vadd.f32 0.0, %v1923
        %1925 = vmatmul.f32.gmra.mxu0 %v1694
        %v1926 = vpop.f32.mrf.mxu0
        %v1927 = vadd.f32 0.0, %v1926
        %1928 = vmatmul.f32.gmra.mxu0 %v1697
        %v1929 = vpop.f32.mrf.mxu0
        %v1930 = vadd.f32 0.0, %v1929
        %1931 = vmatmul.f32.gmra.mxu0 %v1700
        %v1932 = vpop.f32.mrf.mxu0
        %v1933 = vadd.f32 0.0, %v1932
        %1934 = vmatmul.f32.gmra.mxu0 %v1703
        %v1935 = vpop.f32.mrf.mxu0
        %v1936 = vadd.f32 0.0, %v1935
        %1937 = vmatmul.f32.gmra.mxu0 %v1706
        %v1938 = vpop.f32.mrf.mxu0
        %v1939 = vadd.f32 0.0, %v1938
        %1940 = vmatmul.f32.gmra.mxu0 %v1709
        %v1941 = vpop.f32.mrf.mxu0
        %v1942 = vadd.f32 0.0, %v1941
        %1943 = vmatmul.f32.gmra.mxu0 %v1712
        %v1944 = vpop.f32.mrf.mxu0
        %v1945 = vadd.f32 0.0, %v1944
        %1946 = vmatmul.f32.gmra.mxu0 %v1715
        %v1947 = vpop.f32.mrf.mxu0
        %v1948 = vadd.f32 0.0, %v1947
        %1949 = vmatmul.f32.gmra.mxu0 %v1718
        %v1950 = vpop.f32.mrf.mxu0
        %v1951 = vadd.f32 0.0, %v1950
        %1952 = vmatmul.f32.gmra.mxu0 %v1721
        %v1953 = vpop.f32.mrf.mxu0
        %v1954 = vadd.f32 0.0, %v1953
        %1955 = vmatmul.f32.gmra.mxu0 %v1724
        %v1956 = vpop.f32.mrf.mxu0
        %v1957 = vadd.f32 0.0, %v1956
        %1958 = vmatmul.f32.gmra.mxu0 %v1727
        %v1959 = vpop.f32.mrf.mxu0
        %v1960 = vadd.f32 0.0, %v1959
        %1961 = vmatmul.f32.gmra.mxu0 %v1730
        %v1962 = vpop.f32.mrf.mxu0
        %v1963 = vadd.f32 0.0, %v1962
        %1964 = vmatmul.f32.gmra.mxu0 %v1733
        %v1965 = vpop.f32.mrf.mxu0
        %v1966 = vadd.f32 0.0, %v1965
        %1967 = vmatmul.f32.gmra.mxu0 %v1736
        %v1968 = vpop.f32.mrf.mxu0
        %v1969 = vadd.f32 0.0, %v1968
        %1970 = vmatmul.f32.gmra.mxu0 %v1739
        %v1971 = vpop.f32.mrf.mxu0
        %v1972 = vadd.f32 0.0, %v1971
        %1973 = vmatmul.f32.gmra.mxu0 %v1742
        %v1974 = vpop.f32.mrf.mxu0
        %v1975 = vadd.f32 0.0, %v1974
        %1976 = vmatmul.f32.gmra.mxu0 %v1745
        %v1977 = vpop.f32.mrf.mxu0
        %v1978 = vadd.f32 0.0, %v1977
        %1979 = vmatmul.f32.gmra.mxu0 %v1748
        %v1980 = vpop.f32.mrf.mxu0
        %v1981 = vadd.f32 0.0, %v1980
        %1982 = vmatmul.f32.gmra.mxu0 %v1751
        %v1983 = vpop.f32.mrf.mxu0
        %v1984 = vadd.f32 0.0, %v1983
        %1985 = vmatmul.f32.gmra.mxu0 %v1754
        %v1986 = vpop.f32.mrf.mxu0
        %v1987 = vadd.f32 0.0, %v1986
        %1988 = vmatmul.f32.gmra.mxu0 %v1757
        %v1989 = vpop.f32.mrf.mxu0
        %v1990 = vadd.f32 0.0, %v1989
        %1991 = vmatmul.f32.gmra.mxu0 %v1760
        %v1992 = vpop.f32.mrf.mxu0
        %v1993 = vadd.f32 0.0, %v1992
        %1994 = vmatmul.f32.gmra.mxu0 %v1763
        %v1995 = vpop.f32.mrf.mxu0
        %v1996 = vadd.f32 0.0, %v1995
        %1997 = vmatmul.f32.gmra.mxu0 %v1766
        %v1998 = vpop.f32.mrf.mxu0
        %v1999 = vadd.f32 0.0, %v1998
        %2000 = vmatmul.f32.gmra.mxu0 %v1769
        %v2001 = vpop.f32.mrf.mxu0
        %v2002 = vadd.f32 0.0, %v2001
        %2003 = vmatmul.f32.gmra.mxu0 %v1772
        %v2004 = vpop.f32.mrf.mxu0
        %v2005 = vadd.f32 0.0, %v2004
        %2006 = vmatmul.f32.gmra.mxu0 %v1775
        %v2007 = vpop.f32.mrf.mxu0
        %v2008 = vadd.f32 0.0, %v2007
        %2009 = vdwg.mxu0
        %2010 = vmatpush.msra.mxu0 0.0
        %2011 = vmatpush.msra.mxu0 0.0
        %2012 = vmatpush.msra.mxu0 0.0
        %2013 = vmatpush.msra.mxu0 0.0
        %2014 = vmatpush.msra.mxu0 0.0
        %2015 = vmatpush.msra.mxu0 0.0
        %2016 = vmatpush.msra.mxu0 0.0
        %2017 = vmatpush.msra.mxu0 0.0
        %2018 = vmatpush.msra.mxu0 0.0
        %2019 = vmatpush.msra.mxu0 0.0
        %2020 = vmatpush.msra.mxu0 0.0
        %2021 = vmatpush.msra.mxu0 0.0
        %2022 = vmatpush.msra.mxu0 0.0
        %2023 = vmatpush.msra.mxu0 0.0
        %2024 = vmatpush.msra.mxu0 %v1781
        %2025 = vmatpush.msra.mxu0 %v903
        %2026 = vmatmul.f32.gmra.mxu0 %v1586
        %v2027 = vpop.f32.mrf.mxu0
        %v2028 = vadd.f32 0.0, %v2027
        %2029 = vmatmul.f32.gmra.mxu0 %v1589
        %v2030 = vpop.f32.mrf.mxu0
        %v2031 = vadd.f32 0.0, %v2030
        %2032 = vmatmul.f32.gmra.mxu0 %v1592
        %v2033 = vpop.f32.mrf.mxu0
        %v2034 = vadd.f32 0.0, %v2033
        %2035 = vmatmul.f32.gmra.mxu0 %v1595
        %v2036 = vpop.f32.mrf.mxu0
        %v2037 = vadd.f32 0.0, %v2036
        %2038 = vmatmul.f32.gmra.mxu0 %v1598
        %v2039 = vpop.f32.mrf.mxu0
        %v2040 = vadd.f32 0.0, %v2039
        %2041 = vmatmul.f32.gmra.mxu0 %v1601
        %v2042 = vpop.f32.mrf.mxu0
        %v2043 = vadd.f32 0.0, %v2042
        %2044 = vmatmul.f32.gmra.mxu0 %v1604
        %v2045 = vpop.f32.mrf.mxu0
        %v2046 = vadd.f32 0.0, %v2045
        %2047 = vmatmul.f32.gmra.mxu0 %v1607
        %v2048 = vpop.f32.mrf.mxu0
        %v2049 = vadd.f32 0.0, %v2048
        %2050 = vmatmul.f32.gmra.mxu0 %v1610
        %v2051 = vpop.f32.mrf.mxu0
        %v2052 = vadd.f32 0.0, %v2051
        %2053 = vmatmul.f32.gmra.mxu0 %v1613
        %v2054 = vpop.f32.mrf.mxu0
        %v2055 = vadd.f32 0.0, %v2054
        %2056 = vmatmul.f32.gmra.mxu0 %v1616
        %v2057 = vpop.f32.mrf.mxu0
        %v2058 = vadd.f32 0.0, %v2057
        %2059 = vmatmul.f32.gmra.mxu0 %v1619
        %v2060 = vpop.f32.mrf.mxu0
        %v2061 = vadd.f32 0.0, %v2060
        %2062 = vmatmul.f32.gmra.mxu0 %v1622
        %v2063 = vpop.f32.mrf.mxu0
        %v2064 = vadd.f32 0.0, %v2063
        %2065 = vmatmul.f32.gmra.mxu0 %v1625
        %v2066 = vpop.f32.mrf.mxu0
        %v2067 = vadd.f32 0.0, %v2066
        %2068 = vmatmul.f32.gmra.mxu0 %v1628
        %v2069 = vpop.f32.mrf.mxu0
        %v2070 = vadd.f32 0.0, %v2069
        %2071 = vmatmul.f32.gmra.mxu0 %v1631
        %v2072 = vpop.f32.mrf.mxu0
        %v2073 = vadd.f32 0.0, %v2072
        %2074 = vmatmul.f32.gmra.mxu0 %v1634
        %v2075 = vpop.f32.mrf.mxu0
        %v2076 = vadd.f32 0.0, %v2075
        %2077 = vmatmul.f32.gmra.mxu0 %v1637
        %v2078 = vpop.f32.mrf.mxu0
        %v2079 = vadd.f32 0.0, %v2078
        %2080 = vmatmul.f32.gmra.mxu0 %v1640
        %v2081 = vpop.f32.mrf.mxu0
        %v2082 = vadd.f32 0.0, %v2081
        %2083 = vmatmul.f32.gmra.mxu0 %v1643
        %v2084 = vpop.f32.mrf.mxu0
        %v2085 = vadd.f32 0.0, %v2084
        %2086 = vmatmul.f32.gmra.mxu0 %v1646
        %v2087 = vpop.f32.mrf.mxu0
        %v2088 = vadd.f32 0.0, %v2087
        %2089 = vmatmul.f32.gmra.mxu0 %v1649
        %v2090 = vpop.f32.mrf.mxu0
        %v2091 = vadd.f32 0.0, %v2090
        %2092 = vmatmul.f32.gmra.mxu0 %v1652
        %v2093 = vpop.f32.mrf.mxu0
        %v2094 = vadd.f32 0.0, %v2093
        %2095 = vmatmul.f32.gmra.mxu0 %v1655
        %v2096 = vpop.f32.mrf.mxu0
        %v2097 = vadd.f32 0.0, %v2096
        %2098 = vmatmul.f32.gmra.mxu0 %v1658
        %v2099 = vpop.f32.mrf.mxu0
        %v2100 = vadd.f32 0.0, %v2099
        %2101 = vmatmul.f32.gmra.mxu0 %v1661
        %v2102 = vpop.f32.mrf.mxu0
        %v2103 = vadd.f32 0.0, %v2102
        %2104 = vmatmul.f32.gmra.mxu0 %v1664
        %v2105 = vpop.f32.mrf.mxu0
        %v2106 = vadd.f32 0.0, %v2105
        %2107 = vmatmul.f32.gmra.mxu0 %v1667
        %v2108 = vpop.f32.mrf.mxu0
        %v2109 = vadd.f32 0.0, %v2108
        %2110 = vmatmul.f32.gmra.mxu0 %v1670
        %v2111 = vpop.f32.mrf.mxu0
        %v2112 = vadd.f32 0.0, %v2111
        %2113 = vmatmul.f32.gmra.mxu0 %v1673
        %v2114 = vpop.f32.mrf.mxu0
        %v2115 = vadd.f32 0.0, %v2114
        %2116 = vmatmul.f32.gmra.mxu0 %v1676
        %v2117 = vpop.f32.mrf.mxu0
        %v2118 = vadd.f32 0.0, %v2117
        %2119 = vmatmul.f32.gmra.mxu0 %v1679
        %v2120 = vpop.f32.mrf.mxu0
        %v2121 = vadd.f32 0.0, %v2120
        %2122 = vmatmul.f32.gmra.mxu0 %v1682
        %v2123 = vpop.f32.mrf.mxu0
        %v2124 = vadd.f32 0.0, %v2123
        %2125 = vmatmul.f32.gmra.mxu0 %v1685
        %v2126 = vpop.f32.mrf.mxu0
        %v2127 = vadd.f32 0.0, %v2126
        %2128 = vmatmul.f32.gmra.mxu0 %v1688
        %v2129 = vpop.f32.mrf.mxu0
        %v2130 = vadd.f32 0.0, %v2129
        %2131 = vmatmul.f32.gmra.mxu0 %v1691
        %v2132 = vpop.f32.mrf.mxu0
        %v2133 = vadd.f32 0.0, %v2132
        %2134 = vmatmul.f32.gmra.mxu0 %v1694
        %v2135 = vpop.f32.mrf.mxu0
        %v2136 = vadd.f32 0.0, %v2135
        %2137 = vmatmul.f32.gmra.mxu0 %v1697
        %v2138 = vpop.f32.mrf.mxu0
        %v2139 = vadd.f32 0.0, %v2138
        %2140 = vmatmul.f32.gmra.mxu0 %v1700
        %v2141 = vpop.f32.mrf.mxu0
        %v2142 = vadd.f32 0.0, %v2141
        %2143 = vmatmul.f32.gmra.mxu0 %v1703
        %v2144 = vpop.f32.mrf.mxu0
        %v2145 = vadd.f32 0.0, %v2144
        %2146 = vmatmul.f32.gmra.mxu0 %v1706
        %v2147 = vpop.f32.mrf.mxu0
        %v2148 = vadd.f32 0.0, %v2147
        %2149 = vmatmul.f32.gmra.mxu0 %v1709
        %v2150 = vpop.f32.mrf.mxu0
        %v2151 = vadd.f32 0.0, %v2150
        %2152 = vmatmul.f32.gmra.mxu0 %v1712
        %v2153 = vpop.f32.mrf.mxu0
        %v2154 = vadd.f32 0.0, %v2153
        %2155 = vmatmul.f32.gmra.mxu0 %v1715
        %v2156 = vpop.f32.mrf.mxu0
        %v2157 = vadd.f32 0.0, %v2156
        %2158 = vmatmul.f32.gmra.mxu0 %v1718
        %v2159 = vpop.f32.mrf.mxu0
        %v2160 = vadd.f32 0.0, %v2159
        %2161 = vmatmul.f32.gmra.mxu0 %v1721
        %v2162 = vpop.f32.mrf.mxu0
        %v2163 = vadd.f32 0.0, %v2162
        %2164 = vmatmul.f32.gmra.mxu0 %v1724
        %v2165 = vpop.f32.mrf.mxu0
        %v2166 = vadd.f32 0.0, %v2165
        %2167 = vmatmul.f32.gmra.mxu0 %v1727
        %v2168 = vpop.f32.mrf.mxu0
        %v2169 = vadd.f32 0.0, %v2168
        %2170 = vmatmul.f32.gmra.mxu0 %v1730
        %v2171 = vpop.f32.mrf.mxu0
        %v2172 = vadd.f32 0.0, %v2171
        %2173 = vmatmul.f32.gmra.mxu0 %v1733
        %v2174 = vpop.f32.mrf.mxu0
        %v2175 = vadd.f32 0.0, %v2174
        %2176 = vmatmul.f32.gmra.mxu0 %v1736
        %v2177 = vpop.f32.mrf.mxu0
        %v2178 = vadd.f32 0.0, %v2177
        %2179 = vmatmul.f32.gmra.mxu0 %v1739
        %v2180 = vpop.f32.mrf.mxu0
        %v2181 = vadd.f32 0.0, %v2180
        %2182 = vmatmul.f32.gmra.mxu0 %v1742
        %v2183 = vpop.f32.mrf.mxu0
        %v2184 = vadd.f32 0.0, %v2183
        %2185 = vmatmul.f32.gmra.mxu0 %v1745
        %v2186 = vpop.f32.mrf.mxu0
        %v2187 = vadd.f32 0.0, %v2186
        %2188 = vmatmul.f32.gmra.mxu0 %v1748
        %v2189 = vpop.f32.mrf.mxu0
        %v2190 = vadd.f32 0.0, %v2189
        %2191 = vmatmul.f32.gmra.mxu0 %v1751
        %v2192 = vpop.f32.mrf.mxu0
        %v2193 = vadd.f32 0.0, %v2192
        %2194 = vmatmul.f32.gmra.mxu0 %v1754
        %v2195 = vpop.f32.mrf.mxu0
        %v2196 = vadd.f32 0.0, %v2195
        %2197 = vmatmul.f32.gmra.mxu0 %v1757
        %v2198 = vpop.f32.mrf.mxu0
        %v2199 = vadd.f32 0.0, %v2198
        %2200 = vmatmul.f32.gmra.mxu0 %v1760
        %v2201 = vpop.f32.mrf.mxu0
        %v2202 = vadd.f32 0.0, %v2201
        %2203 = vmatmul.f32.gmra.mxu0 %v1763
        %v2204 = vpop.f32.mrf.mxu0
        %v2205 = vadd.f32 0.0, %v2204
        %2206 = vmatmul.f32.gmra.mxu0 %v1766
        %v2207 = vpop.f32.mrf.mxu0
        %v2208 = vadd.f32 0.0, %v2207
        %2209 = vmatmul.f32.gmra.mxu0 %v1769
        %v2210 = vpop.f32.mrf.mxu0
        %v2211 = vadd.f32 0.0, %v2210
        %2212 = vmatmul.f32.gmra.mxu0 %v1772
        %v2213 = vpop.f32.mrf.mxu0
        %v2214 = vadd.f32 0.0, %v2213
        %2215 = vmatmul.f32.gmra.mxu0 %v1775
        %v2216 = vpop.f32.mrf.mxu0
        %v2217 = vadd.f32 0.0, %v2216
        %2218 = vdwg.mxu0
        %2219 = vmatpush.msra.mxu0 0.0
        %2220 = vmatpush.msra.mxu0 0.0
        %2221 = vmatpush.msra.mxu0 0.0
        %2222 = vmatpush.msra.mxu0 0.0
        %2223 = vmatpush.msra.mxu0 0.0
        %2224 = vmatpush.msra.mxu0 0.0
        %2225 = vmatpush.msra.mxu0 0.0
        %2226 = vmatpush.msra.mxu0 0.0
        %2227 = vmatpush.msra.mxu0 0.0
        %2228 = vmatpush.msra.mxu0 0.0
        %2229 = vmatpush.msra.mxu0 0.0
        %2230 = vmatpush.msra.mxu0 0.0
        %2231 = vmatpush.msra.mxu0 0.0
        %2232 = vmatpush.msra.mxu0 0.0
        %2233 = vmatpush.msra.mxu0 %v1784
        %2234 = vmatpush.msra.mxu0 %v904
        %2235 = vmatmul.f32.gmra.mxu0 %v1586
        %v2236 = vpop.f32.mrf.mxu0
        %v2237 = vadd.f32 0.0, %v2236
        %2238 = vmatmul.f32.gmra.mxu0 %v1589
        %v2239 = vpop.f32.mrf.mxu0
        %v2240 = vadd.f32 0.0, %v2239
        %2241 = vmatmul.f32.gmra.mxu0 %v1592
        %v2242 = vpop.f32.mrf.mxu0
        %v2243 = vadd.f32 0.0, %v2242
        %2244 = vmatmul.f32.gmra.mxu0 %v1595
        %v2245 = vpop.f32.mrf.mxu0
        %v2246 = vadd.f32 0.0, %v2245
        %2247 = vmatmul.f32.gmra.mxu0 %v1598
        %v2248 = vpop.f32.mrf.mxu0
        %v2249 = vadd.f32 0.0, %v2248
        %2250 = vmatmul.f32.gmra.mxu0 %v1601
        %v2251 = vpop.f32.mrf.mxu0
        %v2252 = vadd.f32 0.0, %v2251
        %2253 = vmatmul.f32.gmra.mxu0 %v1604
        %v2254 = vpop.f32.mrf.mxu0
        %v2255 = vadd.f32 0.0, %v2254
        %2256 = vmatmul.f32.gmra.mxu0 %v1607
        %v2257 = vpop.f32.mrf.mxu0
        %v2258 = vadd.f32 0.0, %v2257
        %2259 = vmatmul.f32.gmra.mxu0 %v1610
        %v2260 = vpop.f32.mrf.mxu0
        %v2261 = vadd.f32 0.0, %v2260
        %2262 = vmatmul.f32.gmra.mxu0 %v1613
        %v2263 = vpop.f32.mrf.mxu0
        %v2264 = vadd.f32 0.0, %v2263
        %2265 = vmatmul.f32.gmra.mxu0 %v1616
        %v2266 = vpop.f32.mrf.mxu0
        %v2267 = vadd.f32 0.0, %v2266
        %2268 = vmatmul.f32.gmra.mxu0 %v1619
        %v2269 = vpop.f32.mrf.mxu0
        %v2270 = vadd.f32 0.0, %v2269
        %2271 = vmatmul.f32.gmra.mxu0 %v1622
        %v2272 = vpop.f32.mrf.mxu0
        %v2273 = vadd.f32 0.0, %v2272
        %2274 = vmatmul.f32.gmra.mxu0 %v1625
        %v2275 = vpop.f32.mrf.mxu0
        %v2276 = vadd.f32 0.0, %v2275
        %2277 = vmatmul.f32.gmra.mxu0 %v1628
        %v2278 = vpop.f32.mrf.mxu0
        %v2279 = vadd.f32 0.0, %v2278
        %2280 = vmatmul.f32.gmra.mxu0 %v1631
        %v2281 = vpop.f32.mrf.mxu0
        %v2282 = vadd.f32 0.0, %v2281
        %2283 = vmatmul.f32.gmra.mxu0 %v1634
        %v2284 = vpop.f32.mrf.mxu0
        %v2285 = vadd.f32 0.0, %v2284
        %2286 = vmatmul.f32.gmra.mxu0 %v1637
        %v2287 = vpop.f32.mrf.mxu0
        %v2288 = vadd.f32 0.0, %v2287
        %2289 = vmatmul.f32.gmra.mxu0 %v1640
        %v2290 = vpop.f32.mrf.mxu0
        %v2291 = vadd.f32 0.0, %v2290
        %2292 = vmatmul.f32.gmra.mxu0 %v1643
        %v2293 = vpop.f32.mrf.mxu0
        %v2294 = vadd.f32 0.0, %v2293
        %2295 = vmatmul.f32.gmra.mxu0 %v1646
        %v2296 = vpop.f32.mrf.mxu0
        %v2297 = vadd.f32 0.0, %v2296
        %2298 = vmatmul.f32.gmra.mxu0 %v1649
        %v2299 = vpop.f32.mrf.mxu0
        %v2300 = vadd.f32 0.0, %v2299
        %2301 = vmatmul.f32.gmra.mxu0 %v1652
        %v2302 = vpop.f32.mrf.mxu0
        %v2303 = vadd.f32 0.0, %v2302
        %2304 = vmatmul.f32.gmra.mxu0 %v1655
        %v2305 = vpop.f32.mrf.mxu0
        %v2306 = vadd.f32 0.0, %v2305
        %2307 = vmatmul.f32.gmra.mxu0 %v1658
        %v2308 = vpop.f32.mrf.mxu0
        %v2309 = vadd.f32 0.0, %v2308
        %2310 = vmatmul.f32.gmra.mxu0 %v1661
        %v2311 = vpop.f32.mrf.mxu0
        %v2312 = vadd.f32 0.0, %v2311
        %2313 = vmatmul.f32.gmra.mxu0 %v1664
        %v2314 = vpop.f32.mrf.mxu0
        %v2315 = vadd.f32 0.0, %v2314
        %2316 = vmatmul.f32.gmra.mxu0 %v1667
        %v2317 = vpop.f32.mrf.mxu0
        %v2318 = vadd.f32 0.0, %v2317
        %2319 = vmatmul.f32.gmra.mxu0 %v1670
        %v2320 = vpop.f32.mrf.mxu0
        %v2321 = vadd.f32 0.0, %v2320
        %2322 = vmatmul.f32.gmra.mxu0 %v1673
        %v2323 = vpop.f32.mrf.mxu0
        %v2324 = vadd.f32 0.0, %v2323
        %2325 = vmatmul.f32.gmra.mxu0 %v1676
        %v2326 = vpop.f32.mrf.mxu0
        %v2327 = vadd.f32 0.0, %v2326
        %2328 = vmatmul.f32.gmra.mxu0 %v1679
        %v2329 = vpop.f32.mrf.mxu0
        %v2330 = vadd.f32 0.0, %v2329
        %2331 = vmatmul.f32.gmra.mxu0 %v1682
        %v2332 = vpop.f32.mrf.mxu0
        %v2333 = vadd.f32 0.0, %v2332
        %2334 = vmatmul.f32.gmra.mxu0 %v1685
        %v2335 = vpop.f32.mrf.mxu0
        %v2336 = vadd.f32 0.0, %v2335
        %2337 = vmatmul.f32.gmra.mxu0 %v1688
        %v2338 = vpop.f32.mrf.mxu0
        %v2339 = vadd.f32 0.0, %v2338
        %2340 = vmatmul.f32.gmra.mxu0 %v1691
        %v2341 = vpop.f32.mrf.mxu0
        %v2342 = vadd.f32 0.0, %v2341
        %2343 = vmatmul.f32.gmra.mxu0 %v1694
        %v2344 = vpop.f32.mrf.mxu0
        %v2345 = vadd.f32 0.0, %v2344
        %2346 = vmatmul.f32.gmra.mxu0 %v1697
        %v2347 = vpop.f32.mrf.mxu0
        %v2348 = vadd.f32 0.0, %v2347
        %2349 = vmatmul.f32.gmra.mxu0 %v1700
        %v2350 = vpop.f32.mrf.mxu0
        %v2351 = vadd.f32 0.0, %v2350
        %2352 = vmatmul.f32.gmra.mxu0 %v1703
        %v2353 = vpop.f32.mrf.mxu0
        %v2354 = vadd.f32 0.0, %v2353
        %2355 = vmatmul.f32.gmra.mxu0 %v1706
        %v2356 = vpop.f32.mrf.mxu0
        %v2357 = vadd.f32 0.0, %v2356
        %2358 = vmatmul.f32.gmra.mxu0 %v1709
        %v2359 = vpop.f32.mrf.mxu0
        %v2360 = vadd.f32 0.0, %v2359
        %2361 = vmatmul.f32.gmra.mxu0 %v1712
        %v2362 = vpop.f32.mrf.mxu0
        %v2363 = vadd.f32 0.0, %v2362
        %2364 = vmatmul.f32.gmra.mxu0 %v1715
        %v2365 = vpop.f32.mrf.mxu0
        %v2366 = vadd.f32 0.0, %v2365
        %2367 = vmatmul.f32.gmra.mxu0 %v1718
        %v2368 = vpop.f32.mrf.mxu0
        %v2369 = vadd.f32 0.0, %v2368
        %2370 = vmatmul.f32.gmra.mxu0 %v1721
        %v2371 = vpop.f32.mrf.mxu0
        %v2372 = vadd.f32 0.0, %v2371
        %2373 = vmatmul.f32.gmra.mxu0 %v1724
        %v2374 = vpop.f32.mrf.mxu0
        %v2375 = vadd.f32 0.0, %v2374
        %2376 = vmatmul.f32.gmra.mxu0 %v1727
        %v2377 = vpop.f32.mrf.mxu0
        %v2378 = vadd.f32 0.0, %v2377
        %2379 = vmatmul.f32.gmra.mxu0 %v1730
        %v2380 = vpop.f32.mrf.mxu0
        %v2381 = vadd.f32 0.0, %v2380
        %2382 = vmatmul.f32.gmra.mxu0 %v1733
        %v2383 = vpop.f32.mrf.mxu0
        %v2384 = vadd.f32 0.0, %v2383
        %2385 = vmatmul.f32.gmra.mxu0 %v1736
        %v2386 = vpop.f32.mrf.mxu0
        %v2387 = vadd.f32 0.0, %v2386
        %2388 = vmatmul.f32.gmra.mxu0 %v1739
        %v2389 = vpop.f32.mrf.mxu0
        %v2390 = vadd.f32 0.0, %v2389
        %2391 = vmatmul.f32.gmra.mxu0 %v1742
        %v2392 = vpop.f32.mrf.mxu0
        %v2393 = vadd.f32 0.0, %v2392
        %2394 = vmatmul.f32.gmra.mxu0 %v1745
        %v2395 = vpop.f32.mrf.mxu0
        %v2396 = vadd.f32 0.0, %v2395
        %2397 = vmatmul.f32.gmra.mxu0 %v1748
        %v2398 = vpop.f32.mrf.mxu0
        %v2399 = vadd.f32 0.0, %v2398
        %2400 = vmatmul.f32.gmra.mxu0 %v1751
        %v2401 = vpop.f32.mrf.mxu0
        %v2402 = vadd.f32 0.0, %v2401
        %2403 = vmatmul.f32.gmra.mxu0 %v1754
        %v2404 = vpop.f32.mrf.mxu0
        %v2405 = vadd.f32 0.0, %v2404
        %2406 = vmatmul.f32.gmra.mxu0 %v1757
        %v2407 = vpop.f32.mrf.mxu0
        %v2408 = vadd.f32 0.0, %v2407
        %2409 = vmatmul.f32.gmra.mxu0 %v1760
        %v2410 = vpop.f32.mrf.mxu0
        %v2411 = vadd.f32 0.0, %v2410
        %2412 = vmatmul.f32.gmra.mxu0 %v1763
        %v2413 = vpop.f32.mrf.mxu0
        %v2414 = vadd.f32 0.0, %v2413
        %2415 = vmatmul.f32.gmra.mxu0 %v1766
        %v2416 = vpop.f32.mrf.mxu0
        %v2417 = vadd.f32 0.0, %v2416
        %2418 = vmatmul.f32.gmra.mxu0 %v1769
        %v2419 = vpop.f32.mrf.mxu0
        %v2420 = vadd.f32 0.0, %v2419
        %2421 = vmatmul.f32.gmra.mxu0 %v1772
        %v2422 = vpop.f32.mrf.mxu0
        %v2423 = vadd.f32 0.0, %v2422
        %2424 = vmatmul.f32.gmra.mxu0 %v1775
        %v2425 = vpop.f32.mrf.mxu0
        %v2426 = vadd.f32 0.0, %v2425
        %2427 = vdwg.mxu0
        %2428 = vmatpush.msra.mxu0 0.0
        %2429 = vmatpush.msra.mxu0 0.0
        %2430 = vmatpush.msra.mxu0 0.0
        %2431 = vmatpush.msra.mxu0 0.0
        %2432 = vmatpush.msra.mxu0 0.0
        %2433 = vmatpush.msra.mxu0 0.0
        %2434 = vmatpush.msra.mxu0 0.0
        %2435 = vmatpush.msra.mxu0 0.0
        %2436 = vmatpush.msra.mxu0 0.0
        %2437 = vmatpush.msra.mxu0 0.0
        %2438 = vmatpush.msra.mxu0 0.0
        %2439 = vmatpush.msra.mxu0 0.0
        %2440 = vmatpush.msra.mxu0 0.0
        %2441 = vmatpush.msra.mxu0 0.0
        %2442 = vmatpush.msra.mxu0 %v1787
        %2443 = vmatpush.msra.mxu0 %v905
        %2444 = vmatmul.f32.gmra.mxu0 %v1586
        %v2445 = vpop.f32.mrf.mxu0
        %v2446 = vadd.f32 0.0, %v2445
        %2447 = vmatmul.f32.gmra.mxu0 %v1589
        %v2448 = vpop.f32.mrf.mxu0
        %v2449 = vadd.f32 0.0, %v2448
        %2450 = vmatmul.f32.gmra.mxu0 %v1592
        %v2451 = vpop.f32.mrf.mxu0
        %v2452 = vadd.f32 0.0, %v2451
        %2453 = vmatmul.f32.gmra.mxu0 %v1595
        %v2454 = vpop.f32.mrf.mxu0
        %v2455 = vadd.f32 0.0, %v2454
        %2456 = vmatmul.f32.gmra.mxu0 %v1598
        %v2457 = vpop.f32.mrf.mxu0
        %v2458 = vadd.f32 0.0, %v2457
        %2459 = vmatmul.f32.gmra.mxu0 %v1601
        %v2460 = vpop.f32.mrf.mxu0
        %v2461 = vadd.f32 0.0, %v2460
        %2462 = vmatmul.f32.gmra.mxu0 %v1604
        %v2463 = vpop.f32.mrf.mxu0
        %v2464 = vadd.f32 0.0, %v2463
        %2465 = vmatmul.f32.gmra.mxu0 %v1607
        %v2466 = vpop.f32.mrf.mxu0
        %v2467 = vadd.f32 0.0, %v2466
        %2468 = vmatmul.f32.gmra.mxu0 %v1610
        %v2469 = vpop.f32.mrf.mxu0
        %v2470 = vadd.f32 0.0, %v2469
        %2471 = vmatmul.f32.gmra.mxu0 %v1613
        %v2472 = vpop.f32.mrf.mxu0
        %v2473 = vadd.f32 0.0, %v2472
        %2474 = vmatmul.f32.gmra.mxu0 %v1616
        %v2475 = vpop.f32.mrf.mxu0
        %v2476 = vadd.f32 0.0, %v2475
        %2477 = vmatmul.f32.gmra.mxu0 %v1619
        %v2478 = vpop.f32.mrf.mxu0
        %v2479 = vadd.f32 0.0, %v2478
        %2480 = vmatmul.f32.gmra.mxu0 %v1622
        %v2481 = vpop.f32.mrf.mxu0
        %v2482 = vadd.f32 0.0, %v2481
        %2483 = vmatmul.f32.gmra.mxu0 %v1625
        %v2484 = vpop.f32.mrf.mxu0
        %v2485 = vadd.f32 0.0, %v2484
        %2486 = vmatmul.f32.gmra.mxu0 %v1628
        %v2487 = vpop.f32.mrf.mxu0
        %v2488 = vadd.f32 0.0, %v2487
        %2489 = vmatmul.f32.gmra.mxu0 %v1631
        %v2490 = vpop.f32.mrf.mxu0
        %v2491 = vadd.f32 0.0, %v2490
        %2492 = vmatmul.f32.gmra.mxu0 %v1634
        %v2493 = vpop.f32.mrf.mxu0
        %v2494 = vadd.f32 0.0, %v2493
        %2495 = vmatmul.f32.gmra.mxu0 %v1637
        %v2496 = vpop.f32.mrf.mxu0
        %v2497 = vadd.f32 0.0, %v2496
        %2498 = vmatmul.f32.gmra.mxu0 %v1640
        %v2499 = vpop.f32.mrf.mxu0
        %v2500 = vadd.f32 0.0, %v2499
        %2501 = vmatmul.f32.gmra.mxu0 %v1643
        %v2502 = vpop.f32.mrf.mxu0
        %v2503 = vadd.f32 0.0, %v2502
        %2504 = vmatmul.f32.gmra.mxu0 %v1646
        %v2505 = vpop.f32.mrf.mxu0
        %v2506 = vadd.f32 0.0, %v2505
        %2507 = vmatmul.f32.gmra.mxu0 %v1649
        %v2508 = vpop.f32.mrf.mxu0
        %v2509 = vadd.f32 0.0, %v2508
        %2510 = vmatmul.f32.gmra.mxu0 %v1652
        %v2511 = vpop.f32.mrf.mxu0
        %v2512 = vadd.f32 0.0, %v2511
        %2513 = vmatmul.f32.gmra.mxu0 %v1655
        %v2514 = vpop.f32.mrf.mxu0
        %v2515 = vadd.f32 0.0, %v2514
        %2516 = vmatmul.f32.gmra.mxu0 %v1658
        %v2517 = vpop.f32.mrf.mxu0
        %v2518 = vadd.f32 0.0, %v2517
        %2519 = vmatmul.f32.gmra.mxu0 %v1661
        %v2520 = vpop.f32.mrf.mxu0
        %v2521 = vadd.f32 0.0, %v2520
        %2522 = vmatmul.f32.gmra.mxu0 %v1664
        %v2523 = vpop.f32.mrf.mxu0
        %v2524 = vadd.f32 0.0, %v2523
        %2525 = vmatmul.f32.gmra.mxu0 %v1667
        %v2526 = vpop.f32.mrf.mxu0
        %v2527 = vadd.f32 0.0, %v2526
        %2528 = vmatmul.f32.gmra.mxu0 %v1670
        %v2529 = vpop.f32.mrf.mxu0
        %v2530 = vadd.f32 0.0, %v2529
        %2531 = vmatmul.f32.gmra.mxu0 %v1673
        %v2532 = vpop.f32.mrf.mxu0
        %v2533 = vadd.f32 0.0, %v2532
        %2534 = vmatmul.f32.gmra.mxu0 %v1676
        %v2535 = vpop.f32.mrf.mxu0
        %v2536 = vadd.f32 0.0, %v2535
        %2537 = vmatmul.f32.gmra.mxu0 %v1679
        %v2538 = vpop.f32.mrf.mxu0
        %v2539 = vadd.f32 0.0, %v2538
        %2540 = vmatmul.f32.gmra.mxu0 %v1682
        %v2541 = vpop.f32.mrf.mxu0
        %v2542 = vadd.f32 0.0, %v2541
        %2543 = vmatmul.f32.gmra.mxu0 %v1685
        %v2544 = vpop.f32.mrf.mxu0
        %v2545 = vadd.f32 0.0, %v2544
        %2546 = vmatmul.f32.gmra.mxu0 %v1688
        %v2547 = vpop.f32.mrf.mxu0
        %v2548 = vadd.f32 0.0, %v2547
        %2549 = vmatmul.f32.gmra.mxu0 %v1691
        %v2550 = vpop.f32.mrf.mxu0
        %v2551 = vadd.f32 0.0, %v2550
        %2552 = vmatmul.f32.gmra.mxu0 %v1694
        %v2553 = vpop.f32.mrf.mxu0
        %v2554 = vadd.f32 0.0, %v2553
        %2555 = vmatmul.f32.gmra.mxu0 %v1697
        %v2556 = vpop.f32.mrf.mxu0
        %v2557 = vadd.f32 0.0, %v2556
        %2558 = vmatmul.f32.gmra.mxu0 %v1700
        %v2559 = vpop.f32.mrf.mxu0
        %v2560 = vadd.f32 0.0, %v2559
        %2561 = vmatmul.f32.gmra.mxu0 %v1703
        %v2562 = vpop.f32.mrf.mxu0
        %v2563 = vadd.f32 0.0, %v2562
        %2564 = vmatmul.f32.gmra.mxu0 %v1706
        %v2565 = vpop.f32.mrf.mxu0
        %v2566 = vadd.f32 0.0, %v2565
        %2567 = vmatmul.f32.gmra.mxu0 %v1709
        %v2568 = vpop.f32.mrf.mxu0
        %v2569 = vadd.f32 0.0, %v2568
        %2570 = vmatmul.f32.gmra.mxu0 %v1712
        %v2571 = vpop.f32.mrf.mxu0
        %v2572 = vadd.f32 0.0, %v2571
        %2573 = vmatmul.f32.gmra.mxu0 %v1715
        %v2574 = vpop.f32.mrf.mxu0
        %v2575 = vadd.f32 0.0, %v2574
        %2576 = vmatmul.f32.gmra.mxu0 %v1718
        %v2577 = vpop.f32.mrf.mxu0
        %v2578 = vadd.f32 0.0, %v2577
        %2579 = vmatmul.f32.gmra.mxu0 %v1721
        %v2580 = vpop.f32.mrf.mxu0
        %v2581 = vadd.f32 0.0, %v2580
        %2582 = vmatmul.f32.gmra.mxu0 %v1724
        %v2583 = vpop.f32.mrf.mxu0
        %v2584 = vadd.f32 0.0, %v2583
        %2585 = vmatmul.f32.gmra.mxu0 %v1727
        %v2586 = vpop.f32.mrf.mxu0
        %v2587 = vadd.f32 0.0, %v2586
        %2588 = vmatmul.f32.gmra.mxu0 %v1730
        %v2589 = vpop.f32.mrf.mxu0
        %v2590 = vadd.f32 0.0, %v2589
        %2591 = vmatmul.f32.gmra.mxu0 %v1733
        %v2592 = vpop.f32.mrf.mxu0
        %v2593 = vadd.f32 0.0, %v2592
        %2594 = vmatmul.f32.gmra.mxu0 %v1736
        %v2595 = vpop.f32.mrf.mxu0
        %v2596 = vadd.f32 0.0, %v2595
        %2597 = vmatmul.f32.gmra.mxu0 %v1739
        %v2598 = vpop.f32.mrf.mxu0
        %v2599 = vadd.f32 0.0, %v2598
        %2600 = vmatmul.f32.gmra.mxu0 %v1742
        %v2601 = vpop.f32.mrf.mxu0
        %v2602 = vadd.f32 0.0, %v2601
        %2603 = vmatmul.f32.gmra.mxu0 %v1745
        %v2604 = vpop.f32.mrf.mxu0
        %v2605 = vadd.f32 0.0, %v2604
        %2606 = vmatmul.f32.gmra.mxu0 %v1748
        %v2607 = vpop.f32.mrf.mxu0
        %v2608 = vadd.f32 0.0, %v2607
        %2609 = vmatmul.f32.gmra.mxu0 %v1751
        %v2610 = vpop.f32.mrf.mxu0
        %v2611 = vadd.f32 0.0, %v2610
        %2612 = vmatmul.f32.gmra.mxu0 %v1754
        %v2613 = vpop.f32.mrf.mxu0
        %v2614 = vadd.f32 0.0, %v2613
        %2615 = vmatmul.f32.gmra.mxu0 %v1757
        %v2616 = vpop.f32.mrf.mxu0
        %v2617 = vadd.f32 0.0, %v2616
        %2618 = vmatmul.f32.gmra.mxu0 %v1760
        %v2619 = vpop.f32.mrf.mxu0
        %v2620 = vadd.f32 0.0, %v2619
        %2621 = vmatmul.f32.gmra.mxu0 %v1763
        %v2622 = vpop.f32.mrf.mxu0
        %v2623 = vadd.f32 0.0, %v2622
        %2624 = vmatmul.f32.gmra.mxu0 %v1766
        %v2625 = vpop.f32.mrf.mxu0
        %v2626 = vadd.f32 0.0, %v2625
        %2627 = vmatmul.f32.gmra.mxu0 %v1769
        %v2628 = vpop.f32.mrf.mxu0
        %v2629 = vadd.f32 0.0, %v2628
        %2630 = vmatmul.f32.gmra.mxu0 %v1772
        %v2631 = vpop.f32.mrf.mxu0
        %v2632 = vadd.f32 0.0, %v2631
        %2633 = vmatmul.f32.gmra.mxu0 %v1775
        %v2634 = vpop.f32.mrf.mxu0
        %v2635 = vadd.f32 0.0, %v2634
        %2636 = vdwg.mxu0
        %2637 = vmatpush.msra.mxu0 0.0
        %2638 = vmatpush.msra.mxu0 0.0
        %2639 = vmatpush.msra.mxu0 0.0
        %2640 = vmatpush.msra.mxu0 0.0
        %2641 = vmatpush.msra.mxu0 0.0
        %2642 = vmatpush.msra.mxu0 0.0
        %2643 = vmatpush.msra.mxu0 0.0
        %2644 = vmatpush.msra.mxu0 0.0
        %2645 = vmatpush.msra.mxu0 0.0
        %2646 = vmatpush.msra.mxu0 0.0
        %2647 = vmatpush.msra.mxu0 0.0
        %2648 = vmatpush.msra.mxu0 0.0
        %2649 = vmatpush.msra.mxu0 0.0
        %2650 = vmatpush.msra.mxu0 0.0
        %2651 = vmatpush.msra.mxu0 %v1790
        %2652 = vmatpush.msra.mxu0 %v906
        %2653 = vmatmul.f32.gmra.mxu0 %v1586
        %v2654 = vpop.f32.mrf.mxu0
        %v2655 = vadd.f32 0.0, %v2654
        %2656 = vmatmul.f32.gmra.mxu0 %v1589
        %v2657 = vpop.f32.mrf.mxu0
        %v2658 = vadd.f32 0.0, %v2657
        %2659 = vmatmul.f32.gmra.mxu0 %v1592
        %v2660 = vpop.f32.mrf.mxu0
        %v2661 = vadd.f32 0.0, %v2660
        %2662 = vmatmul.f32.gmra.mxu0 %v1595
        %v2663 = vpop.f32.mrf.mxu0
        %v2664 = vadd.f32 0.0, %v2663
        %2665 = vmatmul.f32.gmra.mxu0 %v1598
        %v2666 = vpop.f32.mrf.mxu0
        %v2667 = vadd.f32 0.0, %v2666
        %2668 = vmatmul.f32.gmra.mxu0 %v1601
        %v2669 = vpop.f32.mrf.mxu0
        %v2670 = vadd.f32 0.0, %v2669
        %2671 = vmatmul.f32.gmra.mxu0 %v1604
        %v2672 = vpop.f32.mrf.mxu0
        %v2673 = vadd.f32 0.0, %v2672
        %2674 = vmatmul.f32.gmra.mxu0 %v1607
        %v2675 = vpop.f32.mrf.mxu0
        %v2676 = vadd.f32 0.0, %v2675
        %2677 = vmatmul.f32.gmra.mxu0 %v1610
        %v2678 = vpop.f32.mrf.mxu0
        %v2679 = vadd.f32 0.0, %v2678
        %2680 = vmatmul.f32.gmra.mxu0 %v1613
        %v2681 = vpop.f32.mrf.mxu0
        %v2682 = vadd.f32 0.0, %v2681
        %2683 = vmatmul.f32.gmra.mxu0 %v1616
        %v2684 = vpop.f32.mrf.mxu0
        %v2685 = vadd.f32 0.0, %v2684
        %2686 = vmatmul.f32.gmra.mxu0 %v1619
        %v2687 = vpop.f32.mrf.mxu0
        %v2688 = vadd.f32 0.0, %v2687
        %2689 = vmatmul.f32.gmra.mxu0 %v1622
        %v2690 = vpop.f32.mrf.mxu0
        %v2691 = vadd.f32 0.0, %v2690
        %2692 = vmatmul.f32.gmra.mxu0 %v1625
        %v2693 = vpop.f32.mrf.mxu0
        %v2694 = vadd.f32 0.0, %v2693
        %2695 = vmatmul.f32.gmra.mxu0 %v1628
        %v2696 = vpop.f32.mrf.mxu0
        %v2697 = vadd.f32 0.0, %v2696
        %2698 = vmatmul.f32.gmra.mxu0 %v1631
        %v2699 = vpop.f32.mrf.mxu0
        %v2700 = vadd.f32 0.0, %v2699
        %2701 = vmatmul.f32.gmra.mxu0 %v1634
        %v2702 = vpop.f32.mrf.mxu0
        %v2703 = vadd.f32 0.0, %v2702
        %2704 = vmatmul.f32.gmra.mxu0 %v1637
        %v2705 = vpop.f32.mrf.mxu0
        %v2706 = vadd.f32 0.0, %v2705
        %2707 = vmatmul.f32.gmra.mxu0 %v1640
        %v2708 = vpop.f32.mrf.mxu0
        %v2709 = vadd.f32 0.0, %v2708
        %2710 = vmatmul.f32.gmra.mxu0 %v1643
        %v2711 = vpop.f32.mrf.mxu0
        %v2712 = vadd.f32 0.0, %v2711
        %2713 = vmatmul.f32.gmra.mxu0 %v1646
        %v2714 = vpop.f32.mrf.mxu0
        %v2715 = vadd.f32 0.0, %v2714
        %2716 = vmatmul.f32.gmra.mxu0 %v1649
        %v2717 = vpop.f32.mrf.mxu0
        %v2718 = vadd.f32 0.0, %v2717
        %2719 = vmatmul.f32.gmra.mxu0 %v1652
        %v2720 = vpop.f32.mrf.mxu0
        %v2721 = vadd.f32 0.0, %v2720
        %2722 = vmatmul.f32.gmra.mxu0 %v1655
        %v2723 = vpop.f32.mrf.mxu0
        %v2724 = vadd.f32 0.0, %v2723
        %2725 = vmatmul.f32.gmra.mxu0 %v1658
        %v2726 = vpop.f32.mrf.mxu0
        %v2727 = vadd.f32 0.0, %v2726
        %2728 = vmatmul.f32.gmra.mxu0 %v1661
        %v2729 = vpop.f32.mrf.mxu0
        %v2730 = vadd.f32 0.0, %v2729
        %2731 = vmatmul.f32.gmra.mxu0 %v1664
        %v2732 = vpop.f32.mrf.mxu0
        %v2733 = vadd.f32 0.0, %v2732
        %2734 = vmatmul.f32.gmra.mxu0 %v1667
        %v2735 = vpop.f32.mrf.mxu0
        %v2736 = vadd.f32 0.0, %v2735
        %2737 = vmatmul.f32.gmra.mxu0 %v1670
        %v2738 = vpop.f32.mrf.mxu0
        %v2739 = vadd.f32 0.0, %v2738
        %2740 = vmatmul.f32.gmra.mxu0 %v1673
        %v2741 = vpop.f32.mrf.mxu0
        %v2742 = vadd.f32 0.0, %v2741
        %2743 = vmatmul.f32.gmra.mxu0 %v1676
        %v2744 = vpop.f32.mrf.mxu0
        %v2745 = vadd.f32 0.0, %v2744
        %2746 = vmatmul.f32.gmra.mxu0 %v1679
        %v2747 = vpop.f32.mrf.mxu0
        %v2748 = vadd.f32 0.0, %v2747
        %2749 = vmatmul.f32.gmra.mxu0 %v1682
        %v2750 = vpop.f32.mrf.mxu0
        %v2751 = vadd.f32 0.0, %v2750
        %2752 = vmatmul.f32.gmra.mxu0 %v1685
        %v2753 = vpop.f32.mrf.mxu0
        %v2754 = vadd.f32 0.0, %v2753
        %2755 = vmatmul.f32.gmra.mxu0 %v1688
        %v2756 = vpop.f32.mrf.mxu0
        %v2757 = vadd.f32 0.0, %v2756
        %2758 = vmatmul.f32.gmra.mxu0 %v1691
        %v2759 = vpop.f32.mrf.mxu0
        %v2760 = vadd.f32 0.0, %v2759
        %2761 = vmatmul.f32.gmra.mxu0 %v1694
        %v2762 = vpop.f32.mrf.mxu0
        %v2763 = vadd.f32 0.0, %v2762
        %2764 = vmatmul.f32.gmra.mxu0 %v1697
        %v2765 = vpop.f32.mrf.mxu0
        %v2766 = vadd.f32 0.0, %v2765
        %2767 = vmatmul.f32.gmra.mxu0 %v1700
        %v2768 = vpop.f32.mrf.mxu0
        %v2769 = vadd.f32 0.0, %v2768
        %2770 = vmatmul.f32.gmra.mxu0 %v1703
        %v2771 = vpop.f32.mrf.mxu0
        %v2772 = vadd.f32 0.0, %v2771
        %2773 = vmatmul.f32.gmra.mxu0 %v1706
        %v2774 = vpop.f32.mrf.mxu0
        %v2775 = vadd.f32 0.0, %v2774
        %2776 = vmatmul.f32.gmra.mxu0 %v1709
        %v2777 = vpop.f32.mrf.mxu0
        %v2778 = vadd.f32 0.0, %v2777
        %2779 = vmatmul.f32.gmra.mxu0 %v1712
        %v2780 = vpop.f32.mrf.mxu0
        %v2781 = vadd.f32 0.0, %v2780
        %2782 = vmatmul.f32.gmra.mxu0 %v1715
        %v2783 = vpop.f32.mrf.mxu0
        %v2784 = vadd.f32 0.0, %v2783
        %2785 = vmatmul.f32.gmra.mxu0 %v1718
        %v2786 = vpop.f32.mrf.mxu0
        %v2787 = vadd.f32 0.0, %v2786
        %2788 = vmatmul.f32.gmra.mxu0 %v1721
        %v2789 = vpop.f32.mrf.mxu0
        %v2790 = vadd.f32 0.0, %v2789
        %2791 = vmatmul.f32.gmra.mxu0 %v1724
        %v2792 = vpop.f32.mrf.mxu0
        %v2793 = vadd.f32 0.0, %v2792
        %2794 = vmatmul.f32.gmra.mxu0 %v1727
        %v2795 = vpop.f32.mrf.mxu0
        %v2796 = vadd.f32 0.0, %v2795
        %2797 = vmatmul.f32.gmra.mxu0 %v1730
        %v2798 = vpop.f32.mrf.mxu0
        %v2799 = vadd.f32 0.0, %v2798
        %2800 = vmatmul.f32.gmra.mxu0 %v1733
        %v2801 = vpop.f32.mrf.mxu0
        %v2802 = vadd.f32 0.0, %v2801
        %2803 = vmatmul.f32.gmra.mxu0 %v1736
        %v2804 = vpop.f32.mrf.mxu0
        %v2805 = vadd.f32 0.0, %v2804
        %2806 = vmatmul.f32.gmra.mxu0 %v1739
        %v2807 = vpop.f32.mrf.mxu0
        %v2808 = vadd.f32 0.0, %v2807
        %2809 = vmatmul.f32.gmra.mxu0 %v1742
        %v2810 = vpop.f32.mrf.mxu0
        %v2811 = vadd.f32 0.0, %v2810
        %2812 = vmatmul.f32.gmra.mxu0 %v1745
        %v2813 = vpop.f32.mrf.mxu0
        %v2814 = vadd.f32 0.0, %v2813
        %2815 = vmatmul.f32.gmra.mxu0 %v1748
        %v2816 = vpop.f32.mrf.mxu0
        %v2817 = vadd.f32 0.0, %v2816
        %2818 = vmatmul.f32.gmra.mxu0 %v1751
        %v2819 = vpop.f32.mrf.mxu0
        %v2820 = vadd.f32 0.0, %v2819
        %2821 = vmatmul.f32.gmra.mxu0 %v1754
        %v2822 = vpop.f32.mrf.mxu0
        %v2823 = vadd.f32 0.0, %v2822
        %2824 = vmatmul.f32.gmra.mxu0 %v1757
        %v2825 = vpop.f32.mrf.mxu0
        %v2826 = vadd.f32 0.0, %v2825
        %2827 = vmatmul.f32.gmra.mxu0 %v1760
        %v2828 = vpop.f32.mrf.mxu0
        %v2829 = vadd.f32 0.0, %v2828
        %2830 = vmatmul.f32.gmra.mxu0 %v1763
        %v2831 = vpop.f32.mrf.mxu0
        %v2832 = vadd.f32 0.0, %v2831
        %2833 = vmatmul.f32.gmra.mxu0 %v1766
        %v2834 = vpop.f32.mrf.mxu0
        %v2835 = vadd.f32 0.0, %v2834
        %2836 = vmatmul.f32.gmra.mxu0 %v1769
        %v2837 = vpop.f32.mrf.mxu0
        %v2838 = vadd.f32 0.0, %v2837
        %2839 = vmatmul.f32.gmra.mxu0 %v1772
        %v2840 = vpop.f32.mrf.mxu0
        %v2841 = vadd.f32 0.0, %v2840
        %2842 = vmatmul.f32.gmra.mxu0 %v1775
        %v2843 = vpop.f32.mrf.mxu0
        %v2844 = vadd.f32 0.0, %v2843
        %2845 = vdwg.mxu0
        %2846 = vmatpush.msra.mxu0 0.0
        %2847 = vmatpush.msra.mxu0 0.0
        %2848 = vmatpush.msra.mxu0 0.0
        %2849 = vmatpush.msra.mxu0 0.0
        %2850 = vmatpush.msra.mxu0 0.0
        %2851 = vmatpush.msra.mxu0 0.0
        %2852 = vmatpush.msra.mxu0 0.0
        %2853 = vmatpush.msra.mxu0 0.0
        %2854 = vmatpush.msra.mxu0 0.0
        %2855 = vmatpush.msra.mxu0 0.0
        %2856 = vmatpush.msra.mxu0 0.0
        %2857 = vmatpush.msra.mxu0 0.0
        %2858 = vmatpush.msra.mxu0 0.0
        %2859 = vmatpush.msra.mxu0 0.0
        %2860 = vmatpush.msra.mxu0 %v1793
        %2861 = vmatpush.msra.mxu0 %v907
        %2862 = vmatmul.f32.gmra.mxu0 %v1586
        %v2863 = vpop.f32.mrf.mxu0
        %v2864 = vadd.f32 0.0, %v2863
        %2865 = vmatmul.f32.gmra.mxu0 %v1589
        %v2866 = vpop.f32.mrf.mxu0
        %v2867 = vadd.f32 0.0, %v2866
        %2868 = vmatmul.f32.gmra.mxu0 %v1592
        %v2869 = vpop.f32.mrf.mxu0
        %v2870 = vadd.f32 0.0, %v2869
        %2871 = vmatmul.f32.gmra.mxu0 %v1595
        %v2872 = vpop.f32.mrf.mxu0
        %v2873 = vadd.f32 0.0, %v2872
        %2874 = vmatmul.f32.gmra.mxu0 %v1598
        %v2875 = vpop.f32.mrf.mxu0
        %v2876 = vadd.f32 0.0, %v2875
        %2877 = vmatmul.f32.gmra.mxu0 %v1601
        %v2878 = vpop.f32.mrf.mxu0
        %v2879 = vadd.f32 0.0, %v2878
        %2880 = vmatmul.f32.gmra.mxu0 %v1604
        %v2881 = vpop.f32.mrf.mxu0
        %v2882 = vadd.f32 0.0, %v2881
        %2883 = vmatmul.f32.gmra.mxu0 %v1607
        %v2884 = vpop.f32.mrf.mxu0
        %v2885 = vadd.f32 0.0, %v2884
        %2886 = vmatmul.f32.gmra.mxu0 %v1610
        %v2887 = vpop.f32.mrf.mxu0
        %v2888 = vadd.f32 0.0, %v2887
        %2889 = vmatmul.f32.gmra.mxu0 %v1613
        %v2890 = vpop.f32.mrf.mxu0
        %v2891 = vadd.f32 0.0, %v2890
        %2892 = vmatmul.f32.gmra.mxu0 %v1616
        %v2893 = vpop.f32.mrf.mxu0
        %v2894 = vadd.f32 0.0, %v2893
        %2895 = vmatmul.f32.gmra.mxu0 %v1619
        %v2896 = vpop.f32.mrf.mxu0
        %v2897 = vadd.f32 0.0, %v2896
        %2898 = vmatmul.f32.gmra.mxu0 %v1622
        %v2899 = vpop.f32.mrf.mxu0
        %v2900 = vadd.f32 0.0, %v2899
        %2901 = vmatmul.f32.gmra.mxu0 %v1625
        %v2902 = vpop.f32.mrf.mxu0
        %v2903 = vadd.f32 0.0, %v2902
        %2904 = vmatmul.f32.gmra.mxu0 %v1628
        %v2905 = vpop.f32.mrf.mxu0
        %v2906 = vadd.f32 0.0, %v2905
        %2907 = vmatmul.f32.gmra.mxu0 %v1631
        %v2908 = vpop.f32.mrf.mxu0
        %v2909 = vadd.f32 0.0, %v2908
        %2910 = vmatmul.f32.gmra.mxu0 %v1634
        %v2911 = vpop.f32.mrf.mxu0
        %v2912 = vadd.f32 0.0, %v2911
        %2913 = vmatmul.f32.gmra.mxu0 %v1637
        %v2914 = vpop.f32.mrf.mxu0
        %v2915 = vadd.f32 0.0, %v2914
        %2916 = vmatmul.f32.gmra.mxu0 %v1640
        %v2917 = vpop.f32.mrf.mxu0
        %v2918 = vadd.f32 0.0, %v2917
        %2919 = vmatmul.f32.gmra.mxu0 %v1643
        %v2920 = vpop.f32.mrf.mxu0
        %v2921 = vadd.f32 0.0, %v2920
        %2922 = vmatmul.f32.gmra.mxu0 %v1646
        %v2923 = vpop.f32.mrf.mxu0
        %v2924 = vadd.f32 0.0, %v2923
        %2925 = vmatmul.f32.gmra.mxu0 %v1649
        %v2926 = vpop.f32.mrf.mxu0
        %v2927 = vadd.f32 0.0, %v2926
        %2928 = vmatmul.f32.gmra.mxu0 %v1652
        %v2929 = vpop.f32.mrf.mxu0
        %v2930 = vadd.f32 0.0, %v2929
        %2931 = vmatmul.f32.gmra.mxu0 %v1655
        %v2932 = vpop.f32.mrf.mxu0
        %v2933 = vadd.f32 0.0, %v2932
        %2934 = vmatmul.f32.gmra.mxu0 %v1658
        %v2935 = vpop.f32.mrf.mxu0
        %v2936 = vadd.f32 0.0, %v2935
        %2937 = vmatmul.f32.gmra.mxu0 %v1661
        %v2938 = vpop.f32.mrf.mxu0
        %v2939 = vadd.f32 0.0, %v2938
        %2940 = vmatmul.f32.gmra.mxu0 %v1664
        %v2941 = vpop.f32.mrf.mxu0
        %v2942 = vadd.f32 0.0, %v2941
        %2943 = vmatmul.f32.gmra.mxu0 %v1667
        %v2944 = vpop.f32.mrf.mxu0
        %v2945 = vadd.f32 0.0, %v2944
        %2946 = vmatmul.f32.gmra.mxu0 %v1670
        %v2947 = vpop.f32.mrf.mxu0
        %v2948 = vadd.f32 0.0, %v2947
        %2949 = vmatmul.f32.gmra.mxu0 %v1673
        %v2950 = vpop.f32.mrf.mxu0
        %v2951 = vadd.f32 0.0, %v2950
        %2952 = vmatmul.f32.gmra.mxu0 %v1676
        %v2953 = vpop.f32.mrf.mxu0
        %v2954 = vadd.f32 0.0, %v2953
        %2955 = vmatmul.f32.gmra.mxu0 %v1679
        %v2956 = vpop.f32.mrf.mxu0
        %v2957 = vadd.f32 0.0, %v2956
        %2958 = vmatmul.f32.gmra.mxu0 %v1682
        %v2959 = vpop.f32.mrf.mxu0
        %v2960 = vadd.f32 0.0, %v2959
        %2961 = vmatmul.f32.gmra.mxu0 %v1685
        %v2962 = vpop.f32.mrf.mxu0
        %v2963 = vadd.f32 0.0, %v2962
        %2964 = vmatmul.f32.gmra.mxu0 %v1688
        %v2965 = vpop.f32.mrf.mxu0
        %v2966 = vadd.f32 0.0, %v2965
        %2967 = vmatmul.f32.gmra.mxu0 %v1691
        %v2968 = vpop.f32.mrf.mxu0
        %v2969 = vadd.f32 0.0, %v2968
        %2970 = vmatmul.f32.gmra.mxu0 %v1694
        %v2971 = vpop.f32.mrf.mxu0
        %v2972 = vadd.f32 0.0, %v2971
        %2973 = vmatmul.f32.gmra.mxu0 %v1697
        %v2974 = vpop.f32.mrf.mxu0
        %v2975 = vadd.f32 0.0, %v2974
        %2976 = vmatmul.f32.gmra.mxu0 %v1700
        %v2977 = vpop.f32.mrf.mxu0
        %v2978 = vadd.f32 0.0, %v2977
        %2979 = vmatmul.f32.gmra.mxu0 %v1703
        %v2980 = vpop.f32.mrf.mxu0
        %v2981 = vadd.f32 0.0, %v2980
        %2982 = vmatmul.f32.gmra.mxu0 %v1706
        %v2983 = vpop.f32.mrf.mxu0
        %v2984 = vadd.f32 0.0, %v2983
        %2985 = vmatmul.f32.gmra.mxu0 %v1709
        %v2986 = vpop.f32.mrf.mxu0
        %v2987 = vadd.f32 0.0, %v2986
        %2988 = vmatmul.f32.gmra.mxu0 %v1712
        %v2989 = vpop.f32.mrf.mxu0
        %v2990 = vadd.f32 0.0, %v2989
        %2991 = vmatmul.f32.gmra.mxu0 %v1715
        %v2992 = vpop.f32.mrf.mxu0
        %v2993 = vadd.f32 0.0, %v2992
        %2994 = vmatmul.f32.gmra.mxu0 %v1718
        %v2995 = vpop.f32.mrf.mxu0
        %v2996 = vadd.f32 0.0, %v2995
        %2997 = vmatmul.f32.gmra.mxu0 %v1721
        %v2998 = vpop.f32.mrf.mxu0
        %v2999 = vadd.f32 0.0, %v2998
        %3000 = vmatmul.f32.gmra.mxu0 %v1724
        %v3001 = vpop.f32.mrf.mxu0
        %v3002 = vadd.f32 0.0, %v3001
        %3003 = vmatmul.f32.gmra.mxu0 %v1727
        %v3004 = vpop.f32.mrf.mxu0
        %v3005 = vadd.f32 0.0, %v3004
        %3006 = vmatmul.f32.gmra.mxu0 %v1730
        %v3007 = vpop.f32.mrf.mxu0
        %v3008 = vadd.f32 0.0, %v3007
        %3009 = vmatmul.f32.gmra.mxu0 %v1733
        %v3010 = vpop.f32.mrf.mxu0
        %v3011 = vadd.f32 0.0, %v3010
        %3012 = vmatmul.f32.gmra.mxu0 %v1736
        %v3013 = vpop.f32.mrf.mxu0
        %v3014 = vadd.f32 0.0, %v3013
        %3015 = vmatmul.f32.gmra.mxu0 %v1739
        %v3016 = vpop.f32.mrf.mxu0
        %v3017 = vadd.f32 0.0, %v3016
        %3018 = vmatmul.f32.gmra.mxu0 %v1742
        %v3019 = vpop.f32.mrf.mxu0
        %v3020 = vadd.f32 0.0, %v3019
        %3021 = vmatmul.f32.gmra.mxu0 %v1745
        %v3022 = vpop.f32.mrf.mxu0
        %v3023 = vadd.f32 0.0, %v3022
        %3024 = vmatmul.f32.gmra.mxu0 %v1748
        %v3025 = vpop.f32.mrf.mxu0
        %v3026 = vadd.f32 0.0, %v3025
        %3027 = vmatmul.f32.gmra.mxu0 %v1751
        %v3028 = vpop.f32.mrf.mxu0
        %v3029 = vadd.f32 0.0, %v3028
        %3030 = vmatmul.f32.gmra.mxu0 %v1754
        %v3031 = vpop.f32.mrf.mxu0
        %v3032 = vadd.f32 0.0, %v3031
        %3033 = vmatmul.f32.gmra.mxu0 %v1757
        %v3034 = vpop.f32.mrf.mxu0
        %v3035 = vadd.f32 0.0, %v3034
        %3036 = vmatmul.f32.gmra.mxu0 %v1760
        %v3037 = vpop.f32.mrf.mxu0
        %v3038 = vadd.f32 0.0, %v3037
        %3039 = vmatmul.f32.gmra.mxu0 %v1763
        %v3040 = vpop.f32.mrf.mxu0
        %v3041 = vadd.f32 0.0, %v3040
        %3042 = vmatmul.f32.gmra.mxu0 %v1766
        %v3043 = vpop.f32.mrf.mxu0
        %v3044 = vadd.f32 0.0, %v3043
        %3045 = vmatmul.f32.gmra.mxu0 %v1769
        %v3046 = vpop.f32.mrf.mxu0
        %v3047 = vadd.f32 0.0, %v3046
        %3048 = vmatmul.f32.gmra.mxu0 %v1772
        %v3049 = vpop.f32.mrf.mxu0
        %v3050 = vadd.f32 0.0, %v3049
        %3051 = vmatmul.f32.gmra.mxu0 %v1775
        %v3052 = vpop.f32.mrf.mxu0
        %v3053 = vadd.f32 0.0, %v3052
        %3054 = vdwg.mxu0
        %3055 = vmatpush.msra.mxu0 0.0
        %3056 = vmatpush.msra.mxu0 0.0
        %3057 = vmatpush.msra.mxu0 0.0
        %3058 = vmatpush.msra.mxu0 0.0
        %3059 = vmatpush.msra.mxu0 0.0
        %3060 = vmatpush.msra.mxu0 0.0
        %3061 = vmatpush.msra.mxu0 0.0
        %3062 = vmatpush.msra.mxu0 0.0
        %3063 = vmatpush.msra.mxu0 0.0
        %3064 = vmatpush.msra.mxu0 0.0
        %3065 = vmatpush.msra.mxu0 0.0
        %3066 = vmatpush.msra.mxu0 0.0
        %3067 = vmatpush.msra.mxu0 0.0
        %3068 = vmatpush.msra.mxu0 0.0
        %3069 = vmatpush.msra.mxu0 %v1796
        %3070 = vmatpush.msra.mxu0 %v908
        %3071 = vmatmul.f32.gmra.mxu0 %v1586
        %v3072 = vpop.f32.mrf.mxu0
        %v3073 = vadd.f32 0.0, %v3072
        %3074 = vmatmul.f32.gmra.mxu0 %v1589
        %v3075 = vpop.f32.mrf.mxu0
        %v3076 = vadd.f32 0.0, %v3075
        %3077 = vmatmul.f32.gmra.mxu0 %v1592
        %v3078 = vpop.f32.mrf.mxu0
        %v3079 = vadd.f32 0.0, %v3078
        %3080 = vmatmul.f32.gmra.mxu0 %v1595
        %v3081 = vpop.f32.mrf.mxu0
        %v3082 = vadd.f32 0.0, %v3081
        %3083 = vmatmul.f32.gmra.mxu0 %v1598
        %v3084 = vpop.f32.mrf.mxu0
        %v3085 = vadd.f32 0.0, %v3084
        %3086 = vmatmul.f32.gmra.mxu0 %v1601
        %v3087 = vpop.f32.mrf.mxu0
        %v3088 = vadd.f32 0.0, %v3087
        %3089 = vmatmul.f32.gmra.mxu0 %v1604
        %v3090 = vpop.f32.mrf.mxu0
        %v3091 = vadd.f32 0.0, %v3090
        %3092 = vmatmul.f32.gmra.mxu0 %v1607
        %v3093 = vpop.f32.mrf.mxu0
        %v3094 = vadd.f32 0.0, %v3093
        %3095 = vmatmul.f32.gmra.mxu0 %v1610
        %v3096 = vpop.f32.mrf.mxu0
        %v3097 = vadd.f32 0.0, %v3096
        %3098 = vmatmul.f32.gmra.mxu0 %v1613
        %v3099 = vpop.f32.mrf.mxu0
        %v3100 = vadd.f32 0.0, %v3099
        %3101 = vmatmul.f32.gmra.mxu0 %v1616
        %v3102 = vpop.f32.mrf.mxu0
        %v3103 = vadd.f32 0.0, %v3102
        %3104 = vmatmul.f32.gmra.mxu0 %v1619
        %v3105 = vpop.f32.mrf.mxu0
        %v3106 = vadd.f32 0.0, %v3105
        %3107 = vmatmul.f32.gmra.mxu0 %v1622
        %v3108 = vpop.f32.mrf.mxu0
        %v3109 = vadd.f32 0.0, %v3108
        %3110 = vmatmul.f32.gmra.mxu0 %v1625
        %v3111 = vpop.f32.mrf.mxu0
        %v3112 = vadd.f32 0.0, %v3111
        %3113 = vmatmul.f32.gmra.mxu0 %v1628
        %v3114 = vpop.f32.mrf.mxu0
        %v3115 = vadd.f32 0.0, %v3114
        %3116 = vmatmul.f32.gmra.mxu0 %v1631
        %v3117 = vpop.f32.mrf.mxu0
        %v3118 = vadd.f32 0.0, %v3117
        %3119 = vmatmul.f32.gmra.mxu0 %v1634
        %v3120 = vpop.f32.mrf.mxu0
        %v3121 = vadd.f32 0.0, %v3120
        %3122 = vmatmul.f32.gmra.mxu0 %v1637
        %v3123 = vpop.f32.mrf.mxu0
        %v3124 = vadd.f32 0.0, %v3123
        %3125 = vmatmul.f32.gmra.mxu0 %v1640
        %v3126 = vpop.f32.mrf.mxu0
        %v3127 = vadd.f32 0.0, %v3126
        %3128 = vmatmul.f32.gmra.mxu0 %v1643
        %v3129 = vpop.f32.mrf.mxu0
        %v3130 = vadd.f32 0.0, %v3129
        %3131 = vmatmul.f32.gmra.mxu0 %v1646
        %v3132 = vpop.f32.mrf.mxu0
        %v3133 = vadd.f32 0.0, %v3132
        %3134 = vmatmul.f32.gmra.mxu0 %v1649
        %v3135 = vpop.f32.mrf.mxu0
        %v3136 = vadd.f32 0.0, %v3135
        %3137 = vmatmul.f32.gmra.mxu0 %v1652
        %v3138 = vpop.f32.mrf.mxu0
        %v3139 = vadd.f32 0.0, %v3138
        %3140 = vmatmul.f32.gmra.mxu0 %v1655
        %v3141 = vpop.f32.mrf.mxu0
        %v3142 = vadd.f32 0.0, %v3141
        %3143 = vmatmul.f32.gmra.mxu0 %v1658
        %v3144 = vpop.f32.mrf.mxu0
        %v3145 = vadd.f32 0.0, %v3144
        %3146 = vmatmul.f32.gmra.mxu0 %v1661
        %v3147 = vpop.f32.mrf.mxu0
        %v3148 = vadd.f32 0.0, %v3147
        %3149 = vmatmul.f32.gmra.mxu0 %v1664
        %v3150 = vpop.f32.mrf.mxu0
        %v3151 = vadd.f32 0.0, %v3150
        %3152 = vmatmul.f32.gmra.mxu0 %v1667
        %v3153 = vpop.f32.mrf.mxu0
        %v3154 = vadd.f32 0.0, %v3153
        %3155 = vmatmul.f32.gmra.mxu0 %v1670
        %v3156 = vpop.f32.mrf.mxu0
        %v3157 = vadd.f32 0.0, %v3156
        %3158 = vmatmul.f32.gmra.mxu0 %v1673
        %v3159 = vpop.f32.mrf.mxu0
        %v3160 = vadd.f32 0.0, %v3159
        %3161 = vmatmul.f32.gmra.mxu0 %v1676
        %v3162 = vpop.f32.mrf.mxu0
        %v3163 = vadd.f32 0.0, %v3162
        %3164 = vmatmul.f32.gmra.mxu0 %v1679
        %v3165 = vpop.f32.mrf.mxu0
        %v3166 = vadd.f32 0.0, %v3165
        %3167 = vmatmul.f32.gmra.mxu0 %v1682
        %v3168 = vpop.f32.mrf.mxu0
        %v3169 = vadd.f32 0.0, %v3168
        %3170 = vmatmul.f32.gmra.mxu0 %v1685
        %v3171 = vpop.f32.mrf.mxu0
        %v3172 = vadd.f32 0.0, %v3171
        %3173 = vmatmul.f32.gmra.mxu0 %v1688
        %v3174 = vpop.f32.mrf.mxu0
        %v3175 = vadd.f32 0.0, %v3174
        %3176 = vmatmul.f32.gmra.mxu0 %v1691
        %v3177 = vpop.f32.mrf.mxu0
        %v3178 = vadd.f32 0.0, %v3177
        %3179 = vmatmul.f32.gmra.mxu0 %v1694
        %v3180 = vpop.f32.mrf.mxu0
        %v3181 = vadd.f32 0.0, %v3180
        %3182 = vmatmul.f32.gmra.mxu0 %v1697
        %v3183 = vpop.f32.mrf.mxu0
        %v3184 = vadd.f32 0.0, %v3183
        %3185 = vmatmul.f32.gmra.mxu0 %v1700
        %v3186 = vpop.f32.mrf.mxu0
        %v3187 = vadd.f32 0.0, %v3186
        %3188 = vmatmul.f32.gmra.mxu0 %v1703
        %v3189 = vpop.f32.mrf.mxu0
        %v3190 = vadd.f32 0.0, %v3189
        %3191 = vmatmul.f32.gmra.mxu0 %v1706
        %v3192 = vpop.f32.mrf.mxu0
        %v3193 = vadd.f32 0.0, %v3192
        %3194 = vmatmul.f32.gmra.mxu0 %v1709
        %v3195 = vpop.f32.mrf.mxu0
        %v3196 = vadd.f32 0.0, %v3195
        %3197 = vmatmul.f32.gmra.mxu0 %v1712
        %v3198 = vpop.f32.mrf.mxu0
        %v3199 = vadd.f32 0.0, %v3198
        %3200 = vmatmul.f32.gmra.mxu0 %v1715
        %v3201 = vpop.f32.mrf.mxu0
        %v3202 = vadd.f32 0.0, %v3201
        %3203 = vmatmul.f32.gmra.mxu0 %v1718
        %v3204 = vpop.f32.mrf.mxu0
        %v3205 = vadd.f32 0.0, %v3204
        %3206 = vmatmul.f32.gmra.mxu0 %v1721
        %v3207 = vpop.f32.mrf.mxu0
        %v3208 = vadd.f32 0.0, %v3207
        %3209 = vmatmul.f32.gmra.mxu0 %v1724
        %v3210 = vpop.f32.mrf.mxu0
        %v3211 = vadd.f32 0.0, %v3210
        %3212 = vmatmul.f32.gmra.mxu0 %v1727
        %v3213 = vpop.f32.mrf.mxu0
        %v3214 = vadd.f32 0.0, %v3213
        %3215 = vmatmul.f32.gmra.mxu0 %v1730
        %v3216 = vpop.f32.mrf.mxu0
        %v3217 = vadd.f32 0.0, %v3216
        %3218 = vmatmul.f32.gmra.mxu0 %v1733
        %v3219 = vpop.f32.mrf.mxu0
        %v3220 = vadd.f32 0.0, %v3219
        %3221 = vmatmul.f32.gmra.mxu0 %v1736
        %v3222 = vpop.f32.mrf.mxu0
        %v3223 = vadd.f32 0.0, %v3222
        %3224 = vmatmul.f32.gmra.mxu0 %v1739
        %v3225 = vpop.f32.mrf.mxu0
        %v3226 = vadd.f32 0.0, %v3225
        %3227 = vmatmul.f32.gmra.mxu0 %v1742
        %v3228 = vpop.f32.mrf.mxu0
        %v3229 = vadd.f32 0.0, %v3228
        %3230 = vmatmul.f32.gmra.mxu0 %v1745
        %v3231 = vpop.f32.mrf.mxu0
        %v3232 = vadd.f32 0.0, %v3231
        %3233 = vmatmul.f32.gmra.mxu0 %v1748
        %v3234 = vpop.f32.mrf.mxu0
        %v3235 = vadd.f32 0.0, %v3234
        %3236 = vmatmul.f32.gmra.mxu0 %v1751
        %v3237 = vpop.f32.mrf.mxu0
        %v3238 = vadd.f32 0.0, %v3237
        %3239 = vmatmul.f32.gmra.mxu0 %v1754
        %v3240 = vpop.f32.mrf.mxu0
        %v3241 = vadd.f32 0.0, %v3240
        %3242 = vmatmul.f32.gmra.mxu0 %v1757
        %v3243 = vpop.f32.mrf.mxu0
        %v3244 = vadd.f32 0.0, %v3243
        %3245 = vmatmul.f32.gmra.mxu0 %v1760
        %v3246 = vpop.f32.mrf.mxu0
        %v3247 = vadd.f32 0.0, %v3246
        %3248 = vmatmul.f32.gmra.mxu0 %v1763
        %v3249 = vpop.f32.mrf.mxu0
        %v3250 = vadd.f32 0.0, %v3249
        %3251 = vmatmul.f32.gmra.mxu0 %v1766
        %v3252 = vpop.f32.mrf.mxu0
        %v3253 = vadd.f32 0.0, %v3252
        %3254 = vmatmul.f32.gmra.mxu0 %v1769
        %v3255 = vpop.f32.mrf.mxu0
        %v3256 = vadd.f32 0.0, %v3255
        %3257 = vmatmul.f32.gmra.mxu0 %v1772
        %v3258 = vpop.f32.mrf.mxu0
        %v3259 = vadd.f32 0.0, %v3258
        %3260 = vmatmul.f32.gmra.mxu0 %v1775
        %v3261 = vpop.f32.mrf.mxu0
        %v3262 = vadd.f32 0.0, %v3261
        %3263 = vdwg.mxu0
        %3264 = vmatpush.msra.mxu0 0.0
        %3265 = vmatpush.msra.mxu0 0.0
        %3266 = vmatpush.msra.mxu0 0.0
        %3267 = vmatpush.msra.mxu0 0.0
        %3268 = vmatpush.msra.mxu0 0.0
        %3269 = vmatpush.msra.mxu0 0.0
        %3270 = vmatpush.msra.mxu0 0.0
        %3271 = vmatpush.msra.mxu0 0.0
        %3272 = vmatpush.msra.mxu0 0.0
        %3273 = vmatpush.msra.mxu0 0.0
        %3274 = vmatpush.msra.mxu0 0.0
        %3275 = vmatpush.msra.mxu0 0.0
        %3276 = vmatpush.msra.mxu0 0.0
        %3277 = vmatpush.msra.mxu0 0.0
        %3278 = vmatpush.msra.mxu0 %v1799
        %3279 = vmatpush.msra.mxu0 %v909
        %3280 = vmatmul.f32.gmra.mxu0 %v1586
        %v3281 = vpop.f32.mrf.mxu0
        %v3282 = vadd.f32 0.0, %v3281
        %3283 = vmatmul.f32.gmra.mxu0 %v1589
        %v3284 = vpop.f32.mrf.mxu0
        %v3285 = vadd.f32 0.0, %v3284
        %3286 = vmatmul.f32.gmra.mxu0 %v1592
        %v3287 = vpop.f32.mrf.mxu0
        %v3288 = vadd.f32 0.0, %v3287
        %3289 = vmatmul.f32.gmra.mxu0 %v1595
        %v3290 = vpop.f32.mrf.mxu0
        %v3291 = vadd.f32 0.0, %v3290
        %3292 = vmatmul.f32.gmra.mxu0 %v1598
        %v3293 = vpop.f32.mrf.mxu0
        %v3294 = vadd.f32 0.0, %v3293
        %3295 = vmatmul.f32.gmra.mxu0 %v1601
        %v3296 = vpop.f32.mrf.mxu0
        %v3297 = vadd.f32 0.0, %v3296
        %3298 = vmatmul.f32.gmra.mxu0 %v1604
        %v3299 = vpop.f32.mrf.mxu0
        %v3300 = vadd.f32 0.0, %v3299
        %3301 = vmatmul.f32.gmra.mxu0 %v1607
        %v3302 = vpop.f32.mrf.mxu0
        %v3303 = vadd.f32 0.0, %v3302
        %3304 = vmatmul.f32.gmra.mxu0 %v1610
        %v3305 = vpop.f32.mrf.mxu0
        %v3306 = vadd.f32 0.0, %v3305
        %3307 = vmatmul.f32.gmra.mxu0 %v1613
        %v3308 = vpop.f32.mrf.mxu0
        %v3309 = vadd.f32 0.0, %v3308
        %3310 = vmatmul.f32.gmra.mxu0 %v1616
        %v3311 = vpop.f32.mrf.mxu0
        %v3312 = vadd.f32 0.0, %v3311
        %3313 = vmatmul.f32.gmra.mxu0 %v1619
        %v3314 = vpop.f32.mrf.mxu0
        %v3315 = vadd.f32 0.0, %v3314
        %3316 = vmatmul.f32.gmra.mxu0 %v1622
        %v3317 = vpop.f32.mrf.mxu0
        %v3318 = vadd.f32 0.0, %v3317
        %3319 = vmatmul.f32.gmra.mxu0 %v1625
        %v3320 = vpop.f32.mrf.mxu0
        %v3321 = vadd.f32 0.0, %v3320
        %3322 = vmatmul.f32.gmra.mxu0 %v1628
        %v3323 = vpop.f32.mrf.mxu0
        %v3324 = vadd.f32 0.0, %v3323
        %3325 = vmatmul.f32.gmra.mxu0 %v1631
        %v3326 = vpop.f32.mrf.mxu0
        %v3327 = vadd.f32 0.0, %v3326
        %3328 = vmatmul.f32.gmra.mxu0 %v1634
        %v3329 = vpop.f32.mrf.mxu0
        %v3330 = vadd.f32 0.0, %v3329
        %3331 = vmatmul.f32.gmra.mxu0 %v1637
        %v3332 = vpop.f32.mrf.mxu0
        %v3333 = vadd.f32 0.0, %v3332
        %3334 = vmatmul.f32.gmra.mxu0 %v1640
        %v3335 = vpop.f32.mrf.mxu0
        %v3336 = vadd.f32 0.0, %v3335
        %3337 = vmatmul.f32.gmra.mxu0 %v1643
        %v3338 = vpop.f32.mrf.mxu0
        %v3339 = vadd.f32 0.0, %v3338
        %3340 = vmatmul.f32.gmra.mxu0 %v1646
        %v3341 = vpop.f32.mrf.mxu0
        %v3342 = vadd.f32 0.0, %v3341
        %3343 = vmatmul.f32.gmra.mxu0 %v1649
        %v3344 = vpop.f32.mrf.mxu0
        %v3345 = vadd.f32 0.0, %v3344
        %3346 = vmatmul.f32.gmra.mxu0 %v1652
        %v3347 = vpop.f32.mrf.mxu0
        %v3348 = vadd.f32 0.0, %v3347
        %3349 = vmatmul.f32.gmra.mxu0 %v1655
        %v3350 = vpop.f32.mrf.mxu0
        %v3351 = vadd.f32 0.0, %v3350
        %3352 = vmatmul.f32.gmra.mxu0 %v1658
        %v3353 = vpop.f32.mrf.mxu0
        %v3354 = vadd.f32 0.0, %v3353
        %3355 = vmatmul.f32.gmra.mxu0 %v1661
        %v3356 = vpop.f32.mrf.mxu0
        %v3357 = vadd.f32 0.0, %v3356
        %3358 = vmatmul.f32.gmra.mxu0 %v1664
        %v3359 = vpop.f32.mrf.mxu0
        %v3360 = vadd.f32 0.0, %v3359
        %3361 = vmatmul.f32.gmra.mxu0 %v1667
        %v3362 = vpop.f32.mrf.mxu0
        %v3363 = vadd.f32 0.0, %v3362
        %3364 = vmatmul.f32.gmra.mxu0 %v1670
        %v3365 = vpop.f32.mrf.mxu0
        %v3366 = vadd.f32 0.0, %v3365
        %3367 = vmatmul.f32.gmra.mxu0 %v1673
        %v3368 = vpop.f32.mrf.mxu0
        %v3369 = vadd.f32 0.0, %v3368
        %3370 = vmatmul.f32.gmra.mxu0 %v1676
        %v3371 = vpop.f32.mrf.mxu0
        %v3372 = vadd.f32 0.0, %v3371
        %3373 = vmatmul.f32.gmra.mxu0 %v1679
        %v3374 = vpop.f32.mrf.mxu0
        %v3375 = vadd.f32 0.0, %v3374
        %3376 = vmatmul.f32.gmra.mxu0 %v1682
        %v3377 = vpop.f32.mrf.mxu0
        %v3378 = vadd.f32 0.0, %v3377
        %3379 = vmatmul.f32.gmra.mxu0 %v1685
        %v3380 = vpop.f32.mrf.mxu0
        %v3381 = vadd.f32 0.0, %v3380
        %3382 = vmatmul.f32.gmra.mxu0 %v1688
        %v3383 = vpop.f32.mrf.mxu0
        %v3384 = vadd.f32 0.0, %v3383
        %3385 = vmatmul.f32.gmra.mxu0 %v1691
        %v3386 = vpop.f32.mrf.mxu0
        %v3387 = vadd.f32 0.0, %v3386
        %3388 = vmatmul.f32.gmra.mxu0 %v1694
        %v3389 = vpop.f32.mrf.mxu0
        %v3390 = vadd.f32 0.0, %v3389
        %3391 = vmatmul.f32.gmra.mxu0 %v1697
        %v3392 = vpop.f32.mrf.mxu0
        %v3393 = vadd.f32 0.0, %v3392
        %3394 = vmatmul.f32.gmra.mxu0 %v1700
        %v3395 = vpop.f32.mrf.mxu0
        %v3396 = vadd.f32 0.0, %v3395
        %3397 = vmatmul.f32.gmra.mxu0 %v1703
        %v3398 = vpop.f32.mrf.mxu0
        %v3399 = vadd.f32 0.0, %v3398
        %3400 = vmatmul.f32.gmra.mxu0 %v1706
        %v3401 = vpop.f32.mrf.mxu0
        %v3402 = vadd.f32 0.0, %v3401
        %3403 = vmatmul.f32.gmra.mxu0 %v1709
        %v3404 = vpop.f32.mrf.mxu0
        %v3405 = vadd.f32 0.0, %v3404
        %3406 = vmatmul.f32.gmra.mxu0 %v1712
        %v3407 = vpop.f32.mrf.mxu0
        %v3408 = vadd.f32 0.0, %v3407
        %3409 = vmatmul.f32.gmra.mxu0 %v1715
        %v3410 = vpop.f32.mrf.mxu0
        %v3411 = vadd.f32 0.0, %v3410
        %3412 = vmatmul.f32.gmra.mxu0 %v1718
        %v3413 = vpop.f32.mrf.mxu0
        %v3414 = vadd.f32 0.0, %v3413
        %3415 = vmatmul.f32.gmra.mxu0 %v1721
        %v3416 = vpop.f32.mrf.mxu0
        %v3417 = vadd.f32 0.0, %v3416
        %3418 = vmatmul.f32.gmra.mxu0 %v1724
        %v3419 = vpop.f32.mrf.mxu0
        %v3420 = vadd.f32 0.0, %v3419
        %3421 = vmatmul.f32.gmra.mxu0 %v1727
        %v3422 = vpop.f32.mrf.mxu0
        %v3423 = vadd.f32 0.0, %v3422
        %3424 = vmatmul.f32.gmra.mxu0 %v1730
        %v3425 = vpop.f32.mrf.mxu0
        %v3426 = vadd.f32 0.0, %v3425
        %3427 = vmatmul.f32.gmra.mxu0 %v1733
        %v3428 = vpop.f32.mrf.mxu0
        %v3429 = vadd.f32 0.0, %v3428
        %3430 = vmatmul.f32.gmra.mxu0 %v1736
        %v3431 = vpop.f32.mrf.mxu0
        %v3432 = vadd.f32 0.0, %v3431
        %3433 = vmatmul.f32.gmra.mxu0 %v1739
        %v3434 = vpop.f32.mrf.mxu0
        %v3435 = vadd.f32 0.0, %v3434
        %3436 = vmatmul.f32.gmra.mxu0 %v1742
        %v3437 = vpop.f32.mrf.mxu0
        %v3438 = vadd.f32 0.0, %v3437
        %3439 = vmatmul.f32.gmra.mxu0 %v1745
        %v3440 = vpop.f32.mrf.mxu0
        %v3441 = vadd.f32 0.0, %v3440
        %3442 = vmatmul.f32.gmra.mxu0 %v1748
        %v3443 = vpop.f32.mrf.mxu0
        %v3444 = vadd.f32 0.0, %v3443
        %3445 = vmatmul.f32.gmra.mxu0 %v1751
        %v3446 = vpop.f32.mrf.mxu0
        %v3447 = vadd.f32 0.0, %v3446
        %3448 = vmatmul.f32.gmra.mxu0 %v1754
        %v3449 = vpop.f32.mrf.mxu0
        %v3450 = vadd.f32 0.0, %v3449
        %3451 = vmatmul.f32.gmra.mxu0 %v1757
        %v3452 = vpop.f32.mrf.mxu0
        %v3453 = vadd.f32 0.0, %v3452
        %3454 = vmatmul.f32.gmra.mxu0 %v1760
        %v3455 = vpop.f32.mrf.mxu0
        %v3456 = vadd.f32 0.0, %v3455
        %3457 = vmatmul.f32.gmra.mxu0 %v1763
        %v3458 = vpop.f32.mrf.mxu0
        %v3459 = vadd.f32 0.0, %v3458
        %3460 = vmatmul.f32.gmra.mxu0 %v1766
        %v3461 = vpop.f32.mrf.mxu0
        %v3462 = vadd.f32 0.0, %v3461
        %3463 = vmatmul.f32.gmra.mxu0 %v1769
        %v3464 = vpop.f32.mrf.mxu0
        %v3465 = vadd.f32 0.0, %v3464
        %3466 = vmatmul.f32.gmra.mxu0 %v1772
        %v3467 = vpop.f32.mrf.mxu0
        %v3468 = vadd.f32 0.0, %v3467
        %3469 = vmatmul.f32.gmra.mxu0 %v1775
        %v3470 = vpop.f32.mrf.mxu0
        %v3471 = vadd.f32 0.0, %v3470
        %3472 = vdwg.mxu0
        %v3473 = vsub.f32 %v1819, %v1430
        %v3474 = vsub.f32 %v2028, %v1431
        %v3475 = vsub.f32 %v2237, %v1432
        %v3476 = vsub.f32 %v2446, %v1433
        %v3477 = vsub.f32 %v2655, %v1434
        %v3478 = vsub.f32 %v2864, %v1435
        %v3479 = vsub.f32 %v3073, %v1436
        %v3480 = vsub.f32 %v3282, %v1437
        %v3481 = vsub.f32 %v1822, %v1430
        %v3482 = vsub.f32 %v2031, %v1431
        %v3483 = vsub.f32 %v2240, %v1432
        %v3484 = vsub.f32 %v2449, %v1433
        %v3485 = vsub.f32 %v2658, %v1434
        %v3486 = vsub.f32 %v2867, %v1435
        %v3487 = vsub.f32 %v3076, %v1436
        %v3488 = vsub.f32 %v3285, %v1437
        %v3489 = vsub.f32 %v1825, %v1430
        %v3490 = vsub.f32 %v2034, %v1431
        %v3491 = vsub.f32 %v2243, %v1432
        %v3492 = vsub.f32 %v2452, %v1433
        %v3493 = vsub.f32 %v2661, %v1434
        %v3494 = vsub.f32 %v2870, %v1435
        %v3495 = vsub.f32 %v3079, %v1436
        %v3496 = vsub.f32 %v3288, %v1437
        %v3497 = vsub.f32 %v1828, %v1430
        %v3498 = vsub.f32 %v2037, %v1431
        %v3499 = vsub.f32 %v2246, %v1432
        %v3500 = vsub.f32 %v2455, %v1433
        %v3501 = vsub.f32 %v2664, %v1434
        %v3502 = vsub.f32 %v2873, %v1435
        %v3503 = vsub.f32 %v3082, %v1436
        %v3504 = vsub.f32 %v3291, %v1437
        %v3505 = vsub.f32 %v1831, %v1430
        %v3506 = vsub.f32 %v2040, %v1431
        %v3507 = vsub.f32 %v2249, %v1432
        %v3508 = vsub.f32 %v2458, %v1433
        %v3509 = vsub.f32 %v2667, %v1434
        %v3510 = vsub.f32 %v2876, %v1435
        %v3511 = vsub.f32 %v3085, %v1436
        %v3512 = vsub.f32 %v3294, %v1437
        %v3513 = vsub.f32 %v1834, %v1430
        %v3514 = vsub.f32 %v2043, %v1431
        %v3515 = vsub.f32 %v2252, %v1432
        %v3516 = vsub.f32 %v2461, %v1433
        %v3517 = vsub.f32 %v2670, %v1434
        %v3518 = vsub.f32 %v2879, %v1435
        %v3519 = vsub.f32 %v3088, %v1436
        %v3520 = vsub.f32 %v3297, %v1437
        %v3521 = vsub.f32 %v1837, %v1430
        %v3522 = vsub.f32 %v2046, %v1431
        %v3523 = vsub.f32 %v2255, %v1432
        %v3524 = vsub.f32 %v2464, %v1433
        %v3525 = vsub.f32 %v2673, %v1434
        %v3526 = vsub.f32 %v2882, %v1435
        %v3527 = vsub.f32 %v3091, %v1436
        %v3528 = vsub.f32 %v3300, %v1437
        %v3529 = vsub.f32 %v1840, %v1430
        %v3530 = vsub.f32 %v2049, %v1431
        %v3531 = vsub.f32 %v2258, %v1432
        %v3532 = vsub.f32 %v2467, %v1433
        %v3533 = vsub.f32 %v2676, %v1434
        %v3534 = vsub.f32 %v2885, %v1435
        %v3535 = vsub.f32 %v3094, %v1436
        %v3536 = vsub.f32 %v3303, %v1437
        %v3537 = vsub.f32 %v1843, %v1430
        %v3538 = vsub.f32 %v2052, %v1431
        %v3539 = vsub.f32 %v2261, %v1432
        %v3540 = vsub.f32 %v2470, %v1433
        %v3541 = vsub.f32 %v2679, %v1434
        %v3542 = vsub.f32 %v2888, %v1435
        %v3543 = vsub.f32 %v3097, %v1436
        %v3544 = vsub.f32 %v3306, %v1437
        %v3545 = vsub.f32 %v1846, %v1430
        %v3546 = vsub.f32 %v2055, %v1431
        %v3547 = vsub.f32 %v2264, %v1432
        %v3548 = vsub.f32 %v2473, %v1433
        %v3549 = vsub.f32 %v2682, %v1434
        %v3550 = vsub.f32 %v2891, %v1435
        %v3551 = vsub.f32 %v3100, %v1436
        %v3552 = vsub.f32 %v3309, %v1437
        %v3553 = vsub.f32 %v1849, %v1430
        %v3554 = vsub.f32 %v2058, %v1431
        %v3555 = vsub.f32 %v2267, %v1432
        %v3556 = vsub.f32 %v2476, %v1433
        %v3557 = vsub.f32 %v2685, %v1434
        %v3558 = vsub.f32 %v2894, %v1435
        %v3559 = vsub.f32 %v3103, %v1436
        %v3560 = vsub.f32 %v3312, %v1437
        %v3561 = vsub.f32 %v1852, %v1430
        %v3562 = vsub.f32 %v2061, %v1431
        %v3563 = vsub.f32 %v2270, %v1432
        %v3564 = vsub.f32 %v2479, %v1433
        %v3565 = vsub.f32 %v2688, %v1434
        %v3566 = vsub.f32 %v2897, %v1435
        %v3567 = vsub.f32 %v3106, %v1436
        %v3568 = vsub.f32 %v3315, %v1437
        %v3569 = vsub.f32 %v1855, %v1430
        %v3570 = vsub.f32 %v2064, %v1431
        %v3571 = vsub.f32 %v2273, %v1432
        %v3572 = vsub.f32 %v2482, %v1433
        %v3573 = vsub.f32 %v2691, %v1434
        %v3574 = vsub.f32 %v2900, %v1435
        %v3575 = vsub.f32 %v3109, %v1436
        %v3576 = vsub.f32 %v3318, %v1437
        %v3577 = vsub.f32 %v1858, %v1430
        %v3578 = vsub.f32 %v2067, %v1431
        %v3579 = vsub.f32 %v2276, %v1432
        %v3580 = vsub.f32 %v2485, %v1433
        %v3581 = vsub.f32 %v2694, %v1434
        %v3582 = vsub.f32 %v2903, %v1435
        %v3583 = vsub.f32 %v3112, %v1436
        %v3584 = vsub.f32 %v3321, %v1437
        %v3585 = vsub.f32 %v1861, %v1430
        %v3586 = vsub.f32 %v2070, %v1431
        %v3587 = vsub.f32 %v2279, %v1432
        %v3588 = vsub.f32 %v2488, %v1433
        %v3589 = vsub.f32 %v2697, %v1434
        %v3590 = vsub.f32 %v2906, %v1435
        %v3591 = vsub.f32 %v3115, %v1436
        %v3592 = vsub.f32 %v3324, %v1437
        %v3593 = vsub.f32 %v1864, %v1430
        %v3594 = vsub.f32 %v2073, %v1431
        %v3595 = vsub.f32 %v2282, %v1432
        %v3596 = vsub.f32 %v2491, %v1433
        %v3597 = vsub.f32 %v2700, %v1434
        %v3598 = vsub.f32 %v2909, %v1435
        %v3599 = vsub.f32 %v3118, %v1436
        %v3600 = vsub.f32 %v3327, %v1437
        %v3601 = vsub.f32 %v1867, %v1430
        %v3602 = vsub.f32 %v2076, %v1431
        %v3603 = vsub.f32 %v2285, %v1432
        %v3604 = vsub.f32 %v2494, %v1433
        %v3605 = vsub.f32 %v2703, %v1434
        %v3606 = vsub.f32 %v2912, %v1435
        %v3607 = vsub.f32 %v3121, %v1436
        %v3608 = vsub.f32 %v3330, %v1437
        %v3609 = vsub.f32 %v1870, %v1430
        %v3610 = vsub.f32 %v2079, %v1431
        %v3611 = vsub.f32 %v2288, %v1432
        %v3612 = vsub.f32 %v2497, %v1433
        %v3613 = vsub.f32 %v2706, %v1434
        %v3614 = vsub.f32 %v2915, %v1435
        %v3615 = vsub.f32 %v3124, %v1436
        %v3616 = vsub.f32 %v3333, %v1437
        %v3617 = vsub.f32 %v1873, %v1430
        %v3618 = vsub.f32 %v2082, %v1431
        %v3619 = vsub.f32 %v2291, %v1432
        %v3620 = vsub.f32 %v2500, %v1433
        %v3621 = vsub.f32 %v2709, %v1434
        %v3622 = vsub.f32 %v2918, %v1435
        %v3623 = vsub.f32 %v3127, %v1436
        %v3624 = vsub.f32 %v3336, %v1437
        %v3625 = vsub.f32 %v1876, %v1430
        %v3626 = vsub.f32 %v2085, %v1431
        %v3627 = vsub.f32 %v2294, %v1432
        %v3628 = vsub.f32 %v2503, %v1433
        %v3629 = vsub.f32 %v2712, %v1434
        %v3630 = vsub.f32 %v2921, %v1435
        %v3631 = vsub.f32 %v3130, %v1436
        %v3632 = vsub.f32 %v3339, %v1437
        %v3633 = vsub.f32 %v1879, %v1430
        %v3634 = vsub.f32 %v2088, %v1431
        %v3635 = vsub.f32 %v2297, %v1432
        %v3636 = vsub.f32 %v2506, %v1433
        %v3637 = vsub.f32 %v2715, %v1434
        %v3638 = vsub.f32 %v2924, %v1435
        %v3639 = vsub.f32 %v3133, %v1436
        %v3640 = vsub.f32 %v3342, %v1437
        %v3641 = vsub.f32 %v1882, %v1430
        %v3642 = vsub.f32 %v2091, %v1431
        %v3643 = vsub.f32 %v2300, %v1432
        %v3644 = vsub.f32 %v2509, %v1433
        %v3645 = vsub.f32 %v2718, %v1434
        %v3646 = vsub.f32 %v2927, %v1435
        %v3647 = vsub.f32 %v3136, %v1436
        %v3648 = vsub.f32 %v3345, %v1437
        %v3649 = vsub.f32 %v1885, %v1430
        %v3650 = vsub.f32 %v2094, %v1431
        %v3651 = vsub.f32 %v2303, %v1432
        %v3652 = vsub.f32 %v2512, %v1433
        %v3653 = vsub.f32 %v2721, %v1434
        %v3654 = vsub.f32 %v2930, %v1435
        %v3655 = vsub.f32 %v3139, %v1436
        %v3656 = vsub.f32 %v3348, %v1437
        %v3657 = vsub.f32 %v1888, %v1430
        %v3658 = vsub.f32 %v2097, %v1431
        %v3659 = vsub.f32 %v2306, %v1432
        %v3660 = vsub.f32 %v2515, %v1433
        %v3661 = vsub.f32 %v2724, %v1434
        %v3662 = vsub.f32 %v2933, %v1435
        %v3663 = vsub.f32 %v3142, %v1436
        %v3664 = vsub.f32 %v3351, %v1437
        %v3665 = vsub.f32 %v1891, %v1430
        %v3666 = vsub.f32 %v2100, %v1431
        %v3667 = vsub.f32 %v2309, %v1432
        %v3668 = vsub.f32 %v2518, %v1433
        %v3669 = vsub.f32 %v2727, %v1434
        %v3670 = vsub.f32 %v2936, %v1435
        %v3671 = vsub.f32 %v3145, %v1436
        %v3672 = vsub.f32 %v3354, %v1437
        %v3673 = vsub.f32 %v1894, %v1430
        %v3674 = vsub.f32 %v2103, %v1431
        %v3675 = vsub.f32 %v2312, %v1432
        %v3676 = vsub.f32 %v2521, %v1433
        %v3677 = vsub.f32 %v2730, %v1434
        %v3678 = vsub.f32 %v2939, %v1435
        %v3679 = vsub.f32 %v3148, %v1436
        %v3680 = vsub.f32 %v3357, %v1437
        %v3681 = vsub.f32 %v1897, %v1430
        %v3682 = vsub.f32 %v2106, %v1431
        %v3683 = vsub.f32 %v2315, %v1432
        %v3684 = vsub.f32 %v2524, %v1433
        %v3685 = vsub.f32 %v2733, %v1434
        %v3686 = vsub.f32 %v2942, %v1435
        %v3687 = vsub.f32 %v3151, %v1436
        %v3688 = vsub.f32 %v3360, %v1437
        %v3689 = vsub.f32 %v1900, %v1430
        %v3690 = vsub.f32 %v2109, %v1431
        %v3691 = vsub.f32 %v2318, %v1432
        %v3692 = vsub.f32 %v2527, %v1433
        %v3693 = vsub.f32 %v2736, %v1434
        %v3694 = vsub.f32 %v2945, %v1435
        %v3695 = vsub.f32 %v3154, %v1436
        %v3696 = vsub.f32 %v3363, %v1437
        %v3697 = vsub.f32 %v1903, %v1430
        %v3698 = vsub.f32 %v2112, %v1431
        %v3699 = vsub.f32 %v2321, %v1432
        %v3700 = vsub.f32 %v2530, %v1433
        %v3701 = vsub.f32 %v2739, %v1434
        %v3702 = vsub.f32 %v2948, %v1435
        %v3703 = vsub.f32 %v3157, %v1436
        %v3704 = vsub.f32 %v3366, %v1437
        %v3705 = vsub.f32 %v1906, %v1430
        %v3706 = vsub.f32 %v2115, %v1431
        %v3707 = vsub.f32 %v2324, %v1432
        %v3708 = vsub.f32 %v2533, %v1433
        %v3709 = vsub.f32 %v2742, %v1434
        %v3710 = vsub.f32 %v2951, %v1435
        %v3711 = vsub.f32 %v3160, %v1436
        %v3712 = vsub.f32 %v3369, %v1437
        %v3713 = vsub.f32 %v1909, %v1430
        %v3714 = vsub.f32 %v2118, %v1431
        %v3715 = vsub.f32 %v2327, %v1432
        %v3716 = vsub.f32 %v2536, %v1433
        %v3717 = vsub.f32 %v2745, %v1434
        %v3718 = vsub.f32 %v2954, %v1435
        %v3719 = vsub.f32 %v3163, %v1436
        %v3720 = vsub.f32 %v3372, %v1437
        %v3721 = vsub.f32 %v1912, %v1430
        %v3722 = vsub.f32 %v2121, %v1431
        %v3723 = vsub.f32 %v2330, %v1432
        %v3724 = vsub.f32 %v2539, %v1433
        %v3725 = vsub.f32 %v2748, %v1434
        %v3726 = vsub.f32 %v2957, %v1435
        %v3727 = vsub.f32 %v3166, %v1436
        %v3728 = vsub.f32 %v3375, %v1437
        %v3729 = vsub.f32 %v1915, %v1430
        %v3730 = vsub.f32 %v2124, %v1431
        %v3731 = vsub.f32 %v2333, %v1432
        %v3732 = vsub.f32 %v2542, %v1433
        %v3733 = vsub.f32 %v2751, %v1434
        %v3734 = vsub.f32 %v2960, %v1435
        %v3735 = vsub.f32 %v3169, %v1436
        %v3736 = vsub.f32 %v3378, %v1437
        %v3737 = vsub.f32 %v1918, %v1430
        %v3738 = vsub.f32 %v2127, %v1431
        %v3739 = vsub.f32 %v2336, %v1432
        %v3740 = vsub.f32 %v2545, %v1433
        %v3741 = vsub.f32 %v2754, %v1434
        %v3742 = vsub.f32 %v2963, %v1435
        %v3743 = vsub.f32 %v3172, %v1436
        %v3744 = vsub.f32 %v3381, %v1437
        %v3745 = vsub.f32 %v1921, %v1430
        %v3746 = vsub.f32 %v2130, %v1431
        %v3747 = vsub.f32 %v2339, %v1432
        %v3748 = vsub.f32 %v2548, %v1433
        %v3749 = vsub.f32 %v2757, %v1434
        %v3750 = vsub.f32 %v2966, %v1435
        %v3751 = vsub.f32 %v3175, %v1436
        %v3752 = vsub.f32 %v3384, %v1437
        %v3753 = vsub.f32 %v1924, %v1430
        %v3754 = vsub.f32 %v2133, %v1431
        %v3755 = vsub.f32 %v2342, %v1432
        %v3756 = vsub.f32 %v2551, %v1433
        %v3757 = vsub.f32 %v2760, %v1434
        %v3758 = vsub.f32 %v2969, %v1435
        %v3759 = vsub.f32 %v3178, %v1436
        %v3760 = vsub.f32 %v3387, %v1437
        %v3761 = vsub.f32 %v1927, %v1430
        %v3762 = vsub.f32 %v2136, %v1431
        %v3763 = vsub.f32 %v2345, %v1432
        %v3764 = vsub.f32 %v2554, %v1433
        %v3765 = vsub.f32 %v2763, %v1434
        %v3766 = vsub.f32 %v2972, %v1435
        %v3767 = vsub.f32 %v3181, %v1436
        %v3768 = vsub.f32 %v3390, %v1437
        %v3769 = vsub.f32 %v1930, %v1430
        %v3770 = vsub.f32 %v2139, %v1431
        %v3771 = vsub.f32 %v2348, %v1432
        %v3772 = vsub.f32 %v2557, %v1433
        %v3773 = vsub.f32 %v2766, %v1434
        %v3774 = vsub.f32 %v2975, %v1435
        %v3775 = vsub.f32 %v3184, %v1436
        %v3776 = vsub.f32 %v3393, %v1437
        %v3777 = vsub.f32 %v1933, %v1430
        %v3778 = vsub.f32 %v2142, %v1431
        %v3779 = vsub.f32 %v2351, %v1432
        %v3780 = vsub.f32 %v2560, %v1433
        %v3781 = vsub.f32 %v2769, %v1434
        %v3782 = vsub.f32 %v2978, %v1435
        %v3783 = vsub.f32 %v3187, %v1436
        %v3784 = vsub.f32 %v3396, %v1437
        %v3785 = vsub.f32 %v1936, %v1430
        %v3786 = vsub.f32 %v2145, %v1431
        %v3787 = vsub.f32 %v2354, %v1432
        %v3788 = vsub.f32 %v2563, %v1433
        %v3789 = vsub.f32 %v2772, %v1434
        %v3790 = vsub.f32 %v2981, %v1435
        %v3791 = vsub.f32 %v3190, %v1436
        %v3792 = vsub.f32 %v3399, %v1437
        %v3793 = vsub.f32 %v1939, %v1430
        %v3794 = vsub.f32 %v2148, %v1431
        %v3795 = vsub.f32 %v2357, %v1432
        %v3796 = vsub.f32 %v2566, %v1433
        %v3797 = vsub.f32 %v2775, %v1434
        %v3798 = vsub.f32 %v2984, %v1435
        %v3799 = vsub.f32 %v3193, %v1436
        %v3800 = vsub.f32 %v3402, %v1437
        %v3801 = vsub.f32 %v1942, %v1430
        %v3802 = vsub.f32 %v2151, %v1431
        %v3803 = vsub.f32 %v2360, %v1432
        %v3804 = vsub.f32 %v2569, %v1433
        %v3805 = vsub.f32 %v2778, %v1434
        %v3806 = vsub.f32 %v2987, %v1435
        %v3807 = vsub.f32 %v3196, %v1436
        %v3808 = vsub.f32 %v3405, %v1437
        %v3809 = vsub.f32 %v1945, %v1430
        %v3810 = vsub.f32 %v2154, %v1431
        %v3811 = vsub.f32 %v2363, %v1432
        %v3812 = vsub.f32 %v2572, %v1433
        %v3813 = vsub.f32 %v2781, %v1434
        %v3814 = vsub.f32 %v2990, %v1435
        %v3815 = vsub.f32 %v3199, %v1436
        %v3816 = vsub.f32 %v3408, %v1437
        %v3817 = vsub.f32 %v1948, %v1430
        %v3818 = vsub.f32 %v2157, %v1431
        %v3819 = vsub.f32 %v2366, %v1432
        %v3820 = vsub.f32 %v2575, %v1433
        %v3821 = vsub.f32 %v2784, %v1434
        %v3822 = vsub.f32 %v2993, %v1435
        %v3823 = vsub.f32 %v3202, %v1436
        %v3824 = vsub.f32 %v3411, %v1437
        %v3825 = vsub.f32 %v1951, %v1430
        %v3826 = vsub.f32 %v2160, %v1431
        %v3827 = vsub.f32 %v2369, %v1432
        %v3828 = vsub.f32 %v2578, %v1433
        %v3829 = vsub.f32 %v2787, %v1434
        %v3830 = vsub.f32 %v2996, %v1435
        %v3831 = vsub.f32 %v3205, %v1436
        %v3832 = vsub.f32 %v3414, %v1437
        %v3833 = vsub.f32 %v1954, %v1430
        %v3834 = vsub.f32 %v2163, %v1431
        %v3835 = vsub.f32 %v2372, %v1432
        %v3836 = vsub.f32 %v2581, %v1433
        %v3837 = vsub.f32 %v2790, %v1434
        %v3838 = vsub.f32 %v2999, %v1435
        %v3839 = vsub.f32 %v3208, %v1436
        %v3840 = vsub.f32 %v3417, %v1437
        %v3841 = vsub.f32 %v1957, %v1430
        %v3842 = vsub.f32 %v2166, %v1431
        %v3843 = vsub.f32 %v2375, %v1432
        %v3844 = vsub.f32 %v2584, %v1433
        %v3845 = vsub.f32 %v2793, %v1434
        %v3846 = vsub.f32 %v3002, %v1435
        %v3847 = vsub.f32 %v3211, %v1436
        %v3848 = vsub.f32 %v3420, %v1437
        %v3849 = vsub.f32 %v1960, %v1430
        %v3850 = vsub.f32 %v2169, %v1431
        %v3851 = vsub.f32 %v2378, %v1432
        %v3852 = vsub.f32 %v2587, %v1433
        %v3853 = vsub.f32 %v2796, %v1434
        %v3854 = vsub.f32 %v3005, %v1435
        %v3855 = vsub.f32 %v3214, %v1436
        %v3856 = vsub.f32 %v3423, %v1437
        %v3857 = vsub.f32 %v1963, %v1430
        %v3858 = vsub.f32 %v2172, %v1431
        %v3859 = vsub.f32 %v2381, %v1432
        %v3860 = vsub.f32 %v2590, %v1433
        %v3861 = vsub.f32 %v2799, %v1434
        %v3862 = vsub.f32 %v3008, %v1435
        %v3863 = vsub.f32 %v3217, %v1436
        %v3864 = vsub.f32 %v3426, %v1437
        %v3865 = vsub.f32 %v1966, %v1430
        %v3866 = vsub.f32 %v2175, %v1431
        %v3867 = vsub.f32 %v2384, %v1432
        %v3868 = vsub.f32 %v2593, %v1433
        %v3869 = vsub.f32 %v2802, %v1434
        %v3870 = vsub.f32 %v3011, %v1435
        %v3871 = vsub.f32 %v3220, %v1436
        %v3872 = vsub.f32 %v3429, %v1437
        %v3873 = vsub.f32 %v1969, %v1430
        %v3874 = vsub.f32 %v2178, %v1431
        %v3875 = vsub.f32 %v2387, %v1432
        %v3876 = vsub.f32 %v2596, %v1433
        %v3877 = vsub.f32 %v2805, %v1434
        %v3878 = vsub.f32 %v3014, %v1435
        %v3879 = vsub.f32 %v3223, %v1436
        %v3880 = vsub.f32 %v3432, %v1437
        %v3881 = vsub.f32 %v1972, %v1430
        %v3882 = vsub.f32 %v2181, %v1431
        %v3883 = vsub.f32 %v2390, %v1432
        %v3884 = vsub.f32 %v2599, %v1433
        %v3885 = vsub.f32 %v2808, %v1434
        %v3886 = vsub.f32 %v3017, %v1435
        %v3887 = vsub.f32 %v3226, %v1436
        %v3888 = vsub.f32 %v3435, %v1437
        %v3889 = vsub.f32 %v1975, %v1430
        %v3890 = vsub.f32 %v2184, %v1431
        %v3891 = vsub.f32 %v2393, %v1432
        %v3892 = vsub.f32 %v2602, %v1433
        %v3893 = vsub.f32 %v2811, %v1434
        %v3894 = vsub.f32 %v3020, %v1435
        %v3895 = vsub.f32 %v3229, %v1436
        %v3896 = vsub.f32 %v3438, %v1437
        %v3897 = vsub.f32 %v1978, %v1430
        %v3898 = vsub.f32 %v2187, %v1431
        %v3899 = vsub.f32 %v2396, %v1432
        %v3900 = vsub.f32 %v2605, %v1433
        %v3901 = vsub.f32 %v2814, %v1434
        %v3902 = vsub.f32 %v3023, %v1435
        %v3903 = vsub.f32 %v3232, %v1436
        %v3904 = vsub.f32 %v3441, %v1437
        %v3905 = vsub.f32 %v1981, %v1430
        %v3906 = vsub.f32 %v2190, %v1431
        %v3907 = vsub.f32 %v2399, %v1432
        %v3908 = vsub.f32 %v2608, %v1433
        %v3909 = vsub.f32 %v2817, %v1434
        %v3910 = vsub.f32 %v3026, %v1435
        %v3911 = vsub.f32 %v3235, %v1436
        %v3912 = vsub.f32 %v3444, %v1437
        %v3913 = vsub.f32 %v1984, %v1430
        %v3914 = vsub.f32 %v2193, %v1431
        %v3915 = vsub.f32 %v2402, %v1432
        %v3916 = vsub.f32 %v2611, %v1433
        %v3917 = vsub.f32 %v2820, %v1434
        %v3918 = vsub.f32 %v3029, %v1435
        %v3919 = vsub.f32 %v3238, %v1436
        %v3920 = vsub.f32 %v3447, %v1437
        %v3921 = vsub.f32 %v1987, %v1430
        %v3922 = vsub.f32 %v2196, %v1431
        %v3923 = vsub.f32 %v2405, %v1432
        %v3924 = vsub.f32 %v2614, %v1433
        %v3925 = vsub.f32 %v2823, %v1434
        %v3926 = vsub.f32 %v3032, %v1435
        %v3927 = vsub.f32 %v3241, %v1436
        %v3928 = vsub.f32 %v3450, %v1437
        %v3929 = vsub.f32 %v1990, %v1430
        %v3930 = vsub.f32 %v2199, %v1431
        %v3931 = vsub.f32 %v2408, %v1432
        %v3932 = vsub.f32 %v2617, %v1433
        %v3933 = vsub.f32 %v2826, %v1434
        %v3934 = vsub.f32 %v3035, %v1435
        %v3935 = vsub.f32 %v3244, %v1436
        %v3936 = vsub.f32 %v3453, %v1437
        %v3937 = vsub.f32 %v1993, %v1430
        %v3938 = vsub.f32 %v2202, %v1431
        %v3939 = vsub.f32 %v2411, %v1432
        %v3940 = vsub.f32 %v2620, %v1433
        %v3941 = vsub.f32 %v2829, %v1434
        %v3942 = vsub.f32 %v3038, %v1435
        %v3943 = vsub.f32 %v3247, %v1436
        %v3944 = vsub.f32 %v3456, %v1437
        %v3945 = vsub.f32 %v1996, %v1430
        %v3946 = vsub.f32 %v2205, %v1431
        %v3947 = vsub.f32 %v2414, %v1432
        %v3948 = vsub.f32 %v2623, %v1433
        %v3949 = vsub.f32 %v2832, %v1434
        %v3950 = vsub.f32 %v3041, %v1435
        %v3951 = vsub.f32 %v3250, %v1436
        %v3952 = vsub.f32 %v3459, %v1437
        %v3953 = vsub.f32 %v1999, %v1430
        %v3954 = vsub.f32 %v2208, %v1431
        %v3955 = vsub.f32 %v2417, %v1432
        %v3956 = vsub.f32 %v2626, %v1433
        %v3957 = vsub.f32 %v2835, %v1434
        %v3958 = vsub.f32 %v3044, %v1435
        %v3959 = vsub.f32 %v3253, %v1436
        %v3960 = vsub.f32 %v3462, %v1437
        %v3961 = vsub.f32 %v2002, %v1430
        %v3962 = vsub.f32 %v2211, %v1431
        %v3963 = vsub.f32 %v2420, %v1432
        %v3964 = vsub.f32 %v2629, %v1433
        %v3965 = vsub.f32 %v2838, %v1434
        %v3966 = vsub.f32 %v3047, %v1435
        %v3967 = vsub.f32 %v3256, %v1436
        %v3968 = vsub.f32 %v3465, %v1437
        %v3969 = vsub.f32 %v2005, %v1430
        %v3970 = vsub.f32 %v2214, %v1431
        %v3971 = vsub.f32 %v2423, %v1432
        %v3972 = vsub.f32 %v2632, %v1433
        %v3973 = vsub.f32 %v2841, %v1434
        %v3974 = vsub.f32 %v3050, %v1435
        %v3975 = vsub.f32 %v3259, %v1436
        %v3976 = vsub.f32 %v3468, %v1437
        %v3977 = vsub.f32 %v2008, %v1430
        %v3978 = vsub.f32 %v2217, %v1431
        %v3979 = vsub.f32 %v2426, %v1432
        %v3980 = vsub.f32 %v2635, %v1433
        %v3981 = vsub.f32 %v2844, %v1434
        %v3982 = vsub.f32 %v3053, %v1435
        %v3983 = vsub.f32 %v3262, %v1436
        %v3984 = vsub.f32 %v3471, %v1437
        %v3985 = vmul.f32 %v3473, 1.442695
        %v3986 = vpow.pop %v3985
        %v3987 = vmul.f32 %v3474, 1.442695
        %v3988 = vpow.pop %v3987
        %v3989 = vmul.f32 %v3475, 1.442695
        %v3990 = vpow.pop %v3989
        %v3991 = vmul.f32 %v3476, 1.442695
        %v3992 = vpow.pop %v3991
        %v3993 = vmul.f32 %v3477, 1.442695
        %v3994 = vpow.pop %v3993
        %v3995 = vmul.f32 %v3478, 1.442695
        %v3996 = vpow.pop %v3995
        %v3997 = vmul.f32 %v3479, 1.442695
        %v3998 = vpow.pop %v3997
        %v3999 = vmul.f32 %v3480, 1.442695
        %v4000 = vpow.pop %v3999
        %v4001 = vmul.f32 %v3481, 1.442695
        %v4002 = vpow.pop %v4001
        %v4003 = vmul.f32 %v3482, 1.442695
        %v4004 = vpow.pop %v4003
        %v4005 = vmul.f32 %v3483, 1.442695
        %v4006 = vpow.pop %v4005
        %v4007 = vmul.f32 %v3484, 1.442695
        %v4008 = vpow.pop %v4007
        %v4009 = vmul.f32 %v3485, 1.442695
        %v4010 = vpow.pop %v4009
        %v4011 = vmul.f32 %v3486, 1.442695
        %v4012 = vpow.pop %v4011
        %v4013 = vmul.f32 %v3487, 1.442695
        %v4014 = vpow.pop %v4013
        %v4015 = vmul.f32 %v3488, 1.442695
        %v4016 = vpow.pop %v4015
        %v4017 = vmul.f32 %v3489, 1.442695
        %v4018 = vpow.pop %v4017
        %v4019 = vmul.f32 %v3490, 1.442695
        %v4020 = vpow.pop %v4019
        %v4021 = vmul.f32 %v3491, 1.442695
        %v4022 = vpow.pop %v4021
        %v4023 = vmul.f32 %v3492, 1.442695
        %v4024 = vpow.pop %v4023
        %v4025 = vmul.f32 %v3493, 1.442695
        %v4026 = vpow.pop %v4025
        %v4027 = vmul.f32 %v3494, 1.442695
        %v4028 = vpow.pop %v4027
        %v4029 = vmul.f32 %v3495, 1.442695
        %v4030 = vpow.pop %v4029
        %v4031 = vmul.f32 %v3496, 1.442695
        %v4032 = vpow.pop %v4031
        %v4033 = vmul.f32 %v3497, 1.442695
        %v4034 = vpow.pop %v4033
        %v4035 = vmul.f32 %v3498, 1.442695
        %v4036 = vpow.pop %v4035
        %v4037 = vmul.f32 %v3499, 1.442695
        %v4038 = vpow.pop %v4037
        %v4039 = vmul.f32 %v3500, 1.442695
        %v4040 = vpow.pop %v4039
        %v4041 = vmul.f32 %v3501, 1.442695
        %v4042 = vpow.pop %v4041
        %v4043 = vmul.f32 %v3502, 1.442695
        %v4044 = vpow.pop %v4043
        %v4045 = vmul.f32 %v3503, 1.442695
        %v4046 = vpow.pop %v4045
        %v4047 = vmul.f32 %v3504, 1.442695
        %v4048 = vpow.pop %v4047
        %v4049 = vmul.f32 %v3505, 1.442695
        %v4050 = vpow.pop %v4049
        %v4051 = vmul.f32 %v3506, 1.442695
        %v4052 = vpow.pop %v4051
        %v4053 = vmul.f32 %v3507, 1.442695
        %v4054 = vpow.pop %v4053
        %v4055 = vmul.f32 %v3508, 1.442695
        %v4056 = vpow.pop %v4055
        %v4057 = vmul.f32 %v3509, 1.442695
        %v4058 = vpow.pop %v4057
        %v4059 = vmul.f32 %v3510, 1.442695
        %v4060 = vpow.pop %v4059
        %v4061 = vmul.f32 %v3511, 1.442695
        %v4062 = vpow.pop %v4061
        %v4063 = vmul.f32 %v3512, 1.442695
        %v4064 = vpow.pop %v4063
        %v4065 = vmul.f32 %v3513, 1.442695
        %v4066 = vpow.pop %v4065
        %v4067 = vmul.f32 %v3514, 1.442695
        %v4068 = vpow.pop %v4067
        %v4069 = vmul.f32 %v3515, 1.442695
        %v4070 = vpow.pop %v4069
        %v4071 = vmul.f32 %v3516, 1.442695
        %v4072 = vpow.pop %v4071
        %v4073 = vmul.f32 %v3517, 1.442695
        %v4074 = vpow.pop %v4073
        %v4075 = vmul.f32 %v3518, 1.442695
        %v4076 = vpow.pop %v4075
        %v4077 = vmul.f32 %v3519, 1.442695
        %v4078 = vpow.pop %v4077
        %v4079 = vmul.f32 %v3520, 1.442695
        %v4080 = vpow.pop %v4079
        %v4081 = vmul.f32 %v3521, 1.442695
        %v4082 = vpow.pop %v4081
        %v4083 = vmul.f32 %v3522, 1.442695
        %v4084 = vpow.pop %v4083
        %v4085 = vmul.f32 %v3523, 1.442695
        %v4086 = vpow.pop %v4085
        %v4087 = vmul.f32 %v3524, 1.442695
        %v4088 = vpow.pop %v4087
        %v4089 = vmul.f32 %v3525, 1.442695
        %v4090 = vpow.pop %v4089
        %v4091 = vmul.f32 %v3526, 1.442695
        %v4092 = vpow.pop %v4091
        %v4093 = vmul.f32 %v3527, 1.442695
        %v4094 = vpow.pop %v4093
        %v4095 = vmul.f32 %v3528, 1.442695
        %v4096 = vpow.pop %v4095
        %v4097 = vmul.f32 %v3529, 1.442695
        %v4098 = vpow.pop %v4097
        %v4099 = vmul.f32 %v3530, 1.442695
        %v4100 = vpow.pop %v4099
        %v4101 = vmul.f32 %v3531, 1.442695
        %v4102 = vpow.pop %v4101
        %v4103 = vmul.f32 %v3532, 1.442695
        %v4104 = vpow.pop %v4103
        %v4105 = vmul.f32 %v3533, 1.442695
        %v4106 = vpow.pop %v4105
        %v4107 = vmul.f32 %v3534, 1.442695
        %v4108 = vpow.pop %v4107
        %v4109 = vmul.f32 %v3535, 1.442695
        %v4110 = vpow.pop %v4109
        %v4111 = vmul.f32 %v3536, 1.442695
        %v4112 = vpow.pop %v4111
        %v4113 = vmul.f32 %v3537, 1.442695
        %v4114 = vpow.pop %v4113
        %v4115 = vmul.f32 %v3538, 1.442695
        %v4116 = vpow.pop %v4115
        %v4117 = vmul.f32 %v3539, 1.442695
        %v4118 = vpow.pop %v4117
        %v4119 = vmul.f32 %v3540, 1.442695
        %v4120 = vpow.pop %v4119
        %v4121 = vmul.f32 %v3541, 1.442695
        %v4122 = vpow.pop %v4121
        %v4123 = vmul.f32 %v3542, 1.442695
        %v4124 = vpow.pop %v4123
        %v4125 = vmul.f32 %v3543, 1.442695
        %v4126 = vpow.pop %v4125
        %v4127 = vmul.f32 %v3544, 1.442695
        %v4128 = vpow.pop %v4127
        %v4129 = vmul.f32 %v3545, 1.442695
        %v4130 = vpow.pop %v4129
        %v4131 = vmul.f32 %v3546, 1.442695
        %v4132 = vpow.pop %v4131
        %v4133 = vmul.f32 %v3547, 1.442695
        %v4134 = vpow.pop %v4133
        %v4135 = vmul.f32 %v3548, 1.442695
        %v4136 = vpow.pop %v4135
        %v4137 = vmul.f32 %v3549, 1.442695
        %v4138 = vpow.pop %v4137
        %v4139 = vmul.f32 %v3550, 1.442695
        %v4140 = vpow.pop %v4139
        %v4141 = vmul.f32 %v3551, 1.442695
        %v4142 = vpow.pop %v4141
        %v4143 = vmul.f32 %v3552, 1.442695
        %v4144 = vpow.pop %v4143
        %v4145 = vmul.f32 %v3553, 1.442695
        %v4146 = vpow.pop %v4145
        %v4147 = vmul.f32 %v3554, 1.442695
        %v4148 = vpow.pop %v4147
        %v4149 = vmul.f32 %v3555, 1.442695
        %v4150 = vpow.pop %v4149
        %v4151 = vmul.f32 %v3556, 1.442695
        %v4152 = vpow.pop %v4151
        %v4153 = vmul.f32 %v3557, 1.442695
        %v4154 = vpow.pop %v4153
        %v4155 = vmul.f32 %v3558, 1.442695
        %v4156 = vpow.pop %v4155
        %v4157 = vmul.f32 %v3559, 1.442695
        %v4158 = vpow.pop %v4157
        %v4159 = vmul.f32 %v3560, 1.442695
        %v4160 = vpow.pop %v4159
        %v4161 = vmul.f32 %v3561, 1.442695
        %v4162 = vpow.pop %v4161
        %v4163 = vmul.f32 %v3562, 1.442695
        %v4164 = vpow.pop %v4163
        %v4165 = vmul.f32 %v3563, 1.442695
        %v4166 = vpow.pop %v4165
        %v4167 = vmul.f32 %v3564, 1.442695
        %v4168 = vpow.pop %v4167
        %v4169 = vmul.f32 %v3565, 1.442695
        %v4170 = vpow.pop %v4169
        %v4171 = vmul.f32 %v3566, 1.442695
        %v4172 = vpow.pop %v4171
        %v4173 = vmul.f32 %v3567, 1.442695
        %v4174 = vpow.pop %v4173
        %v4175 = vmul.f32 %v3568, 1.442695
        %v4176 = vpow.pop %v4175
        %v4177 = vmul.f32 %v3569, 1.442695
        %v4178 = vpow.pop %v4177
        %v4179 = vmul.f32 %v3570, 1.442695
        %v4180 = vpow.pop %v4179
        %v4181 = vmul.f32 %v3571, 1.442695
        %v4182 = vpow.pop %v4181
        %v4183 = vmul.f32 %v3572, 1.442695
        %v4184 = vpow.pop %v4183
        %v4185 = vmul.f32 %v3573, 1.442695
        %v4186 = vpow.pop %v4185
        %v4187 = vmul.f32 %v3574, 1.442695
        %v4188 = vpow.pop %v4187
        %v4189 = vmul.f32 %v3575, 1.442695
        %v4190 = vpow.pop %v4189
        %v4191 = vmul.f32 %v3576, 1.442695
        %v4192 = vpow.pop %v4191
        %v4193 = vmul.f32 %v3577, 1.442695
        %v4194 = vpow.pop %v4193
        %v4195 = vmul.f32 %v3578, 1.442695
        %v4196 = vpow.pop %v4195
        %v4197 = vmul.f32 %v3579, 1.442695
        %v4198 = vpow.pop %v4197
        %v4199 = vmul.f32 %v3580, 1.442695
        %v4200 = vpow.pop %v4199
        %v4201 = vmul.f32 %v3581, 1.442695
        %v4202 = vpow.pop %v4201
        %v4203 = vmul.f32 %v3582, 1.442695
        %v4204 = vpow.pop %v4203
        %v4205 = vmul.f32 %v3583, 1.442695
        %v4206 = vpow.pop %v4205
        %v4207 = vmul.f32 %v3584, 1.442695
        %v4208 = vpow.pop %v4207
        %v4209 = vmul.f32 %v3585, 1.442695
        %v4210 = vpow.pop %v4209
        %v4211 = vmul.f32 %v3586, 1.442695
        %v4212 = vpow.pop %v4211
        %v4213 = vmul.f32 %v3587, 1.442695
        %v4214 = vpow.pop %v4213
        %v4215 = vmul.f32 %v3588, 1.442695
        %v4216 = vpow.pop %v4215
        %v4217 = vmul.f32 %v3589, 1.442695
        %v4218 = vpow.pop %v4217
        %v4219 = vmul.f32 %v3590, 1.442695
        %v4220 = vpow.pop %v4219
        %v4221 = vmul.f32 %v3591, 1.442695
        %v4222 = vpow.pop %v4221
        %v4223 = vmul.f32 %v3592, 1.442695
        %v4224 = vpow.pop %v4223
        %v4225 = vmul.f32 %v3593, 1.442695
        %v4226 = vpow.pop %v4225
        %v4227 = vmul.f32 %v3594, 1.442695
        %v4228 = vpow.pop %v4227
        %v4229 = vmul.f32 %v3595, 1.442695
        %v4230 = vpow.pop %v4229
        %v4231 = vmul.f32 %v3596, 1.442695
        %v4232 = vpow.pop %v4231
        %v4233 = vmul.f32 %v3597, 1.442695
        %v4234 = vpow.pop %v4233
        %v4235 = vmul.f32 %v3598, 1.442695
        %v4236 = vpow.pop %v4235
        %v4237 = vmul.f32 %v3599, 1.442695
        %v4238 = vpow.pop %v4237
        %v4239 = vmul.f32 %v3600, 1.442695
        %v4240 = vpow.pop %v4239
        %v4241 = vmul.f32 %v3601, 1.442695
        %v4242 = vpow.pop %v4241
        %v4243 = vmul.f32 %v3602, 1.442695
        %v4244 = vpow.pop %v4243
        %v4245 = vmul.f32 %v3603, 1.442695
        %v4246 = vpow.pop %v4245
        %v4247 = vmul.f32 %v3604, 1.442695
        %v4248 = vpow.pop %v4247
        %v4249 = vmul.f32 %v3605, 1.442695
        %v4250 = vpow.pop %v4249
        %v4251 = vmul.f32 %v3606, 1.442695
        %v4252 = vpow.pop %v4251
        %v4253 = vmul.f32 %v3607, 1.442695
        %v4254 = vpow.pop %v4253
        %v4255 = vmul.f32 %v3608, 1.442695
        %v4256 = vpow.pop %v4255
        %v4257 = vmul.f32 %v3609, 1.442695
        %v4258 = vpow.pop %v4257
        %v4259 = vmul.f32 %v3610, 1.442695
        %v4260 = vpow.pop %v4259
        %v4261 = vmul.f32 %v3611, 1.442695
        %v4262 = vpow.pop %v4261
        %v4263 = vmul.f32 %v3612, 1.442695
        %v4264 = vpow.pop %v4263
        %v4265 = vmul.f32 %v3613, 1.442695
        %v4266 = vpow.pop %v4265
        %v4267 = vmul.f32 %v3614, 1.442695
        %v4268 = vpow.pop %v4267
        %v4269 = vmul.f32 %v3615, 1.442695
        %v4270 = vpow.pop %v4269
        %v4271 = vmul.f32 %v3616, 1.442695
        %v4272 = vpow.pop %v4271
        %v4273 = vmul.f32 %v3617, 1.442695
        %v4274 = vpow.pop %v4273
        %v4275 = vmul.f32 %v3618, 1.442695
        %v4276 = vpow.pop %v4275
        %v4277 = vmul.f32 %v3619, 1.442695
        %v4278 = vpow.pop %v4277
        %v4279 = vmul.f32 %v3620, 1.442695
        %v4280 = vpow.pop %v4279
        %v4281 = vmul.f32 %v3621, 1.442695
        %v4282 = vpow.pop %v4281
        %v4283 = vmul.f32 %v3622, 1.442695
        %v4284 = vpow.pop %v4283
        %v4285 = vmul.f32 %v3623, 1.442695
        %v4286 = vpow.pop %v4285
        %v4287 = vmul.f32 %v3624, 1.442695
        %v4288 = vpow.pop %v4287
        %v4289 = vmul.f32 %v3625, 1.442695
        %v4290 = vpow.pop %v4289
        %v4291 = vmul.f32 %v3626, 1.442695
        %v4292 = vpow.pop %v4291
        %v4293 = vmul.f32 %v3627, 1.442695
        %v4294 = vpow.pop %v4293
        %v4295 = vmul.f32 %v3628, 1.442695
        %v4296 = vpow.pop %v4295
        %v4297 = vmul.f32 %v3629, 1.442695
        %v4298 = vpow.pop %v4297
        %v4299 = vmul.f32 %v3630, 1.442695
        %v4300 = vpow.pop %v4299
        %v4301 = vmul.f32 %v3631, 1.442695
        %v4302 = vpow.pop %v4301
        %v4303 = vmul.f32 %v3632, 1.442695
        %v4304 = vpow.pop %v4303
        %v4305 = vmul.f32 %v3633, 1.442695
        %v4306 = vpow.pop %v4305
        %v4307 = vmul.f32 %v3634, 1.442695
        %v4308 = vpow.pop %v4307
        %v4309 = vmul.f32 %v3635, 1.442695
        %v4310 = vpow.pop %v4309
        %v4311 = vmul.f32 %v3636, 1.442695
        %v4312 = vpow.pop %v4311
        %v4313 = vmul.f32 %v3637, 1.442695
        %v4314 = vpow.pop %v4313
        %v4315 = vmul.f32 %v3638, 1.442695
        %v4316 = vpow.pop %v4315
        %v4317 = vmul.f32 %v3639, 1.442695
        %v4318 = vpow.pop %v4317
        %v4319 = vmul.f32 %v3640, 1.442695
        %v4320 = vpow.pop %v4319
        %v4321 = vmul.f32 %v3641, 1.442695
        %v4322 = vpow.pop %v4321
        %v4323 = vmul.f32 %v3642, 1.442695
        %v4324 = vpow.pop %v4323
        %v4325 = vmul.f32 %v3643, 1.442695
        %v4326 = vpow.pop %v4325
        %v4327 = vmul.f32 %v3644, 1.442695
        %v4328 = vpow.pop %v4327
        %v4329 = vmul.f32 %v3645, 1.442695
        %v4330 = vpow.pop %v4329
        %v4331 = vmul.f32 %v3646, 1.442695
        %v4332 = vpow.pop %v4331
        %v4333 = vmul.f32 %v3647, 1.442695
        %v4334 = vpow.pop %v4333
        %v4335 = vmul.f32 %v3648, 1.442695
        %v4336 = vpow.pop %v4335
        %v4337 = vmul.f32 %v3649, 1.442695
        %v4338 = vpow.pop %v4337
        %v4339 = vmul.f32 %v3650, 1.442695
        %v4340 = vpow.pop %v4339
        %v4341 = vmul.f32 %v3651, 1.442695
        %v4342 = vpow.pop %v4341
        %v4343 = vmul.f32 %v3652, 1.442695
        %v4344 = vpow.pop %v4343
        %v4345 = vmul.f32 %v3653, 1.442695
        %v4346 = vpow.pop %v4345
        %v4347 = vmul.f32 %v3654, 1.442695
        %v4348 = vpow.pop %v4347
        %v4349 = vmul.f32 %v3655, 1.442695
        %v4350 = vpow.pop %v4349
        %v4351 = vmul.f32 %v3656, 1.442695
        %v4352 = vpow.pop %v4351
        %v4353 = vmul.f32 %v3657, 1.442695
        %v4354 = vpow.pop %v4353
        %v4355 = vmul.f32 %v3658, 1.442695
        %v4356 = vpow.pop %v4355
        %v4357 = vmul.f32 %v3659, 1.442695
        %v4358 = vpow.pop %v4357
        %v4359 = vmul.f32 %v3660, 1.442695
        %v4360 = vpow.pop %v4359
        %v4361 = vmul.f32 %v3661, 1.442695
        %v4362 = vpow.pop %v4361
        %v4363 = vmul.f32 %v3662, 1.442695
        %v4364 = vpow.pop %v4363
        %v4365 = vmul.f32 %v3663, 1.442695
        %v4366 = vpow.pop %v4365
        %v4367 = vmul.f32 %v3664, 1.442695
        %v4368 = vpow.pop %v4367
        %v4369 = vmul.f32 %v3665, 1.442695
        %v4370 = vpow.pop %v4369
        %v4371 = vmul.f32 %v3666, 1.442695
        %v4372 = vpow.pop %v4371
        %v4373 = vmul.f32 %v3667, 1.442695
        %v4374 = vpow.pop %v4373
        %v4375 = vmul.f32 %v3668, 1.442695
        %v4376 = vpow.pop %v4375
        %v4377 = vmul.f32 %v3669, 1.442695
        %v4378 = vpow.pop %v4377
        %v4379 = vmul.f32 %v3670, 1.442695
        %v4380 = vpow.pop %v4379
        %v4381 = vmul.f32 %v3671, 1.442695
        %v4382 = vpow.pop %v4381
        %v4383 = vmul.f32 %v3672, 1.442695
        %v4384 = vpow.pop %v4383
        %v4385 = vmul.f32 %v3673, 1.442695
        %v4386 = vpow.pop %v4385
        %v4387 = vmul.f32 %v3674, 1.442695
        %v4388 = vpow.pop %v4387
        %v4389 = vmul.f32 %v3675, 1.442695
        %v4390 = vpow.pop %v4389
        %v4391 = vmul.f32 %v3676, 1.442695
        %v4392 = vpow.pop %v4391
        %v4393 = vmul.f32 %v3677, 1.442695
        %v4394 = vpow.pop %v4393
        %v4395 = vmul.f32 %v3678, 1.442695
        %v4396 = vpow.pop %v4395
        %v4397 = vmul.f32 %v3679, 1.442695
        %v4398 = vpow.pop %v4397
        %v4399 = vmul.f32 %v3680, 1.442695
        %v4400 = vpow.pop %v4399
        %v4401 = vmul.f32 %v3681, 1.442695
        %v4402 = vpow.pop %v4401
        %v4403 = vmul.f32 %v3682, 1.442695
        %v4404 = vpow.pop %v4403
        %v4405 = vmul.f32 %v3683, 1.442695
        %v4406 = vpow.pop %v4405
        %v4407 = vmul.f32 %v3684, 1.442695
        %v4408 = vpow.pop %v4407
        %v4409 = vmul.f32 %v3685, 1.442695
        %v4410 = vpow.pop %v4409
        %v4411 = vmul.f32 %v3686, 1.442695
        %v4412 = vpow.pop %v4411
        %v4413 = vmul.f32 %v3687, 1.442695
        %v4414 = vpow.pop %v4413
        %v4415 = vmul.f32 %v3688, 1.442695
        %v4416 = vpow.pop %v4415
        %v4417 = vmul.f32 %v3689, 1.442695
        %v4418 = vpow.pop %v4417
        %v4419 = vmul.f32 %v3690, 1.442695
        %v4420 = vpow.pop %v4419
        %v4421 = vmul.f32 %v3691, 1.442695
        %v4422 = vpow.pop %v4421
        %v4423 = vmul.f32 %v3692, 1.442695
        %v4424 = vpow.pop %v4423
        %v4425 = vmul.f32 %v3693, 1.442695
        %v4426 = vpow.pop %v4425
        %v4427 = vmul.f32 %v3694, 1.442695
        %v4428 = vpow.pop %v4427
        %v4429 = vmul.f32 %v3695, 1.442695
        %v4430 = vpow.pop %v4429
        %v4431 = vmul.f32 %v3696, 1.442695
        %v4432 = vpow.pop %v4431
        %v4433 = vmul.f32 %v3697, 1.442695
        %v4434 = vpow.pop %v4433
        %v4435 = vmul.f32 %v3698, 1.442695
        %v4436 = vpow.pop %v4435
        %v4437 = vmul.f32 %v3699, 1.442695
        %v4438 = vpow.pop %v4437
        %v4439 = vmul.f32 %v3700, 1.442695
        %v4440 = vpow.pop %v4439
        %v4441 = vmul.f32 %v3701, 1.442695
        %v4442 = vpow.pop %v4441
        %v4443 = vmul.f32 %v3702, 1.442695
        %v4444 = vpow.pop %v4443
        %v4445 = vmul.f32 %v3703, 1.442695
        %v4446 = vpow.pop %v4445
        %v4447 = vmul.f32 %v3704, 1.442695
        %v4448 = vpow.pop %v4447
        %v4449 = vmul.f32 %v3705, 1.442695
        %v4450 = vpow.pop %v4449
        %v4451 = vmul.f32 %v3706, 1.442695
        %v4452 = vpow.pop %v4451
        %v4453 = vmul.f32 %v3707, 1.442695
        %v4454 = vpow.pop %v4453
        %v4455 = vmul.f32 %v3708, 1.442695
        %v4456 = vpow.pop %v4455
        %v4457 = vmul.f32 %v3709, 1.442695
        %v4458 = vpow.pop %v4457
        %v4459 = vmul.f32 %v3710, 1.442695
        %v4460 = vpow.pop %v4459
        %v4461 = vmul.f32 %v3711, 1.442695
        %v4462 = vpow.pop %v4461
        %v4463 = vmul.f32 %v3712, 1.442695
        %v4464 = vpow.pop %v4463
        %v4465 = vmul.f32 %v3713, 1.442695
        %v4466 = vpow.pop %v4465
        %v4467 = vmul.f32 %v3714, 1.442695
        %v4468 = vpow.pop %v4467
        %v4469 = vmul.f32 %v3715, 1.442695
        %v4470 = vpow.pop %v4469
        %v4471 = vmul.f32 %v3716, 1.442695
        %v4472 = vpow.pop %v4471
        %v4473 = vmul.f32 %v3717, 1.442695
        %v4474 = vpow.pop %v4473
        %v4475 = vmul.f32 %v3718, 1.442695
        %v4476 = vpow.pop %v4475
        %v4477 = vmul.f32 %v3719, 1.442695
        %v4478 = vpow.pop %v4477
        %v4479 = vmul.f32 %v3720, 1.442695
        %v4480 = vpow.pop %v4479
        %v4481 = vmul.f32 %v3721, 1.442695
        %v4482 = vpow.pop %v4481
        %v4483 = vmul.f32 %v3722, 1.442695
        %v4484 = vpow.pop %v4483
        %v4485 = vmul.f32 %v3723, 1.442695
        %v4486 = vpow.pop %v4485
        %v4487 = vmul.f32 %v3724, 1.442695
        %v4488 = vpow.pop %v4487
        %v4489 = vmul.f32 %v3725, 1.442695
        %v4490 = vpow.pop %v4489
        %v4491 = vmul.f32 %v3726, 1.442695
        %v4492 = vpow.pop %v4491
        %v4493 = vmul.f32 %v3727, 1.442695
        %v4494 = vpow.pop %v4493
        %v4495 = vmul.f32 %v3728, 1.442695
        %v4496 = vpow.pop %v4495
        %v4497 = vmul.f32 %v3729, 1.442695
        %v4498 = vpow.pop %v4497
        %v4499 = vmul.f32 %v3730, 1.442695
        %v4500 = vpow.pop %v4499
        %v4501 = vmul.f32 %v3731, 1.442695
        %v4502 = vpow.pop %v4501
        %v4503 = vmul.f32 %v3732, 1.442695
        %v4504 = vpow.pop %v4503
        %v4505 = vmul.f32 %v3733, 1.442695
        %v4506 = vpow.pop %v4505
        %v4507 = vmul.f32 %v3734, 1.442695
        %v4508 = vpow.pop %v4507
        %v4509 = vmul.f32 %v3735, 1.442695
        %v4510 = vpow.pop %v4509
        %v4511 = vmul.f32 %v3736, 1.442695
        %v4512 = vpow.pop %v4511
        %v4513 = vmul.f32 %v3737, 1.442695
        %v4514 = vpow.pop %v4513
        %v4515 = vmul.f32 %v3738, 1.442695
        %v4516 = vpow.pop %v4515
        %v4517 = vmul.f32 %v3739, 1.442695
        %v4518 = vpow.pop %v4517
        %v4519 = vmul.f32 %v3740, 1.442695
        %v4520 = vpow.pop %v4519
        %v4521 = vmul.f32 %v3741, 1.442695
        %v4522 = vpow.pop %v4521
        %v4523 = vmul.f32 %v3742, 1.442695
        %v4524 = vpow.pop %v4523
        %v4525 = vmul.f32 %v3743, 1.442695
        %v4526 = vpow.pop %v4525
        %v4527 = vmul.f32 %v3744, 1.442695
        %v4528 = vpow.pop %v4527
        %v4529 = vmul.f32 %v3745, 1.442695
        %v4530 = vpow.pop %v4529
        %v4531 = vmul.f32 %v3746, 1.442695
        %v4532 = vpow.pop %v4531
        %v4533 = vmul.f32 %v3747, 1.442695
        %v4534 = vpow.pop %v4533
        %v4535 = vmul.f32 %v3748, 1.442695
        %v4536 = vpow.pop %v4535
        %v4537 = vmul.f32 %v3749, 1.442695
        %v4538 = vpow.pop %v4537
        %v4539 = vmul.f32 %v3750, 1.442695
        %v4540 = vpow.pop %v4539
        %v4541 = vmul.f32 %v3751, 1.442695
        %v4542 = vpow.pop %v4541
        %v4543 = vmul.f32 %v3752, 1.442695
        %v4544 = vpow.pop %v4543
        %v4545 = vmul.f32 %v3753, 1.442695
        %v4546 = vpow.pop %v4545
        %v4547 = vmul.f32 %v3754, 1.442695
        %v4548 = vpow.pop %v4547
        %v4549 = vmul.f32 %v3755, 1.442695
        %v4550 = vpow.pop %v4549
        %v4551 = vmul.f32 %v3756, 1.442695
        %v4552 = vpow.pop %v4551
        %v4553 = vmul.f32 %v3757, 1.442695
        %v4554 = vpow.pop %v4553
        %v4555 = vmul.f32 %v3758, 1.442695
        %v4556 = vpow.pop %v4555
        %v4557 = vmul.f32 %v3759, 1.442695
        %v4558 = vpow.pop %v4557
        %v4559 = vmul.f32 %v3760, 1.442695
        %v4560 = vpow.pop %v4559
        %v4561 = vmul.f32 %v3761, 1.442695
        %v4562 = vpow.pop %v4561
        %v4563 = vmul.f32 %v3762, 1.442695
        %v4564 = vpow.pop %v4563
        %v4565 = vmul.f32 %v3763, 1.442695
        %v4566 = vpow.pop %v4565
        %v4567 = vmul.f32 %v3764, 1.442695
        %v4568 = vpow.pop %v4567
        %v4569 = vmul.f32 %v3765, 1.442695
        %v4570 = vpow.pop %v4569
        %v4571 = vmul.f32 %v3766, 1.442695
        %v4572 = vpow.pop %v4571
        %v4573 = vmul.f32 %v3767, 1.442695
        %v4574 = vpow.pop %v4573
        %v4575 = vmul.f32 %v3768, 1.442695
        %v4576 = vpow.pop %v4575
        %v4577 = vmul.f32 %v3769, 1.442695
        %v4578 = vpow.pop %v4577
        %v4579 = vmul.f32 %v3770, 1.442695
        %v4580 = vpow.pop %v4579
        %v4581 = vmul.f32 %v3771, 1.442695
        %v4582 = vpow.pop %v4581
        %v4583 = vmul.f32 %v3772, 1.442695
        %v4584 = vpow.pop %v4583
        %v4585 = vmul.f32 %v3773, 1.442695
        %v4586 = vpow.pop %v4585
        %v4587 = vmul.f32 %v3774, 1.442695
        %v4588 = vpow.pop %v4587
        %v4589 = vmul.f32 %v3775, 1.442695
        %v4590 = vpow.pop %v4589
        %v4591 = vmul.f32 %v3776, 1.442695
        %v4592 = vpow.pop %v4591
        %v4593 = vmul.f32 %v3777, 1.442695
        %v4594 = vpow.pop %v4593
        %v4595 = vmul.f32 %v3778, 1.442695
        %v4596 = vpow.pop %v4595
        %v4597 = vmul.f32 %v3779, 1.442695
        %v4598 = vpow.pop %v4597
        %v4599 = vmul.f32 %v3780, 1.442695
        %v4600 = vpow.pop %v4599
        %v4601 = vmul.f32 %v3781, 1.442695
        %v4602 = vpow.pop %v4601
        %v4603 = vmul.f32 %v3782, 1.442695
        %v4604 = vpow.pop %v4603
        %v4605 = vmul.f32 %v3783, 1.442695
        %v4606 = vpow.pop %v4605
        %v4607 = vmul.f32 %v3784, 1.442695
        %v4608 = vpow.pop %v4607
        %v4609 = vmul.f32 %v3785, 1.442695
        %v4610 = vpow.pop %v4609
        %v4611 = vmul.f32 %v3786, 1.442695
        %v4612 = vpow.pop %v4611
        %v4613 = vmul.f32 %v3787, 1.442695
        %v4614 = vpow.pop %v4613
        %v4615 = vmul.f32 %v3788, 1.442695
        %v4616 = vpow.pop %v4615
        %v4617 = vmul.f32 %v3789, 1.442695
        %v4618 = vpow.pop %v4617
        %v4619 = vmul.f32 %v3790, 1.442695
        %v4620 = vpow.pop %v4619
        %v4621 = vmul.f32 %v3791, 1.442695
        %v4622 = vpow.pop %v4621
        %v4623 = vmul.f32 %v3792, 1.442695
        %v4624 = vpow.pop %v4623
        %v4625 = vmul.f32 %v3793, 1.442695
        %v4626 = vpow.pop %v4625
        %v4627 = vmul.f32 %v3794, 1.442695
        %v4628 = vpow.pop %v4627
        %v4629 = vmul.f32 %v3795, 1.442695
        %v4630 = vpow.pop %v4629
        %v4631 = vmul.f32 %v3796, 1.442695
        %v4632 = vpow.pop %v4631
        %v4633 = vmul.f32 %v3797, 1.442695
        %v4634 = vpow.pop %v4633
        %v4635 = vmul.f32 %v3798, 1.442695
        %v4636 = vpow.pop %v4635
        %v4637 = vmul.f32 %v3799, 1.442695
        %v4638 = vpow.pop %v4637
        %v4639 = vmul.f32 %v3800, 1.442695
        %v4640 = vpow.pop %v4639
        %v4641 = vmul.f32 %v3801, 1.442695
        %v4642 = vpow.pop %v4641
        %v4643 = vmul.f32 %v3802, 1.442695
        %v4644 = vpow.pop %v4643
        %v4645 = vmul.f32 %v3803, 1.442695
        %v4646 = vpow.pop %v4645
        %v4647 = vmul.f32 %v3804, 1.442695
        %v4648 = vpow.pop %v4647
        %v4649 = vmul.f32 %v3805, 1.442695
        %v4650 = vpow.pop %v4649
        %v4651 = vmul.f32 %v3806, 1.442695
        %v4652 = vpow.pop %v4651
        %v4653 = vmul.f32 %v3807, 1.442695
        %v4654 = vpow.pop %v4653
        %v4655 = vmul.f32 %v3808, 1.442695
        %v4656 = vpow.pop %v4655
        %v4657 = vmul.f32 %v3809, 1.442695
        %v4658 = vpow.pop %v4657
        %v4659 = vmul.f32 %v3810, 1.442695
        %v4660 = vpow.pop %v4659
        %v4661 = vmul.f32 %v3811, 1.442695
        %v4662 = vpow.pop %v4661
        %v4663 = vmul.f32 %v3812, 1.442695
        %v4664 = vpow.pop %v4663
        %v4665 = vmul.f32 %v3813, 1.442695
        %v4666 = vpow.pop %v4665
        %v4667 = vmul.f32 %v3814, 1.442695
        %v4668 = vpow.pop %v4667
        %v4669 = vmul.f32 %v3815, 1.442695
        %v4670 = vpow.pop %v4669
        %v4671 = vmul.f32 %v3816, 1.442695
        %v4672 = vpow.pop %v4671
        %v4673 = vmul.f32 %v3817, 1.442695
        %v4674 = vpow.pop %v4673
        %v4675 = vmul.f32 %v3818, 1.442695
        %v4676 = vpow.pop %v4675
        %v4677 = vmul.f32 %v3819, 1.442695
        %v4678 = vpow.pop %v4677
        %v4679 = vmul.f32 %v3820, 1.442695
        %v4680 = vpow.pop %v4679
        %v4681 = vmul.f32 %v3821, 1.442695
        %v4682 = vpow.pop %v4681
        %v4683 = vmul.f32 %v3822, 1.442695
        %v4684 = vpow.pop %v4683
        %v4685 = vmul.f32 %v3823, 1.442695
        %v4686 = vpow.pop %v4685
        %v4687 = vmul.f32 %v3824, 1.442695
        %v4688 = vpow.pop %v4687
        %v4689 = vmul.f32 %v3825, 1.442695
        %v4690 = vpow.pop %v4689
        %v4691 = vmul.f32 %v3826, 1.442695
        %v4692 = vpow.pop %v4691
        %v4693 = vmul.f32 %v3827, 1.442695
        %v4694 = vpow.pop %v4693
        %v4695 = vmul.f32 %v3828, 1.442695
        %v4696 = vpow.pop %v4695
        %v4697 = vmul.f32 %v3829, 1.442695
        %v4698 = vpow.pop %v4697
        %v4699 = vmul.f32 %v3830, 1.442695
        %v4700 = vpow.pop %v4699
        %v4701 = vmul.f32 %v3831, 1.442695
        %v4702 = vpow.pop %v4701
        %v4703 = vmul.f32 %v3832, 1.442695
        %v4704 = vpow.pop %v4703
        %v4705 = vmul.f32 %v3833, 1.442695
        %v4706 = vpow.pop %v4705
        %v4707 = vmul.f32 %v3834, 1.442695
        %v4708 = vpow.pop %v4707
        %v4709 = vmul.f32 %v3835, 1.442695
        %v4710 = vpow.pop %v4709
        %v4711 = vmul.f32 %v3836, 1.442695
        %v4712 = vpow.pop %v4711
        %v4713 = vmul.f32 %v3837, 1.442695
        %v4714 = vpow.pop %v4713
        %v4715 = vmul.f32 %v3838, 1.442695
        %v4716 = vpow.pop %v4715
        %v4717 = vmul.f32 %v3839, 1.442695
        %v4718 = vpow.pop %v4717
        %v4719 = vmul.f32 %v3840, 1.442695
        %v4720 = vpow.pop %v4719
        %v4721 = vmul.f32 %v3841, 1.442695
        %v4722 = vpow.pop %v4721
        %v4723 = vmul.f32 %v3842, 1.442695
        %v4724 = vpow.pop %v4723
        %v4725 = vmul.f32 %v3843, 1.442695
        %v4726 = vpow.pop %v4725
        %v4727 = vmul.f32 %v3844, 1.442695
        %v4728 = vpow.pop %v4727
        %v4729 = vmul.f32 %v3845, 1.442695
        %v4730 = vpow.pop %v4729
        %v4731 = vmul.f32 %v3846, 1.442695
        %v4732 = vpow.pop %v4731
        %v4733 = vmul.f32 %v3847, 1.442695
        %v4734 = vpow.pop %v4733
        %v4735 = vmul.f32 %v3848, 1.442695
        %v4736 = vpow.pop %v4735
        %v4737 = vmul.f32 %v3849, 1.442695
        %v4738 = vpow.pop %v4737
        %v4739 = vmul.f32 %v3850, 1.442695
        %v4740 = vpow.pop %v4739
        %v4741 = vmul.f32 %v3851, 1.442695
        %v4742 = vpow.pop %v4741
        %v4743 = vmul.f32 %v3852, 1.442695
        %v4744 = vpow.pop %v4743
        %v4745 = vmul.f32 %v3853, 1.442695
        %v4746 = vpow.pop %v4745
        %v4747 = vmul.f32 %v3854, 1.442695
        %v4748 = vpow.pop %v4747
        %v4749 = vmul.f32 %v3855, 1.442695
        %v4750 = vpow.pop %v4749
        %v4751 = vmul.f32 %v3856, 1.442695
        %v4752 = vpow.pop %v4751
        %v4753 = vmul.f32 %v3857, 1.442695
        %v4754 = vpow.pop %v4753
        %v4755 = vmul.f32 %v3858, 1.442695
        %v4756 = vpow.pop %v4755
        %v4757 = vmul.f32 %v3859, 1.442695
        %v4758 = vpow.pop %v4757
        %v4759 = vmul.f32 %v3860, 1.442695
        %v4760 = vpow.pop %v4759
        %v4761 = vmul.f32 %v3861, 1.442695
        %v4762 = vpow.pop %v4761
        %v4763 = vmul.f32 %v3862, 1.442695
        %v4764 = vpow.pop %v4763
        %v4765 = vmul.f32 %v3863, 1.442695
        %v4766 = vpow.pop %v4765
        %v4767 = vmul.f32 %v3864, 1.442695
        %v4768 = vpow.pop %v4767
        %v4769 = vmul.f32 %v3865, 1.442695
        %v4770 = vpow.pop %v4769
        %v4771 = vmul.f32 %v3866, 1.442695
        %v4772 = vpow.pop %v4771
        %v4773 = vmul.f32 %v3867, 1.442695
        %v4774 = vpow.pop %v4773
        %v4775 = vmul.f32 %v3868, 1.442695
        %v4776 = vpow.pop %v4775
        %v4777 = vmul.f32 %v3869, 1.442695
        %v4778 = vpow.pop %v4777
        %v4779 = vmul.f32 %v3870, 1.442695
        %v4780 = vpow.pop %v4779
        %v4781 = vmul.f32 %v3871, 1.442695
        %v4782 = vpow.pop %v4781
        %v4783 = vmul.f32 %v3872, 1.442695
        %v4784 = vpow.pop %v4783
        %v4785 = vmul.f32 %v3873, 1.442695
        %v4786 = vpow.pop %v4785
        %v4787 = vmul.f32 %v3874, 1.442695
        %v4788 = vpow.pop %v4787
        %v4789 = vmul.f32 %v3875, 1.442695
        %v4790 = vpow.pop %v4789
        %v4791 = vmul.f32 %v3876, 1.442695
        %v4792 = vpow.pop %v4791
        %v4793 = vmul.f32 %v3877, 1.442695
        %v4794 = vpow.pop %v4793
        %v4795 = vmul.f32 %v3878, 1.442695
        %v4796 = vpow.pop %v4795
        %v4797 = vmul.f32 %v3879, 1.442695
        %v4798 = vpow.pop %v4797
        %v4799 = vmul.f32 %v3880, 1.442695
        %v4800 = vpow.pop %v4799
        %v4801 = vmul.f32 %v3881, 1.442695
        %v4802 = vpow.pop %v4801
        %v4803 = vmul.f32 %v3882, 1.442695
        %v4804 = vpow.pop %v4803
        %v4805 = vmul.f32 %v3883, 1.442695
        %v4806 = vpow.pop %v4805
        %v4807 = vmul.f32 %v3884, 1.442695
        %v4808 = vpow.pop %v4807
        %v4809 = vmul.f32 %v3885, 1.442695
        %v4810 = vpow.pop %v4809
        %v4811 = vmul.f32 %v3886, 1.442695
        %v4812 = vpow.pop %v4811
        %v4813 = vmul.f32 %v3887, 1.442695
        %v4814 = vpow.pop %v4813
        %v4815 = vmul.f32 %v3888, 1.442695
        %v4816 = vpow.pop %v4815
        %v4817 = vmul.f32 %v3889, 1.442695
        %v4818 = vpow.pop %v4817
        %v4819 = vmul.f32 %v3890, 1.442695
        %v4820 = vpow.pop %v4819
        %v4821 = vmul.f32 %v3891, 1.442695
        %v4822 = vpow.pop %v4821
        %v4823 = vmul.f32 %v3892, 1.442695
        %v4824 = vpow.pop %v4823
        %v4825 = vmul.f32 %v3893, 1.442695
        %v4826 = vpow.pop %v4825
        %v4827 = vmul.f32 %v3894, 1.442695
        %v4828 = vpow.pop %v4827
        %v4829 = vmul.f32 %v3895, 1.442695
        %v4830 = vpow.pop %v4829
        %v4831 = vmul.f32 %v3896, 1.442695
        %v4832 = vpow.pop %v4831
        %v4833 = vmul.f32 %v3897, 1.442695
        %v4834 = vpow.pop %v4833
        %v4835 = vmul.f32 %v3898, 1.442695
        %v4836 = vpow.pop %v4835
        %v4837 = vmul.f32 %v3899, 1.442695
        %v4838 = vpow.pop %v4837
        %v4839 = vmul.f32 %v3900, 1.442695
        %v4840 = vpow.pop %v4839
        %v4841 = vmul.f32 %v3901, 1.442695
        %v4842 = vpow.pop %v4841
        %v4843 = vmul.f32 %v3902, 1.442695
        %v4844 = vpow.pop %v4843
        %v4845 = vmul.f32 %v3903, 1.442695
        %v4846 = vpow.pop %v4845
        %v4847 = vmul.f32 %v3904, 1.442695
        %v4848 = vpow.pop %v4847
        %v4849 = vmul.f32 %v3905, 1.442695
        %v4850 = vpow.pop %v4849
        %v4851 = vmul.f32 %v3906, 1.442695
        %v4852 = vpow.pop %v4851
        %v4853 = vmul.f32 %v3907, 1.442695
        %v4854 = vpow.pop %v4853
        %v4855 = vmul.f32 %v3908, 1.442695
        %v4856 = vpow.pop %v4855
        %v4857 = vmul.f32 %v3909, 1.442695
        %v4858 = vpow.pop %v4857
        %v4859 = vmul.f32 %v3910, 1.442695
        %v4860 = vpow.pop %v4859
        %v4861 = vmul.f32 %v3911, 1.442695
        %v4862 = vpow.pop %v4861
        %v4863 = vmul.f32 %v3912, 1.442695
        %v4864 = vpow.pop %v4863
        %v4865 = vmul.f32 %v3913, 1.442695
        %v4866 = vpow.pop %v4865
        %v4867 = vmul.f32 %v3914, 1.442695
        %v4868 = vpow.pop %v4867
        %v4869 = vmul.f32 %v3915, 1.442695
        %v4870 = vpow.pop %v4869
        %v4871 = vmul.f32 %v3916, 1.442695
        %v4872 = vpow.pop %v4871
        %v4873 = vmul.f32 %v3917, 1.442695
        %v4874 = vpow.pop %v4873
        %v4875 = vmul.f32 %v3918, 1.442695
        %v4876 = vpow.pop %v4875
        %v4877 = vmul.f32 %v3919, 1.442695
        %v4878 = vpow.pop %v4877
        %v4879 = vmul.f32 %v3920, 1.442695
        %v4880 = vpow.pop %v4879
        %v4881 = vmul.f32 %v3921, 1.442695
        %v4882 = vpow.pop %v4881
        %v4883 = vmul.f32 %v3922, 1.442695
        %v4884 = vpow.pop %v4883
        %v4885 = vmul.f32 %v3923, 1.442695
        %v4886 = vpow.pop %v4885
        %v4887 = vmul.f32 %v3924, 1.442695
        %v4888 = vpow.pop %v4887
        %v4889 = vmul.f32 %v3925, 1.442695
        %v4890 = vpow.pop %v4889
        %v4891 = vmul.f32 %v3926, 1.442695
        %v4892 = vpow.pop %v4891
        %v4893 = vmul.f32 %v3927, 1.442695
        %v4894 = vpow.pop %v4893
        %v4895 = vmul.f32 %v3928, 1.442695
        %v4896 = vpow.pop %v4895
        %v4897 = vmul.f32 %v3929, 1.442695
        %v4898 = vpow.pop %v4897
        %v4899 = vmul.f32 %v3930, 1.442695
        %v4900 = vpow.pop %v4899
        %v4901 = vmul.f32 %v3931, 1.442695
        %v4902 = vpow.pop %v4901
        %v4903 = vmul.f32 %v3932, 1.442695
        %v4904 = vpow.pop %v4903
        %v4905 = vmul.f32 %v3933, 1.442695
        %v4906 = vpow.pop %v4905
        %v4907 = vmul.f32 %v3934, 1.442695
        %v4908 = vpow.pop %v4907
        %v4909 = vmul.f32 %v3935, 1.442695
        %v4910 = vpow.pop %v4909
        %v4911 = vmul.f32 %v3936, 1.442695
        %v4912 = vpow.pop %v4911
        %v4913 = vmul.f32 %v3937, 1.442695
        %v4914 = vpow.pop %v4913
        %v4915 = vmul.f32 %v3938, 1.442695
        %v4916 = vpow.pop %v4915
        %v4917 = vmul.f32 %v3939, 1.442695
        %v4918 = vpow.pop %v4917
        %v4919 = vmul.f32 %v3940, 1.442695
        %v4920 = vpow.pop %v4919
        %v4921 = vmul.f32 %v3941, 1.442695
        %v4922 = vpow.pop %v4921
        %v4923 = vmul.f32 %v3942, 1.442695
        %v4924 = vpow.pop %v4923
        %v4925 = vmul.f32 %v3943, 1.442695
        %v4926 = vpow.pop %v4925
        %v4927 = vmul.f32 %v3944, 1.442695
        %v4928 = vpow.pop %v4927
        %v4929 = vmul.f32 %v3945, 1.442695
        %v4930 = vpow.pop %v4929
        %v4931 = vmul.f32 %v3946, 1.442695
        %v4932 = vpow.pop %v4931
        %v4933 = vmul.f32 %v3947, 1.442695
        %v4934 = vpow.pop %v4933
        %v4935 = vmul.f32 %v3948, 1.442695
        %v4936 = vpow.pop %v4935
        %v4937 = vmul.f32 %v3949, 1.442695
        %v4938 = vpow.pop %v4937
        %v4939 = vmul.f32 %v3950, 1.442695
        %v4940 = vpow.pop %v4939
        %v4941 = vmul.f32 %v3951, 1.442695
        %v4942 = vpow.pop %v4941
        %v4943 = vmul.f32 %v3952, 1.442695
        %v4944 = vpow.pop %v4943
        %v4945 = vmul.f32 %v3953, 1.442695
        %v4946 = vpow.pop %v4945
        %v4947 = vmul.f32 %v3954, 1.442695
        %v4948 = vpow.pop %v4947
        %v4949 = vmul.f32 %v3955, 1.442695
        %v4950 = vpow.pop %v4949
        %v4951 = vmul.f32 %v3956, 1.442695
        %v4952 = vpow.pop %v4951
        %v4953 = vmul.f32 %v3957, 1.442695
        %v4954 = vpow.pop %v4953
        %v4955 = vmul.f32 %v3958, 1.442695
        %v4956 = vpow.pop %v4955
        %v4957 = vmul.f32 %v3959, 1.442695
        %v4958 = vpow.pop %v4957
        %v4959 = vmul.f32 %v3960, 1.442695
        %v4960 = vpow.pop %v4959
        %v4961 = vmul.f32 %v3961, 1.442695
        %v4962 = vpow.pop %v4961
        %v4963 = vmul.f32 %v3962, 1.442695
        %v4964 = vpow.pop %v4963
        %v4965 = vmul.f32 %v3963, 1.442695
        %v4966 = vpow.pop %v4965
        %v4967 = vmul.f32 %v3964, 1.442695
        %v4968 = vpow.pop %v4967
        %v4969 = vmul.f32 %v3965, 1.442695
        %v4970 = vpow.pop %v4969
        %v4971 = vmul.f32 %v3966, 1.442695
        %v4972 = vpow.pop %v4971
        %v4973 = vmul.f32 %v3967, 1.442695
        %v4974 = vpow.pop %v4973
        %v4975 = vmul.f32 %v3968, 1.442695
        %v4976 = vpow.pop %v4975
        %v4977 = vmul.f32 %v3969, 1.442695
        %v4978 = vpow.pop %v4977
        %v4979 = vmul.f32 %v3970, 1.442695
        %v4980 = vpow.pop %v4979
        %v4981 = vmul.f32 %v3971, 1.442695
        %v4982 = vpow.pop %v4981
        %v4983 = vmul.f32 %v3972, 1.442695
        %v4984 = vpow.pop %v4983
        %v4985 = vmul.f32 %v3973, 1.442695
        %v4986 = vpow.pop %v4985
        %v4987 = vmul.f32 %v3974, 1.442695
        %v4988 = vpow.pop %v4987
        %v4989 = vmul.f32 %v3975, 1.442695
        %v4990 = vpow.pop %v4989
        %v4991 = vmul.f32 %v3976, 1.442695
        %v4992 = vpow.pop %v4991
        %v4993 = vmul.f32 %v3977, 1.442695
        %v4994 = vpow.pop %v4993
        %v4995 = vmul.f32 %v3978, 1.442695
        %v4996 = vpow.pop %v4995
        %v4997 = vmul.f32 %v3979, 1.442695
        %v4998 = vpow.pop %v4997
        %v4999 = vmul.f32 %v3980, 1.442695
        %v5000 = vpow.pop %v4999
        %v5001 = vmul.f32 %v3981, 1.442695
        %v5002 = vpow.pop %v5001
        %v5003 = vmul.f32 %v3982, 1.442695
        %v5004 = vpow.pop %v5003
        %v5005 = vmul.f32 %v3983, 1.442695
        %v5006 = vpow.pop %v5005
        %v5007 = vmul.f32 %v3984, 1.442695
        %v5008 = vpow.pop %v5007
        %v5009 = vld [vmem:[%s2] sm:$0xff]
        %v5010 = vld [vmem:[%s2 + $0x8] sm:$0xff]
        %v5011 = vld [vmem:[%s2 + $0x10] sm:$0xff]
        %v5012 = vld [vmem:[%s2 + $0x18] sm:$0xff]
        %v5013 = vld [vmem:[%s2 + $0x20] sm:$0xff]
        %v5014 = vld [vmem:[%s2 + $0x28] sm:$0xff]
        %v5015 = vld [vmem:[%s2 + $0x30] sm:$0xff]
        %v5016 = vld [vmem:[%s2 + $0x38] sm:$0xff]
        %v5017 = vld [vmem:[%s2 + $0x40] sm:$0xff]
        %v5018 = vld [vmem:[%s2 + $0x48] sm:$0xff]
        %v5019 = vld [vmem:[%s2 + $0x50] sm:$0xff]
        %v5020 = vld [vmem:[%s2 + $0x58] sm:$0xff]
        %v5021 = vld [vmem:[%s2 + $0x60] sm:$0xff]
        %v5022 = vld [vmem:[%s2 + $0x68] sm:$0xff]
        %v5023 = vld [vmem:[%s2 + $0x70] sm:$0xff]
        %v5024 = vld [vmem:[%s2 + $0x78] sm:$0xff]
        %v5025 = vld [vmem:[%s2 + $0x80] sm:$0xff]
        %v5026 = vld [vmem:[%s2 + $0x88] sm:$0xff]
        %v5027 = vld [vmem:[%s2 + $0x90] sm:$0xff]
        %v5028 = vld [vmem:[%s2 + $0x98] sm:$0xff]
        %v5029 = vld [vmem:[%s2 + $0xa0] sm:$0xff]
        %v5030 = vld [vmem:[%s2 + $0xa8] sm:$0xff]
        %v5031 = vld [vmem:[%s2 + $0xb0] sm:$0xff]
        %v5032 = vld [vmem:[%s2 + $0xb8] sm:$0xff]
        %v5033 = vld [vmem:[%s2 + $0xc0] sm:$0xff]
        %v5034 = vld [vmem:[%s2 + $0xc8] sm:$0xff]
        %v5035 = vld [vmem:[%s2 + $0xd0] sm:$0xff]
        %v5036 = vld [vmem:[%s2 + $0xd8] sm:$0xff]
        %v5037 = vld [vmem:[%s2 + $0xe0] sm:$0xff]
        %v5038 = vld [vmem:[%s2 + $0xe8] sm:$0xff]
        %v5039 = vld [vmem:[%s2 + $0xf0] sm:$0xff]
        %v5040 = vld [vmem:[%s2 + $0xf8] sm:$0xff]
        %v5041 = vld [vmem:[%s2 + $0x100] sm:$0xff]
        %v5042 = vld [vmem:[%s2 + $0x108] sm:$0xff]
        %v5043 = vld [vmem:[%s2 + $0x110] sm:$0xff]
        %v5044 = vld [vmem:[%s2 + $0x118] sm:$0xff]
        %v5045 = vld [vmem:[%s2 + $0x120] sm:$0xff]
        %v5046 = vld [vmem:[%s2 + $0x128] sm:$0xff]
        %v5047 = vld [vmem:[%s2 + $0x130] sm:$0xff]
        %v5048 = vld [vmem:[%s2 + $0x138] sm:$0xff]
        %v5049 = vld [vmem:[%s2 + $0x140] sm:$0xff]
        %v5050 = vld [vmem:[%s2 + $0x148] sm:$0xff]
        %v5051 = vld [vmem:[%s2 + $0x150] sm:$0xff]
        %v5052 = vld [vmem:[%s2 + $0x158] sm:$0xff]
        %v5053 = vld [vmem:[%s2 + $0x160] sm:$0xff]
        %v5054 = vld [vmem:[%s2 + $0x168] sm:$0xff]
        %v5055 = vld [vmem:[%s2 + $0x170] sm:$0xff]
        %v5056 = vld [vmem:[%s2 + $0x178] sm:$0xff]
        %v5057 = vld [vmem:[%s2 + $0x180] sm:$0xff]
        %v5058 = vld [vmem:[%s2 + $0x188] sm:$0xff]
        %v5059 = vld [vmem:[%s2 + $0x190] sm:$0xff]
        %v5060 = vld [vmem:[%s2 + $0x198] sm:$0xff]
        %v5061 = vld [vmem:[%s2 + $0x1a0] sm:$0xff]
        %v5062 = vld [vmem:[%s2 + $0x1a8] sm:$0xff]
        %v5063 = vld [vmem:[%s2 + $0x1b0] sm:$0xff]
        %v5064 = vld [vmem:[%s2 + $0x1b8] sm:$0xff]
        %v5065 = vld [vmem:[%s2 + $0x1c0] sm:$0xff]
        %v5066 = vld [vmem:[%s2 + $0x1c8] sm:$0xff]
        %v5067 = vld [vmem:[%s2 + $0x1d0] sm:$0xff]
        %v5068 = vld [vmem:[%s2 + $0x1d8] sm:$0xff]
        %v5069 = vld [vmem:[%s2 + $0x1e0] sm:$0xff]
        %v5070 = vld [vmem:[%s2 + $0x1e8] sm:$0xff]
        %v5071 = vld [vmem:[%s2 + $0x1f0] sm:$0xff]
        %v5072 = vld [vmem:[%s2 + $0x1f8] sm:$0xff]
        %v5073 = vld [vmem:[%s2 + $0x200] sm:$0xff]
        %v5074 = vld [vmem:[%s2 + $0x208] sm:$0xff]
        %v5075 = vld [vmem:[%s2 + $0x210] sm:$0xff]
        %v5076 = vld [vmem:[%s2 + $0x218] sm:$0xff]
        %v5077 = vld [vmem:[%s2 + $0x220] sm:$0xff]
        %v5078 = vld [vmem:[%s2 + $0x228] sm:$0xff]
        %v5079 = vld [vmem:[%s2 + $0x230] sm:$0xff]
        %v5080 = vld [vmem:[%s2 + $0x238] sm:$0xff]
        %v5081 = vld [vmem:[%s2 + $0x240] sm:$0xff]
        %v5082 = vld [vmem:[%s2 + $0x248] sm:$0xff]
        %v5083 = vld [vmem:[%s2 + $0x250] sm:$0xff]
        %v5084 = vld [vmem:[%s2 + $0x258] sm:$0xff]
        %v5085 = vld [vmem:[%s2 + $0x260] sm:$0xff]
        %v5086 = vld [vmem:[%s2 + $0x268] sm:$0xff]
        %v5087 = vld [vmem:[%s2 + $0x270] sm:$0xff]
        %v5088 = vld [vmem:[%s2 + $0x278] sm:$0xff]
        %v5089 = vld [vmem:[%s2 + $0x280] sm:$0xff]
        %v5090 = vld [vmem:[%s2 + $0x288] sm:$0xff]
        %v5091 = vld [vmem:[%s2 + $0x290] sm:$0xff]
        %v5092 = vld [vmem:[%s2 + $0x298] sm:$0xff]
        %v5093 = vld [vmem:[%s2 + $0x2a0] sm:$0xff]
        %v5094 = vld [vmem:[%s2 + $0x2a8] sm:$0xff]
        %v5095 = vld [vmem:[%s2 + $0x2b0] sm:$0xff]
        %v5096 = vld [vmem:[%s2 + $0x2b8] sm:$0xff]
        %v5097 = vld [vmem:[%s2 + $0x2c0] sm:$0xff]
        %v5098 = vld [vmem:[%s2 + $0x2c8] sm:$0xff]
        %v5099 = vld [vmem:[%s2 + $0x2d0] sm:$0xff]
        %v5100 = vld [vmem:[%s2 + $0x2d8] sm:$0xff]
        %v5101 = vld [vmem:[%s2 + $0x2e0] sm:$0xff]
        %v5102 = vld [vmem:[%s2 + $0x2e8] sm:$0xff]
        %v5103 = vld [vmem:[%s2 + $0x2f0] sm:$0xff]
        %v5104 = vld [vmem:[%s2 + $0x2f8] sm:$0xff]
        %v5105 = vld [vmem:[%s2 + $0x300] sm:$0xff]
        %v5106 = vld [vmem:[%s2 + $0x308] sm:$0xff]
        %v5107 = vld [vmem:[%s2 + $0x310] sm:$0xff]
        %v5108 = vld [vmem:[%s2 + $0x318] sm:$0xff]
        %v5109 = vld [vmem:[%s2 + $0x320] sm:$0xff]
        %v5110 = vld [vmem:[%s2 + $0x328] sm:$0xff]
        %v5111 = vld [vmem:[%s2 + $0x330] sm:$0xff]
        %v5112 = vld [vmem:[%s2 + $0x338] sm:$0xff]
        %v5113 = vld [vmem:[%s2 + $0x340] sm:$0xff]
        %v5114 = vld [vmem:[%s2 + $0x348] sm:$0xff]
        %v5115 = vld [vmem:[%s2 + $0x350] sm:$0xff]
        %v5116 = vld [vmem:[%s2 + $0x358] sm:$0xff]
        %v5117 = vld [vmem:[%s2 + $0x360] sm:$0xff]
        %v5118 = vld [vmem:[%s2 + $0x368] sm:$0xff]
        %v5119 = vld [vmem:[%s2 + $0x370] sm:$0xff]
        %v5120 = vld [vmem:[%s2 + $0x378] sm:$0xff]
        %v5121 = vld [vmem:[%s2 + $0x380] sm:$0xff]
        %v5122 = vld [vmem:[%s2 + $0x388] sm:$0xff]
        %v5123 = vld [vmem:[%s2 + $0x390] sm:$0xff]
        %v5124 = vld [vmem:[%s2 + $0x398] sm:$0xff]
        %v5125 = vld [vmem:[%s2 + $0x3a0] sm:$0xff]
        %v5126 = vld [vmem:[%s2 + $0x3a8] sm:$0xff]
        %v5127 = vld [vmem:[%s2 + $0x3b0] sm:$0xff]
        %v5128 = vld [vmem:[%s2 + $0x3b8] sm:$0xff]
        %v5129 = vld [vmem:[%s2 + $0x3c0] sm:$0xff]
        %v5130 = vld [vmem:[%s2 + $0x3c8] sm:$0xff]
        %v5131 = vld [vmem:[%s2 + $0x3d0] sm:$0xff]
        %v5132 = vld [vmem:[%s2 + $0x3d8] sm:$0xff]
        %v5133 = vld [vmem:[%s2 + $0x3e0] sm:$0xff]
        %v5134 = vld [vmem:[%s2 + $0x3e8] sm:$0xff]
        %v5135 = vld [vmem:[%s2 + $0x3f0] sm:$0xff]
        %v5136 = vld [vmem:[%s2 + $0x3f8] sm:$0xff]
        %5137 = vmatpush.msra.mxu0 %v5024
        %5138 = vmatpush.msra.mxu0 %v5023
        %5139 = vmatpush.msra.mxu0 %v5022
        %5140 = vmatpush.msra.mxu0 %v5021
        %5141 = vmatpush.msra.mxu0 %v5020
        %5142 = vmatpush.msra.mxu0 %v5019
        %5143 = vmatpush.msra.mxu0 %v5018
        %5144 = vmatpush.msra.mxu0 %v5017
        %5145 = vmatpush.msra.mxu0 %v5016
        %5146 = vmatpush.msra.mxu0 %v5015
        %5147 = vmatpush.msra.mxu0 %v5014
        %5148 = vmatpush.msra.mxu0 %v5013
        %5149 = vmatpush.msra.mxu0 %v5012
        %5150 = vmatpush.msra.mxu0 %v5011
        %5151 = vmatpush.msra.mxu0 %v5010
        %5152 = vmatpush.msra.mxu0 %v5009
        %5153 = vmatmul.f32.gmra.mxu0 %v3986
        %v5154 = vpop.f32.mrf.mxu0
        %v5155 = vadd.f32 0.0, %v5154
        %5156 = vmatmul.f32.gmra.mxu0 %v4002
        %v5157 = vpop.f32.mrf.mxu0
        %v5158 = vadd.f32 0.0, %v5157
        %5159 = vmatmul.f32.gmra.mxu0 %v4018
        %v5160 = vpop.f32.mrf.mxu0
        %v5161 = vadd.f32 0.0, %v5160
        %5162 = vmatmul.f32.gmra.mxu0 %v4034
        %v5163 = vpop.f32.mrf.mxu0
        %v5164 = vadd.f32 0.0, %v5163
        %5165 = vmatmul.f32.gmra.mxu0 %v4050
        %v5166 = vpop.f32.mrf.mxu0
        %v5167 = vadd.f32 0.0, %v5166
        %5168 = vmatmul.f32.gmra.mxu0 %v4066
        %v5169 = vpop.f32.mrf.mxu0
        %v5170 = vadd.f32 0.0, %v5169
        %5171 = vmatmul.f32.gmra.mxu0 %v4082
        %v5172 = vpop.f32.mrf.mxu0
        %v5173 = vadd.f32 0.0, %v5172
        %5174 = vmatmul.f32.gmra.mxu0 %v4098
        %v5175 = vpop.f32.mrf.mxu0
        %v5176 = vadd.f32 0.0, %v5175
        %5177 = vmatmul.f32.gmra.mxu0 %v4114
        %v5178 = vpop.f32.mrf.mxu0
        %v5179 = vadd.f32 0.0, %v5178
        %5180 = vmatmul.f32.gmra.mxu0 %v4130
        %v5181 = vpop.f32.mrf.mxu0
        %v5182 = vadd.f32 0.0, %v5181
        %5183 = vmatmul.f32.gmra.mxu0 %v4146
        %v5184 = vpop.f32.mrf.mxu0
        %v5185 = vadd.f32 0.0, %v5184
        %5186 = vmatmul.f32.gmra.mxu0 %v4162
        %v5187 = vpop.f32.mrf.mxu0
        %v5188 = vadd.f32 0.0, %v5187
        %5189 = vmatmul.f32.gmra.mxu0 %v4178
        %v5190 = vpop.f32.mrf.mxu0
        %v5191 = vadd.f32 0.0, %v5190
        %5192 = vmatmul.f32.gmra.mxu0 %v4194
        %v5193 = vpop.f32.mrf.mxu0
        %v5194 = vadd.f32 0.0, %v5193
        %5195 = vmatmul.f32.gmra.mxu0 %v4210
        %v5196 = vpop.f32.mrf.mxu0
        %v5197 = vadd.f32 0.0, %v5196
        %5198 = vmatmul.f32.gmra.mxu0 %v4226
        %v5199 = vpop.f32.mrf.mxu0
        %v5200 = vadd.f32 0.0, %v5199
        %5201 = vmatmul.f32.gmra.mxu0 %v4242
        %v5202 = vpop.f32.mrf.mxu0
        %v5203 = vadd.f32 0.0, %v5202
        %5204 = vmatmul.f32.gmra.mxu0 %v4258
        %v5205 = vpop.f32.mrf.mxu0
        %v5206 = vadd.f32 0.0, %v5205
        %5207 = vmatmul.f32.gmra.mxu0 %v4274
        %v5208 = vpop.f32.mrf.mxu0
        %v5209 = vadd.f32 0.0, %v5208
        %5210 = vmatmul.f32.gmra.mxu0 %v4290
        %v5211 = vpop.f32.mrf.mxu0
        %v5212 = vadd.f32 0.0, %v5211
        %5213 = vmatmul.f32.gmra.mxu0 %v4306
        %v5214 = vpop.f32.mrf.mxu0
        %v5215 = vadd.f32 0.0, %v5214
        %5216 = vmatmul.f32.gmra.mxu0 %v4322
        %v5217 = vpop.f32.mrf.mxu0
        %v5218 = vadd.f32 0.0, %v5217
        %5219 = vmatmul.f32.gmra.mxu0 %v4338
        %v5220 = vpop.f32.mrf.mxu0
        %v5221 = vadd.f32 0.0, %v5220
        %5222 = vmatmul.f32.gmra.mxu0 %v4354
        %v5223 = vpop.f32.mrf.mxu0
        %v5224 = vadd.f32 0.0, %v5223
        %5225 = vmatmul.f32.gmra.mxu0 %v4370
        %v5226 = vpop.f32.mrf.mxu0
        %v5227 = vadd.f32 0.0, %v5226
        %5228 = vmatmul.f32.gmra.mxu0 %v4386
        %v5229 = vpop.f32.mrf.mxu0
        %v5230 = vadd.f32 0.0, %v5229
        %5231 = vmatmul.f32.gmra.mxu0 %v4402
        %v5232 = vpop.f32.mrf.mxu0
        %v5233 = vadd.f32 0.0, %v5232
        %5234 = vmatmul.f32.gmra.mxu0 %v4418
        %v5235 = vpop.f32.mrf.mxu0
        %v5236 = vadd.f32 0.0, %v5235
        %5237 = vmatmul.f32.gmra.mxu0 %v4434
        %v5238 = vpop.f32.mrf.mxu0
        %v5239 = vadd.f32 0.0, %v5238
        %5240 = vmatmul.f32.gmra.mxu0 %v4450
        %v5241 = vpop.f32.mrf.mxu0
        %v5242 = vadd.f32 0.0, %v5241
        %5243 = vmatmul.f32.gmra.mxu0 %v4466
        %v5244 = vpop.f32.mrf.mxu0
        %v5245 = vadd.f32 0.0, %v5244
        %5246 = vmatmul.f32.gmra.mxu0 %v4482
        %v5247 = vpop.f32.mrf.mxu0
        %v5248 = vadd.f32 0.0, %v5247
        %5249 = vmatmul.f32.gmra.mxu0 %v4498
        %v5250 = vpop.f32.mrf.mxu0
        %v5251 = vadd.f32 0.0, %v5250
        %5252 = vmatmul.f32.gmra.mxu0 %v4514
        %v5253 = vpop.f32.mrf.mxu0
        %v5254 = vadd.f32 0.0, %v5253
        %5255 = vmatmul.f32.gmra.mxu0 %v4530
        %v5256 = vpop.f32.mrf.mxu0
        %v5257 = vadd.f32 0.0, %v5256
        %5258 = vmatmul.f32.gmra.mxu0 %v4546
        %v5259 = vpop.f32.mrf.mxu0
        %v5260 = vadd.f32 0.0, %v5259
        %5261 = vmatmul.f32.gmra.mxu0 %v4562
        %v5262 = vpop.f32.mrf.mxu0
        %v5263 = vadd.f32 0.0, %v5262
        %5264 = vmatmul.f32.gmra.mxu0 %v4578
        %v5265 = vpop.f32.mrf.mxu0
        %v5266 = vadd.f32 0.0, %v5265
        %5267 = vmatmul.f32.gmra.mxu0 %v4594
        %v5268 = vpop.f32.mrf.mxu0
        %v5269 = vadd.f32 0.0, %v5268
        %5270 = vmatmul.f32.gmra.mxu0 %v4610
        %v5271 = vpop.f32.mrf.mxu0
        %v5272 = vadd.f32 0.0, %v5271
        %5273 = vmatmul.f32.gmra.mxu0 %v4626
        %v5274 = vpop.f32.mrf.mxu0
        %v5275 = vadd.f32 0.0, %v5274
        %5276 = vmatmul.f32.gmra.mxu0 %v4642
        %v5277 = vpop.f32.mrf.mxu0
        %v5278 = vadd.f32 0.0, %v5277
        %5279 = vmatmul.f32.gmra.mxu0 %v4658
        %v5280 = vpop.f32.mrf.mxu0
        %v5281 = vadd.f32 0.0, %v5280
        %5282 = vmatmul.f32.gmra.mxu0 %v4674
        %v5283 = vpop.f32.mrf.mxu0
        %v5284 = vadd.f32 0.0, %v5283
        %5285 = vmatmul.f32.gmra.mxu0 %v4690
        %v5286 = vpop.f32.mrf.mxu0
        %v5287 = vadd.f32 0.0, %v5286
        %5288 = vmatmul.f32.gmra.mxu0 %v4706
        %v5289 = vpop.f32.mrf.mxu0
        %v5290 = vadd.f32 0.0, %v5289
        %5291 = vmatmul.f32.gmra.mxu0 %v4722
        %v5292 = vpop.f32.mrf.mxu0
        %v5293 = vadd.f32 0.0, %v5292
        %5294 = vmatmul.f32.gmra.mxu0 %v4738
        %v5295 = vpop.f32.mrf.mxu0
        %v5296 = vadd.f32 0.0, %v5295
        %5297 = vmatmul.f32.gmra.mxu0 %v4754
        %v5298 = vpop.f32.mrf.mxu0
        %v5299 = vadd.f32 0.0, %v5298
        %5300 = vmatmul.f32.gmra.mxu0 %v4770
        %v5301 = vpop.f32.mrf.mxu0
        %v5302 = vadd.f32 0.0, %v5301
        %5303 = vmatmul.f32.gmra.mxu0 %v4786
        %v5304 = vpop.f32.mrf.mxu0
        %v5305 = vadd.f32 0.0, %v5304
        %5306 = vmatmul.f32.gmra.mxu0 %v4802
        %v5307 = vpop.f32.mrf.mxu0
        %v5308 = vadd.f32 0.0, %v5307
        %5309 = vmatmul.f32.gmra.mxu0 %v4818
        %v5310 = vpop.f32.mrf.mxu0
        %v5311 = vadd.f32 0.0, %v5310
        %5312 = vmatmul.f32.gmra.mxu0 %v4834
        %v5313 = vpop.f32.mrf.mxu0
        %v5314 = vadd.f32 0.0, %v5313
        %5315 = vmatmul.f32.gmra.mxu0 %v4850
        %v5316 = vpop.f32.mrf.mxu0
        %v5317 = vadd.f32 0.0, %v5316
        %5318 = vmatmul.f32.gmra.mxu0 %v4866
        %v5319 = vpop.f32.mrf.mxu0
        %v5320 = vadd.f32 0.0, %v5319
        %5321 = vmatmul.f32.gmra.mxu0 %v4882
        %v5322 = vpop.f32.mrf.mxu0
        %v5323 = vadd.f32 0.0, %v5322
        %5324 = vmatmul.f32.gmra.mxu0 %v4898
        %v5325 = vpop.f32.mrf.mxu0
        %v5326 = vadd.f32 0.0, %v5325
        %5327 = vmatmul.f32.gmra.mxu0 %v4914
        %v5328 = vpop.f32.mrf.mxu0
        %v5329 = vadd.f32 0.0, %v5328
        %5330 = vmatmul.f32.gmra.mxu0 %v4930
        %v5331 = vpop.f32.mrf.mxu0
        %v5332 = vadd.f32 0.0, %v5331
        %5333 = vmatmul.f32.gmra.mxu0 %v4946
        %v5334 = vpop.f32.mrf.mxu0
        %v5335 = vadd.f32 0.0, %v5334
        %5336 = vmatmul.f32.gmra.mxu0 %v4962
        %v5337 = vpop.f32.mrf.mxu0
        %v5338 = vadd.f32 0.0, %v5337
        %5339 = vmatmul.f32.gmra.mxu0 %v4978
        %v5340 = vpop.f32.mrf.mxu0
        %v5341 = vadd.f32 0.0, %v5340
        %5342 = vmatmul.f32.gmra.mxu0 %v4994
        %v5343 = vpop.f32.mrf.mxu0
        %v5344 = vadd.f32 0.0, %v5343
        %5345 = vdwg.mxu0
        %5346 = vmatpush.msra.mxu0 %v5040
        %5347 = vmatpush.msra.mxu0 %v5039
        %5348 = vmatpush.msra.mxu0 %v5038
        %5349 = vmatpush.msra.mxu0 %v5037
        %5350 = vmatpush.msra.mxu0 %v5036
        %5351 = vmatpush.msra.mxu0 %v5035
        %5352 = vmatpush.msra.mxu0 %v5034
        %5353 = vmatpush.msra.mxu0 %v5033
        %5354 = vmatpush.msra.mxu0 %v5032
        %5355 = vmatpush.msra.mxu0 %v5031
        %5356 = vmatpush.msra.mxu0 %v5030
        %5357 = vmatpush.msra.mxu0 %v5029
        %5358 = vmatpush.msra.mxu0 %v5028
        %5359 = vmatpush.msra.mxu0 %v5027
        %5360 = vmatpush.msra.mxu0 %v5026
        %5361 = vmatpush.msra.mxu0 %v5025
        %5362 = vmatmul.f32.gmra.mxu0 %v3988
        %v5363 = vpop.f32.mrf.mxu0
        %v5364 = vadd.f32 %v5155, %v5363
        %5365 = vmatmul.f32.gmra.mxu0 %v4004
        %v5366 = vpop.f32.mrf.mxu0
        %v5367 = vadd.f32 %v5158, %v5366
        %5368 = vmatmul.f32.gmra.mxu0 %v4020
        %v5369 = vpop.f32.mrf.mxu0
        %v5370 = vadd.f32 %v5161, %v5369
        %5371 = vmatmul.f32.gmra.mxu0 %v4036
        %v5372 = vpop.f32.mrf.mxu0
        %v5373 = vadd.f32 %v5164, %v5372
        %5374 = vmatmul.f32.gmra.mxu0 %v4052
        %v5375 = vpop.f32.mrf.mxu0
        %v5376 = vadd.f32 %v5167, %v5375
        %5377 = vmatmul.f32.gmra.mxu0 %v4068
        %v5378 = vpop.f32.mrf.mxu0
        %v5379 = vadd.f32 %v5170, %v5378
        %5380 = vmatmul.f32.gmra.mxu0 %v4084
        %v5381 = vpop.f32.mrf.mxu0
        %v5382 = vadd.f32 %v5173, %v5381
        %5383 = vmatmul.f32.gmra.mxu0 %v4100
        %v5384 = vpop.f32.mrf.mxu0
        %v5385 = vadd.f32 %v5176, %v5384
        %5386 = vmatmul.f32.gmra.mxu0 %v4116
        %v5387 = vpop.f32.mrf.mxu0
        %v5388 = vadd.f32 %v5179, %v5387
        %5389 = vmatmul.f32.gmra.mxu0 %v4132
        %v5390 = vpop.f32.mrf.mxu0
        %v5391 = vadd.f32 %v5182, %v5390
        %5392 = vmatmul.f32.gmra.mxu0 %v4148
        %v5393 = vpop.f32.mrf.mxu0
        %v5394 = vadd.f32 %v5185, %v5393
        %5395 = vmatmul.f32.gmra.mxu0 %v4164
        %v5396 = vpop.f32.mrf.mxu0
        %v5397 = vadd.f32 %v5188, %v5396
        %5398 = vmatmul.f32.gmra.mxu0 %v4180
        %v5399 = vpop.f32.mrf.mxu0
        %v5400 = vadd.f32 %v5191, %v5399
        %5401 = vmatmul.f32.gmra.mxu0 %v4196
        %v5402 = vpop.f32.mrf.mxu0
        %v5403 = vadd.f32 %v5194, %v5402
        %5404 = vmatmul.f32.gmra.mxu0 %v4212
        %v5405 = vpop.f32.mrf.mxu0
        %v5406 = vadd.f32 %v5197, %v5405
        %5407 = vmatmul.f32.gmra.mxu0 %v4228
        %v5408 = vpop.f32.mrf.mxu0
        %v5409 = vadd.f32 %v5200, %v5408
        %5410 = vmatmul.f32.gmra.mxu0 %v4244
        %v5411 = vpop.f32.mrf.mxu0
        %v5412 = vadd.f32 %v5203, %v5411
        %5413 = vmatmul.f32.gmra.mxu0 %v4260
        %v5414 = vpop.f32.mrf.mxu0
        %v5415 = vadd.f32 %v5206, %v5414
        %5416 = vmatmul.f32.gmra.mxu0 %v4276
        %v5417 = vpop.f32.mrf.mxu0
        %v5418 = vadd.f32 %v5209, %v5417
        %5419 = vmatmul.f32.gmra.mxu0 %v4292
        %v5420 = vpop.f32.mrf.mxu0
        %v5421 = vadd.f32 %v5212, %v5420
        %5422 = vmatmul.f32.gmra.mxu0 %v4308
        %v5423 = vpop.f32.mrf.mxu0
        %v5424 = vadd.f32 %v5215, %v5423
        %5425 = vmatmul.f32.gmra.mxu0 %v4324
        %v5426 = vpop.f32.mrf.mxu0
        %v5427 = vadd.f32 %v5218, %v5426
        %5428 = vmatmul.f32.gmra.mxu0 %v4340
        %v5429 = vpop.f32.mrf.mxu0
        %v5430 = vadd.f32 %v5221, %v5429
        %5431 = vmatmul.f32.gmra.mxu0 %v4356
        %v5432 = vpop.f32.mrf.mxu0
        %v5433 = vadd.f32 %v5224, %v5432
        %5434 = vmatmul.f32.gmra.mxu0 %v4372
        %v5435 = vpop.f32.mrf.mxu0
        %v5436 = vadd.f32 %v5227, %v5435
        %5437 = vmatmul.f32.gmra.mxu0 %v4388
        %v5438 = vpop.f32.mrf.mxu0
        %v5439 = vadd.f32 %v5230, %v5438
        %5440 = vmatmul.f32.gmra.mxu0 %v4404
        %v5441 = vpop.f32.mrf.mxu0
        %v5442 = vadd.f32 %v5233, %v5441
        %5443 = vmatmul.f32.gmra.mxu0 %v4420
        %v5444 = vpop.f32.mrf.mxu0
        %v5445 = vadd.f32 %v5236, %v5444
        %5446 = vmatmul.f32.gmra.mxu0 %v4436
        %v5447 = vpop.f32.mrf.mxu0
        %v5448 = vadd.f32 %v5239, %v5447
        %5449 = vmatmul.f32.gmra.mxu0 %v4452
        %v5450 = vpop.f32.mrf.mxu0
        %v5451 = vadd.f32 %v5242, %v5450
        %5452 = vmatmul.f32.gmra.mxu0 %v4468
        %v5453 = vpop.f32.mrf.mxu0
        %v5454 = vadd.f32 %v5245, %v5453
        %5455 = vmatmul.f32.gmra.mxu0 %v4484
        %v5456 = vpop.f32.mrf.mxu0
        %v5457 = vadd.f32 %v5248, %v5456
        %5458 = vmatmul.f32.gmra.mxu0 %v4500
        %v5459 = vpop.f32.mrf.mxu0
        %v5460 = vadd.f32 %v5251, %v5459
        %5461 = vmatmul.f32.gmra.mxu0 %v4516
        %v5462 = vpop.f32.mrf.mxu0
        %v5463 = vadd.f32 %v5254, %v5462
        %5464 = vmatmul.f32.gmra.mxu0 %v4532
        %v5465 = vpop.f32.mrf.mxu0
        %v5466 = vadd.f32 %v5257, %v5465
        %5467 = vmatmul.f32.gmra.mxu0 %v4548
        %v5468 = vpop.f32.mrf.mxu0
        %v5469 = vadd.f32 %v5260, %v5468
        %5470 = vmatmul.f32.gmra.mxu0 %v4564
        %v5471 = vpop.f32.mrf.mxu0
        %v5472 = vadd.f32 %v5263, %v5471
        %5473 = vmatmul.f32.gmra.mxu0 %v4580
        %v5474 = vpop.f32.mrf.mxu0
        %v5475 = vadd.f32 %v5266, %v5474
        %5476 = vmatmul.f32.gmra.mxu0 %v4596
        %v5477 = vpop.f32.mrf.mxu0
        %v5478 = vadd.f32 %v5269, %v5477
        %5479 = vmatmul.f32.gmra.mxu0 %v4612
        %v5480 = vpop.f32.mrf.mxu0
        %v5481 = vadd.f32 %v5272, %v5480
        %5482 = vmatmul.f32.gmra.mxu0 %v4628
        %v5483 = vpop.f32.mrf.mxu0
        %v5484 = vadd.f32 %v5275, %v5483
        %5485 = vmatmul.f32.gmra.mxu0 %v4644
        %v5486 = vpop.f32.mrf.mxu0
        %v5487 = vadd.f32 %v5278, %v5486
        %5488 = vmatmul.f32.gmra.mxu0 %v4660
        %v5489 = vpop.f32.mrf.mxu0
        %v5490 = vadd.f32 %v5281, %v5489
        %5491 = vmatmul.f32.gmra.mxu0 %v4676
        %v5492 = vpop.f32.mrf.mxu0
        %v5493 = vadd.f32 %v5284, %v5492
        %5494 = vmatmul.f32.gmra.mxu0 %v4692
        %v5495 = vpop.f32.mrf.mxu0
        %v5496 = vadd.f32 %v5287, %v5495
        %5497 = vmatmul.f32.gmra.mxu0 %v4708
        %v5498 = vpop.f32.mrf.mxu0
        %v5499 = vadd.f32 %v5290, %v5498
        %5500 = vmatmul.f32.gmra.mxu0 %v4724
        %v5501 = vpop.f32.mrf.mxu0
        %v5502 = vadd.f32 %v5293, %v5501
        %5503 = vmatmul.f32.gmra.mxu0 %v4740
        %v5504 = vpop.f32.mrf.mxu0
        %v5505 = vadd.f32 %v5296, %v5504
        %5506 = vmatmul.f32.gmra.mxu0 %v4756
        %v5507 = vpop.f32.mrf.mxu0
        %v5508 = vadd.f32 %v5299, %v5507
        %5509 = vmatmul.f32.gmra.mxu0 %v4772
        %v5510 = vpop.f32.mrf.mxu0
        %v5511 = vadd.f32 %v5302, %v5510
        %5512 = vmatmul.f32.gmra.mxu0 %v4788
        %v5513 = vpop.f32.mrf.mxu0
        %v5514 = vadd.f32 %v5305, %v5513
        %5515 = vmatmul.f32.gmra.mxu0 %v4804
        %v5516 = vpop.f32.mrf.mxu0
        %v5517 = vadd.f32 %v5308, %v5516
        %5518 = vmatmul.f32.gmra.mxu0 %v4820
        %v5519 = vpop.f32.mrf.mxu0
        %v5520 = vadd.f32 %v5311, %v5519
        %5521 = vmatmul.f32.gmra.mxu0 %v4836
        %v5522 = vpop.f32.mrf.mxu0
        %v5523 = vadd.f32 %v5314, %v5522
        %5524 = vmatmul.f32.gmra.mxu0 %v4852
        %v5525 = vpop.f32.mrf.mxu0
        %v5526 = vadd.f32 %v5317, %v5525
        %5527 = vmatmul.f32.gmra.mxu0 %v4868
        %v5528 = vpop.f32.mrf.mxu0
        %v5529 = vadd.f32 %v5320, %v5528
        %5530 = vmatmul.f32.gmra.mxu0 %v4884
        %v5531 = vpop.f32.mrf.mxu0
        %v5532 = vadd.f32 %v5323, %v5531
        %5533 = vmatmul.f32.gmra.mxu0 %v4900
        %v5534 = vpop.f32.mrf.mxu0
        %v5535 = vadd.f32 %v5326, %v5534
        %5536 = vmatmul.f32.gmra.mxu0 %v4916
        %v5537 = vpop.f32.mrf.mxu0
        %v5538 = vadd.f32 %v5329, %v5537
        %5539 = vmatmul.f32.gmra.mxu0 %v4932
        %v5540 = vpop.f32.mrf.mxu0
        %v5541 = vadd.f32 %v5332, %v5540
        %5542 = vmatmul.f32.gmra.mxu0 %v4948
        %v5543 = vpop.f32.mrf.mxu0
        %v5544 = vadd.f32 %v5335, %v5543
        %5545 = vmatmul.f32.gmra.mxu0 %v4964
        %v5546 = vpop.f32.mrf.mxu0
        %v5547 = vadd.f32 %v5338, %v5546
        %5548 = vmatmul.f32.gmra.mxu0 %v4980
        %v5549 = vpop.f32.mrf.mxu0
        %v5550 = vadd.f32 %v5341, %v5549
        %5551 = vmatmul.f32.gmra.mxu0 %v4996
        %v5552 = vpop.f32.mrf.mxu0
        %v5553 = vadd.f32 %v5344, %v5552
        %5554 = vdwg.mxu0
        %5555 = vmatpush.msra.mxu0 %v5056
        %5556 = vmatpush.msra.mxu0 %v5055
        %5557 = vmatpush.msra.mxu0 %v5054
        %5558 = vmatpush.msra.mxu0 %v5053
        %5559 = vmatpush.msra.mxu0 %v5052
        %5560 = vmatpush.msra.mxu0 %v5051
        %5561 = vmatpush.msra.mxu0 %v5050
        %5562 = vmatpush.msra.mxu0 %v5049
        %5563 = vmatpush.msra.mxu0 %v5048
        %5564 = vmatpush.msra.mxu0 %v5047
        %5565 = vmatpush.msra.mxu0 %v5046
        %5566 = vmatpush.msra.mxu0 %v5045
        %5567 = vmatpush.msra.mxu0 %v5044
        %5568 = vmatpush.msra.mxu0 %v5043
        %5569 = vmatpush.msra.mxu0 %v5042
        %5570 = vmatpush.msra.mxu0 %v5041
        %5571 = vmatmul.f32.gmra.mxu0 %v3990
        %v5572 = vpop.f32.mrf.mxu0
        %v5573 = vadd.f32 %v5364, %v5572
        %5574 = vmatmul.f32.gmra.mxu0 %v4006
        %v5575 = vpop.f32.mrf.mxu0
        %v5576 = vadd.f32 %v5367, %v5575
        %5577 = vmatmul.f32.gmra.mxu0 %v4022
        %v5578 = vpop.f32.mrf.mxu0
        %v5579 = vadd.f32 %v5370, %v5578
        %5580 = vmatmul.f32.gmra.mxu0 %v4038
        %v5581 = vpop.f32.mrf.mxu0
        %v5582 = vadd.f32 %v5373, %v5581
        %5583 = vmatmul.f32.gmra.mxu0 %v4054
        %v5584 = vpop.f32.mrf.mxu0
        %v5585 = vadd.f32 %v5376, %v5584
        %5586 = vmatmul.f32.gmra.mxu0 %v4070
        %v5587 = vpop.f32.mrf.mxu0
        %v5588 = vadd.f32 %v5379, %v5587
        %5589 = vmatmul.f32.gmra.mxu0 %v4086
        %v5590 = vpop.f32.mrf.mxu0
        %v5591 = vadd.f32 %v5382, %v5590
        %5592 = vmatmul.f32.gmra.mxu0 %v4102
        %v5593 = vpop.f32.mrf.mxu0
        %v5594 = vadd.f32 %v5385, %v5593
        %5595 = vmatmul.f32.gmra.mxu0 %v4118
        %v5596 = vpop.f32.mrf.mxu0
        %v5597 = vadd.f32 %v5388, %v5596
        %5598 = vmatmul.f32.gmra.mxu0 %v4134
        %v5599 = vpop.f32.mrf.mxu0
        %v5600 = vadd.f32 %v5391, %v5599
        %5601 = vmatmul.f32.gmra.mxu0 %v4150
        %v5602 = vpop.f32.mrf.mxu0
        %v5603 = vadd.f32 %v5394, %v5602
        %5604 = vmatmul.f32.gmra.mxu0 %v4166
        %v5605 = vpop.f32.mrf.mxu0
        %v5606 = vadd.f32 %v5397, %v5605
        %5607 = vmatmul.f32.gmra.mxu0 %v4182
        %v5608 = vpop.f32.mrf.mxu0
        %v5609 = vadd.f32 %v5400, %v5608
        %5610 = vmatmul.f32.gmra.mxu0 %v4198
        %v5611 = vpop.f32.mrf.mxu0
        %v5612 = vadd.f32 %v5403, %v5611
        %5613 = vmatmul.f32.gmra.mxu0 %v4214
        %v5614 = vpop.f32.mrf.mxu0
        %v5615 = vadd.f32 %v5406, %v5614
        %5616 = vmatmul.f32.gmra.mxu0 %v4230
        %v5617 = vpop.f32.mrf.mxu0
        %v5618 = vadd.f32 %v5409, %v5617
        %5619 = vmatmul.f32.gmra.mxu0 %v4246
        %v5620 = vpop.f32.mrf.mxu0
        %v5621 = vadd.f32 %v5412, %v5620
        %5622 = vmatmul.f32.gmra.mxu0 %v4262
        %v5623 = vpop.f32.mrf.mxu0
        %v5624 = vadd.f32 %v5415, %v5623
        %5625 = vmatmul.f32.gmra.mxu0 %v4278
        %v5626 = vpop.f32.mrf.mxu0
        %v5627 = vadd.f32 %v5418, %v5626
        %5628 = vmatmul.f32.gmra.mxu0 %v4294
        %v5629 = vpop.f32.mrf.mxu0
        %v5630 = vadd.f32 %v5421, %v5629
        %5631 = vmatmul.f32.gmra.mxu0 %v4310
        %v5632 = vpop.f32.mrf.mxu0
        %v5633 = vadd.f32 %v5424, %v5632
        %5634 = vmatmul.f32.gmra.mxu0 %v4326
        %v5635 = vpop.f32.mrf.mxu0
        %v5636 = vadd.f32 %v5427, %v5635
        %5637 = vmatmul.f32.gmra.mxu0 %v4342
        %v5638 = vpop.f32.mrf.mxu0
        %v5639 = vadd.f32 %v5430, %v5638
        %5640 = vmatmul.f32.gmra.mxu0 %v4358
        %v5641 = vpop.f32.mrf.mxu0
        %v5642 = vadd.f32 %v5433, %v5641
        %5643 = vmatmul.f32.gmra.mxu0 %v4374
        %v5644 = vpop.f32.mrf.mxu0
        %v5645 = vadd.f32 %v5436, %v5644
        %5646 = vmatmul.f32.gmra.mxu0 %v4390
        %v5647 = vpop.f32.mrf.mxu0
        %v5648 = vadd.f32 %v5439, %v5647
        %5649 = vmatmul.f32.gmra.mxu0 %v4406
        %v5650 = vpop.f32.mrf.mxu0
        %v5651 = vadd.f32 %v5442, %v5650
        %5652 = vmatmul.f32.gmra.mxu0 %v4422
        %v5653 = vpop.f32.mrf.mxu0
        %v5654 = vadd.f32 %v5445, %v5653
        %5655 = vmatmul.f32.gmra.mxu0 %v4438
        %v5656 = vpop.f32.mrf.mxu0
        %v5657 = vadd.f32 %v5448, %v5656
        %5658 = vmatmul.f32.gmra.mxu0 %v4454
        %v5659 = vpop.f32.mrf.mxu0
        %v5660 = vadd.f32 %v5451, %v5659
        %5661 = vmatmul.f32.gmra.mxu0 %v4470
        %v5662 = vpop.f32.mrf.mxu0
        %v5663 = vadd.f32 %v5454, %v5662
        %5664 = vmatmul.f32.gmra.mxu0 %v4486
        %v5665 = vpop.f32.mrf.mxu0
        %v5666 = vadd.f32 %v5457, %v5665
        %5667 = vmatmul.f32.gmra.mxu0 %v4502
        %v5668 = vpop.f32.mrf.mxu0
        %v5669 = vadd.f32 %v5460, %v5668
        %5670 = vmatmul.f32.gmra.mxu0 %v4518
        %v5671 = vpop.f32.mrf.mxu0
        %v5672 = vadd.f32 %v5463, %v5671
        %5673 = vmatmul.f32.gmra.mxu0 %v4534
        %v5674 = vpop.f32.mrf.mxu0
        %v5675 = vadd.f32 %v5466, %v5674
        %5676 = vmatmul.f32.gmra.mxu0 %v4550
        %v5677 = vpop.f32.mrf.mxu0
        %v5678 = vadd.f32 %v5469, %v5677
        %5679 = vmatmul.f32.gmra.mxu0 %v4566
        %v5680 = vpop.f32.mrf.mxu0
        %v5681 = vadd.f32 %v5472, %v5680
        %5682 = vmatmul.f32.gmra.mxu0 %v4582
        %v5683 = vpop.f32.mrf.mxu0
        %v5684 = vadd.f32 %v5475, %v5683
        %5685 = vmatmul.f32.gmra.mxu0 %v4598
        %v5686 = vpop.f32.mrf.mxu0
        %v5687 = vadd.f32 %v5478, %v5686
        %5688 = vmatmul.f32.gmra.mxu0 %v4614
        %v5689 = vpop.f32.mrf.mxu0
        %v5690 = vadd.f32 %v5481, %v5689
        %5691 = vmatmul.f32.gmra.mxu0 %v4630
        %v5692 = vpop.f32.mrf.mxu0
        %v5693 = vadd.f32 %v5484, %v5692
        %5694 = vmatmul.f32.gmra.mxu0 %v4646
        %v5695 = vpop.f32.mrf.mxu0
        %v5696 = vadd.f32 %v5487, %v5695
        %5697 = vmatmul.f32.gmra.mxu0 %v4662
        %v5698 = vpop.f32.mrf.mxu0
        %v5699 = vadd.f32 %v5490, %v5698
        %5700 = vmatmul.f32.gmra.mxu0 %v4678
        %v5701 = vpop.f32.mrf.mxu0
        %v5702 = vadd.f32 %v5493, %v5701
        %5703 = vmatmul.f32.gmra.mxu0 %v4694
        %v5704 = vpop.f32.mrf.mxu0
        %v5705 = vadd.f32 %v5496, %v5704
        %5706 = vmatmul.f32.gmra.mxu0 %v4710
        %v5707 = vpop.f32.mrf.mxu0
        %v5708 = vadd.f32 %v5499, %v5707
        %5709 = vmatmul.f32.gmra.mxu0 %v4726
        %v5710 = vpop.f32.mrf.mxu0
        %v5711 = vadd.f32 %v5502, %v5710
        %5712 = vmatmul.f32.gmra.mxu0 %v4742
        %v5713 = vpop.f32.mrf.mxu0
        %v5714 = vadd.f32 %v5505, %v5713
        %5715 = vmatmul.f32.gmra.mxu0 %v4758
        %v5716 = vpop.f32.mrf.mxu0
        %v5717 = vadd.f32 %v5508, %v5716
        %5718 = vmatmul.f32.gmra.mxu0 %v4774
        %v5719 = vpop.f32.mrf.mxu0
        %v5720 = vadd.f32 %v5511, %v5719
        %5721 = vmatmul.f32.gmra.mxu0 %v4790
        %v5722 = vpop.f32.mrf.mxu0
        %v5723 = vadd.f32 %v5514, %v5722
        %5724 = vmatmul.f32.gmra.mxu0 %v4806
        %v5725 = vpop.f32.mrf.mxu0
        %v5726 = vadd.f32 %v5517, %v5725
        %5727 = vmatmul.f32.gmra.mxu0 %v4822
        %v5728 = vpop.f32.mrf.mxu0
        %v5729 = vadd.f32 %v5520, %v5728
        %5730 = vmatmul.f32.gmra.mxu0 %v4838
        %v5731 = vpop.f32.mrf.mxu0
        %v5732 = vadd.f32 %v5523, %v5731
        %5733 = vmatmul.f32.gmra.mxu0 %v4854
        %v5734 = vpop.f32.mrf.mxu0
        %v5735 = vadd.f32 %v5526, %v5734
        %5736 = vmatmul.f32.gmra.mxu0 %v4870
        %v5737 = vpop.f32.mrf.mxu0
        %v5738 = vadd.f32 %v5529, %v5737
        %5739 = vmatmul.f32.gmra.mxu0 %v4886
        %v5740 = vpop.f32.mrf.mxu0
        %v5741 = vadd.f32 %v5532, %v5740
        %5742 = vmatmul.f32.gmra.mxu0 %v4902
        %v5743 = vpop.f32.mrf.mxu0
        %v5744 = vadd.f32 %v5535, %v5743
        %5745 = vmatmul.f32.gmra.mxu0 %v4918
        %v5746 = vpop.f32.mrf.mxu0
        %v5747 = vadd.f32 %v5538, %v5746
        %5748 = vmatmul.f32.gmra.mxu0 %v4934
        %v5749 = vpop.f32.mrf.mxu0
        %v5750 = vadd.f32 %v5541, %v5749
        %5751 = vmatmul.f32.gmra.mxu0 %v4950
        %v5752 = vpop.f32.mrf.mxu0
        %v5753 = vadd.f32 %v5544, %v5752
        %5754 = vmatmul.f32.gmra.mxu0 %v4966
        %v5755 = vpop.f32.mrf.mxu0
        %v5756 = vadd.f32 %v5547, %v5755
        %5757 = vmatmul.f32.gmra.mxu0 %v4982
        %v5758 = vpop.f32.mrf.mxu0
        %v5759 = vadd.f32 %v5550, %v5758
        %5760 = vmatmul.f32.gmra.mxu0 %v4998
        %v5761 = vpop.f32.mrf.mxu0
        %v5762 = vadd.f32 %v5553, %v5761
        %5763 = vdwg.mxu0
        %5764 = vmatpush.msra.mxu0 %v5072
        %5765 = vmatpush.msra.mxu0 %v5071
        %5766 = vmatpush.msra.mxu0 %v5070
        %5767 = vmatpush.msra.mxu0 %v5069
        %5768 = vmatpush.msra.mxu0 %v5068
        %5769 = vmatpush.msra.mxu0 %v5067
        %5770 = vmatpush.msra.mxu0 %v5066
        %5771 = vmatpush.msra.mxu0 %v5065
        %5772 = vmatpush.msra.mxu0 %v5064
        %5773 = vmatpush.msra.mxu0 %v5063
        %5774 = vmatpush.msra.mxu0 %v5062
        %5775 = vmatpush.msra.mxu0 %v5061
        %5776 = vmatpush.msra.mxu0 %v5060
        %5777 = vmatpush.msra.mxu0 %v5059
        %5778 = vmatpush.msra.mxu0 %v5058
        %5779 = vmatpush.msra.mxu0 %v5057
        %5780 = vmatmul.f32.gmra.mxu0 %v3992
        %v5781 = vpop.f32.mrf.mxu0
        %v5782 = vadd.f32 %v5573, %v5781
        %5783 = vmatmul.f32.gmra.mxu0 %v4008
        %v5784 = vpop.f32.mrf.mxu0
        %v5785 = vadd.f32 %v5576, %v5784
        %5786 = vmatmul.f32.gmra.mxu0 %v4024
        %v5787 = vpop.f32.mrf.mxu0
        %v5788 = vadd.f32 %v5579, %v5787
        %5789 = vmatmul.f32.gmra.mxu0 %v4040
        %v5790 = vpop.f32.mrf.mxu0
        %v5791 = vadd.f32 %v5582, %v5790
        %5792 = vmatmul.f32.gmra.mxu0 %v4056
        %v5793 = vpop.f32.mrf.mxu0
        %v5794 = vadd.f32 %v5585, %v5793
        %5795 = vmatmul.f32.gmra.mxu0 %v4072
        %v5796 = vpop.f32.mrf.mxu0
        %v5797 = vadd.f32 %v5588, %v5796
        %5798 = vmatmul.f32.gmra.mxu0 %v4088
        %v5799 = vpop.f32.mrf.mxu0
        %v5800 = vadd.f32 %v5591, %v5799
        %5801 = vmatmul.f32.gmra.mxu0 %v4104
        %v5802 = vpop.f32.mrf.mxu0
        %v5803 = vadd.f32 %v5594, %v5802
        %5804 = vmatmul.f32.gmra.mxu0 %v4120
        %v5805 = vpop.f32.mrf.mxu0
        %v5806 = vadd.f32 %v5597, %v5805
        %5807 = vmatmul.f32.gmra.mxu0 %v4136
        %v5808 = vpop.f32.mrf.mxu0
        %v5809 = vadd.f32 %v5600, %v5808
        %5810 = vmatmul.f32.gmra.mxu0 %v4152
        %v5811 = vpop.f32.mrf.mxu0
        %v5812 = vadd.f32 %v5603, %v5811
        %5813 = vmatmul.f32.gmra.mxu0 %v4168
        %v5814 = vpop.f32.mrf.mxu0
        %v5815 = vadd.f32 %v5606, %v5814
        %5816 = vmatmul.f32.gmra.mxu0 %v4184
        %v5817 = vpop.f32.mrf.mxu0
        %v5818 = vadd.f32 %v5609, %v5817
        %5819 = vmatmul.f32.gmra.mxu0 %v4200
        %v5820 = vpop.f32.mrf.mxu0
        %v5821 = vadd.f32 %v5612, %v5820
        %5822 = vmatmul.f32.gmra.mxu0 %v4216
        %v5823 = vpop.f32.mrf.mxu0
        %v5824 = vadd.f32 %v5615, %v5823
        %5825 = vmatmul.f32.gmra.mxu0 %v4232
        %v5826 = vpop.f32.mrf.mxu0
        %v5827 = vadd.f32 %v5618, %v5826
        %5828 = vmatmul.f32.gmra.mxu0 %v4248
        %v5829 = vpop.f32.mrf.mxu0
        %v5830 = vadd.f32 %v5621, %v5829
        %5831 = vmatmul.f32.gmra.mxu0 %v4264
        %v5832 = vpop.f32.mrf.mxu0
        %v5833 = vadd.f32 %v5624, %v5832
        %5834 = vmatmul.f32.gmra.mxu0 %v4280
        %v5835 = vpop.f32.mrf.mxu0
        %v5836 = vadd.f32 %v5627, %v5835
        %5837 = vmatmul.f32.gmra.mxu0 %v4296
        %v5838 = vpop.f32.mrf.mxu0
        %v5839 = vadd.f32 %v5630, %v5838
        %5840 = vmatmul.f32.gmra.mxu0 %v4312
        %v5841 = vpop.f32.mrf.mxu0
        %v5842 = vadd.f32 %v5633, %v5841
        %5843 = vmatmul.f32.gmra.mxu0 %v4328
        %v5844 = vpop.f32.mrf.mxu0
        %v5845 = vadd.f32 %v5636, %v5844
        %5846 = vmatmul.f32.gmra.mxu0 %v4344
        %v5847 = vpop.f32.mrf.mxu0
        %v5848 = vadd.f32 %v5639, %v5847
        %5849 = vmatmul.f32.gmra.mxu0 %v4360
        %v5850 = vpop.f32.mrf.mxu0
        %v5851 = vadd.f32 %v5642, %v5850
        %5852 = vmatmul.f32.gmra.mxu0 %v4376
        %v5853 = vpop.f32.mrf.mxu0
        %v5854 = vadd.f32 %v5645, %v5853
        %5855 = vmatmul.f32.gmra.mxu0 %v4392
        %v5856 = vpop.f32.mrf.mxu0
        %v5857 = vadd.f32 %v5648, %v5856
        %5858 = vmatmul.f32.gmra.mxu0 %v4408
        %v5859 = vpop.f32.mrf.mxu0
        %v5860 = vadd.f32 %v5651, %v5859
        %5861 = vmatmul.f32.gmra.mxu0 %v4424
        %v5862 = vpop.f32.mrf.mxu0
        %v5863 = vadd.f32 %v5654, %v5862
        %5864 = vmatmul.f32.gmra.mxu0 %v4440
        %v5865 = vpop.f32.mrf.mxu0
        %v5866 = vadd.f32 %v5657, %v5865
        %5867 = vmatmul.f32.gmra.mxu0 %v4456
        %v5868 = vpop.f32.mrf.mxu0
        %v5869 = vadd.f32 %v5660, %v5868
        %5870 = vmatmul.f32.gmra.mxu0 %v4472
        %v5871 = vpop.f32.mrf.mxu0
        %v5872 = vadd.f32 %v5663, %v5871
        %5873 = vmatmul.f32.gmra.mxu0 %v4488
        %v5874 = vpop.f32.mrf.mxu0
        %v5875 = vadd.f32 %v5666, %v5874
        %5876 = vmatmul.f32.gmra.mxu0 %v4504
        %v5877 = vpop.f32.mrf.mxu0
        %v5878 = vadd.f32 %v5669, %v5877
        %5879 = vmatmul.f32.gmra.mxu0 %v4520
        %v5880 = vpop.f32.mrf.mxu0
        %v5881 = vadd.f32 %v5672, %v5880
        %5882 = vmatmul.f32.gmra.mxu0 %v4536
        %v5883 = vpop.f32.mrf.mxu0
        %v5884 = vadd.f32 %v5675, %v5883
        %5885 = vmatmul.f32.gmra.mxu0 %v4552
        %v5886 = vpop.f32.mrf.mxu0
        %v5887 = vadd.f32 %v5678, %v5886
        %5888 = vmatmul.f32.gmra.mxu0 %v4568
        %v5889 = vpop.f32.mrf.mxu0
        %v5890 = vadd.f32 %v5681, %v5889
        %5891 = vmatmul.f32.gmra.mxu0 %v4584
        %v5892 = vpop.f32.mrf.mxu0
        %v5893 = vadd.f32 %v5684, %v5892
        %5894 = vmatmul.f32.gmra.mxu0 %v4600
        %v5895 = vpop.f32.mrf.mxu0
        %v5896 = vadd.f32 %v5687, %v5895
        %5897 = vmatmul.f32.gmra.mxu0 %v4616
        %v5898 = vpop.f32.mrf.mxu0
        %v5899 = vadd.f32 %v5690, %v5898
        %5900 = vmatmul.f32.gmra.mxu0 %v4632
        %v5901 = vpop.f32.mrf.mxu0
        %v5902 = vadd.f32 %v5693, %v5901
        %5903 = vmatmul.f32.gmra.mxu0 %v4648
        %v5904 = vpop.f32.mrf.mxu0
        %v5905 = vadd.f32 %v5696, %v5904
        %5906 = vmatmul.f32.gmra.mxu0 %v4664
        %v5907 = vpop.f32.mrf.mxu0
        %v5908 = vadd.f32 %v5699, %v5907
        %5909 = vmatmul.f32.gmra.mxu0 %v4680
        %v5910 = vpop.f32.mrf.mxu0
        %v5911 = vadd.f32 %v5702, %v5910
        %5912 = vmatmul.f32.gmra.mxu0 %v4696
        %v5913 = vpop.f32.mrf.mxu0
        %v5914 = vadd.f32 %v5705, %v5913
        %5915 = vmatmul.f32.gmra.mxu0 %v4712
        %v5916 = vpop.f32.mrf.mxu0
        %v5917 = vadd.f32 %v5708, %v5916
        %5918 = vmatmul.f32.gmra.mxu0 %v4728
        %v5919 = vpop.f32.mrf.mxu0
        %v5920 = vadd.f32 %v5711, %v5919
        %5921 = vmatmul.f32.gmra.mxu0 %v4744
        %v5922 = vpop.f32.mrf.mxu0
        %v5923 = vadd.f32 %v5714, %v5922
        %5924 = vmatmul.f32.gmra.mxu0 %v4760
        %v5925 = vpop.f32.mrf.mxu0
        %v5926 = vadd.f32 %v5717, %v5925
        %5927 = vmatmul.f32.gmra.mxu0 %v4776
        %v5928 = vpop.f32.mrf.mxu0
        %v5929 = vadd.f32 %v5720, %v5928
        %5930 = vmatmul.f32.gmra.mxu0 %v4792
        %v5931 = vpop.f32.mrf.mxu0
        %v5932 = vadd.f32 %v5723, %v5931
        %5933 = vmatmul.f32.gmra.mxu0 %v4808
        %v5934 = vpop.f32.mrf.mxu0
        %v5935 = vadd.f32 %v5726, %v5934
        %5936 = vmatmul.f32.gmra.mxu0 %v4824
        %v5937 = vpop.f32.mrf.mxu0
        %v5938 = vadd.f32 %v5729, %v5937
        %5939 = vmatmul.f32.gmra.mxu0 %v4840
        %v5940 = vpop.f32.mrf.mxu0
        %v5941 = vadd.f32 %v5732, %v5940
        %5942 = vmatmul.f32.gmra.mxu0 %v4856
        %v5943 = vpop.f32.mrf.mxu0
        %v5944 = vadd.f32 %v5735, %v5943
        %5945 = vmatmul.f32.gmra.mxu0 %v4872
        %v5946 = vpop.f32.mrf.mxu0
        %v5947 = vadd.f32 %v5738, %v5946
        %5948 = vmatmul.f32.gmra.mxu0 %v4888
        %v5949 = vpop.f32.mrf.mxu0
        %v5950 = vadd.f32 %v5741, %v5949
        %5951 = vmatmul.f32.gmra.mxu0 %v4904
        %v5952 = vpop.f32.mrf.mxu0
        %v5953 = vadd.f32 %v5744, %v5952
        %5954 = vmatmul.f32.gmra.mxu0 %v4920
        %v5955 = vpop.f32.mrf.mxu0
        %v5956 = vadd.f32 %v5747, %v5955
        %5957 = vmatmul.f32.gmra.mxu0 %v4936
        %v5958 = vpop.f32.mrf.mxu0
        %v5959 = vadd.f32 %v5750, %v5958
        %5960 = vmatmul.f32.gmra.mxu0 %v4952
        %v5961 = vpop.f32.mrf.mxu0
        %v5962 = vadd.f32 %v5753, %v5961
        %5963 = vmatmul.f32.gmra.mxu0 %v4968
        %v5964 = vpop.f32.mrf.mxu0
        %v5965 = vadd.f32 %v5756, %v5964
        %5966 = vmatmul.f32.gmra.mxu0 %v4984
        %v5967 = vpop.f32.mrf.mxu0
        %v5968 = vadd.f32 %v5759, %v5967
        %5969 = vmatmul.f32.gmra.mxu0 %v5000
        %v5970 = vpop.f32.mrf.mxu0
        %v5971 = vadd.f32 %v5762, %v5970
        %5972 = vdwg.mxu0
        %5973 = vmatpush.msra.mxu0 %v5088
        %5974 = vmatpush.msra.mxu0 %v5087
        %5975 = vmatpush.msra.mxu0 %v5086
        %5976 = vmatpush.msra.mxu0 %v5085
        %5977 = vmatpush.msra.mxu0 %v5084
        %5978 = vmatpush.msra.mxu0 %v5083
        %5979 = vmatpush.msra.mxu0 %v5082
        %5980 = vmatpush.msra.mxu0 %v5081
        %5981 = vmatpush.msra.mxu0 %v5080
        %5982 = vmatpush.msra.mxu0 %v5079
        %5983 = vmatpush.msra.mxu0 %v5078
        %5984 = vmatpush.msra.mxu0 %v5077
        %5985 = vmatpush.msra.mxu0 %v5076
        %5986 = vmatpush.msra.mxu0 %v5075
        %5987 = vmatpush.msra.mxu0 %v5074
        %5988 = vmatpush.msra.mxu0 %v5073
        %5989 = vmatmul.f32.gmra.mxu0 %v3994
        %v5990 = vpop.f32.mrf.mxu0
        %v5991 = vadd.f32 %v5782, %v5990
        %5992 = vmatmul.f32.gmra.mxu0 %v4010
        %v5993 = vpop.f32.mrf.mxu0
        %v5994 = vadd.f32 %v5785, %v5993
        %5995 = vmatmul.f32.gmra.mxu0 %v4026
        %v5996 = vpop.f32.mrf.mxu0
        %v5997 = vadd.f32 %v5788, %v5996
        %5998 = vmatmul.f32.gmra.mxu0 %v4042
        %v5999 = vpop.f32.mrf.mxu0
        %v6000 = vadd.f32 %v5791, %v5999
        %6001 = vmatmul.f32.gmra.mxu0 %v4058
        %v6002 = vpop.f32.mrf.mxu0
        %v6003 = vadd.f32 %v5794, %v6002
        %6004 = vmatmul.f32.gmra.mxu0 %v4074
        %v6005 = vpop.f32.mrf.mxu0
        %v6006 = vadd.f32 %v5797, %v6005
        %6007 = vmatmul.f32.gmra.mxu0 %v4090
        %v6008 = vpop.f32.mrf.mxu0
        %v6009 = vadd.f32 %v5800, %v6008
        %6010 = vmatmul.f32.gmra.mxu0 %v4106
        %v6011 = vpop.f32.mrf.mxu0
        %v6012 = vadd.f32 %v5803, %v6011
        %6013 = vmatmul.f32.gmra.mxu0 %v4122
        %v6014 = vpop.f32.mrf.mxu0
        %v6015 = vadd.f32 %v5806, %v6014
        %6016 = vmatmul.f32.gmra.mxu0 %v4138
        %v6017 = vpop.f32.mrf.mxu0
        %v6018 = vadd.f32 %v5809, %v6017
        %6019 = vmatmul.f32.gmra.mxu0 %v4154
        %v6020 = vpop.f32.mrf.mxu0
        %v6021 = vadd.f32 %v5812, %v6020
        %6022 = vmatmul.f32.gmra.mxu0 %v4170
        %v6023 = vpop.f32.mrf.mxu0
        %v6024 = vadd.f32 %v5815, %v6023
        %6025 = vmatmul.f32.gmra.mxu0 %v4186
        %v6026 = vpop.f32.mrf.mxu0
        %v6027 = vadd.f32 %v5818, %v6026
        %6028 = vmatmul.f32.gmra.mxu0 %v4202
        %v6029 = vpop.f32.mrf.mxu0
        %v6030 = vadd.f32 %v5821, %v6029
        %6031 = vmatmul.f32.gmra.mxu0 %v4218
        %v6032 = vpop.f32.mrf.mxu0
        %v6033 = vadd.f32 %v5824, %v6032
        %6034 = vmatmul.f32.gmra.mxu0 %v4234
        %v6035 = vpop.f32.mrf.mxu0
        %v6036 = vadd.f32 %v5827, %v6035
        %6037 = vmatmul.f32.gmra.mxu0 %v4250
        %v6038 = vpop.f32.mrf.mxu0
        %v6039 = vadd.f32 %v5830, %v6038
        %6040 = vmatmul.f32.gmra.mxu0 %v4266
        %v6041 = vpop.f32.mrf.mxu0
        %v6042 = vadd.f32 %v5833, %v6041
        %6043 = vmatmul.f32.gmra.mxu0 %v4282
        %v6044 = vpop.f32.mrf.mxu0
        %v6045 = vadd.f32 %v5836, %v6044
        %6046 = vmatmul.f32.gmra.mxu0 %v4298
        %v6047 = vpop.f32.mrf.mxu0
        %v6048 = vadd.f32 %v5839, %v6047
        %6049 = vmatmul.f32.gmra.mxu0 %v4314
        %v6050 = vpop.f32.mrf.mxu0
        %v6051 = vadd.f32 %v5842, %v6050
        %6052 = vmatmul.f32.gmra.mxu0 %v4330
        %v6053 = vpop.f32.mrf.mxu0
        %v6054 = vadd.f32 %v5845, %v6053
        %6055 = vmatmul.f32.gmra.mxu0 %v4346
        %v6056 = vpop.f32.mrf.mxu0
        %v6057 = vadd.f32 %v5848, %v6056
        %6058 = vmatmul.f32.gmra.mxu0 %v4362
        %v6059 = vpop.f32.mrf.mxu0
        %v6060 = vadd.f32 %v5851, %v6059
        %6061 = vmatmul.f32.gmra.mxu0 %v4378
        %v6062 = vpop.f32.mrf.mxu0
        %v6063 = vadd.f32 %v5854, %v6062
        %6064 = vmatmul.f32.gmra.mxu0 %v4394
        %v6065 = vpop.f32.mrf.mxu0
        %v6066 = vadd.f32 %v5857, %v6065
        %6067 = vmatmul.f32.gmra.mxu0 %v4410
        %v6068 = vpop.f32.mrf.mxu0
        %v6069 = vadd.f32 %v5860, %v6068
        %6070 = vmatmul.f32.gmra.mxu0 %v4426
        %v6071 = vpop.f32.mrf.mxu0
        %v6072 = vadd.f32 %v5863, %v6071
        %6073 = vmatmul.f32.gmra.mxu0 %v4442
        %v6074 = vpop.f32.mrf.mxu0
        %v6075 = vadd.f32 %v5866, %v6074
        %6076 = vmatmul.f32.gmra.mxu0 %v4458
        %v6077 = vpop.f32.mrf.mxu0
        %v6078 = vadd.f32 %v5869, %v6077
        %6079 = vmatmul.f32.gmra.mxu0 %v4474
        %v6080 = vpop.f32.mrf.mxu0
        %v6081 = vadd.f32 %v5872, %v6080
        %6082 = vmatmul.f32.gmra.mxu0 %v4490
        %v6083 = vpop.f32.mrf.mxu0
        %v6084 = vadd.f32 %v5875, %v6083
        %6085 = vmatmul.f32.gmra.mxu0 %v4506
        %v6086 = vpop.f32.mrf.mxu0
        %v6087 = vadd.f32 %v5878, %v6086
        %6088 = vmatmul.f32.gmra.mxu0 %v4522
        %v6089 = vpop.f32.mrf.mxu0
        %v6090 = vadd.f32 %v5881, %v6089
        %6091 = vmatmul.f32.gmra.mxu0 %v4538
        %v6092 = vpop.f32.mrf.mxu0
        %v6093 = vadd.f32 %v5884, %v6092
        %6094 = vmatmul.f32.gmra.mxu0 %v4554
        %v6095 = vpop.f32.mrf.mxu0
        %v6096 = vadd.f32 %v5887, %v6095
        %6097 = vmatmul.f32.gmra.mxu0 %v4570
        %v6098 = vpop.f32.mrf.mxu0
        %v6099 = vadd.f32 %v5890, %v6098
        %6100 = vmatmul.f32.gmra.mxu0 %v4586
        %v6101 = vpop.f32.mrf.mxu0
        %v6102 = vadd.f32 %v5893, %v6101
        %6103 = vmatmul.f32.gmra.mxu0 %v4602
        %v6104 = vpop.f32.mrf.mxu0
        %v6105 = vadd.f32 %v5896, %v6104
        %6106 = vmatmul.f32.gmra.mxu0 %v4618
        %v6107 = vpop.f32.mrf.mxu0
        %v6108 = vadd.f32 %v5899, %v6107
        %6109 = vmatmul.f32.gmra.mxu0 %v4634
        %v6110 = vpop.f32.mrf.mxu0
        %v6111 = vadd.f32 %v5902, %v6110
        %6112 = vmatmul.f32.gmra.mxu0 %v4650
        %v6113 = vpop.f32.mrf.mxu0
        %v6114 = vadd.f32 %v5905, %v6113
        %6115 = vmatmul.f32.gmra.mxu0 %v4666
        %v6116 = vpop.f32.mrf.mxu0
        %v6117 = vadd.f32 %v5908, %v6116
        %6118 = vmatmul.f32.gmra.mxu0 %v4682
        %v6119 = vpop.f32.mrf.mxu0
        %v6120 = vadd.f32 %v5911, %v6119
        %6121 = vmatmul.f32.gmra.mxu0 %v4698
        %v6122 = vpop.f32.mrf.mxu0
        %v6123 = vadd.f32 %v5914, %v6122
        %6124 = vmatmul.f32.gmra.mxu0 %v4714
        %v6125 = vpop.f32.mrf.mxu0
        %v6126 = vadd.f32 %v5917, %v6125
        %6127 = vmatmul.f32.gmra.mxu0 %v4730
        %v6128 = vpop.f32.mrf.mxu0
        %v6129 = vadd.f32 %v5920, %v6128
        %6130 = vmatmul.f32.gmra.mxu0 %v4746
        %v6131 = vpop.f32.mrf.mxu0
        %v6132 = vadd.f32 %v5923, %v6131
        %6133 = vmatmul.f32.gmra.mxu0 %v4762
        %v6134 = vpop.f32.mrf.mxu0
        %v6135 = vadd.f32 %v5926, %v6134
        %6136 = vmatmul.f32.gmra.mxu0 %v4778
        %v6137 = vpop.f32.mrf.mxu0
        %v6138 = vadd.f32 %v5929, %v6137
        %6139 = vmatmul.f32.gmra.mxu0 %v4794
        %v6140 = vpop.f32.mrf.mxu0
        %v6141 = vadd.f32 %v5932, %v6140
        %6142 = vmatmul.f32.gmra.mxu0 %v4810
        %v6143 = vpop.f32.mrf.mxu0
        %v6144 = vadd.f32 %v5935, %v6143
        %6145 = vmatmul.f32.gmra.mxu0 %v4826
        %v6146 = vpop.f32.mrf.mxu0
        %v6147 = vadd.f32 %v5938, %v6146
        %6148 = vmatmul.f32.gmra.mxu0 %v4842
        %v6149 = vpop.f32.mrf.mxu0
        %v6150 = vadd.f32 %v5941, %v6149
        %6151 = vmatmul.f32.gmra.mxu0 %v4858
        %v6152 = vpop.f32.mrf.mxu0
        %v6153 = vadd.f32 %v5944, %v6152
        %6154 = vmatmul.f32.gmra.mxu0 %v4874
        %v6155 = vpop.f32.mrf.mxu0
        %v6156 = vadd.f32 %v5947, %v6155
        %6157 = vmatmul.f32.gmra.mxu0 %v4890
        %v6158 = vpop.f32.mrf.mxu0
        %v6159 = vadd.f32 %v5950, %v6158
        %6160 = vmatmul.f32.gmra.mxu0 %v4906
        %v6161 = vpop.f32.mrf.mxu0
        %v6162 = vadd.f32 %v5953, %v6161
        %6163 = vmatmul.f32.gmra.mxu0 %v4922
        %v6164 = vpop.f32.mrf.mxu0
        %v6165 = vadd.f32 %v5956, %v6164
        %6166 = vmatmul.f32.gmra.mxu0 %v4938
        %v6167 = vpop.f32.mrf.mxu0
        %v6168 = vadd.f32 %v5959, %v6167
        %6169 = vmatmul.f32.gmra.mxu0 %v4954
        %v6170 = vpop.f32.mrf.mxu0
        %v6171 = vadd.f32 %v5962, %v6170
        %6172 = vmatmul.f32.gmra.mxu0 %v4970
        %v6173 = vpop.f32.mrf.mxu0
        %v6174 = vadd.f32 %v5965, %v6173
        %6175 = vmatmul.f32.gmra.mxu0 %v4986
        %v6176 = vpop.f32.mrf.mxu0
        %v6177 = vadd.f32 %v5968, %v6176
        %6178 = vmatmul.f32.gmra.mxu0 %v5002
        %v6179 = vpop.f32.mrf.mxu0
        %v6180 = vadd.f32 %v5971, %v6179
        %6181 = vdwg.mxu0
        %6182 = vmatpush.msra.mxu0 %v5104
        %6183 = vmatpush.msra.mxu0 %v5103
        %6184 = vmatpush.msra.mxu0 %v5102
        %6185 = vmatpush.msra.mxu0 %v5101
        %6186 = vmatpush.msra.mxu0 %v5100
        %6187 = vmatpush.msra.mxu0 %v5099
        %6188 = vmatpush.msra.mxu0 %v5098
        %6189 = vmatpush.msra.mxu0 %v5097
        %6190 = vmatpush.msra.mxu0 %v5096
        %6191 = vmatpush.msra.mxu0 %v5095
        %6192 = vmatpush.msra.mxu0 %v5094
        %6193 = vmatpush.msra.mxu0 %v5093
        %6194 = vmatpush.msra.mxu0 %v5092
        %6195 = vmatpush.msra.mxu0 %v5091
        %6196 = vmatpush.msra.mxu0 %v5090
        %6197 = vmatpush.msra.mxu0 %v5089
        %6198 = vmatmul.f32.gmra.mxu0 %v3996
        %v6199 = vpop.f32.mrf.mxu0
        %v6200 = vadd.f32 %v5991, %v6199
        %6201 = vmatmul.f32.gmra.mxu0 %v4012
        %v6202 = vpop.f32.mrf.mxu0
        %v6203 = vadd.f32 %v5994, %v6202
        %6204 = vmatmul.f32.gmra.mxu0 %v4028
        %v6205 = vpop.f32.mrf.mxu0
        %v6206 = vadd.f32 %v5997, %v6205
        %6207 = vmatmul.f32.gmra.mxu0 %v4044
        %v6208 = vpop.f32.mrf.mxu0
        %v6209 = vadd.f32 %v6000, %v6208
        %6210 = vmatmul.f32.gmra.mxu0 %v4060
        %v6211 = vpop.f32.mrf.mxu0
        %v6212 = vadd.f32 %v6003, %v6211
        %6213 = vmatmul.f32.gmra.mxu0 %v4076
        %v6214 = vpop.f32.mrf.mxu0
        %v6215 = vadd.f32 %v6006, %v6214
        %6216 = vmatmul.f32.gmra.mxu0 %v4092
        %v6217 = vpop.f32.mrf.mxu0
        %v6218 = vadd.f32 %v6009, %v6217
        %6219 = vmatmul.f32.gmra.mxu0 %v4108
        %v6220 = vpop.f32.mrf.mxu0
        %v6221 = vadd.f32 %v6012, %v6220
        %6222 = vmatmul.f32.gmra.mxu0 %v4124
        %v6223 = vpop.f32.mrf.mxu0
        %v6224 = vadd.f32 %v6015, %v6223
        %6225 = vmatmul.f32.gmra.mxu0 %v4140
        %v6226 = vpop.f32.mrf.mxu0
        %v6227 = vadd.f32 %v6018, %v6226
        %6228 = vmatmul.f32.gmra.mxu0 %v4156
        %v6229 = vpop.f32.mrf.mxu0
        %v6230 = vadd.f32 %v6021, %v6229
        %6231 = vmatmul.f32.gmra.mxu0 %v4172
        %v6232 = vpop.f32.mrf.mxu0
        %v6233 = vadd.f32 %v6024, %v6232
        %6234 = vmatmul.f32.gmra.mxu0 %v4188
        %v6235 = vpop.f32.mrf.mxu0
        %v6236 = vadd.f32 %v6027, %v6235
        %6237 = vmatmul.f32.gmra.mxu0 %v4204
        %v6238 = vpop.f32.mrf.mxu0
        %v6239 = vadd.f32 %v6030, %v6238
        %6240 = vmatmul.f32.gmra.mxu0 %v4220
        %v6241 = vpop.f32.mrf.mxu0
        %v6242 = vadd.f32 %v6033, %v6241
        %6243 = vmatmul.f32.gmra.mxu0 %v4236
        %v6244 = vpop.f32.mrf.mxu0
        %v6245 = vadd.f32 %v6036, %v6244
        %6246 = vmatmul.f32.gmra.mxu0 %v4252
        %v6247 = vpop.f32.mrf.mxu0
        %v6248 = vadd.f32 %v6039, %v6247
        %6249 = vmatmul.f32.gmra.mxu0 %v4268
        %v6250 = vpop.f32.mrf.mxu0
        %v6251 = vadd.f32 %v6042, %v6250
        %6252 = vmatmul.f32.gmra.mxu0 %v4284
        %v6253 = vpop.f32.mrf.mxu0
        %v6254 = vadd.f32 %v6045, %v6253
        %6255 = vmatmul.f32.gmra.mxu0 %v4300
        %v6256 = vpop.f32.mrf.mxu0
        %v6257 = vadd.f32 %v6048, %v6256
        %6258 = vmatmul.f32.gmra.mxu0 %v4316
        %v6259 = vpop.f32.mrf.mxu0
        %v6260 = vadd.f32 %v6051, %v6259
        %6261 = vmatmul.f32.gmra.mxu0 %v4332
        %v6262 = vpop.f32.mrf.mxu0
        %v6263 = vadd.f32 %v6054, %v6262
        %6264 = vmatmul.f32.gmra.mxu0 %v4348
        %v6265 = vpop.f32.mrf.mxu0
        %v6266 = vadd.f32 %v6057, %v6265
        %6267 = vmatmul.f32.gmra.mxu0 %v4364
        %v6268 = vpop.f32.mrf.mxu0
        %v6269 = vadd.f32 %v6060, %v6268
        %6270 = vmatmul.f32.gmra.mxu0 %v4380
        %v6271 = vpop.f32.mrf.mxu0
        %v6272 = vadd.f32 %v6063, %v6271
        %6273 = vmatmul.f32.gmra.mxu0 %v4396
        %v6274 = vpop.f32.mrf.mxu0
        %v6275 = vadd.f32 %v6066, %v6274
        %6276 = vmatmul.f32.gmra.mxu0 %v4412
        %v6277 = vpop.f32.mrf.mxu0
        %v6278 = vadd.f32 %v6069, %v6277
        %6279 = vmatmul.f32.gmra.mxu0 %v4428
        %v6280 = vpop.f32.mrf.mxu0
        %v6281 = vadd.f32 %v6072, %v6280
        %6282 = vmatmul.f32.gmra.mxu0 %v4444
        %v6283 = vpop.f32.mrf.mxu0
        %v6284 = vadd.f32 %v6075, %v6283
        %6285 = vmatmul.f32.gmra.mxu0 %v4460
        %v6286 = vpop.f32.mrf.mxu0
        %v6287 = vadd.f32 %v6078, %v6286
        %6288 = vmatmul.f32.gmra.mxu0 %v4476
        %v6289 = vpop.f32.mrf.mxu0
        %v6290 = vadd.f32 %v6081, %v6289
        %6291 = vmatmul.f32.gmra.mxu0 %v4492
        %v6292 = vpop.f32.mrf.mxu0
        %v6293 = vadd.f32 %v6084, %v6292
        %6294 = vmatmul.f32.gmra.mxu0 %v4508
        %v6295 = vpop.f32.mrf.mxu0
        %v6296 = vadd.f32 %v6087, %v6295
        %6297 = vmatmul.f32.gmra.mxu0 %v4524
        %v6298 = vpop.f32.mrf.mxu0
        %v6299 = vadd.f32 %v6090, %v6298
        %6300 = vmatmul.f32.gmra.mxu0 %v4540
        %v6301 = vpop.f32.mrf.mxu0
        %v6302 = vadd.f32 %v6093, %v6301
        %6303 = vmatmul.f32.gmra.mxu0 %v4556
        %v6304 = vpop.f32.mrf.mxu0
        %v6305 = vadd.f32 %v6096, %v6304
        %6306 = vmatmul.f32.gmra.mxu0 %v4572
        %v6307 = vpop.f32.mrf.mxu0
        %v6308 = vadd.f32 %v6099, %v6307
        %6309 = vmatmul.f32.gmra.mxu0 %v4588
        %v6310 = vpop.f32.mrf.mxu0
        %v6311 = vadd.f32 %v6102, %v6310
        %6312 = vmatmul.f32.gmra.mxu0 %v4604
        %v6313 = vpop.f32.mrf.mxu0
        %v6314 = vadd.f32 %v6105, %v6313
        %6315 = vmatmul.f32.gmra.mxu0 %v4620
        %v6316 = vpop.f32.mrf.mxu0
        %v6317 = vadd.f32 %v6108, %v6316
        %6318 = vmatmul.f32.gmra.mxu0 %v4636
        %v6319 = vpop.f32.mrf.mxu0
        %v6320 = vadd.f32 %v6111, %v6319
        %6321 = vmatmul.f32.gmra.mxu0 %v4652
        %v6322 = vpop.f32.mrf.mxu0
        %v6323 = vadd.f32 %v6114, %v6322
        %6324 = vmatmul.f32.gmra.mxu0 %v4668
        %v6325 = vpop.f32.mrf.mxu0
        %v6326 = vadd.f32 %v6117, %v6325
        %6327 = vmatmul.f32.gmra.mxu0 %v4684
        %v6328 = vpop.f32.mrf.mxu0
        %v6329 = vadd.f32 %v6120, %v6328
        %6330 = vmatmul.f32.gmra.mxu0 %v4700
        %v6331 = vpop.f32.mrf.mxu0
        %v6332 = vadd.f32 %v6123, %v6331
        %6333 = vmatmul.f32.gmra.mxu0 %v4716
        %v6334 = vpop.f32.mrf.mxu0
        %v6335 = vadd.f32 %v6126, %v6334
        %6336 = vmatmul.f32.gmra.mxu0 %v4732
        %v6337 = vpop.f32.mrf.mxu0
        %v6338 = vadd.f32 %v6129, %v6337
        %6339 = vmatmul.f32.gmra.mxu0 %v4748
        %v6340 = vpop.f32.mrf.mxu0
        %v6341 = vadd.f32 %v6132, %v6340
        %6342 = vmatmul.f32.gmra.mxu0 %v4764
        %v6343 = vpop.f32.mrf.mxu0
        %v6344 = vadd.f32 %v6135, %v6343
        %6345 = vmatmul.f32.gmra.mxu0 %v4780
        %v6346 = vpop.f32.mrf.mxu0
        %v6347 = vadd.f32 %v6138, %v6346
        %6348 = vmatmul.f32.gmra.mxu0 %v4796
        %v6349 = vpop.f32.mrf.mxu0
        %v6350 = vadd.f32 %v6141, %v6349
        %6351 = vmatmul.f32.gmra.mxu0 %v4812
        %v6352 = vpop.f32.mrf.mxu0
        %v6353 = vadd.f32 %v6144, %v6352
        %6354 = vmatmul.f32.gmra.mxu0 %v4828
        %v6355 = vpop.f32.mrf.mxu0
        %v6356 = vadd.f32 %v6147, %v6355
        %6357 = vmatmul.f32.gmra.mxu0 %v4844
        %v6358 = vpop.f32.mrf.mxu0
        %v6359 = vadd.f32 %v6150, %v6358
        %6360 = vmatmul.f32.gmra.mxu0 %v4860
        %v6361 = vpop.f32.mrf.mxu0
        %v6362 = vadd.f32 %v6153, %v6361
        %6363 = vmatmul.f32.gmra.mxu0 %v4876
        %v6364 = vpop.f32.mrf.mxu0
        %v6365 = vadd.f32 %v6156, %v6364
        %6366 = vmatmul.f32.gmra.mxu0 %v4892
        %v6367 = vpop.f32.mrf.mxu0
        %v6368 = vadd.f32 %v6159, %v6367
        %6369 = vmatmul.f32.gmra.mxu0 %v4908
        %v6370 = vpop.f32.mrf.mxu0
        %v6371 = vadd.f32 %v6162, %v6370
        %6372 = vmatmul.f32.gmra.mxu0 %v4924
        %v6373 = vpop.f32.mrf.mxu0
        %v6374 = vadd.f32 %v6165, %v6373
        %6375 = vmatmul.f32.gmra.mxu0 %v4940
        %v6376 = vpop.f32.mrf.mxu0
        %v6377 = vadd.f32 %v6168, %v6376
        %6378 = vmatmul.f32.gmra.mxu0 %v4956
        %v6379 = vpop.f32.mrf.mxu0
        %v6380 = vadd.f32 %v6171, %v6379
        %6381 = vmatmul.f32.gmra.mxu0 %v4972
        %v6382 = vpop.f32.mrf.mxu0
        %v6383 = vadd.f32 %v6174, %v6382
        %6384 = vmatmul.f32.gmra.mxu0 %v4988
        %v6385 = vpop.f32.mrf.mxu0
        %v6386 = vadd.f32 %v6177, %v6385
        %6387 = vmatmul.f32.gmra.mxu0 %v5004
        %v6388 = vpop.f32.mrf.mxu0
        %v6389 = vadd.f32 %v6180, %v6388
        %6390 = vdwg.mxu0
        %6391 = vmatpush.msra.mxu0 %v5120
        %6392 = vmatpush.msra.mxu0 %v5119
        %6393 = vmatpush.msra.mxu0 %v5118
        %6394 = vmatpush.msra.mxu0 %v5117
        %6395 = vmatpush.msra.mxu0 %v5116
        %6396 = vmatpush.msra.mxu0 %v5115
        %6397 = vmatpush.msra.mxu0 %v5114
        %6398 = vmatpush.msra.mxu0 %v5113
        %6399 = vmatpush.msra.mxu0 %v5112
        %6400 = vmatpush.msra.mxu0 %v5111
        %6401 = vmatpush.msra.mxu0 %v5110
        %6402 = vmatpush.msra.mxu0 %v5109
        %6403 = vmatpush.msra.mxu0 %v5108
        %6404 = vmatpush.msra.mxu0 %v5107
        %6405 = vmatpush.msra.mxu0 %v5106
        %6406 = vmatpush.msra.mxu0 %v5105
        %6407 = vmatmul.f32.gmra.mxu0 %v3998
        %v6408 = vpop.f32.mrf.mxu0
        %v6409 = vadd.f32 %v6200, %v6408
        %6410 = vmatmul.f32.gmra.mxu0 %v4014
        %v6411 = vpop.f32.mrf.mxu0
        %v6412 = vadd.f32 %v6203, %v6411
        %6413 = vmatmul.f32.gmra.mxu0 %v4030
        %v6414 = vpop.f32.mrf.mxu0
        %v6415 = vadd.f32 %v6206, %v6414
        %6416 = vmatmul.f32.gmra.mxu0 %v4046
        %v6417 = vpop.f32.mrf.mxu0
        %v6418 = vadd.f32 %v6209, %v6417
        %6419 = vmatmul.f32.gmra.mxu0 %v4062
        %v6420 = vpop.f32.mrf.mxu0
        %v6421 = vadd.f32 %v6212, %v6420
        %6422 = vmatmul.f32.gmra.mxu0 %v4078
        %v6423 = vpop.f32.mrf.mxu0
        %v6424 = vadd.f32 %v6215, %v6423
        %6425 = vmatmul.f32.gmra.mxu0 %v4094
        %v6426 = vpop.f32.mrf.mxu0
        %v6427 = vadd.f32 %v6218, %v6426
        %6428 = vmatmul.f32.gmra.mxu0 %v4110
        %v6429 = vpop.f32.mrf.mxu0
        %v6430 = vadd.f32 %v6221, %v6429
        %6431 = vmatmul.f32.gmra.mxu0 %v4126
        %v6432 = vpop.f32.mrf.mxu0
        %v6433 = vadd.f32 %v6224, %v6432
        %6434 = vmatmul.f32.gmra.mxu0 %v4142
        %v6435 = vpop.f32.mrf.mxu0
        %v6436 = vadd.f32 %v6227, %v6435
        %6437 = vmatmul.f32.gmra.mxu0 %v4158
        %v6438 = vpop.f32.mrf.mxu0
        %v6439 = vadd.f32 %v6230, %v6438
        %6440 = vmatmul.f32.gmra.mxu0 %v4174
        %v6441 = vpop.f32.mrf.mxu0
        %v6442 = vadd.f32 %v6233, %v6441
        %6443 = vmatmul.f32.gmra.mxu0 %v4190
        %v6444 = vpop.f32.mrf.mxu0
        %v6445 = vadd.f32 %v6236, %v6444
        %6446 = vmatmul.f32.gmra.mxu0 %v4206
        %v6447 = vpop.f32.mrf.mxu0
        %v6448 = vadd.f32 %v6239, %v6447
        %6449 = vmatmul.f32.gmra.mxu0 %v4222
        %v6450 = vpop.f32.mrf.mxu0
        %v6451 = vadd.f32 %v6242, %v6450
        %6452 = vmatmul.f32.gmra.mxu0 %v4238
        %v6453 = vpop.f32.mrf.mxu0
        %v6454 = vadd.f32 %v6245, %v6453
        %6455 = vmatmul.f32.gmra.mxu0 %v4254
        %v6456 = vpop.f32.mrf.mxu0
        %v6457 = vadd.f32 %v6248, %v6456
        %6458 = vmatmul.f32.gmra.mxu0 %v4270
        %v6459 = vpop.f32.mrf.mxu0
        %v6460 = vadd.f32 %v6251, %v6459
        %6461 = vmatmul.f32.gmra.mxu0 %v4286
        %v6462 = vpop.f32.mrf.mxu0
        %v6463 = vadd.f32 %v6254, %v6462
        %6464 = vmatmul.f32.gmra.mxu0 %v4302
        %v6465 = vpop.f32.mrf.mxu0
        %v6466 = vadd.f32 %v6257, %v6465
        %6467 = vmatmul.f32.gmra.mxu0 %v4318
        %v6468 = vpop.f32.mrf.mxu0
        %v6469 = vadd.f32 %v6260, %v6468
        %6470 = vmatmul.f32.gmra.mxu0 %v4334
        %v6471 = vpop.f32.mrf.mxu0
        %v6472 = vadd.f32 %v6263, %v6471
        %6473 = vmatmul.f32.gmra.mxu0 %v4350
        %v6474 = vpop.f32.mrf.mxu0
        %v6475 = vadd.f32 %v6266, %v6474
        %6476 = vmatmul.f32.gmra.mxu0 %v4366
        %v6477 = vpop.f32.mrf.mxu0
        %v6478 = vadd.f32 %v6269, %v6477
        %6479 = vmatmul.f32.gmra.mxu0 %v4382
        %v6480 = vpop.f32.mrf.mxu0
        %v6481 = vadd.f32 %v6272, %v6480
        %6482 = vmatmul.f32.gmra.mxu0 %v4398
        %v6483 = vpop.f32.mrf.mxu0
        %v6484 = vadd.f32 %v6275, %v6483
        %6485 = vmatmul.f32.gmra.mxu0 %v4414
        %v6486 = vpop.f32.mrf.mxu0
        %v6487 = vadd.f32 %v6278, %v6486
        %6488 = vmatmul.f32.gmra.mxu0 %v4430
        %v6489 = vpop.f32.mrf.mxu0
        %v6490 = vadd.f32 %v6281, %v6489
        %6491 = vmatmul.f32.gmra.mxu0 %v4446
        %v6492 = vpop.f32.mrf.mxu0
        %v6493 = vadd.f32 %v6284, %v6492
        %6494 = vmatmul.f32.gmra.mxu0 %v4462
        %v6495 = vpop.f32.mrf.mxu0
        %v6496 = vadd.f32 %v6287, %v6495
        %6497 = vmatmul.f32.gmra.mxu0 %v4478
        %v6498 = vpop.f32.mrf.mxu0
        %v6499 = vadd.f32 %v6290, %v6498
        %6500 = vmatmul.f32.gmra.mxu0 %v4494
        %v6501 = vpop.f32.mrf.mxu0
        %v6502 = vadd.f32 %v6293, %v6501
        %6503 = vmatmul.f32.gmra.mxu0 %v4510
        %v6504 = vpop.f32.mrf.mxu0
        %v6505 = vadd.f32 %v6296, %v6504
        %6506 = vmatmul.f32.gmra.mxu0 %v4526
        %v6507 = vpop.f32.mrf.mxu0
        %v6508 = vadd.f32 %v6299, %v6507
        %6509 = vmatmul.f32.gmra.mxu0 %v4542
        %v6510 = vpop.f32.mrf.mxu0
        %v6511 = vadd.f32 %v6302, %v6510
        %6512 = vmatmul.f32.gmra.mxu0 %v4558
        %v6513 = vpop.f32.mrf.mxu0
        %v6514 = vadd.f32 %v6305, %v6513
        %6515 = vmatmul.f32.gmra.mxu0 %v4574
        %v6516 = vpop.f32.mrf.mxu0
        %v6517 = vadd.f32 %v6308, %v6516
        %6518 = vmatmul.f32.gmra.mxu0 %v4590
        %v6519 = vpop.f32.mrf.mxu0
        %v6520 = vadd.f32 %v6311, %v6519
        %6521 = vmatmul.f32.gmra.mxu0 %v4606
        %v6522 = vpop.f32.mrf.mxu0
        %v6523 = vadd.f32 %v6314, %v6522
        %6524 = vmatmul.f32.gmra.mxu0 %v4622
        %v6525 = vpop.f32.mrf.mxu0
        %v6526 = vadd.f32 %v6317, %v6525
        %6527 = vmatmul.f32.gmra.mxu0 %v4638
        %v6528 = vpop.f32.mrf.mxu0
        %v6529 = vadd.f32 %v6320, %v6528
        %6530 = vmatmul.f32.gmra.mxu0 %v4654
        %v6531 = vpop.f32.mrf.mxu0
        %v6532 = vadd.f32 %v6323, %v6531
        %6533 = vmatmul.f32.gmra.mxu0 %v4670
        %v6534 = vpop.f32.mrf.mxu0
        %v6535 = vadd.f32 %v6326, %v6534
        %6536 = vmatmul.f32.gmra.mxu0 %v4686
        %v6537 = vpop.f32.mrf.mxu0
        %v6538 = vadd.f32 %v6329, %v6537
        %6539 = vmatmul.f32.gmra.mxu0 %v4702
        %v6540 = vpop.f32.mrf.mxu0
        %v6541 = vadd.f32 %v6332, %v6540
        %6542 = vmatmul.f32.gmra.mxu0 %v4718
        %v6543 = vpop.f32.mrf.mxu0
        %v6544 = vadd.f32 %v6335, %v6543
        %6545 = vmatmul.f32.gmra.mxu0 %v4734
        %v6546 = vpop.f32.mrf.mxu0
        %v6547 = vadd.f32 %v6338, %v6546
        %6548 = vmatmul.f32.gmra.mxu0 %v4750
        %v6549 = vpop.f32.mrf.mxu0
        %v6550 = vadd.f32 %v6341, %v6549
        %6551 = vmatmul.f32.gmra.mxu0 %v4766
        %v6552 = vpop.f32.mrf.mxu0
        %v6553 = vadd.f32 %v6344, %v6552
        %6554 = vmatmul.f32.gmra.mxu0 %v4782
        %v6555 = vpop.f32.mrf.mxu0
        %v6556 = vadd.f32 %v6347, %v6555
        %6557 = vmatmul.f32.gmra.mxu0 %v4798
        %v6558 = vpop.f32.mrf.mxu0
        %v6559 = vadd.f32 %v6350, %v6558
        %6560 = vmatmul.f32.gmra.mxu0 %v4814
        %v6561 = vpop.f32.mrf.mxu0
        %v6562 = vadd.f32 %v6353, %v6561
        %6563 = vmatmul.f32.gmra.mxu0 %v4830
        %v6564 = vpop.f32.mrf.mxu0
        %v6565 = vadd.f32 %v6356, %v6564
        %6566 = vmatmul.f32.gmra.mxu0 %v4846
        %v6567 = vpop.f32.mrf.mxu0
        %v6568 = vadd.f32 %v6359, %v6567
        %6569 = vmatmul.f32.gmra.mxu0 %v4862
        %v6570 = vpop.f32.mrf.mxu0
        %v6571 = vadd.f32 %v6362, %v6570
        %6572 = vmatmul.f32.gmra.mxu0 %v4878
        %v6573 = vpop.f32.mrf.mxu0
        %v6574 = vadd.f32 %v6365, %v6573
        %6575 = vmatmul.f32.gmra.mxu0 %v4894
        %v6576 = vpop.f32.mrf.mxu0
        %v6577 = vadd.f32 %v6368, %v6576
        %6578 = vmatmul.f32.gmra.mxu0 %v4910
        %v6579 = vpop.f32.mrf.mxu0
        %v6580 = vadd.f32 %v6371, %v6579
        %6581 = vmatmul.f32.gmra.mxu0 %v4926
        %v6582 = vpop.f32.mrf.mxu0
        %v6583 = vadd.f32 %v6374, %v6582
        %6584 = vmatmul.f32.gmra.mxu0 %v4942
        %v6585 = vpop.f32.mrf.mxu0
        %v6586 = vadd.f32 %v6377, %v6585
        %6587 = vmatmul.f32.gmra.mxu0 %v4958
        %v6588 = vpop.f32.mrf.mxu0
        %v6589 = vadd.f32 %v6380, %v6588
        %6590 = vmatmul.f32.gmra.mxu0 %v4974
        %v6591 = vpop.f32.mrf.mxu0
        %v6592 = vadd.f32 %v6383, %v6591
        %6593 = vmatmul.f32.gmra.mxu0 %v4990
        %v6594 = vpop.f32.mrf.mxu0
        %v6595 = vadd.f32 %v6386, %v6594
        %6596 = vmatmul.f32.gmra.mxu0 %v5006
        %v6597 = vpop.f32.mrf.mxu0
        %v6598 = vadd.f32 %v6389, %v6597
        %6599 = vdwg.mxu0
        %6600 = vmatpush.msra.mxu0 %v5136
        %6601 = vmatpush.msra.mxu0 %v5135
        %6602 = vmatpush.msra.mxu0 %v5134
        %6603 = vmatpush.msra.mxu0 %v5133
        %6604 = vmatpush.msra.mxu0 %v5132
        %6605 = vmatpush.msra.mxu0 %v5131
        %6606 = vmatpush.msra.mxu0 %v5130
        %6607 = vmatpush.msra.mxu0 %v5129
        %6608 = vmatpush.msra.mxu0 %v5128
        %6609 = vmatpush.msra.mxu0 %v5127
        %6610 = vmatpush.msra.mxu0 %v5126
        %6611 = vmatpush.msra.mxu0 %v5125
        %6612 = vmatpush.msra.mxu0 %v5124
        %6613 = vmatpush.msra.mxu0 %v5123
        %6614 = vmatpush.msra.mxu0 %v5122
        %6615 = vmatpush.msra.mxu0 %v5121
        %6616 = vmatmul.f32.gmra.mxu0 %v4000
        %v6617 = vpop.f32.mrf.mxu0
        %v6618 = vadd.f32 %v6409, %v6617
        %6619 = vmatmul.f32.gmra.mxu0 %v4016
        %v6620 = vpop.f32.mrf.mxu0
        %v6621 = vadd.f32 %v6412, %v6620
        %6622 = vmatmul.f32.gmra.mxu0 %v4032
        %v6623 = vpop.f32.mrf.mxu0
        %v6624 = vadd.f32 %v6415, %v6623
        %6625 = vmatmul.f32.gmra.mxu0 %v4048
        %v6626 = vpop.f32.mrf.mxu0
        %v6627 = vadd.f32 %v6418, %v6626
        %6628 = vmatmul.f32.gmra.mxu0 %v4064
        %v6629 = vpop.f32.mrf.mxu0
        %v6630 = vadd.f32 %v6421, %v6629
        %6631 = vmatmul.f32.gmra.mxu0 %v4080
        %v6632 = vpop.f32.mrf.mxu0
        %v6633 = vadd.f32 %v6424, %v6632
        %6634 = vmatmul.f32.gmra.mxu0 %v4096
        %v6635 = vpop.f32.mrf.mxu0
        %v6636 = vadd.f32 %v6427, %v6635
        %6637 = vmatmul.f32.gmra.mxu0 %v4112
        %v6638 = vpop.f32.mrf.mxu0
        %v6639 = vadd.f32 %v6430, %v6638
        %6640 = vmatmul.f32.gmra.mxu0 %v4128
        %v6641 = vpop.f32.mrf.mxu0
        %v6642 = vadd.f32 %v6433, %v6641
        %6643 = vmatmul.f32.gmra.mxu0 %v4144
        %v6644 = vpop.f32.mrf.mxu0
        %v6645 = vadd.f32 %v6436, %v6644
        %6646 = vmatmul.f32.gmra.mxu0 %v4160
        %v6647 = vpop.f32.mrf.mxu0
        %v6648 = vadd.f32 %v6439, %v6647
        %6649 = vmatmul.f32.gmra.mxu0 %v4176
        %v6650 = vpop.f32.mrf.mxu0
        %v6651 = vadd.f32 %v6442, %v6650
        %6652 = vmatmul.f32.gmra.mxu0 %v4192
        %v6653 = vpop.f32.mrf.mxu0
        %v6654 = vadd.f32 %v6445, %v6653
        %6655 = vmatmul.f32.gmra.mxu0 %v4208
        %v6656 = vpop.f32.mrf.mxu0
        %v6657 = vadd.f32 %v6448, %v6656
        %6658 = vmatmul.f32.gmra.mxu0 %v4224
        %v6659 = vpop.f32.mrf.mxu0
        %v6660 = vadd.f32 %v6451, %v6659
        %6661 = vmatmul.f32.gmra.mxu0 %v4240
        %v6662 = vpop.f32.mrf.mxu0
        %v6663 = vadd.f32 %v6454, %v6662
        %6664 = vmatmul.f32.gmra.mxu0 %v4256
        %v6665 = vpop.f32.mrf.mxu0
        %v6666 = vadd.f32 %v6457, %v6665
        %6667 = vmatmul.f32.gmra.mxu0 %v4272
        %v6668 = vpop.f32.mrf.mxu0
        %v6669 = vadd.f32 %v6460, %v6668
        %6670 = vmatmul.f32.gmra.mxu0 %v4288
        %v6671 = vpop.f32.mrf.mxu0
        %v6672 = vadd.f32 %v6463, %v6671
        %6673 = vmatmul.f32.gmra.mxu0 %v4304
        %v6674 = vpop.f32.mrf.mxu0
        %v6675 = vadd.f32 %v6466, %v6674
        %6676 = vmatmul.f32.gmra.mxu0 %v4320
        %v6677 = vpop.f32.mrf.mxu0
        %v6678 = vadd.f32 %v6469, %v6677
        %6679 = vmatmul.f32.gmra.mxu0 %v4336
        %v6680 = vpop.f32.mrf.mxu0
        %v6681 = vadd.f32 %v6472, %v6680
        %6682 = vmatmul.f32.gmra.mxu0 %v4352
        %v6683 = vpop.f32.mrf.mxu0
        %v6684 = vadd.f32 %v6475, %v6683
        %6685 = vmatmul.f32.gmra.mxu0 %v4368
        %v6686 = vpop.f32.mrf.mxu0
        %v6687 = vadd.f32 %v6478, %v6686
        %6688 = vmatmul.f32.gmra.mxu0 %v4384
        %v6689 = vpop.f32.mrf.mxu0
        %v6690 = vadd.f32 %v6481, %v6689
        %6691 = vmatmul.f32.gmra.mxu0 %v4400
        %v6692 = vpop.f32.mrf.mxu0
        %v6693 = vadd.f32 %v6484, %v6692
        %6694 = vmatmul.f32.gmra.mxu0 %v4416
        %v6695 = vpop.f32.mrf.mxu0
        %v6696 = vadd.f32 %v6487, %v6695
        %6697 = vmatmul.f32.gmra.mxu0 %v4432
        %v6698 = vpop.f32.mrf.mxu0
        %v6699 = vadd.f32 %v6490, %v6698
        %6700 = vmatmul.f32.gmra.mxu0 %v4448
        %v6701 = vpop.f32.mrf.mxu0
        %v6702 = vadd.f32 %v6493, %v6701
        %6703 = vmatmul.f32.gmra.mxu0 %v4464
        %v6704 = vpop.f32.mrf.mxu0
        %v6705 = vadd.f32 %v6496, %v6704
        %6706 = vmatmul.f32.gmra.mxu0 %v4480
        %v6707 = vpop.f32.mrf.mxu0
        %v6708 = vadd.f32 %v6499, %v6707
        %6709 = vmatmul.f32.gmra.mxu0 %v4496
        %v6710 = vpop.f32.mrf.mxu0
        %v6711 = vadd.f32 %v6502, %v6710
        %6712 = vmatmul.f32.gmra.mxu0 %v4512
        %v6713 = vpop.f32.mrf.mxu0
        %v6714 = vadd.f32 %v6505, %v6713
        %6715 = vmatmul.f32.gmra.mxu0 %v4528
        %v6716 = vpop.f32.mrf.mxu0
        %v6717 = vadd.f32 %v6508, %v6716
        %6718 = vmatmul.f32.gmra.mxu0 %v4544
        %v6719 = vpop.f32.mrf.mxu0
        %v6720 = vadd.f32 %v6511, %v6719
        %6721 = vmatmul.f32.gmra.mxu0 %v4560
        %v6722 = vpop.f32.mrf.mxu0
        %v6723 = vadd.f32 %v6514, %v6722
        %6724 = vmatmul.f32.gmra.mxu0 %v4576
        %v6725 = vpop.f32.mrf.mxu0
        %v6726 = vadd.f32 %v6517, %v6725
        %6727 = vmatmul.f32.gmra.mxu0 %v4592
        %v6728 = vpop.f32.mrf.mxu0
        %v6729 = vadd.f32 %v6520, %v6728
        %6730 = vmatmul.f32.gmra.mxu0 %v4608
        %v6731 = vpop.f32.mrf.mxu0
        %v6732 = vadd.f32 %v6523, %v6731
        %6733 = vmatmul.f32.gmra.mxu0 %v4624
        %v6734 = vpop.f32.mrf.mxu0
        %v6735 = vadd.f32 %v6526, %v6734
        %6736 = vmatmul.f32.gmra.mxu0 %v4640
        %v6737 = vpop.f32.mrf.mxu0
        %v6738 = vadd.f32 %v6529, %v6737
        %6739 = vmatmul.f32.gmra.mxu0 %v4656
        %v6740 = vpop.f32.mrf.mxu0
        %v6741 = vadd.f32 %v6532, %v6740
        %6742 = vmatmul.f32.gmra.mxu0 %v4672
        %v6743 = vpop.f32.mrf.mxu0
        %v6744 = vadd.f32 %v6535, %v6743
        %6745 = vmatmul.f32.gmra.mxu0 %v4688
        %v6746 = vpop.f32.mrf.mxu0
        %v6747 = vadd.f32 %v6538, %v6746
        %6748 = vmatmul.f32.gmra.mxu0 %v4704
        %v6749 = vpop.f32.mrf.mxu0
        %v6750 = vadd.f32 %v6541, %v6749
        %6751 = vmatmul.f32.gmra.mxu0 %v4720
        %v6752 = vpop.f32.mrf.mxu0
        %v6753 = vadd.f32 %v6544, %v6752
        %6754 = vmatmul.f32.gmra.mxu0 %v4736
        %v6755 = vpop.f32.mrf.mxu0
        %v6756 = vadd.f32 %v6547, %v6755
        %6757 = vmatmul.f32.gmra.mxu0 %v4752
        %v6758 = vpop.f32.mrf.mxu0
        %v6759 = vadd.f32 %v6550, %v6758
        %6760 = vmatmul.f32.gmra.mxu0 %v4768
        %v6761 = vpop.f32.mrf.mxu0
        %v6762 = vadd.f32 %v6553, %v6761
        %6763 = vmatmul.f32.gmra.mxu0 %v4784
        %v6764 = vpop.f32.mrf.mxu0
        %v6765 = vadd.f32 %v6556, %v6764
        %6766 = vmatmul.f32.gmra.mxu0 %v4800
        %v6767 = vpop.f32.mrf.mxu0
        %v6768 = vadd.f32 %v6559, %v6767
        %6769 = vmatmul.f32.gmra.mxu0 %v4816
        %v6770 = vpop.f32.mrf.mxu0
        %v6771 = vadd.f32 %v6562, %v6770
        %6772 = vmatmul.f32.gmra.mxu0 %v4832
        %v6773 = vpop.f32.mrf.mxu0
        %v6774 = vadd.f32 %v6565, %v6773
        %6775 = vmatmul.f32.gmra.mxu0 %v4848
        %v6776 = vpop.f32.mrf.mxu0
        %v6777 = vadd.f32 %v6568, %v6776
        %6778 = vmatmul.f32.gmra.mxu0 %v4864
        %v6779 = vpop.f32.mrf.mxu0
        %v6780 = vadd.f32 %v6571, %v6779
        %6781 = vmatmul.f32.gmra.mxu0 %v4880
        %v6782 = vpop.f32.mrf.mxu0
        %v6783 = vadd.f32 %v6574, %v6782
        %6784 = vmatmul.f32.gmra.mxu0 %v4896
        %v6785 = vpop.f32.mrf.mxu0
        %v6786 = vadd.f32 %v6577, %v6785
        %6787 = vmatmul.f32.gmra.mxu0 %v4912
        %v6788 = vpop.f32.mrf.mxu0
        %v6789 = vadd.f32 %v6580, %v6788
        %6790 = vmatmul.f32.gmra.mxu0 %v4928
        %v6791 = vpop.f32.mrf.mxu0
        %v6792 = vadd.f32 %v6583, %v6791
        %6793 = vmatmul.f32.gmra.mxu0 %v4944
        %v6794 = vpop.f32.mrf.mxu0
        %v6795 = vadd.f32 %v6586, %v6794
        %6796 = vmatmul.f32.gmra.mxu0 %v4960
        %v6797 = vpop.f32.mrf.mxu0
        %v6798 = vadd.f32 %v6589, %v6797
        %6799 = vmatmul.f32.gmra.mxu0 %v4976
        %v6800 = vpop.f32.mrf.mxu0
        %v6801 = vadd.f32 %v6592, %v6800
        %6802 = vmatmul.f32.gmra.mxu0 %v4992
        %v6803 = vpop.f32.mrf.mxu0
        %v6804 = vadd.f32 %v6595, %v6803
        %6805 = vmatmul.f32.gmra.mxu0 %v5008
        %v6806 = vpop.f32.mrf.mxu0
        %v6807 = vadd.f32 %v6598, %v6806
        %6808 = vdwg.mxu0
        %vm6809 = vcmask 15360
        %6810 = vst.msk [vmem:[%s440] sm:$0xff] %vm6809, %v6618
        %6811 = vst.msk [vmem:[%s440 + $0x8] sm:$0xff] %vm6809, %v6621
        %6812 = vst.msk [vmem:[%s440 + $0x10] sm:$0xff] %vm6809, %v6624
        %6813 = vst.msk [vmem:[%s440 + $0x18] sm:$0xff] %vm6809, %v6627
        %6814 = vst.msk [vmem:[%s440 + $0x20] sm:$0xff] %vm6809, %v6630
        %6815 = vst.msk [vmem:[%s440 + $0x28] sm:$0xff] %vm6809, %v6633
        %6816 = vst.msk [vmem:[%s440 + $0x30] sm:$0xff] %vm6809, %v6636
        %6817 = vst.msk [vmem:[%s440 + $0x38] sm:$0xff] %vm6809, %v6639
        %6818 = vst.msk [vmem:[%s440 + $0x40] sm:$0xff] %vm6809, %v6642
        %6819 = vst.msk [vmem:[%s440 + $0x48] sm:$0xff] %vm6809, %v6645
        %6820 = vst.msk [vmem:[%s440 + $0x50] sm:$0xff] %vm6809, %v6648
        %6821 = vst.msk [vmem:[%s440 + $0x58] sm:$0xff] %vm6809, %v6651
        %6822 = vst.msk [vmem:[%s440 + $0x60] sm:$0xff] %vm6809, %v6654
        %6823 = vst.msk [vmem:[%s440 + $0x68] sm:$0xff] %vm6809, %v6657
        %6824 = vst.msk [vmem:[%s440 + $0x70] sm:$0xff] %vm6809, %v6660
        %6825 = vst.msk [vmem:[%s440 + $0x78] sm:$0xff] %vm6809, %v6663
        %6826 = vst.msk [vmem:[%s440 + $0x80] sm:$0xff] %vm6809, %v6666
        %6827 = vst.msk [vmem:[%s440 + $0x88] sm:$0xff] %vm6809, %v6669
        %6828 = vst.msk [vmem:[%s440 + $0x90] sm:$0xff] %vm6809, %v6672
        %6829 = vst.msk [vmem:[%s440 + $0x98] sm:$0xff] %vm6809, %v6675
        %6830 = vst.msk [vmem:[%s440 + $0xa0] sm:$0xff] %vm6809, %v6678
        %6831 = vst.msk [vmem:[%s440 + $0xa8] sm:$0xff] %vm6809, %v6681
        %6832 = vst.msk [vmem:[%s440 + $0xb0] sm:$0xff] %vm6809, %v6684
        %6833 = vst.msk [vmem:[%s440 + $0xb8] sm:$0xff] %vm6809, %v6687
        %6834 = vst.msk [vmem:[%s440 + $0xc0] sm:$0xff] %vm6809, %v6690
        %6835 = vst.msk [vmem:[%s440 + $0xc8] sm:$0xff] %vm6809, %v6693
        %6836 = vst.msk [vmem:[%s440 + $0xd0] sm:$0xff] %vm6809, %v6696
        %6837 = vst.msk [vmem:[%s440 + $0xd8] sm:$0xff] %vm6809, %v6699
        %6838 = vst.msk [vmem:[%s440 + $0xe0] sm:$0xff] %vm6809, %v6702
        %6839 = vst.msk [vmem:[%s440 + $0xe8] sm:$0xff] %vm6809, %v6705
        %6840 = vst.msk [vmem:[%s440 + $0xf0] sm:$0xff] %vm6809, %v6708
        %6841 = vst.msk [vmem:[%s440 + $0xf8] sm:$0xff] %vm6809, %v6711
        %6842 = vst.msk [vmem:[%s440 + $0x100] sm:$0xff] %vm6809, %v6714
        %6843 = vst.msk [vmem:[%s440 + $0x108] sm:$0xff] %vm6809, %v6717
        %6844 = vst.msk [vmem:[%s440 + $0x110] sm:$0xff] %vm6809, %v6720
        %6845 = vst.msk [vmem:[%s440 + $0x118] sm:$0xff] %vm6809, %v6723
        %6846 = vst.msk [vmem:[%s440 + $0x120] sm:$0xff] %vm6809, %v6726
        %6847 = vst.msk [vmem:[%s440 + $0x128] sm:$0xff] %vm6809, %v6729
        %6848 = vst.msk [vmem:[%s440 + $0x130] sm:$0xff] %vm6809, %v6732
        %6849 = vst.msk [vmem:[%s440 + $0x138] sm:$0xff] %vm6809, %v6735
        %6850 = vst.msk [vmem:[%s440 + $0x140] sm:$0xff] %vm6809, %v6738
        %6851 = vst.msk [vmem:[%s440 + $0x148] sm:$0xff] %vm6809, %v6741
        %6852 = vst.msk [vmem:[%s440 + $0x150] sm:$0xff] %vm6809, %v6744
        %6853 = vst.msk [vmem:[%s440 + $0x158] sm:$0xff] %vm6809, %v6747
        %6854 = vst.msk [vmem:[%s440 + $0x160] sm:$0xff] %vm6809, %v6750
        %6855 = vst.msk [vmem:[%s440 + $0x168] sm:$0xff] %vm6809, %v6753
        %6856 = vst.msk [vmem:[%s440 + $0x170] sm:$0xff] %vm6809, %v6756
        %6857 = vst.msk [vmem:[%s440 + $0x178] sm:$0xff] %vm6809, %v6759
        %6858 = vst.msk [vmem:[%s440 + $0x180] sm:$0xff] %vm6809, %v6762
        %6859 = vst.msk [vmem:[%s440 + $0x188] sm:$0xff] %vm6809, %v6765
        %6860 = vst.msk [vmem:[%s440 + $0x190] sm:$0xff] %vm6809, %v6768
        %6861 = vst.msk [vmem:[%s440 + $0x198] sm:$0xff] %vm6809, %v6771
        %6862 = vst.msk [vmem:[%s440 + $0x1a0] sm:$0xff] %vm6809, %v6774
        %6863 = vst.msk [vmem:[%s440 + $0x1a8] sm:$0xff] %vm6809, %v6777
        %6864 = vst.msk [vmem:[%s440 + $0x1b0] sm:$0xff] %vm6809, %v6780
        %6865 = vst.msk [vmem:[%s440 + $0x1b8] sm:$0xff] %vm6809, %v6783
        %6866 = vst.msk [vmem:[%s440 + $0x1c0] sm:$0xff] %vm6809, %v6786
        %6867 = vst.msk [vmem:[%s440 + $0x1c8] sm:$0xff] %vm6809, %v6789
        %6868 = vst.msk [vmem:[%s440 + $0x1d0] sm:$0xff] %vm6809, %v6792
        %6869 = vst.msk [vmem:[%s440 + $0x1d8] sm:$0xff] %vm6809, %v6795
        %6870 = vst.msk [vmem:[%s440 + $0x1e0] sm:$0xff] %vm6809, %v6798
        %6871 = vst.msk [vmem:[%s440 + $0x1e8] sm:$0xff] %vm6809, %v6801
        %6872 = vst.msk [vmem:[%s440 + $0x1f0] sm:$0xff] %vm6809, %v6804
        %6873 = vst.msk [vmem:[%s440 + $0x1f8] sm:$0xff] %vm6809, %v6807
        %s6874 = sand.u32 %s118, 1
        %s6875 = sand.u32 %s118, 1
        %s6876 = smul.addr %s6875, 128
        %s6877 = scalar_lea.vmem [#allocation3], %s6876
        %s6878 = sand.u32 %s146, 1
        %s6879 = scalar_lea.sflag [#allocation5], %s6878
        %s6880 = sand.u32 %s146, 1
        %s6881 = smul.addr %s6880, 4
        %s6882 = scalar_lea.vmem [#allocation4], %s6881
        %s6883 = sand.u32 %s174, 1
        %s6884 = scalar_lea.sflag [#allocation7], %s6883
        %s6885 = sand.u32 %s174, 1
        %s6886 = smul.addr %s6885, 8
        %s6887 = scalar_lea.vmem [#allocation6], %s6886
        %p6888 = scmp.lt.s32.totalorder %s30, 1
        %s6889 = scalar_select %p6888, %s30, 1
        %p6890 = scmp.lt.s32.totalorder %s31, 1
        %s6891 = scalar_select %p6890, %s31, 1
        %s6892 = smul.addr %s6891, 64
        %s6893 = smul.addr %s6889, 128
        %s6894 = sadd.s32 %s6892, %s6893
        %s6895 = smul.addr %s6894, 8
        %s6896 = scalar_lea.vmem %s6, %s6895
        %p6897 = scmp.lt.s32.totalorder %s30, 1
        %s6898 = scalar_select %p6897, %s30, 1
        %p6899 = scmp.lt.s32.totalorder %s31, 1
        %s6900 = scalar_select %p6899, %s31, 1
        %s6901 = smul.addr %s6898, 2
        %s6902 = sadd.s32 %s6900, %s6901
        %s6903 = scalar_lea.vmem %s7, %s6902
        %p6904 = scmp.lt.s32.totalorder %s30, 1
        %s6905 = scalar_select %p6904, %s30, 1
        %p6906 = scmp.lt.s32.totalorder %s31, 1
        %s6907 = scalar_select %p6906, %s31, 1
        %s6908 = smul.addr %s6905, 2
        %s6909 = sadd.s32 %s6907, %s6908
        %s6910 = scalar_lea.vmem %s8, %s6909
        // Predicated region
        $region56: #{tpu_custom_call.1} parent=50 // pred_check
          %p6911 = pneg %p128
        $region57: #{tpu_custom_call.1} parent=50 // pred_check_branch
          %6913 = sbr.rel (%p6911) target = $region59
        $region58: #{tpu_custom_call.1} parent=50 // pred_region
          %s6914 = smul.u32 4, %s31
          %s6915 = smul.addr %s30, 32
          %s6916 = sadd.s32 %s6914, %s6915
          %s6917 = smul.addr %s6916, 8
          %s6918 = scalar_lea.vmem %s3, %s6917
          // Predicated region
          $region60: #{tpu_custom_call.1} parent=58 // pred_check
            _
          $region61: #{tpu_custom_call.1} parent=58 // pred_check_branch
            %6920 = sbr.rel (0) target = $region63
          $region62: #{tpu_custom_call.1} parent=58 // pred_region
            // Predicated region
            $region64: #{tpu_custom_call.1} parent=62 // pred_check
              _
            $region65: #{tpu_custom_call.1} parent=62 // pred_check_branch
              %6922 = sbr.rel (0) target = $region67
            $region66: #{tpu_custom_call.1} parent=62 // pred_region
              loop: start=0, step=1, limit=1
              $region68: #{tpu_custom_call.1} parent=66 // loop_pre_header
                _
              $region69: #{tpu_custom_call.1} parent=66 // loop_header
                %s6924 = sphi 0, %s6928
                %p6925 = scmp.ge.s32.totalorder %s6924, 1
                %s6929 = sphi %s6877, %s6877
                %s6930 = sphi %s6918, %s6918
              $region70: #{tpu_custom_call.1} parent=66 // loop_header_branch
                %6927 = sbr.rel (%p6925) target = $region74
              $region71: #{tpu_custom_call.1} parent=66 // loop_body
                %v6931 = vld [vmem:[%s6929] sm:$0xff]
                %6932 = vst [vmem:[%s6930] sm:$0xff] %v6931
                %v6933 = vld [vmem:[%s6929 + $0x8] sm:$0xff]
                %6934 = vst [vmem:[%s6930 + $0x8] sm:$0xff] %v6933
                %v6935 = vld [vmem:[%s6929 + $0x10] sm:$0xff]
                %6936 = vst [vmem:[%s6930 + $0x10] sm:$0xff] %v6935
                %v6937 = vld [vmem:[%s6929 + $0x18] sm:$0xff]
                %6938 = vst [vmem:[%s6930 + $0x18] sm:$0xff] %v6937
                %v6939 = vld [vmem:[%s6929 + $0x20] sm:$0xff]
                %6940 = vst [vmem:[%s6930 + $0x40] sm:$0xff] %v6939
                %v6941 = vld [vmem:[%s6929 + $0x28] sm:$0xff]
                %6942 = vst [vmem:[%s6930 + $0x48] sm:$0xff] %v6941
                %v6943 = vld [vmem:[%s6929 + $0x30] sm:$0xff]
                %6944 = vst [vmem:[%s6930 + $0x50] sm:$0xff] %v6943
                %v6945 = vld [vmem:[%s6929 + $0x38] sm:$0xff]
                %6946 = vst [vmem:[%s6930 + $0x58] sm:$0xff] %v6945
                %v6947 = vld [vmem:[%s6929 + $0x40] sm:$0xff]
                %6948 = vst [vmem:[%s6930 + $0x80] sm:$0xff] %v6947
                %v6949 = vld [vmem:[%s6929 + $0x48] sm:$0xff]
                %6950 = vst [vmem:[%s6930 + $0x88] sm:$0xff] %v6949
                %v6951 = vld [vmem:[%s6929 + $0x50] sm:$0xff]
                %6952 = vst [vmem:[%s6930 + $0x90] sm:$0xff] %v6951
                %v6953 = vld [vmem:[%s6929 + $0x58] sm:$0xff]
                %6954 = vst [vmem:[%s6930 + $0x98] sm:$0xff] %v6953
                %v6955 = vld [vmem:[%s6929 + $0x60] sm:$0xff]
                %6956 = vst [vmem:[%s6930 + $0xc0] sm:$0xff] %v6955
                %v6957 = vld [vmem:[%s6929 + $0x68] sm:$0xff]
                %6958 = vst [vmem:[%s6930 + $0xc8] sm:$0xff] %v6957
                %v6959 = vld [vmem:[%s6929 + $0x70] sm:$0xff]
                %6960 = vst [vmem:[%s6930 + $0xd0] sm:$0xff] %v6959
                %v6961 = vld [vmem:[%s6929 + $0x78] sm:$0xff]
                %6962 = vst [vmem:[%s6930 + $0xd8] sm:$0xff] %v6961
              $region72: #{tpu_custom_call.1} parent=66 // loop_footer
                %s6928 = sadd.s32 1, %s6924
              $region73: #{tpu_custom_call.1} parent=66 // loop_footer_branch
                %6923 = sbr.rel target = $region69
              $region74: #{tpu_custom_call.1} parent=66 // loop_exit
                _
            $region67: #{tpu_custom_call.1} parent=62 // pred_fallthru
              _
            // Predicated region
            $region75: #{tpu_custom_call.1} parent=62 // pred_check
              _
            $region76: #{tpu_custom_call.1} parent=62 // pred_check_branch
              %6964 = sbr.rel target = $region78
            $region77: #{tpu_custom_call.1} parent=62 // pred_region
              _
            $region78: #{tpu_custom_call.1} parent=62 // pred_fallthru
              _
          $region63: #{tpu_custom_call.1} parent=58 // pred_fallthru
            _
          %6965 = vnop
        $region59: #{tpu_custom_call.1} parent=50 // pred_fallthru
          _
        // Predicated region
        $region79: #{tpu_custom_call.1} parent=50 // pred_check
          %p6966 = pneg %p156
        $region80: #{tpu_custom_call.1} parent=50 // pred_check_branch
          %6968 = sbr.rel (%p6966) target = $region82
        $region81: #{tpu_custom_call.1} parent=50 // pred_region
          %s6969 = smul.u32 4, %s31
          %6971 = vsyncadd %s6879, 0
          %s6972 = smul.addr %s30, 8
          %s6973 = sadd.s32 %s6969, %s6972
          %s6974 = scalar_lea.hbm %s4, %s6973
          %s6976 = sshll.u32 %s6882, 4
          %s6977 = int_to_ptr.vmem [resolvable:$true] %s6976
          %s6978 = sshll.u32 %s6974, 4
          %s6979 = int_to_ptr.hbm [resolvable:$true] %s6978
          %6981 = dma.vmem_to_hbm [thread:$0]  %s6977, 64, %s6979, %s6879
        $region82: #{tpu_custom_call.1} parent=50 // pred_fallthru
          _
        // Predicated region
        $region83: #{tpu_custom_call.1} parent=50 // pred_check
          %p6982 = pneg %p184
        $region84: #{tpu_custom_call.1} parent=50 // pred_check_branch
          %6984 = sbr.rel (%p6982) target = $region86
        $region85: #{tpu_custom_call.1} parent=50 // pred_region
          %s6985 = smul.u32 4, %s31
          %6987 = vsyncadd %s6884, 0
          %s6988 = smul.addr %s30, 8
          %s6989 = sadd.s32 %s6985, %s6988
          %s6990 = smul.addr %s6989, 2
          %s6991 = scalar_lea.hbm %s5, %s6990
          %s6993 = sshll.u32 %s6887, 4
          %s6994 = int_to_ptr.vmem [resolvable:$true] %s6993
          %s6995 = sshll.u32 %s6991, 4
          %s6996 = int_to_ptr.hbm [resolvable:$true] %s6995
          %6998 = dma.vmem_to_hbm [thread:$0]  %s6994, 128, %s6996, %s6884
        $region86: #{tpu_custom_call.1} parent=50 // pred_fallthru
          _
        // Predicated region
        $region87: #{tpu_custom_call.1} parent=50 // pred_check
          %p6999 = pneg %p212
        $region88: #{tpu_custom_call.1} parent=50 // pred_check_branch
          %7001 = sbr.rel (%p6999) target = $region90
        $region89: #{tpu_custom_call.1} parent=50 // pred_region
          _
        $region90: #{tpu_custom_call.1} parent=50 // pred_fallthru
          _
        // Predicated region
        $region91: #{tpu_custom_call.1} parent=50 // pred_check
          %p7002 = pneg %p240
        $region92: #{tpu_custom_call.1} parent=50 // pred_check_branch
          %7004 = sbr.rel (%p7002) target = $region94
        $region93: #{tpu_custom_call.1} parent=50 // pred_region
          _
        $region94: #{tpu_custom_call.1} parent=50 // pred_fallthru
          _
        // Predicated region
        $region95: #{tpu_custom_call.1} parent=50 // pred_check
          %p7005 = pneg %p268
        $region96: #{tpu_custom_call.1} parent=50 // pred_check_branch
          %7007 = sbr.rel (%p7005) target = $region98
        $region97: #{tpu_custom_call.1} parent=50 // pred_region
          _
        $region98: #{tpu_custom_call.1} parent=50 // pred_fallthru
          _
      $region51: #{tpu_custom_call.1} parent=5 // pred_fallthru
        _
      %p7008 = scmp.le.s32.totalorder 2, %s21
      // Predicated region
      $region99: #{tpu_custom_call.1} parent=5 // pred_check
        %p7009 = pneg %p7008
      $region100: #{tpu_custom_call.1} parent=5 // pred_check_branch
        %7011 = sbr.rel (%p7009) target = $region102
      $region101: #{tpu_custom_call.1} parent=5 // pred_region
        %s7012 = ssub.s32 %s21, 2
        // Predicated region
        $region103: #{tpu_custom_call.1} parent=101 // pred_check
          %p7013 = pneg %p134
        $region104: #{tpu_custom_call.1} parent=101 // pred_check_branch
          %7015 = sbr.rel (%p7013) target = $region106
        $region105: #{tpu_custom_call.1} parent=101 // pred_region
          %s7016 = sand.u32 %s119, 1
          %s7017 = sand.u32 %s119, 1
          %s7018 = smul.addr %s7017, 128
          %s7019 = scalar_lea.vmem [#allocation3], %s7018
        $region106: #{tpu_custom_call.1} parent=101 // pred_fallthru
          _
        // Predicated region
        $region107: #{tpu_custom_call.1} parent=101 // pred_check
          %p7020 = pneg %p162
        $region108: #{tpu_custom_call.1} parent=101 // pred_check_branch
          %7022 = sbr.rel (%p7020) target = $region110
        $region109: #{tpu_custom_call.1} parent=101 // pred_region
          %s7023 = sand.u32 %s147, 1
          %s7024 = scalar_lea.sflag [#allocation5], %s7023
          %s7025 = sand.u32 %s147, 1
          %s7026 = smul.addr %s7025, 4
          %s7027 = scalar_lea.vmem [#allocation4], %s7026
          %7029 = dma.done %s7024, 64
        $region110: #{tpu_custom_call.1} parent=101 // pred_fallthru
          _
        // Predicated region
        $region111: #{tpu_custom_call.1} parent=101 // pred_check
          %p7030 = pneg %p190
        $region112: #{tpu_custom_call.1} parent=101 // pred_check_branch
          %7032 = sbr.rel (%p7030) target = $region114
        $region113: #{tpu_custom_call.1} parent=101 // pred_region
          %s7033 = sand.u32 %s175, 1
          %s7034 = scalar_lea.sflag [#allocation7], %s7033
          %s7035 = sand.u32 %s175, 1
          %s7036 = smul.addr %s7035, 8
          %s7037 = scalar_lea.vmem [#allocation6], %s7036
          %7039 = dma.done %s7034, 128
        $region114: #{tpu_custom_call.1} parent=101 // pred_fallthru
          _
        // Predicated region
        $region115: #{tpu_custom_call.1} parent=101 // pred_check
          %p7040 = pneg %p218
        $region116: #{tpu_custom_call.1} parent=101 // pred_check_branch
          %7042 = sbr.rel (%p7040) target = $region118
        $region117: #{tpu_custom_call.1} parent=101 // pred_region
          %p7043 = scmp.lt.s32.totalorder %s32, 1
          %s7044 = scalar_select %p7043, %s32, 1
          %p7045 = scmp.lt.s32.totalorder %s33, 1
          %s7046 = scalar_select %p7045, %s33, 1
          %s7047 = smul.addr %s7046, 64
          %s7048 = smul.addr %s7044, 128
          %s7049 = sadd.s32 %s7047, %s7048
          %s7050 = smul.addr %s7049, 8
          %s7051 = scalar_lea.vmem %s6, %s7050
        $region118: #{tpu_custom_call.1} parent=101 // pred_fallthru
          _
        // Predicated region
        $region119: #{tpu_custom_call.1} parent=101 // pred_check
          %p7052 = pneg %p246
        $region120: #{tpu_custom_call.1} parent=101 // pred_check_branch
          %7054 = sbr.rel (%p7052) target = $region122
        $region121: #{tpu_custom_call.1} parent=101 // pred_region
          %p7055 = scmp.lt.s32.totalorder %s32, 1
          %s7056 = scalar_select %p7055, %s32, 1
          %p7057 = scmp.lt.s32.totalorder %s33, 1
          %s7058 = scalar_select %p7057, %s33, 1
          %s7059 = smul.addr %s7056, 2
          %s7060 = sadd.s32 %s7058, %s7059
          %s7061 = scalar_lea.vmem %s7, %s7060
        $region122: #{tpu_custom_call.1} parent=101 // pred_fallthru
          _
        // Predicated region
        $region123: #{tpu_custom_call.1} parent=101 // pred_check
          %p7062 = pneg %p274
        $region124: #{tpu_custom_call.1} parent=101 // pred_check_branch
          %7064 = sbr.rel (%p7062) target = $region126
        $region125: #{tpu_custom_call.1} parent=101 // pred_region
          %p7065 = scmp.lt.s32.totalorder %s32, 1
          %s7066 = scalar_select %p7065, %s32, 1
          %p7067 = scmp.lt.s32.totalorder %s33, 1
          %s7068 = scalar_select %p7067, %s33, 1
          %s7069 = smul.addr %s7066, 2
          %s7070 = sadd.s32 %s7068, %s7069
          %s7071 = scalar_lea.vmem %s8, %s7070
        $region126: #{tpu_custom_call.1} parent=101 // pred_fallthru
          _
      $region102: #{tpu_custom_call.1} parent=5 // pred_fallthru
        _
    $region6: #{tpu_custom_call.1} parent=1 // loop_footer
      %s25 = sadd.s32 1, %s21
    $region7: #{tpu_custom_call.1} parent=1 // loop_footer_branch
      %20 = sbr.rel target = $region3
    $region8: #{tpu_custom_call.1} parent=1 // loop_exit
      _
    %7072 = vsyncpa [#allocation5], 1
    %s7073 = scalar_lea.sflag [#allocation5], 1
    %7074 = vsyncpa %s7073, 1
    %7075 = vsyncpa [#allocation7], 1
    %s7076 = scalar_lea.sflag [#allocation7], 1
    %7077 = vsyncpa %s7076, 1

</llo_original>
